<compile_context>
chip_gen: v7x
topology: tpu7x:2x2x1
jax: 0.10.0
libtpu: 0.0.40
codegen_flags: <defaults>
</compile_context>

<pallas_src>
import numpy as np
import jax
import jax.numpy as jnp
from jax.experimental import pallas as pl
from jax.experimental.pallas import tpu as pltpu


def _round_up(x, m):
    return (x + m - 1) // m * m


def make_lstm_kernel(num_layers, t_chunk, hidden_dim, dot_dtype):
    H = hidden_dim

    def kernel(*refs):
        # refs layout:
        #   x_ref (t_chunk, B, D), lens_ref (B, 1),
        #   per layer: w_x (D_in, 4H), w_h (H, 4H), b (1, 4H),
        #   w_fc (H, O_pad), b_fc (1, O_pad), out_ref (B, O_pad),
        #   scratch: zx_scr (t_chunk, B, 4H), seq_scr (t_chunk, B, H),
        #            h_scr (L, B, H), c_scr (L, B, H), hlast_scr (B, H)
        x_ref = refs[0]
        lens_ref = refs[1]
        layer_refs = refs[2:2 + 3 * num_layers]
        w_fc_ref = refs[2 + 3 * num_layers]
        b_fc_ref = refs[3 + 3 * num_layers]
        out_ref = refs[4 + 3 * num_layers]
        zx_scr, seq_scr, h_scr, c_scr, hlast_scr = refs[5 + 3 * num_layers:]

        tc = pl.program_id(0)
        n_chunks = pl.num_programs(0)

        @pl.when(tc == 0)
        def _init():
            h_scr[...] = jnp.zeros_like(h_scr)
            c_scr[...] = jnp.zeros_like(c_scr)
            hlast_scr[...] = jnp.zeros_like(hlast_scr)

        lens = lens_ref[...]                       # (B, 1) int32
        base = tc * t_chunk                        # first global timestep of this chunk
        B = seq_scr.shape[1]
        TB = t_chunk * B

        for l in range(num_layers):
            w_x = layer_refs[3 * l]                # (D_in, 4H)
            w_h = layer_refs[3 * l + 1]            # (H, 4H)
            b = layer_refs[3 * l + 2]              # (1, 4H) f32

            # ---- input projection for the whole chunk: one wide MXU matmul (off the
            #      serial path), bias folded in here once ----
            if l == 0:
                inp_seq = x_ref[...]               # (t_chunk, B, D)
            else:
                inp_seq = seq_scr[...]             # (t_chunk, B, H) f32
            D_in = inp_seq.shape[-1]
            zx = (jnp.dot(inp_seq.reshape(TB, D_in).astype(dot_dtype), w_x[...],
                          preferred_element_type=jnp.float32)
                  + b[...])
            zx_scr[...] = zx.reshape(t_chunk, B, 4 * H)

            # ---- serial recurrence: only h_prev @ w_h + elementwise on the critical path ----
            def cell_step(z_pre, h_prev, c_prev):
                z = z_pre + jnp.dot(h_prev.astype(dot_dtype), w_h[...],
                                    preferred_element_type=jnp.float32)
                # gate order (i, f, o, g): one sigmoid over a 3H slab, one tanh over H
                sig = jax.nn.sigmoid(z[:, :3 * H])
                g_g = jnp.tanh(z[:, 3 * H:])
                c_new = sig[:, H:2 * H] * c_prev + sig[:, :H] * g_g
                h_new = sig[:, 2 * H:3 * H] * jnp.tanh(c_new)
                return h_new, c_new

            h_prev = h_scr[l]                      # (B, H) f32
            c_prev = c_scr[l]                      # (B, H) f32
            if t_chunk <= 16:
                for tt in range(t_chunk):          # static unroll for short chunks
                    h_prev, c_prev = cell_step(zx_scr[tt], h_prev, c_prev)
                    seq_scr[tt] = h_prev
            else:
                def body(tt, carry):               # bounded live ranges for deep chunks
                    h_p, c_p = carry
                    h_n, c_n = cell_step(zx_scr[tt], h_p, c_p)
                    seq_scr[tt] = h_n
                    return (h_n, c_n)
                h_prev, c_prev = jax.lax.fori_loop(0, t_chunk, body, (h_prev, c_prev),
                                                   unroll=4)
            h_scr[l] = h_prev
            c_scr[l] = c_prev

        # ---- capture top-layer hidden at the last valid timestep: one masked reduce over
        #      the chunk's hidden sequence (seq_scr now holds the top layer) ----
        t_ids = jax.lax.broadcasted_iota(jnp.int32, (t_chunk, B, 1), 0) + base
        hit = lens[None, :, :] == (t_ids + 1)                          # (t_chunk, B, 1)
        selected = jnp.sum(jnp.where(hit, seq_scr[...], 0.0), axis=0)  # (B, H)
        in_chunk = (lens > base) & (lens <= base + t_chunk)            # (B, 1)
        hlast_scr[...] = jnp.where(in_chunk, selected, hlast_scr[...])

        @pl.when(tc == n_chunks - 1)
        def _final():
            out_ref[...] = (jnp.dot(hlast_scr[...], w_fc_ref[...],
                                    preferred_element_type=jnp.float32)
                            + b_fc_ref[...])

    return kernel


def lstm_forward_pallas(x_btd, lengths, params, *, t_chunk=8,
                        compute_dtype=jnp.float32,
                        vmem_limit_bytes=48 * 1024 * 1024):
    """x_btd: (B, T, D) float32 (batch_first); lengths: (B,) int, all >= 1.

    compute_dtype: matmul operand dtype. bf16 recommended on v6e/v7x; keep f32 on v5e.
    vmem_limit_bytes: 48 MiB keeps headroom under v7x's 64 MiB VMEM; raise (and sweep t_chunk
    up to 32-64) on v6e/v5e.
    """
    B, T, D = x_btd.shape
    layers = params["layers"]
    L = len(layers)
    H = layers[0][1].shape[0]          # w_h: (H, 4H)
    O = params["w_fc"].shape[1]

    # sublane-aligned batch: 8 for f32, 16 for bf16 operand packing
    sub = 16 if compute_dtype == jnp.bfloat16 else 8
    B_pad = _round_up(max(B, 1), sub)

    # trim dead timesteps using the host-known max length (lengths are concrete here)
    try:
        max_len = int(np.max(np.asarray(lengths)))
        T_eff = max(1, min(T, max_len))
    except Exception:
        T_eff = T
    t_chunk = max(1, min(t_chunk, T_eff))
    T_pad = _round_up(T_eff, t_chunk)

    # time-major; pad T and B with zeros (padded rows get length 0 -> never selected)
    x_tbd = jnp.transpose(x_btd[:, :T_eff, :], (1, 0, 2)).astype(compute_dtype)
    x_tbd = jnp.pad(x_tbd, ((0, T_pad - T_eff), (0, B_pad - B), (0, 0)))
    lens2d = jnp.pad(lengths.astype(jnp.int32).reshape(B, 1),
                     ((0, B_pad - B), (0, 0)))

    # lane-dense final projection: pad O -> 128
    O_pad = _round_up(O, 128)
    w_fc = jnp.pad(params["w_fc"].astype(jnp.float32), ((0, 0), (0, O_pad - O)))
    b_fc = jnp.pad(params["b_fc"].astype(jnp.float32), ((0, 0), (0, O_pad - O)))

    def _const_spec(shape, single_buffer):
        ndim = len(shape)
        idx = lambda i, _n=ndim: (0,) * _n
        if single_buffer:
            try:
                return pl.BlockSpec(shape, idx, pipeline_mode=pl.Buffered(1))
            except TypeError:
                pass
        return pl.BlockSpec(shape, idx)

    def _call(single_buffer):
        inputs = [x_tbd, lens2d]
        in_specs = [
            pl.BlockSpec((t_chunk, B_pad, D), lambda i: (i, 0, 0)),  # streamed x chunk
            _const_spec((B_pad, 1), single_buffer),
        ]
        for (w_x, w_h, b) in layers:
            w_xc = w_x.astype(compute_dtype)
            w_hc = w_h.astype(compute_dtype)
            bc = b.astype(jnp.float32)                               # bias stays f32
            inputs += [w_xc, w_hc, bc]
            in_specs += [
                _const_spec(w_xc.shape, single_buffer),
                _const_spec(w_hc.shape, single_buffer),
                _const_spec(bc.shape, single_buffer),
            ]
        inputs += [w_fc, b_fc]
        in_specs += [
            _const_spec(w_fc.shape, single_buffer),
            _const_spec(b_fc.shape, single_buffer),
        ]

        return pl.pallas_call(
            make_lstm_kernel(L, t_chunk, H, compute_dtype),
            out_shape=jax.ShapeDtypeStruct((B_pad, O_pad), jnp.float32),
            grid=(T_pad // t_chunk,),
            in_specs=in_specs,
            out_specs=pl.BlockSpec((B_pad, O_pad), lambda i: (0, 0)),
            scratch_shapes=[
                pltpu.VMEM((t_chunk, B_pad, 4 * H), jnp.float32),  # zx slab (chunk preact)
                pltpu.VMEM((t_chunk, B_pad, H), jnp.float32),      # layer hidden sequence
                pltpu.VMEM((L, B_pad, H), jnp.float32),            # h state per layer
                pltpu.VMEM((L, B_pad, H), jnp.float32),            # c state per layer
                pltpu.VMEM((B_pad, H), jnp.float32),               # h at last valid step
            ],
            compiler_params=pltpu.CompilerParams(
                dimension_semantics=("arbitrary",),                # time recurrence -> serial
                vmem_limit_bytes=vmem_limit_bytes,
            ),
        )(*inputs)

    try:
        out = jax.block_until_ready(_call(single_buffer=True))
    except Exception:
        # fallback if this JAX/Mosaic build rejects pipeline_mode=pl.Buffered(1)
        out = jax.block_until_ready(_call(single_buffer=False))
    return out[:B, :O]


def lstm_forward_ref(x_btd, lengths, params):
    """Pure-JAX f32 reference (same math, same packed (i, f, o, g) param layout)."""
    B, T, D = x_btd.shape
    layers = params["layers"]
    L = len(layers)
    H = layers[0][1].shape[0]
    h = [jnp.zeros((B, H), jnp.float32) for _ in range(L)]
    c = [jnp.zeros((B, H), jnp.float32) for _ in range(L)]
    h_last = jnp.zeros((B, H), jnp.float32)
    lens2d = lengths.reshape(B, 1)
    for t in range(T):
        inp = x_btd[:, t, :]
        for l, (w_x, w_h, b) in enumerate(layers):
            z = inp @ w_x + h[l] @ w_h + b
            i_g = jax.nn.sigmoid(z[:, :H])
            f_g = jax.nn.sigmoid(z[:, H:2 * H])
            o_g = jax.nn.sigmoid(z[:, 2 * H:3 * H])
            g_g = jnp.tanh(z[:, 3 * H:])
            c[l] = f_g * c[l] + i_g * g_g
            h[l] = o_g * jnp.tanh(c[l])
            inp = h[l]
        h_last = jnp.where(lens2d == (t + 1), inp, h_last)
    return h_last @ params["w_fc"] + params["b_fc"]


def init_params(key, input_dim, hidden_dim, output_dim, num_layers):
    """Deterministic synthetic init (uniform +-1/sqrt(H), like PyTorch's LSTM default),
    stored pre-packed for the fused-gate kernel: per layer w_x:(D_in,4H), w_h:(H,4H),
    b:(1,4H) with gate order (i, f, o, g) and b_ih+b_hh folded; fc:(H,O) + (1,O)."""
    scale = 1.0 / np.sqrt(hidden_dim)
    layers = []
    for l in range(num_layers):
        d_in = input_dim if l == 0 else hidden_dim
        key, k1, k2, k3 = jax.random.split(key, 4)
        w_x = jax.random.uniform(k1, (d_in, 4 * hidden_dim), jnp.float32, -scale, scale)
        w_h = jax.random.uniform(k2, (hidden_dim, 4 * hidden_dim), jnp.float32, -scale, scale)
        b = jax.random.uniform(k3, (1, 4 * hidden_dim), jnp.float32, -scale, scale)
        layers.append((w_x, w_h, b))
    key, k4, k5 = jax.random.split(key, 3)
    w_fc = jax.random.uniform(k4, (hidden_dim, output_dim), jnp.float32, -scale, scale)
    b_fc = jax.random.uniform(k5, (1, output_dim), jnp.float32, -scale, scale)
    return {"layers": layers, "w_fc": w_fc, "b_fc": b_fc}


if __name__ == "__main__":
    # Small shapes consistent with the module's forward:
    #   X: (batch, seq, lstm_input_dim), X_lengths: (batch,)
    B, T = 4, 8
    LSTM_INPUT_DIM = 8
    LSTM_NUM_LAYERS = 2
    LSTM_HIDDEN_DIM = 32      # fused gate width 4H = 128 (full lane width)
    LSTM_OUTPUT_DIM = 4

    key = jax.random.PRNGKey(0)
    key, kx = jax.random.split(key)
    x = jax.random.normal(kx, (B, T, LSTM_INPUT_DIM), jnp.float32)
    # pack_padded_sequence expects descending lengths >= 1 (the training code sorts); mimic that.
    lengths = jnp.array([8, 6, 5, 3], dtype=jnp.int32)

    params = init_params(key, LSTM_INPUT_DIM, LSTM_HIDDEN_DIM, LSTM_OUTPUT_DIM,
                         LSTM_NUM_LAYERS)

    ref = lstm_forward_ref(x, lengths, params)

    # f32 operand path (reference-accurate; recommended on v5e)
    out = lstm_forward_pallas(x, lengths, params, t_chunk=8, compute_dtype=jnp.float32)
    out = jax.block_until_ready(out)
    np.testing.assert_allclose(np.asarray(out), np.asarray(ref), rtol=1e-5, atol=1e-5)

    # bf16 matmul-operand path (v6e/v7x MXU rate); h/c state, bias adds, activations stay f32.
    out_bf16 = lstm_forward_pallas(x, lengths, params, t_chunk=8,
                                   compute_dtype=jnp.bfloat16)
    out_bf16 = jax.block_until_ready(out_bf16)
    np.testing.assert_allclose(np.asarray(out_bf16), np.asarray(ref), rtol=1e-1, atol=1e-1)

    # TODO(synk): Adam optimizer / CrossEntropy-MSE loss / training loop are not part of the
    # forward pass and are intentionally not implemented.
    print("KERNEL_OK")
</pallas_src>

<mosaic_0001>
module attributes {stable_mosaic.version = 11 : i64} {
  func.func @kernel(%arg0: i32, %arg1: memref<8x8x8xf32, #tpu.memory_space<vmem>>, %arg2: memref<8x1xi32, #tpu.memory_space<vmem>>, %arg3: memref<8x128xf32, #tpu.memory_space<vmem>>, %arg4: memref<32x128xf32, #tpu.memory_space<vmem>>, %arg5: memref<1x128xf32, #tpu.memory_space<vmem>>, %arg6: memref<32x128xf32, #tpu.memory_space<vmem>>, %arg7: memref<32x128xf32, #tpu.memory_space<vmem>>, %arg8: memref<1x128xf32, #tpu.memory_space<vmem>>, %arg9: memref<32x128xf32, #tpu.memory_space<vmem>>, %arg10: memref<1x128xf32, #tpu.memory_space<vmem>>, %arg11: memref<8x128xf32, #tpu.memory_space<vmem>>, %arg12: memref<8x8x128xf32, #tpu.memory_space<vmem>>, %arg13: memref<8x8x32xf32, #tpu.memory_space<vmem>>, %arg14: memref<2x8x32xf32, #tpu.memory_space<vmem>>, %arg15: memref<2x8x32xf32, #tpu.memory_space<vmem>>, %arg16: memref<8x32xf32, #tpu.memory_space<vmem>>) attributes {dimension_semantics = [#tpu.dimension_semantics<arbitrary>], iteration_bounds = array<i64: 1>, scalar_prefetch = 0 : i64, scratch_operands = 5 : i64, tpu.core_type = #tpu.core_type<tc>, window_params = [{transform_indices = @transform_0, window_bounds = array<i64: 8, 8, 8>}, {pipeline_mode = #tpu.pipeline_mode<synchronous>, transform_indices = @transform_1, window_bounds = array<i64: 8, 1>}, {pipeline_mode = #tpu.pipeline_mode<synchronous>, transform_indices = @transform_2, window_bounds = array<i64: 8, 128>}, {pipeline_mode = #tpu.pipeline_mode<synchronous>, transform_indices = @transform_3, window_bounds = array<i64: 32, 128>}, {pipeline_mode = #tpu.pipeline_mode<synchronous>, transform_indices = @transform_4, window_bounds = array<i64: 1, 128>}, {pipeline_mode = #tpu.pipeline_mode<synchronous>, transform_indices = @transform_5, window_bounds = array<i64: 32, 128>}, {pipeline_mode = #tpu.pipeline_mode<synchronous>, transform_indices = @transform_6, window_bounds = array<i64: 32, 128>}, {pipeline_mode = #tpu.pipeline_mode<synchronous>, transform_indices = @transform_7, window_bounds = array<i64: 1, 128>}, {pipeline_mode = #tpu.pipeline_mode<synchronous>, transform_indices = @transform_8, window_bounds = array<i64: 32, 128>}, {pipeline_mode = #tpu.pipeline_mode<synchronous>, transform_indices = @transform_9, window_bounds = array<i64: 1, 128>}, {pipeline_mode = #tpu.pipeline_mode<synchronous>, transform_indices = @transform_10, window_bounds = array<i64: 8, 128>}]} {
    %c0_i32 = arith.constant 0 : i32
    %0 = arith.cmpi eq, %arg0, %c0_i32 : i32
    %1 = arith.extui %0 : i1 to i32
    %c0_i32_0 = arith.constant 0 : i32
    %2 = arith.cmpi ne, %1, %c0_i32_0 : i32
    scf.if %2 {
      %cst_212 = arith.constant 0.000000e+00 : f32
      %455 = vector.broadcast %cst_212 : f32 to vector<2x8x32xf32>
      %c0_213 = arith.constant 0 : index
      %c0_214 = arith.constant 0 : index
      %c0_215 = arith.constant 0 : index
      %456 = vector.load %arg14[%c0_213, %c0_214, %c0_215] : memref<2x8x32xf32, #tpu.memory_space<vmem>>, vector<2x8x32xf32>
      tpu.vector_store %arg14[%c0_213, %c0_214, %c0_215], %455 {strides = array<i32>} : memref<2x8x32xf32, #tpu.memory_space<vmem>>, vector<2x8x32xf32>,
      %cst_216 = arith.constant 0.000000e+00 : f32
      %457 = vector.broadcast %cst_216 : f32 to vector<2x8x32xf32>
      %c0_217 = arith.constant 0 : index
      %c0_218 = arith.constant 0 : index
      %c0_219 = arith.constant 0 : index
      %458 = vector.load %arg15[%c0_217, %c0_218, %c0_219] : memref<2x8x32xf32, #tpu.memory_space<vmem>>, vector<2x8x32xf32>
      tpu.vector_store %arg15[%c0_217, %c0_218, %c0_219], %457 {strides = array<i32>} : memref<2x8x32xf32, #tpu.memory_space<vmem>>, vector<2x8x32xf32>,
      %cst_220 = arith.constant 0.000000e+00 : f32
      %459 = vector.broadcast %cst_220 : f32 to vector<8x32xf32>
      %c0_221 = arith.constant 0 : index
      %c0_222 = arith.constant 0 : index
      %460 = vector.load %arg16[%c0_221, %c0_222] : memref<8x32xf32, #tpu.memory_space<vmem>>, vector<8x32xf32>
      tpu.vector_store %arg16[%c0_221, %c0_222], %459 {strides = array<i32>} : memref<8x32xf32, #tpu.memory_space<vmem>>, vector<8x32xf32>,
    } else {
    }
    %c0 = arith.constant 0 : index
    %c0_1 = arith.constant 0 : index
    %3 = vector.load %arg2[%c0, %c0_1] : memref<8x1xi32, #tpu.memory_space<vmem>>, vector<8x1xi32>
    %c8_i32 = arith.constant 8 : i32
    %4 = arith.muli %arg0, %c8_i32 : i32
    %c0_2 = arith.constant 0 : index
    %c0_3 = arith.constant 0 : index
    %c0_4 = arith.constant 0 : index
    %5 = vector.load %arg1[%c0_2, %c0_3, %c0_4] : memref<8x8x8xf32, #tpu.memory_space<vmem>>, vector<8x8x8xf32>
    %6 = vector.shape_cast %5 : vector<8x8x8xf32> to vector<64x8xf32>
    %c0_5 = arith.constant 0 : index
    %c0_6 = arith.constant 0 : index
    %7 = vector.load %arg3[%c0_5, %c0_6] : memref<8x128xf32, #tpu.memory_space<vmem>>, vector<8x128xf32>
    %cst = arith.constant dense<0.000000e+00> : vector<64x128xf32>
    %8 = tpu.matmul %6, %7, %cst {dimension_numbers = #tpu.dot_dimension_numbers<[1], [0], [0], [1], [0, 0, 1, 1], [], []>} : vector<64x8xf32>, vector<8x128xf32>, vector<64x128xf32> -> vector<64x128xf32>
    %c0_7 = arith.constant 0 : index
    %c0_8 = arith.constant 0 : index
    %9 = vector.load %arg5[%c0_7, %c0_8] : memref<1x128xf32, #tpu.memory_space<vmem>>, vector<1x128xf32>
    %10 = vector.broadcast %9 : vector<1x128xf32> to vector<64x128xf32>
    %11 = arith.addf %8, %10 : vector<64x128xf32>
    %12 = vector.shape_cast %11 : vector<64x128xf32> to vector<8x8x128xf32>
    %c0_9 = arith.constant 0 : index
    %c0_10 = arith.constant 0 : index
    %c0_11 = arith.constant 0 : index
    %13 = vector.load %arg12[%c0_9, %c0_10, %c0_11] : memref<8x8x128xf32, #tpu.memory_space<vmem>>, vector<8x8x128xf32>
    tpu.vector_store %arg12[%c0_9, %c0_10, %c0_11], %12 {strides = array<i32>} : memref<8x8x128xf32, #tpu.memory_space<vmem>>, vector<8x8x128xf32>,
    %c0_12 = arith.constant 0 : index
    %c0_13 = arith.constant 0 : index
    %c0_14 = arith.constant 0 : index
    %14 = vector.load %arg14[%c0_12, %c0_13, %c0_14] : memref<2x8x32xf32, #tpu.memory_space<vmem>>, vector<1x8x32xf32>
    %15 = vector.shape_cast %14 : vector<1x8x32xf32> to vector<8x32xf32>
    %c0_15 = arith.constant 0 : index
    %c0_16 = arith.constant 0 : index
    %c0_17 = arith.constant 0 : index
    %16 = vector.load %arg15[%c0_15, %c0_16, %c0_17] : memref<2x8x32xf32, #tpu.memory_space<vmem>>, vector<1x8x32xf32>
    %17 = vector.shape_cast %16 : vector<1x8x32xf32> to vector<8x32xf32>
    %c0_18 = arith.constant 0 : index
    %c0_19 = arith.constant 0 : index
    %c0_20 = arith.constant 0 : index
    %18 = vector.load %arg12[%c0_18, %c0_19, %c0_20] : memref<8x8x128xf32, #tpu.memory_space<vmem>>, vector<1x8x128xf32>
    %19 = vector.shape_cast %18 : vector<1x8x128xf32> to vector<8x128xf32>
    %c0_21 = arith.constant 0 : index
    %c0_22 = arith.constant 0 : index
    %20 = vector.load %arg4[%c0_21, %c0_22] : memref<32x128xf32, #tpu.memory_space<vmem>>, vector<32x128xf32>
    %cst_23 = arith.constant dense<0.000000e+00> : vector<8x128xf32>
    %21 = tpu.matmul %15, %20, %cst_23 {dimension_numbers = #tpu.dot_dimension_numbers<[1], [0], [0], [1], [0, 0, 1, 1], [], []>} : vector<8x32xf32>, vector<32x128xf32>, vector<8x128xf32> -> vector<8x128xf32>
    %22 = arith.addf %19, %21 : vector<8x128xf32>
    %23 = vector.extract_strided_slice %22 {offsets = [0, 0], sizes = [8, 96], strides = [1, 1]} : vector<8x128xf32> to vector<8x96xf32>
    %24 = arith.negf %23 : vector<8x96xf32>
    %25 = math.exp %24 : vector<8x96xf32>
    %cst_24 = arith.constant 1.000000e+00 : f32
    %26 = vector.broadcast %cst_24 : f32 to vector<8x96xf32>
    %27 = arith.addf %26, %25 : vector<8x96xf32>
    %28 = arith.divf %26, %27 : vector<8x96xf32>
    %29 = vector.extract_strided_slice %22 {offsets = [0, 96], sizes = [8, 32], strides = [1, 1]} : vector<8x128xf32> to vector<8x32xf32>
    %30 = math.tanh %29 : vector<8x32xf32>
    %31 = vector.extract_strided_slice %28 {offsets = [0, 32], sizes = [8, 32], strides = [1, 1]} : vector<8x96xf32> to vector<8x32xf32>
    %32 = arith.mulf %31, %17 : vector<8x32xf32>
    %33 = vector.extract_strided_slice %28 {offsets = [0, 0], sizes = [8, 32], strides = [1, 1]} : vector<8x96xf32> to vector<8x32xf32>
    %34 = arith.mulf %33, %30 : vector<8x32xf32>
    %35 = arith.addf %32, %34 : vector<8x32xf32>
    %36 = vector.extract_strided_slice %28 {offsets = [0, 64], sizes = [8, 32], strides = [1, 1]} : vector<8x96xf32> to vector<8x32xf32>
    %37 = math.tanh %35 : vector<8x32xf32>
    %38 = arith.mulf %36, %37 : vector<8x32xf32>
    %c0_25 = arith.constant 0 : index
    %c0_26 = arith.constant 0 : index
    %c0_27 = arith.constant 0 : index
    %39 = vector.load %arg13[%c0_25, %c0_26, %c0_27] : memref<8x8x32xf32, #tpu.memory_space<vmem>>, vector<1x8x32xf32>
    %40 = vector.shape_cast %39 : vector<1x8x32xf32> to vector<8x32xf32>
    %41 = vector.shape_cast %38 : vector<8x32xf32> to vector<1x8x32xf32>
    tpu.vector_store %arg13[%c0_25, %c0_26, %c0_27], %41 {strides = array<i32>} : memref<8x8x32xf32, #tpu.memory_space<vmem>>, vector<1x8x32xf32>,
    %c1 = arith.constant 1 : index
    %c0_28 = arith.constant 0 : index
    %c0_29 = arith.constant 0 : index
    %42 = vector.load %arg12[%c1, %c0_28, %c0_29] : memref<8x8x128xf32, #tpu.memory_space<vmem>>, vector<1x8x128xf32>
    %43 = vector.shape_cast %42 : vector<1x8x128xf32> to vector<8x128xf32>
    %c0_30 = arith.constant 0 : index
    %c0_31 = arith.constant 0 : index
    %44 = vector.load %arg4[%c0_30, %c0_31] : memref<32x128xf32, #tpu.memory_space<vmem>>, vector<32x128xf32>
    %cst_32 = arith.constant dense<0.000000e+00> : vector<8x128xf32>
    %45 = tpu.matmul %38, %44, %cst_32 {dimension_numbers = #tpu.dot_dimension_numbers<[1], [0], [0], [1], [0, 0, 1, 1], [], []>} : vector<8x32xf32>, vector<32x128xf32>, vector<8x128xf32> -> vector<8x128xf32>
    %46 = arith.addf %43, %45 : vector<8x128xf32>
    %47 = vector.extract_strided_slice %46 {offsets = [0, 0], sizes = [8, 96], strides = [1, 1]} : vector<8x128xf32> to vector<8x96xf32>
    %48 = arith.negf %47 : vector<8x96xf32>
    %49 = math.exp %48 : vector<8x96xf32>
    %cst_33 = arith.constant 1.000000e+00 : f32
    %50 = vector.broadcast %cst_33 : f32 to vector<8x96xf32>
    %51 = arith.addf %50, %49 : vector<8x96xf32>
    %52 = arith.divf %50, %51 : vector<8x96xf32>
    %53 = vector.extract_strided_slice %46 {offsets = [0, 96], sizes = [8, 32], strides = [1, 1]} : vector<8x128xf32> to vector<8x32xf32>
    %54 = math.tanh %53 : vector<8x32xf32>
    %55 = vector.extract_strided_slice %52 {offsets = [0, 32], sizes = [8, 32], strides = [1, 1]} : vector<8x96xf32> to vector<8x32xf32>
    %56 = arith.mulf %55, %35 : vector<8x32xf32>
    %57 = vector.extract_strided_slice %52 {offsets = [0, 0], sizes = [8, 32], strides = [1, 1]} : vector<8x96xf32> to vector<8x32xf32>
    %58 = arith.mulf %57, %54 : vector<8x32xf32>
    %59 = arith.addf %56, %58 : vector<8x32xf32>
    %60 = vector.extract_strided_slice %52 {offsets = [0, 64], sizes = [8, 32], strides = [1, 1]} : vector<8x96xf32> to vector<8x32xf32>
    %61 = math.tanh %59 : vector<8x32xf32>
    %62 = arith.mulf %60, %61 : vector<8x32xf32>
    %c1_34 = arith.constant 1 : index
    %c0_35 = arith.constant 0 : index
    %c0_36 = arith.constant 0 : index
    %63 = vector.load %arg13[%c1_34, %c0_35, %c0_36] : memref<8x8x32xf32, #tpu.memory_space<vmem>>, vector<1x8x32xf32>
    %64 = vector.shape_cast %63 : vector<1x8x32xf32> to vector<8x32xf32>
    %65 = vector.shape_cast %62 : vector<8x32xf32> to vector<1x8x32xf32>
    tpu.vector_store %arg13[%c1_34, %c0_35, %c0_36], %65 {strides = array<i32>} : memref<8x8x32xf32, #tpu.memory_space<vmem>>, vector<1x8x32xf32>,
    %c2 = arith.constant 2 : index
    %c0_37 = arith.constant 0 : index
    %c0_38 = arith.constant 0 : index
    %66 = vector.load %arg12[%c2, %c0_37, %c0_38] : memref<8x8x128xf32, #tpu.memory_space<vmem>>, vector<1x8x128xf32>
    %67 = vector.shape_cast %66 : vector<1x8x128xf32> to vector<8x128xf32>
    %c0_39 = arith.constant 0 : index
    %c0_40 = arith.constant 0 : index
    %68 = vector.load %arg4[%c0_39, %c0_40] : memref<32x128xf32, #tpu.memory_space<vmem>>, vector<32x128xf32>
    %cst_41 = arith.constant dense<0.000000e+00> : vector<8x128xf32>
    %69 = tpu.matmul %62, %68, %cst_41 {dimension_numbers = #tpu.dot_dimension_numbers<[1], [0], [0], [1], [0, 0, 1, 1], [], []>} : vector<8x32xf32>, vector<32x128xf32>, vector<8x128xf32> -> vector<8x128xf32>
    %70 = arith.addf %67, %69 : vector<8x128xf32>
    %71 = vector.extract_strided_slice %70 {offsets = [0, 0], sizes = [8, 96], strides = [1, 1]} : vector<8x128xf32> to vector<8x96xf32>
    %72 = arith.negf %71 : vector<8x96xf32>
    %73 = math.exp %72 : vector<8x96xf32>
    %cst_42 = arith.constant 1.000000e+00 : f32
    %74 = vector.broadcast %cst_42 : f32 to vector<8x96xf32>
    %75 = arith.addf %74, %73 : vector<8x96xf32>
    %76 = arith.divf %74, %75 : vector<8x96xf32>
    %77 = vector.extract_strided_slice %70 {offsets = [0, 96], sizes = [8, 32], strides = [1, 1]} : vector<8x128xf32> to vector<8x32xf32>
    %78 = math.tanh %77 : vector<8x32xf32>
    %79 = vector.extract_strided_slice %76 {offsets = [0, 32], sizes = [8, 32], strides = [1, 1]} : vector<8x96xf32> to vector<8x32xf32>
    %80 = arith.mulf %79, %59 : vector<8x32xf32>
    %81 = vector.extract_strided_slice %76 {offsets = [0, 0], sizes = [8, 32], strides = [1, 1]} : vector<8x96xf32> to vector<8x32xf32>
    %82 = arith.mulf %81, %78 : vector<8x32xf32>
    %83 = arith.addf %80, %82 : vector<8x32xf32>
    %84 = vector.extract_strided_slice %76 {offsets = [0, 64], sizes = [8, 32], strides = [1, 1]} : vector<8x96xf32> to vector<8x32xf32>
    %85 = math.tanh %83 : vector<8x32xf32>
    %86 = arith.mulf %84, %85 : vector<8x32xf32>
    %c2_43 = arith.constant 2 : index
    %c0_44 = arith.constant 0 : index
    %c0_45 = arith.constant 0 : index
    %87 = vector.load %arg13[%c2_43, %c0_44, %c0_45] : memref<8x8x32xf32, #tpu.memory_space<vmem>>, vector<1x8x32xf32>
    %88 = vector.shape_cast %87 : vector<1x8x32xf32> to vector<8x32xf32>
    %89 = vector.shape_cast %86 : vector<8x32xf32> to vector<1x8x32xf32>
    tpu.vector_store %arg13[%c2_43, %c0_44, %c0_45], %89 {strides = array<i32>} : memref<8x8x32xf32, #tpu.memory_space<vmem>>, vector<1x8x32xf32>,
    %c3 = arith.constant 3 : index
    %c0_46 = arith.constant 0 : index
    %c0_47 = arith.constant 0 : index
    %90 = vector.load %arg12[%c3, %c0_46, %c0_47] : memref<8x8x128xf32, #tpu.memory_space<vmem>>, vector<1x8x128xf32>
    %91 = vector.shape_cast %90 : vector<1x8x128xf32> to vector<8x128xf32>
    %c0_48 = arith.constant 0 : index
    %c0_49 = arith.constant 0 : index
    %92 = vector.load %arg4[%c0_48, %c0_49] : memref<32x128xf32, #tpu.memory_space<vmem>>, vector<32x128xf32>
    %cst_50 = arith.constant dense<0.000000e+00> : vector<8x128xf32>
    %93 = tpu.matmul %86, %92, %cst_50 {dimension_numbers = #tpu.dot_dimension_numbers<[1], [0], [0], [1], [0, 0, 1, 1], [], []>} : vector<8x32xf32>, vector<32x128xf32>, vector<8x128xf32> -> vector<8x128xf32>
    %94 = arith.addf %91, %93 : vector<8x128xf32>
    %95 = vector.extract_strided_slice %94 {offsets = [0, 0], sizes = [8, 96], strides = [1, 1]} : vector<8x128xf32> to vector<8x96xf32>
    %96 = arith.negf %95 : vector<8x96xf32>
    %97 = math.exp %96 : vector<8x96xf32>
    %cst_51 = arith.constant 1.000000e+00 : f32
    %98 = vector.broadcast %cst_51 : f32 to vector<8x96xf32>
    %99 = arith.addf %98, %97 : vector<8x96xf32>
    %100 = arith.divf %98, %99 : vector<8x96xf32>
    %101 = vector.extract_strided_slice %94 {offsets = [0, 96], sizes = [8, 32], strides = [1, 1]} : vector<8x128xf32> to vector<8x32xf32>
    %102 = math.tanh %101 : vector<8x32xf32>
    %103 = vector.extract_strided_slice %100 {offsets = [0, 32], sizes = [8, 32], strides = [1, 1]} : vector<8x96xf32> to vector<8x32xf32>
    %104 = arith.mulf %103, %83 : vector<8x32xf32>
    %105 = vector.extract_strided_slice %100 {offsets = [0, 0], sizes = [8, 32], strides = [1, 1]} : vector<8x96xf32> to vector<8x32xf32>
    %106 = arith.mulf %105, %102 : vector<8x32xf32>
    %107 = arith.addf %104, %106 : vector<8x32xf32>
    %108 = vector.extract_strided_slice %100 {offsets = [0, 64], sizes = [8, 32], strides = [1, 1]} : vector<8x96xf32> to vector<8x32xf32>
    %109 = math.tanh %107 : vector<8x32xf32>
    %110 = arith.mulf %108, %109 : vector<8x32xf32>
    %c3_52 = arith.constant 3 : index
    %c0_53 = arith.constant 0 : index
    %c0_54 = arith.constant 0 : index
    %111 = vector.load %arg13[%c3_52, %c0_53, %c0_54] : memref<8x8x32xf32, #tpu.memory_space<vmem>>, vector<1x8x32xf32>
    %112 = vector.shape_cast %111 : vector<1x8x32xf32> to vector<8x32xf32>
    %113 = vector.shape_cast %110 : vector<8x32xf32> to vector<1x8x32xf32>
    tpu.vector_store %arg13[%c3_52, %c0_53, %c0_54], %113 {strides = array<i32>} : memref<8x8x32xf32, #tpu.memory_space<vmem>>, vector<1x8x32xf32>,
    %c4 = arith.constant 4 : index
    %c0_55 = arith.constant 0 : index
    %c0_56 = arith.constant 0 : index
    %114 = vector.load %arg12[%c4, %c0_55, %c0_56] : memref<8x8x128xf32, #tpu.memory_space<vmem>>, vector<1x8x128xf32>
    %115 = vector.shape_cast %114 : vector<1x8x128xf32> to vector<8x128xf32>
    %c0_57 = arith.constant 0 : index
    %c0_58 = arith.constant 0 : index
    %116 = vector.load %arg4[%c0_57, %c0_58] : memref<32x128xf32, #tpu.memory_space<vmem>>, vector<32x128xf32>
    %cst_59 = arith.constant dense<0.000000e+00> : vector<8x128xf32>
    %117 = tpu.matmul %110, %116, %cst_59 {dimension_numbers = #tpu.dot_dimension_numbers<[1], [0], [0], [1], [0, 0, 1, 1], [], []>} : vector<8x32xf32>, vector<32x128xf32>, vector<8x128xf32> -> vector<8x128xf32>
    %118 = arith.addf %115, %117 : vector<8x128xf32>
    %119 = vector.extract_strided_slice %118 {offsets = [0, 0], sizes = [8, 96], strides = [1, 1]} : vector<8x128xf32> to vector<8x96xf32>
    %120 = arith.negf %119 : vector<8x96xf32>
    %121 = math.exp %120 : vector<8x96xf32>
    %cst_60 = arith.constant 1.000000e+00 : f32
    %122 = vector.broadcast %cst_60 : f32 to vector<8x96xf32>
    %123 = arith.addf %122, %121 : vector<8x96xf32>
    %124 = arith.divf %122, %123 : vector<8x96xf32>
    %125 = vector.extract_strided_slice %118 {offsets = [0, 96], sizes = [8, 32], strides = [1, 1]} : vector<8x128xf32> to vector<8x32xf32>
    %126 = math.tanh %125 : vector<8x32xf32>
    %127 = vector.extract_strided_slice %124 {offsets = [0, 32], sizes = [8, 32], strides = [1, 1]} : vector<8x96xf32> to vector<8x32xf32>
    %128 = arith.mulf %127, %107 : vector<8x32xf32>
    %129 = vector.extract_strided_slice %124 {offsets = [0, 0], sizes = [8, 32], strides = [1, 1]} : vector<8x96xf32> to vector<8x32xf32>
    %130 = arith.mulf %129, %126 : vector<8x32xf32>
    %131 = arith.addf %128, %130 : vector<8x32xf32>
    %132 = vector.extract_strided_slice %124 {offsets = [0, 64], sizes = [8, 32], strides = [1, 1]} : vector<8x96xf32> to vector<8x32xf32>
    %133 = math.tanh %131 : vector<8x32xf32>
    %134 = arith.mulf %132, %133 : vector<8x32xf32>
    %c4_61 = arith.constant 4 : index
    %c0_62 = arith.constant 0 : index
    %c0_63 = arith.constant 0 : index
    %135 = vector.load %arg13[%c4_61, %c0_62, %c0_63] : memref<8x8x32xf32, #tpu.memory_space<vmem>>, vector<1x8x32xf32>
    %136 = vector.shape_cast %135 : vector<1x8x32xf32> to vector<8x32xf32>
    %137 = vector.shape_cast %134 : vector<8x32xf32> to vector<1x8x32xf32>
    tpu.vector_store %arg13[%c4_61, %c0_62, %c0_63], %137 {strides = array<i32>} : memref<8x8x32xf32, #tpu.memory_space<vmem>>, vector<1x8x32xf32>,
    %c5 = arith.constant 5 : index
    %c0_64 = arith.constant 0 : index
    %c0_65 = arith.constant 0 : index
    %138 = vector.load %arg12[%c5, %c0_64, %c0_65] : memref<8x8x128xf32, #tpu.memory_space<vmem>>, vector<1x8x128xf32>
    %139 = vector.shape_cast %138 : vector<1x8x128xf32> to vector<8x128xf32>
    %c0_66 = arith.constant 0 : index
    %c0_67 = arith.constant 0 : index
    %140 = vector.load %arg4[%c0_66, %c0_67] : memref<32x128xf32, #tpu.memory_space<vmem>>, vector<32x128xf32>
    %cst_68 = arith.constant dense<0.000000e+00> : vector<8x128xf32>
    %141 = tpu.matmul %134, %140, %cst_68 {dimension_numbers = #tpu.dot_dimension_numbers<[1], [0], [0], [1], [0, 0, 1, 1], [], []>} : vector<8x32xf32>, vector<32x128xf32>, vector<8x128xf32> -> vector<8x128xf32>
    %142 = arith.addf %139, %141 : vector<8x128xf32>
    %143 = vector.extract_strided_slice %142 {offsets = [0, 0], sizes = [8, 96], strides = [1, 1]} : vector<8x128xf32> to vector<8x96xf32>
    %144 = arith.negf %143 : vector<8x96xf32>
    %145 = math.exp %144 : vector<8x96xf32>
    %cst_69 = arith.constant 1.000000e+00 : f32
    %146 = vector.broadcast %cst_69 : f32 to vector<8x96xf32>
    %147 = arith.addf %146, %145 : vector<8x96xf32>
    %148 = arith.divf %146, %147 : vector<8x96xf32>
    %149 = vector.extract_strided_slice %142 {offsets = [0, 96], sizes = [8, 32], strides = [1, 1]} : vector<8x128xf32> to vector<8x32xf32>
    %150 = math.tanh %149 : vector<8x32xf32>
    %151 = vector.extract_strided_slice %148 {offsets = [0, 32], sizes = [8, 32], strides = [1, 1]} : vector<8x96xf32> to vector<8x32xf32>
    %152 = arith.mulf %151, %131 : vector<8x32xf32>
    %153 = vector.extract_strided_slice %148 {offsets = [0, 0], sizes = [8, 32], strides = [1, 1]} : vector<8x96xf32> to vector<8x32xf32>
    %154 = arith.mulf %153, %150 : vector<8x32xf32>
    %155 = arith.addf %152, %154 : vector<8x32xf32>
    %156 = vector.extract_strided_slice %148 {offsets = [0, 64], sizes = [8, 32], strides = [1, 1]} : vector<8x96xf32> to vector<8x32xf32>
    %157 = math.tanh %155 : vector<8x32xf32>
    %158 = arith.mulf %156, %157 : vector<8x32xf32>
    %c5_70 = arith.constant 5 : index
    %c0_71 = arith.constant 0 : index
    %c0_72 = arith.constant 0 : index
    %159 = vector.load %arg13[%c5_70, %c0_71, %c0_72] : memref<8x8x32xf32, #tpu.memory_space<vmem>>, vector<1x8x32xf32>
    %160 = vector.shape_cast %159 : vector<1x8x32xf32> to vector<8x32xf32>
    %161 = vector.shape_cast %158 : vector<8x32xf32> to vector<1x8x32xf32>
    tpu.vector_store %arg13[%c5_70, %c0_71, %c0_72], %161 {strides = array<i32>} : memref<8x8x32xf32, #tpu.memory_space<vmem>>, vector<1x8x32xf32>,
    %c6 = arith.constant 6 : index
    %c0_73 = arith.constant 0 : index
    %c0_74 = arith.constant 0 : index
    %162 = vector.load %arg12[%c6, %c0_73, %c0_74] : memref<8x8x128xf32, #tpu.memory_space<vmem>>, vector<1x8x128xf32>
    %163 = vector.shape_cast %162 : vector<1x8x128xf32> to vector<8x128xf32>
    %c0_75 = arith.constant 0 : index
    %c0_76 = arith.constant 0 : index
    %164 = vector.load %arg4[%c0_75, %c0_76] : memref<32x128xf32, #tpu.memory_space<vmem>>, vector<32x128xf32>
    %cst_77 = arith.constant dense<0.000000e+00> : vector<8x128xf32>
    %165 = tpu.matmul %158, %164, %cst_77 {dimension_numbers = #tpu.dot_dimension_numbers<[1], [0], [0], [1], [0, 0, 1, 1], [], []>} : vector<8x32xf32>, vector<32x128xf32>, vector<8x128xf32> -> vector<8x128xf32>
    %166 = arith.addf %163, %165 : vector<8x128xf32>
    %167 = vector.extract_strided_slice %166 {offsets = [0, 0], sizes = [8, 96], strides = [1, 1]} : vector<8x128xf32> to vector<8x96xf32>
    %168 = arith.negf %167 : vector<8x96xf32>
    %169 = math.exp %168 : vector<8x96xf32>
    %cst_78 = arith.constant 1.000000e+00 : f32
    %170 = vector.broadcast %cst_78 : f32 to vector<8x96xf32>
    %171 = arith.addf %170, %169 : vector<8x96xf32>
    %172 = arith.divf %170, %171 : vector<8x96xf32>
    %173 = vector.extract_strided_slice %166 {offsets = [0, 96], sizes = [8, 32], strides = [1, 1]} : vector<8x128xf32> to vector<8x32xf32>
    %174 = math.tanh %173 : vector<8x32xf32>
    %175 = vector.extract_strided_slice %172 {offsets = [0, 32], sizes = [8, 32], strides = [1, 1]} : vector<8x96xf32> to vector<8x32xf32>
    %176 = arith.mulf %175, %155 : vector<8x32xf32>
    %177 = vector.extract_strided_slice %172 {offsets = [0, 0], sizes = [8, 32], strides = [1, 1]} : vector<8x96xf32> to vector<8x32xf32>
    %178 = arith.mulf %177, %174 : vector<8x32xf32>
    %179 = arith.addf %176, %178 : vector<8x32xf32>
    %180 = vector.extract_strided_slice %172 {offsets = [0, 64], sizes = [8, 32], strides = [1, 1]} : vector<8x96xf32> to vector<8x32xf32>
    %181 = math.tanh %179 : vector<8x32xf32>
    %182 = arith.mulf %180, %181 : vector<8x32xf32>
    %c6_79 = arith.constant 6 : index
    %c0_80 = arith.constant 0 : index
    %c0_81 = arith.constant 0 : index
    %183 = vector.load %arg13[%c6_79, %c0_80, %c0_81] : memref<8x8x32xf32, #tpu.memory_space<vmem>>, vector<1x8x32xf32>
    %184 = vector.shape_cast %183 : vector<1x8x32xf32> to vector<8x32xf32>
    %185 = vector.shape_cast %182 : vector<8x32xf32> to vector<1x8x32xf32>
    tpu.vector_store %arg13[%c6_79, %c0_80, %c0_81], %185 {strides = array<i32>} : memref<8x8x32xf32, #tpu.memory_space<vmem>>, vector<1x8x32xf32>,
    %c7 = arith.constant 7 : index
    %c0_82 = arith.constant 0 : index
    %c0_83 = arith.constant 0 : index
    %186 = vector.load %arg12[%c7, %c0_82, %c0_83] : memref<8x8x128xf32, #tpu.memory_space<vmem>>, vector<1x8x128xf32>
    %187 = vector.shape_cast %186 : vector<1x8x128xf32> to vector<8x128xf32>
    %c0_84 = arith.constant 0 : index
    %c0_85 = arith.constant 0 : index
    %188 = vector.load %arg4[%c0_84, %c0_85] : memref<32x128xf32, #tpu.memory_space<vmem>>, vector<32x128xf32>
    %cst_86 = arith.constant dense<0.000000e+00> : vector<8x128xf32>
    %189 = tpu.matmul %182, %188, %cst_86 {dimension_numbers = #tpu.dot_dimension_numbers<[1], [0], [0], [1], [0, 0, 1, 1], [], []>} : vector<8x32xf32>, vector<32x128xf32>, vector<8x128xf32> -> vector<8x128xf32>
    %190 = arith.addf %187, %189 : vector<8x128xf32>
    %191 = vector.extract_strided_slice %190 {offsets = [0, 0], sizes = [8, 96], strides = [1, 1]} : vector<8x128xf32> to vector<8x96xf32>
    %192 = arith.negf %191 : vector<8x96xf32>
    %193 = math.exp %192 : vector<8x96xf32>
    %cst_87 = arith.constant 1.000000e+00 : f32
    %194 = vector.broadcast %cst_87 : f32 to vector<8x96xf32>
    %195 = arith.addf %194, %193 : vector<8x96xf32>
    %196 = arith.divf %194, %195 : vector<8x96xf32>
    %197 = vector.extract_strided_slice %190 {offsets = [0, 96], sizes = [8, 32], strides = [1, 1]} : vector<8x128xf32> to vector<8x32xf32>
    %198 = math.tanh %197 : vector<8x32xf32>
    %199 = vector.extract_strided_slice %196 {offsets = [0, 32], sizes = [8, 32], strides = [1, 1]} : vector<8x96xf32> to vector<8x32xf32>
    %200 = arith.mulf %199, %179 : vector<8x32xf32>
    %201 = vector.extract_strided_slice %196 {offsets = [0, 0], sizes = [8, 32], strides = [1, 1]} : vector<8x96xf32> to vector<8x32xf32>
    %202 = arith.mulf %201, %198 : vector<8x32xf32>
    %203 = arith.addf %200, %202 : vector<8x32xf32>
    %204 = vector.extract_strided_slice %196 {offsets = [0, 64], sizes = [8, 32], strides = [1, 1]} : vector<8x96xf32> to vector<8x32xf32>
    %205 = math.tanh %203 : vector<8x32xf32>
    %206 = arith.mulf %204, %205 : vector<8x32xf32>
    %c7_88 = arith.constant 7 : index
    %c0_89 = arith.constant 0 : index
    %c0_90 = arith.constant 0 : index
    %207 = vector.load %arg13[%c7_88, %c0_89, %c0_90] : memref<8x8x32xf32, #tpu.memory_space<vmem>>, vector<1x8x32xf32>
    %208 = vector.shape_cast %207 : vector<1x8x32xf32> to vector<8x32xf32>
    %209 = vector.shape_cast %206 : vector<8x32xf32> to vector<1x8x32xf32>
    tpu.vector_store %arg13[%c7_88, %c0_89, %c0_90], %209 {strides = array<i32>} : memref<8x8x32xf32, #tpu.memory_space<vmem>>, vector<1x8x32xf32>,
    %c0_91 = arith.constant 0 : index
    %c0_92 = arith.constant 0 : index
    %c0_93 = arith.constant 0 : index
    %210 = vector.load %arg14[%c0_91, %c0_92, %c0_93] : memref<2x8x32xf32, #tpu.memory_space<vmem>>, vector<1x8x32xf32>
    %211 = vector.shape_cast %210 : vector<1x8x32xf32> to vector<8x32xf32>
    %212 = vector.shape_cast %206 : vector<8x32xf32> to vector<1x8x32xf32>
    tpu.vector_store %arg14[%c0_91, %c0_92, %c0_93], %212 {strides = array<i32>} : memref<2x8x32xf32, #tpu.memory_space<vmem>>, vector<1x8x32xf32>,
    %c0_94 = arith.constant 0 : index
    %c0_95 = arith.constant 0 : index
    %c0_96 = arith.constant 0 : index
    %213 = vector.load %arg15[%c0_94, %c0_95, %c0_96] : memref<2x8x32xf32, #tpu.memory_space<vmem>>, vector<1x8x32xf32>
    %214 = vector.shape_cast %213 : vector<1x8x32xf32> to vector<8x32xf32>
    %215 = vector.shape_cast %203 : vector<8x32xf32> to vector<1x8x32xf32>
    tpu.vector_store %arg15[%c0_94, %c0_95, %c0_96], %215 {strides = array<i32>} : memref<2x8x32xf32, #tpu.memory_space<vmem>>, vector<1x8x32xf32>,
    %c0_97 = arith.constant 0 : index
    %c0_98 = arith.constant 0 : index
    %c0_99 = arith.constant 0 : index
    %216 = vector.load %arg13[%c0_97, %c0_98, %c0_99] : memref<8x8x32xf32, #tpu.memory_space<vmem>>, vector<8x8x32xf32>
    %217 = vector.shape_cast %216 : vector<8x8x32xf32> to vector<64x32xf32>
    %c0_100 = arith.constant 0 : index
    %c0_101 = arith.constant 0 : index
    %218 = vector.load %arg6[%c0_100, %c0_101] : memref<32x128xf32, #tpu.memory_space<vmem>>, vector<32x128xf32>
    %cst_102 = arith.constant dense<0.000000e+00> : vector<64x128xf32>
    %219 = tpu.matmul %217, %218, %cst_102 {dimension_numbers = #tpu.dot_dimension_numbers<[1], [0], [0], [1], [0, 0, 1, 1], [], []>} : vector<64x32xf32>, vector<32x128xf32>, vector<64x128xf32> -> vector<64x128xf32>
    %c0_103 = arith.constant 0 : index
    %c0_104 = arith.constant 0 : index
    %220 = vector.load %arg8[%c0_103, %c0_104] : memref<1x128xf32, #tpu.memory_space<vmem>>, vector<1x128xf32>
    %221 = vector.broadcast %220 : vector<1x128xf32> to vector<64x128xf32>
    %222 = arith.addf %219, %221 : vector<64x128xf32>
    %223 = vector.shape_cast %222 : vector<64x128xf32> to vector<8x8x128xf32>
    %c0_105 = arith.constant 0 : index
    %c0_106 = arith.constant 0 : index
    %c0_107 = arith.constant 0 : index
    %224 = vector.load %arg12[%c0_105, %c0_106, %c0_107] : memref<8x8x128xf32, #tpu.memory_space<vmem>>, vector<8x8x128xf32>
    tpu.vector_store %arg12[%c0_105, %c0_106, %c0_107], %223 {strides = array<i32>} : memref<8x8x128xf32, #tpu.memory_space<vmem>>, vector<8x8x128xf32>,
    %c1_108 = arith.constant 1 : index
    %c0_109 = arith.constant 0 : index
    %c0_110 = arith.constant 0 : index
    %225 = vector.load %arg14[%c1_108, %c0_109, %c0_110] : memref<2x8x32xf32, #tpu.memory_space<vmem>>, vector<1x8x32xf32>
    %226 = vector.shape_cast %225 : vector<1x8x32xf32> to vector<8x32xf32>
    %c1_111 = arith.constant 1 : index
    %c0_112 = arith.constant 0 : index
    %c0_113 = arith.constant 0 : index
    %227 = vector.load %arg15[%c1_111, %c0_112, %c0_113] : memref<2x8x32xf32, #tpu.memory_space<vmem>>, vector<1x8x32xf32>
    %228 = vector.shape_cast %227 : vector<1x8x32xf32> to vector<8x32xf32>
    %c0_114 = arith.constant 0 : index
    %c0_115 = arith.constant 0 : index
    %c0_116 = arith.constant 0 : index
    %229 = vector.load %arg12[%c0_114, %c0_115, %c0_116] : memref<8x8x128xf32, #tpu.memory_space<vmem>>, vector<1x8x128xf32>
    %230 = vector.shape_cast %229 : vector<1x8x128xf32> to vector<8x128xf32>
    %c0_117 = arith.constant 0 : index
    %c0_118 = arith.constant 0 : index
    %231 = vector.load %arg7[%c0_117, %c0_118] : memref<32x128xf32, #tpu.memory_space<vmem>>, vector<32x128xf32>
    %cst_119 = arith.constant dense<0.000000e+00> : vector<8x128xf32>
    %232 = tpu.matmul %226, %231, %cst_119 {dimension_numbers = #tpu.dot_dimension_numbers<[1], [0], [0], [1], [0, 0, 1, 1], [], []>} : vector<8x32xf32>, vector<32x128xf32>, vector<8x128xf32> -> vector<8x128xf32>
    %233 = arith.addf %230, %232 : vector<8x128xf32>
    %234 = vector.extract_strided_slice %233 {offsets = [0, 0], sizes = [8, 96], strides = [1, 1]} : vector<8x128xf32> to vector<8x96xf32>
    %235 = arith.negf %234 : vector<8x96xf32>
    %236 = math.exp %235 : vector<8x96xf32>
    %cst_120 = arith.constant 1.000000e+00 : f32
    %237 = vector.broadcast %cst_120 : f32 to vector<8x96xf32>
    %238 = arith.addf %237, %236 : vector<8x96xf32>
    %239 = arith.divf %237, %238 : vector<8x96xf32>
    %240 = vector.extract_strided_slice %233 {offsets = [0, 96], sizes = [8, 32], strides = [1, 1]} : vector<8x128xf32> to vector<8x32xf32>
    %241 = math.tanh %240 : vector<8x32xf32>
    %242 = vector.extract_strided_slice %239 {offsets = [0, 32], sizes = [8, 32], strides = [1, 1]} : vector<8x96xf32> to vector<8x32xf32>
    %243 = arith.mulf %242, %228 : vector<8x32xf32>
    %244 = vector.extract_strided_slice %239 {offsets = [0, 0], sizes = [8, 32], strides = [1, 1]} : vector<8x96xf32> to vector<8x32xf32>
    %245 = arith.mulf %244, %241 : vector<8x32xf32>
    %246 = arith.addf %243, %245 : vector<8x32xf32>
    %247 = vector.extract_strided_slice %239 {offsets = [0, 64], sizes = [8, 32], strides = [1, 1]} : vector<8x96xf32> to vector<8x32xf32>
    %248 = math.tanh %246 : vector<8x32xf32>
    %249 = arith.mulf %247, %248 : vector<8x32xf32>
    %c0_121 = arith.constant 0 : index
    %c0_122 = arith.constant 0 : index
    %c0_123 = arith.constant 0 : index
    %250 = vector.load %arg13[%c0_121, %c0_122, %c0_123] : memref<8x8x32xf32, #tpu.memory_space<vmem>>, vector<1x8x32xf32>
    %251 = vector.shape_cast %250 : vector<1x8x32xf32> to vector<8x32xf32>
    %252 = vector.shape_cast %249 : vector<8x32xf32> to vector<1x8x32xf32>
    tpu.vector_store %arg13[%c0_121, %c0_122, %c0_123], %252 {strides = array<i32>} : memref<8x8x32xf32, #tpu.memory_space<vmem>>, vector<1x8x32xf32>,
    %c1_124 = arith.constant 1 : index
    %c0_125 = arith.constant 0 : index
    %c0_126 = arith.constant 0 : index
    %253 = vector.load %arg12[%c1_124, %c0_125, %c0_126] : memref<8x8x128xf32, #tpu.memory_space<vmem>>, vector<1x8x128xf32>
    %254 = vector.shape_cast %253 : vector<1x8x128xf32> to vector<8x128xf32>
    %c0_127 = arith.constant 0 : index
    %c0_128 = arith.constant 0 : index
    %255 = vector.load %arg7[%c0_127, %c0_128] : memref<32x128xf32, #tpu.memory_space<vmem>>, vector<32x128xf32>
    %cst_129 = arith.constant dense<0.000000e+00> : vector<8x128xf32>
    %256 = tpu.matmul %249, %255, %cst_129 {dimension_numbers = #tpu.dot_dimension_numbers<[1], [0], [0], [1], [0, 0, 1, 1], [], []>} : vector<8x32xf32>, vector<32x128xf32>, vector<8x128xf32> -> vector<8x128xf32>
    %257 = arith.addf %254, %256 : vector<8x128xf32>
    %258 = vector.extract_strided_slice %257 {offsets = [0, 0], sizes = [8, 96], strides = [1, 1]} : vector<8x128xf32> to vector<8x96xf32>
    %259 = arith.negf %258 : vector<8x96xf32>
    %260 = math.exp %259 : vector<8x96xf32>
    %cst_130 = arith.constant 1.000000e+00 : f32
    %261 = vector.broadcast %cst_130 : f32 to vector<8x96xf32>
    %262 = arith.addf %261, %260 : vector<8x96xf32>
    %263 = arith.divf %261, %262 : vector<8x96xf32>
    %264 = vector.extract_strided_slice %257 {offsets = [0, 96], sizes = [8, 32], strides = [1, 1]} : vector<8x128xf32> to vector<8x32xf32>
    %265 = math.tanh %264 : vector<8x32xf32>
    %266 = vector.extract_strided_slice %263 {offsets = [0, 32], sizes = [8, 32], strides = [1, 1]} : vector<8x96xf32> to vector<8x32xf32>
    %267 = arith.mulf %266, %246 : vector<8x32xf32>
    %268 = vector.extract_strided_slice %263 {offsets = [0, 0], sizes = [8, 32], strides = [1, 1]} : vector<8x96xf32> to vector<8x32xf32>
    %269 = arith.mulf %268, %265 : vector<8x32xf32>
    %270 = arith.addf %267, %269 : vector<8x32xf32>
    %271 = vector.extract_strided_slice %263 {offsets = [0, 64], sizes = [8, 32], strides = [1, 1]} : vector<8x96xf32> to vector<8x32xf32>
    %272 = math.tanh %270 : vector<8x32xf32>
    %273 = arith.mulf %271, %272 : vector<8x32xf32>
    %c1_131 = arith.constant 1 : index
    %c0_132 = arith.constant 0 : index
    %c0_133 = arith.constant 0 : index
    %274 = vector.load %arg13[%c1_131, %c0_132, %c0_133] : memref<8x8x32xf32, #tpu.memory_space<vmem>>, vector<1x8x32xf32>
    %275 = vector.shape_cast %274 : vector<1x8x32xf32> to vector<8x32xf32>
    %276 = vector.shape_cast %273 : vector<8x32xf32> to vector<1x8x32xf32>
    tpu.vector_store %arg13[%c1_131, %c0_132, %c0_133], %276 {strides = array<i32>} : memref<8x8x32xf32, #tpu.memory_space<vmem>>, vector<1x8x32xf32>,
    %c2_134 = arith.constant 2 : index
    %c0_135 = arith.constant 0 : index
    %c0_136 = arith.constant 0 : index
    %277 = vector.load %arg12[%c2_134, %c0_135, %c0_136] : memref<8x8x128xf32, #tpu.memory_space<vmem>>, vector<1x8x128xf32>
    %278 = vector.shape_cast %277 : vector<1x8x128xf32> to vector<8x128xf32>
    %c0_137 = arith.constant 0 : index
    %c0_138 = arith.constant 0 : index
    %279 = vector.load %arg7[%c0_137, %c0_138] : memref<32x128xf32, #tpu.memory_space<vmem>>, vector<32x128xf32>
    %cst_139 = arith.constant dense<0.000000e+00> : vector<8x128xf32>
    %280 = tpu.matmul %273, %279, %cst_139 {dimension_numbers = #tpu.dot_dimension_numbers<[1], [0], [0], [1], [0, 0, 1, 1], [], []>} : vector<8x32xf32>, vector<32x128xf32>, vector<8x128xf32> -> vector<8x128xf32>
    %281 = arith.addf %278, %280 : vector<8x128xf32>
    %282 = vector.extract_strided_slice %281 {offsets = [0, 0], sizes = [8, 96], strides = [1, 1]} : vector<8x128xf32> to vector<8x96xf32>
    %283 = arith.negf %282 : vector<8x96xf32>
    %284 = math.exp %283 : vector<8x96xf32>
    %cst_140 = arith.constant 1.000000e+00 : f32
    %285 = vector.broadcast %cst_140 : f32 to vector<8x96xf32>
    %286 = arith.addf %285, %284 : vector<8x96xf32>
    %287 = arith.divf %285, %286 : vector<8x96xf32>
    %288 = vector.extract_strided_slice %281 {offsets = [0, 96], sizes = [8, 32], strides = [1, 1]} : vector<8x128xf32> to vector<8x32xf32>
    %289 = math.tanh %288 : vector<8x32xf32>
    %290 = vector.extract_strided_slice %287 {offsets = [0, 32], sizes = [8, 32], strides = [1, 1]} : vector<8x96xf32> to vector<8x32xf32>
    %291 = arith.mulf %290, %270 : vector<8x32xf32>
    %292 = vector.extract_strided_slice %287 {offsets = [0, 0], sizes = [8, 32], strides = [1, 1]} : vector<8x96xf32> to vector<8x32xf32>
    %293 = arith.mulf %292, %289 : vector<8x32xf32>
    %294 = arith.addf %291, %293 : vector<8x32xf32>
    %295 = vector.extract_strided_slice %287 {offsets = [0, 64], sizes = [8, 32], strides = [1, 1]} : vector<8x96xf32> to vector<8x32xf32>
    %296 = math.tanh %294 : vector<8x32xf32>
    %297 = arith.mulf %295, %296 : vector<8x32xf32>
    %c2_141 = arith.constant 2 : index
    %c0_142 = arith.constant 0 : index
    %c0_143 = arith.constant 0 : index
    %298 = vector.load %arg13[%c2_141, %c0_142, %c0_143] : memref<8x8x32xf32, #tpu.memory_space<vmem>>, vector<1x8x32xf32>
    %299 = vector.shape_cast %298 : vector<1x8x32xf32> to vector<8x32xf32>
    %300 = vector.shape_cast %297 : vector<8x32xf32> to vector<1x8x32xf32>
    tpu.vector_store %arg13[%c2_141, %c0_142, %c0_143], %300 {strides = array<i32>} : memref<8x8x32xf32, #tpu.memory_space<vmem>>, vector<1x8x32xf32>,
    %c3_144 = arith.constant 3 : index
    %c0_145 = arith.constant 0 : index
    %c0_146 = arith.constant 0 : index
    %301 = vector.load %arg12[%c3_144, %c0_145, %c0_146] : memref<8x8x128xf32, #tpu.memory_space<vmem>>, vector<1x8x128xf32>
    %302 = vector.shape_cast %301 : vector<1x8x128xf32> to vector<8x128xf32>
    %c0_147 = arith.constant 0 : index
    %c0_148 = arith.constant 0 : index
    %303 = vector.load %arg7[%c0_147, %c0_148] : memref<32x128xf32, #tpu.memory_space<vmem>>, vector<32x128xf32>
    %cst_149 = arith.constant dense<0.000000e+00> : vector<8x128xf32>
    %304 = tpu.matmul %297, %303, %cst_149 {dimension_numbers = #tpu.dot_dimension_numbers<[1], [0], [0], [1], [0, 0, 1, 1], [], []>} : vector<8x32xf32>, vector<32x128xf32>, vector<8x128xf32> -> vector<8x128xf32>
    %305 = arith.addf %302, %304 : vector<8x128xf32>
    %306 = vector.extract_strided_slice %305 {offsets = [0, 0], sizes = [8, 96], strides = [1, 1]} : vector<8x128xf32> to vector<8x96xf32>
    %307 = arith.negf %306 : vector<8x96xf32>
    %308 = math.exp %307 : vector<8x96xf32>
    %cst_150 = arith.constant 1.000000e+00 : f32
    %309 = vector.broadcast %cst_150 : f32 to vector<8x96xf32>
    %310 = arith.addf %309, %308 : vector<8x96xf32>
    %311 = arith.divf %309, %310 : vector<8x96xf32>
    %312 = vector.extract_strided_slice %305 {offsets = [0, 96], sizes = [8, 32], strides = [1, 1]} : vector<8x128xf32> to vector<8x32xf32>
    %313 = math.tanh %312 : vector<8x32xf32>
    %314 = vector.extract_strided_slice %311 {offsets = [0, 32], sizes = [8, 32], strides = [1, 1]} : vector<8x96xf32> to vector<8x32xf32>
    %315 = arith.mulf %314, %294 : vector<8x32xf32>
    %316 = vector.extract_strided_slice %311 {offsets = [0, 0], sizes = [8, 32], strides = [1, 1]} : vector<8x96xf32> to vector<8x32xf32>
    %317 = arith.mulf %316, %313 : vector<8x32xf32>
    %318 = arith.addf %315, %317 : vector<8x32xf32>
    %319 = vector.extract_strided_slice %311 {offsets = [0, 64], sizes = [8, 32], strides = [1, 1]} : vector<8x96xf32> to vector<8x32xf32>
    %320 = math.tanh %318 : vector<8x32xf32>
    %321 = arith.mulf %319, %320 : vector<8x32xf32>
    %c3_151 = arith.constant 3 : index
    %c0_152 = arith.constant 0 : index
    %c0_153 = arith.constant 0 : index
    %322 = vector.load %arg13[%c3_151, %c0_152, %c0_153] : memref<8x8x32xf32, #tpu.memory_space<vmem>>, vector<1x8x32xf32>
    %323 = vector.shape_cast %322 : vector<1x8x32xf32> to vector<8x32xf32>
    %324 = vector.shape_cast %321 : vector<8x32xf32> to vector<1x8x32xf32>
    tpu.vector_store %arg13[%c3_151, %c0_152, %c0_153], %324 {strides = array<i32>} : memref<8x8x32xf32, #tpu.memory_space<vmem>>, vector<1x8x32xf32>,
    %c4_154 = arith.constant 4 : index
    %c0_155 = arith.constant 0 : index
    %c0_156 = arith.constant 0 : index
    %325 = vector.load %arg12[%c4_154, %c0_155, %c0_156] : memref<8x8x128xf32, #tpu.memory_space<vmem>>, vector<1x8x128xf32>
    %326 = vector.shape_cast %325 : vector<1x8x128xf32> to vector<8x128xf32>
    %c0_157 = arith.constant 0 : index
    %c0_158 = arith.constant 0 : index
    %327 = vector.load %arg7[%c0_157, %c0_158] : memref<32x128xf32, #tpu.memory_space<vmem>>, vector<32x128xf32>
    %cst_159 = arith.constant dense<0.000000e+00> : vector<8x128xf32>
    %328 = tpu.matmul %321, %327, %cst_159 {dimension_numbers = #tpu.dot_dimension_numbers<[1], [0], [0], [1], [0, 0, 1, 1], [], []>} : vector<8x32xf32>, vector<32x128xf32>, vector<8x128xf32> -> vector<8x128xf32>
    %329 = arith.addf %326, %328 : vector<8x128xf32>
    %330 = vector.extract_strided_slice %329 {offsets = [0, 0], sizes = [8, 96], strides = [1, 1]} : vector<8x128xf32> to vector<8x96xf32>
    %331 = arith.negf %330 : vector<8x96xf32>
    %332 = math.exp %331 : vector<8x96xf32>
    %cst_160 = arith.constant 1.000000e+00 : f32
    %333 = vector.broadcast %cst_160 : f32 to vector<8x96xf32>
    %334 = arith.addf %333, %332 : vector<8x96xf32>
    %335 = arith.divf %333, %334 : vector<8x96xf32>
    %336 = vector.extract_strided_slice %329 {offsets = [0, 96], sizes = [8, 32], strides = [1, 1]} : vector<8x128xf32> to vector<8x32xf32>
    %337 = math.tanh %336 : vector<8x32xf32>
    %338 = vector.extract_strided_slice %335 {offsets = [0, 32], sizes = [8, 32], strides = [1, 1]} : vector<8x96xf32> to vector<8x32xf32>
    %339 = arith.mulf %338, %318 : vector<8x32xf32>
    %340 = vector.extract_strided_slice %335 {offsets = [0, 0], sizes = [8, 32], strides = [1, 1]} : vector<8x96xf32> to vector<8x32xf32>
    %341 = arith.mulf %340, %337 : vector<8x32xf32>
    %342 = arith.addf %339, %341 : vector<8x32xf32>
    %343 = vector.extract_strided_slice %335 {offsets = [0, 64], sizes = [8, 32], strides = [1, 1]} : vector<8x96xf32> to vector<8x32xf32>
    %344 = math.tanh %342 : vector<8x32xf32>
    %345 = arith.mulf %343, %344 : vector<8x32xf32>
    %c4_161 = arith.constant 4 : index
    %c0_162 = arith.constant 0 : index
    %c0_163 = arith.constant 0 : index
    %346 = vector.load %arg13[%c4_161, %c0_162, %c0_163] : memref<8x8x32xf32, #tpu.memory_space<vmem>>, vector<1x8x32xf32>
    %347 = vector.shape_cast %346 : vector<1x8x32xf32> to vector<8x32xf32>
    %348 = vector.shape_cast %345 : vector<8x32xf32> to vector<1x8x32xf32>
    tpu.vector_store %arg13[%c4_161, %c0_162, %c0_163], %348 {strides = array<i32>} : memref<8x8x32xf32, #tpu.memory_space<vmem>>, vector<1x8x32xf32>,
    %c5_164 = arith.constant 5 : index
    %c0_165 = arith.constant 0 : index
    %c0_166 = arith.constant 0 : index
    %349 = vector.load %arg12[%c5_164, %c0_165, %c0_166] : memref<8x8x128xf32, #tpu.memory_space<vmem>>, vector<1x8x128xf32>
    %350 = vector.shape_cast %349 : vector<1x8x128xf32> to vector<8x128xf32>
    %c0_167 = arith.constant 0 : index
    %c0_168 = arith.constant 0 : index
    %351 = vector.load %arg7[%c0_167, %c0_168] : memref<32x128xf32, #tpu.memory_space<vmem>>, vector<32x128xf32>
    %cst_169 = arith.constant dense<0.000000e+00> : vector<8x128xf32>
    %352 = tpu.matmul %345, %351, %cst_169 {dimension_numbers = #tpu.dot_dimension_numbers<[1], [0], [0], [1], [0, 0, 1, 1], [], []>} : vector<8x32xf32>, vector<32x128xf32>, vector<8x128xf32> -> vector<8x128xf32>
    %353 = arith.addf %350, %352 : vector<8x128xf32>
    %354 = vector.extract_strided_slice %353 {offsets = [0, 0], sizes = [8, 96], strides = [1, 1]} : vector<8x128xf32> to vector<8x96xf32>
    %355 = arith.negf %354 : vector<8x96xf32>
    %356 = math.exp %355 : vector<8x96xf32>
    %cst_170 = arith.constant 1.000000e+00 : f32
    %357 = vector.broadcast %cst_170 : f32 to vector<8x96xf32>
    %358 = arith.addf %357, %356 : vector<8x96xf32>
    %359 = arith.divf %357, %358 : vector<8x96xf32>
    %360 = vector.extract_strided_slice %353 {offsets = [0, 96], sizes = [8, 32], strides = [1, 1]} : vector<8x128xf32> to vector<8x32xf32>
    %361 = math.tanh %360 : vector<8x32xf32>
    %362 = vector.extract_strided_slice %359 {offsets = [0, 32], sizes = [8, 32], strides = [1, 1]} : vector<8x96xf32> to vector<8x32xf32>
    %363 = arith.mulf %362, %342 : vector<8x32xf32>
    %364 = vector.extract_strided_slice %359 {offsets = [0, 0], sizes = [8, 32], strides = [1, 1]} : vector<8x96xf32> to vector<8x32xf32>
    %365 = arith.mulf %364, %361 : vector<8x32xf32>
    %366 = arith.addf %363, %365 : vector<8x32xf32>
    %367 = vector.extract_strided_slice %359 {offsets = [0, 64], sizes = [8, 32], strides = [1, 1]} : vector<8x96xf32> to vector<8x32xf32>
    %368 = math.tanh %366 : vector<8x32xf32>
    %369 = arith.mulf %367, %368 : vector<8x32xf32>
    %c5_171 = arith.constant 5 : index
    %c0_172 = arith.constant 0 : index
    %c0_173 = arith.constant 0 : index
    %370 = vector.load %arg13[%c5_171, %c0_172, %c0_173] : memref<8x8x32xf32, #tpu.memory_space<vmem>>, vector<1x8x32xf32>
    %371 = vector.shape_cast %370 : vector<1x8x32xf32> to vector<8x32xf32>
    %372 = vector.shape_cast %369 : vector<8x32xf32> to vector<1x8x32xf32>
    tpu.vector_store %arg13[%c5_171, %c0_172, %c0_173], %372 {strides = array<i32>} : memref<8x8x32xf32, #tpu.memory_space<vmem>>, vector<1x8x32xf32>,
    %c6_174 = arith.constant 6 : index
    %c0_175 = arith.constant 0 : index
    %c0_176 = arith.constant 0 : index
    %373 = vector.load %arg12[%c6_174, %c0_175, %c0_176] : memref<8x8x128xf32, #tpu.memory_space<vmem>>, vector<1x8x128xf32>
    %374 = vector.shape_cast %373 : vector<1x8x128xf32> to vector<8x128xf32>
    %c0_177 = arith.constant 0 : index
    %c0_178 = arith.constant 0 : index
    %375 = vector.load %arg7[%c0_177, %c0_178] : memref<32x128xf32, #tpu.memory_space<vmem>>, vector<32x128xf32>
    %cst_179 = arith.constant dense<0.000000e+00> : vector<8x128xf32>
    %376 = tpu.matmul %369, %375, %cst_179 {dimension_numbers = #tpu.dot_dimension_numbers<[1], [0], [0], [1], [0, 0, 1, 1], [], []>} : vector<8x32xf32>, vector<32x128xf32>, vector<8x128xf32> -> vector<8x128xf32>
    %377 = arith.addf %374, %376 : vector<8x128xf32>
    %378 = vector.extract_strided_slice %377 {offsets = [0, 0], sizes = [8, 96], strides = [1, 1]} : vector<8x128xf32> to vector<8x96xf32>
    %379 = arith.negf %378 : vector<8x96xf32>
    %380 = math.exp %379 : vector<8x96xf32>
    %cst_180 = arith.constant 1.000000e+00 : f32
    %381 = vector.broadcast %cst_180 : f32 to vector<8x96xf32>
    %382 = arith.addf %381, %380 : vector<8x96xf32>
    %383 = arith.divf %381, %382 : vector<8x96xf32>
    %384 = vector.extract_strided_slice %377 {offsets = [0, 96], sizes = [8, 32], strides = [1, 1]} : vector<8x128xf32> to vector<8x32xf32>
    %385 = math.tanh %384 : vector<8x32xf32>
    %386 = vector.extract_strided_slice %383 {offsets = [0, 32], sizes = [8, 32], strides = [1, 1]} : vector<8x96xf32> to vector<8x32xf32>
    %387 = arith.mulf %386, %366 : vector<8x32xf32>
    %388 = vector.extract_strided_slice %383 {offsets = [0, 0], sizes = [8, 32], strides = [1, 1]} : vector<8x96xf32> to vector<8x32xf32>
    %389 = arith.mulf %388, %385 : vector<8x32xf32>
    %390 = arith.addf %387, %389 : vector<8x32xf32>
    %391 = vector.extract_strided_slice %383 {offsets = [0, 64], sizes = [8, 32], strides = [1, 1]} : vector<8x96xf32> to vector<8x32xf32>
    %392 = math.tanh %390 : vector<8x32xf32>
    %393 = arith.mulf %391, %392 : vector<8x32xf32>
    %c6_181 = arith.constant 6 : index
    %c0_182 = arith.constant 0 : index
    %c0_183 = arith.constant 0 : index
    %394 = vector.load %arg13[%c6_181, %c0_182, %c0_183] : memref<8x8x32xf32, #tpu.memory_space<vmem>>, vector<1x8x32xf32>
    %395 = vector.shape_cast %394 : vector<1x8x32xf32> to vector<8x32xf32>
    %396 = vector.shape_cast %393 : vector<8x32xf32> to vector<1x8x32xf32>
    tpu.vector_store %arg13[%c6_181, %c0_182, %c0_183], %396 {strides = array<i32>} : memref<8x8x32xf32, #tpu.memory_space<vmem>>, vector<1x8x32xf32>,
    %c7_184 = arith.constant 7 : index
    %c0_185 = arith.constant 0 : index
    %c0_186 = arith.constant 0 : index
    %397 = vector.load %arg12[%c7_184, %c0_185, %c0_186] : memref<8x8x128xf32, #tpu.memory_space<vmem>>, vector<1x8x128xf32>
    %398 = vector.shape_cast %397 : vector<1x8x128xf32> to vector<8x128xf32>
    %c0_187 = arith.constant 0 : index
    %c0_188 = arith.constant 0 : index
    %399 = vector.load %arg7[%c0_187, %c0_188] : memref<32x128xf32, #tpu.memory_space<vmem>>, vector<32x128xf32>
    %cst_189 = arith.constant dense<0.000000e+00> : vector<8x128xf32>
    %400 = tpu.matmul %393, %399, %cst_189 {dimension_numbers = #tpu.dot_dimension_numbers<[1], [0], [0], [1], [0, 0, 1, 1], [], []>} : vector<8x32xf32>, vector<32x128xf32>, vector<8x128xf32> -> vector<8x128xf32>
    %401 = arith.addf %398, %400 : vector<8x128xf32>
    %402 = vector.extract_strided_slice %401 {offsets = [0, 0], sizes = [8, 96], strides = [1, 1]} : vector<8x128xf32> to vector<8x96xf32>
    %403 = arith.negf %402 : vector<8x96xf32>
    %404 = math.exp %403 : vector<8x96xf32>
    %cst_190 = arith.constant 1.000000e+00 : f32
    %405 = vector.broadcast %cst_190 : f32 to vector<8x96xf32>
    %406 = arith.addf %405, %404 : vector<8x96xf32>
    %407 = arith.divf %405, %406 : vector<8x96xf32>
    %408 = vector.extract_strided_slice %401 {offsets = [0, 96], sizes = [8, 32], strides = [1, 1]} : vector<8x128xf32> to vector<8x32xf32>
    %409 = math.tanh %408 : vector<8x32xf32>
    %410 = vector.extract_strided_slice %407 {offsets = [0, 32], sizes = [8, 32], strides = [1, 1]} : vector<8x96xf32> to vector<8x32xf32>
    %411 = arith.mulf %410, %390 : vector<8x32xf32>
    %412 = vector.extract_strided_slice %407 {offsets = [0, 0], sizes = [8, 32], strides = [1, 1]} : vector<8x96xf32> to vector<8x32xf32>
    %413 = arith.mulf %412, %409 : vector<8x32xf32>
    %414 = arith.addf %411, %413 : vector<8x32xf32>
    %415 = vector.extract_strided_slice %407 {offsets = [0, 64], sizes = [8, 32], strides = [1, 1]} : vector<8x96xf32> to vector<8x32xf32>
    %416 = math.tanh %414 : vector<8x32xf32>
    %417 = arith.mulf %415, %416 : vector<8x32xf32>
    %c7_191 = arith.constant 7 : index
    %c0_192 = arith.constant 0 : index
    %c0_193 = arith.constant 0 : index
    %418 = vector.load %arg13[%c7_191, %c0_192, %c0_193] : memref<8x8x32xf32, #tpu.memory_space<vmem>>, vector<1x8x32xf32>
    %419 = vector.shape_cast %418 : vector<1x8x32xf32> to vector<8x32xf32>
    %420 = vector.shape_cast %417 : vector<8x32xf32> to vector<1x8x32xf32>
    tpu.vector_store %arg13[%c7_191, %c0_192, %c0_193], %420 {strides = array<i32>} : memref<8x8x32xf32, #tpu.memory_space<vmem>>, vector<1x8x32xf32>,
    %c1_194 = arith.constant 1 : index
    %c0_195 = arith.constant 0 : index
    %c0_196 = arith.constant 0 : index
    %421 = vector.load %arg14[%c1_194, %c0_195, %c0_196] : memref<2x8x32xf32, #tpu.memory_space<vmem>>, vector<1x8x32xf32>
    %422 = vector.shape_cast %421 : vector<1x8x32xf32> to vector<8x32xf32>
    %423 = vector.shape_cast %417 : vector<8x32xf32> to vector<1x8x32xf32>
    tpu.vector_store %arg14[%c1_194, %c0_195, %c0_196], %423 {strides = array<i32>} : memref<2x8x32xf32, #tpu.memory_space<vmem>>, vector<1x8x32xf32>,
    %c1_197 = arith.constant 1 : index
    %c0_198 = arith.constant 0 : index
    %c0_199 = arith.constant 0 : index
    %424 = vector.load %arg15[%c1_197, %c0_198, %c0_199] : memref<2x8x32xf32, #tpu.memory_space<vmem>>, vector<1x8x32xf32>
    %425 = vector.shape_cast %424 : vector<1x8x32xf32> to vector<8x32xf32>
    %426 = vector.shape_cast %414 : vector<8x32xf32> to vector<1x8x32xf32>
    tpu.vector_store %arg15[%c1_197, %c0_198, %c0_199], %426 {strides = array<i32>} : memref<2x8x32xf32, #tpu.memory_space<vmem>>, vector<1x8x32xf32>,
    %427 = tpu.iota {dimensions = array<i32: 0>} : vector<8x8x1xi32>
    %428 = vector.broadcast %4 : i32 to vector<8x8x1xi32>
    %429 = arith.addi %427, %428 : vector<8x8x1xi32>
    %430 = vector.shape_cast %3 : vector<8x1xi32> to vector<1x8x1xi32>
    %c1_i32 = arith.constant 1 : i32
    %431 = vector.broadcast %c1_i32 : i32 to vector<8x8x1xi32>
    %432 = arith.addi %429, %431 : vector<8x8x1xi32>
    %433 = vector.broadcast %430 : vector<1x8x1xi32> to vector<8x8x1xi32>
    %434 = arith.cmpi eq, %433, %432 : vector<8x8x1xi32>
    %c0_200 = arith.constant 0 : index
    %c0_201 = arith.constant 0 : index
    %c0_202 = arith.constant 0 : index
    %435 = vector.load %arg13[%c0_200, %c0_201, %c0_202] : memref<8x8x32xf32, #tpu.memory_space<vmem>>, vector<8x8x32xf32>
    %cst_203 = arith.constant 0.000000e+00 : f32
    %436 = vector.shape_cast %434 : vector<8x8x1xi1> to vector<8x8x1xi1>
    %437 = vector.broadcast %436 : vector<8x8x1xi1> to vector<8x8x32xi1>
    %438 = vector.broadcast %cst_203 : f32 to vector<8x8x32xf32>
    %439 = arith.select %437, %435, %438 : vector<8x8x32xi1>, vector<8x8x32xf32>
    %cst_204 = arith.constant dense<0.000000e+00> : vector<8x32xf32>
    %440 = vector.multi_reduction <add>, %439, %cst_204 [0] : vector<8x8x32xf32> to vector<8x32xf32>
    %441 = vector.broadcast %4 : i32 to vector<8x1xi32>
    %442 = arith.cmpi sgt, %3, %441 : vector<8x1xi32>
    %c8_i32_205 = arith.constant 8 : i32
    %443 = arith.addi %4, %c8_i32_205 : i32
    %444 = vector.broadcast %443 : i32 to vector<8x1xi32>
    %445 = arith.cmpi sle, %3, %444 : vector<8x1xi32>
    %446 = arith.andi %442, %445 : vector<8x1xi1>
    %c0_206 = arith.constant 0 : index
    %c0_207 = arith.constant 0 : index
    %447 = vector.load %arg16[%c0_206, %c0_207] : memref<8x32xf32, #tpu.memory_space<vmem>>, vector<8x32xf32>
    %448 = vector.shape_cast %446 : vector<8x1xi1> to vector<8x1xi1>
    %449 = vector.broadcast %448 : vector<8x1xi1> to vector<8x32xi1>
    %450 = arith.select %449, %440, %447 : vector<8x32xi1>, vector<8x32xf32>
    %c0_208 = arith.constant 0 : index
    %c0_209 = arith.constant 0 : index
    %451 = vector.load %arg16[%c0_208, %c0_209] : memref<8x32xf32, #tpu.memory_space<vmem>>, vector<8x32xf32>
    tpu.vector_store %arg16[%c0_208, %c0_209], %450 {strides = array<i32>} : memref<8x32xf32, #tpu.memory_space<vmem>>, vector<8x32xf32>,
    %c0_i32_210 = arith.constant 0 : i32
    %452 = arith.cmpi eq, %arg0, %c0_i32_210 : i32
    %453 = arith.extui %452 : i1 to i32
    %c0_i32_211 = arith.constant 0 : i32
    %454 = arith.cmpi ne, %453, %c0_i32_211 : i32
    scf.if %454 {
      %c0_212 = arith.constant 0 : index
      %c0_213 = arith.constant 0 : index
      %455 = vector.load %arg16[%c0_212, %c0_213] : memref<8x32xf32, #tpu.memory_space<vmem>>, vector<8x32xf32>
      %c0_214 = arith.constant 0 : index
      %c0_215 = arith.constant 0 : index
      %456 = vector.load %arg9[%c0_214, %c0_215] : memref<32x128xf32, #tpu.memory_space<vmem>>, vector<32x128xf32>
      %cst_216 = arith.constant dense<0.000000e+00> : vector<8x128xf32>
      %457 = tpu.matmul %455, %456, %cst_216 {dimension_numbers = #tpu.dot_dimension_numbers<[1], [0], [0], [1], [0, 0, 1, 1], [], []>} : vector<8x32xf32>, vector<32x128xf32>, vector<8x128xf32> -> vector<8x128xf32>
      %c0_217 = arith.constant 0 : index
      %c0_218 = arith.constant 0 : index
      %458 = vector.load %arg10[%c0_217, %c0_218] : memref<1x128xf32, #tpu.memory_space<vmem>>, vector<1x128xf32>
      %459 = vector.broadcast %458 : vector<1x128xf32> to vector<8x128xf32>
      %460 = arith.addf %457, %459 : vector<8x128xf32>
      %c0_219 = arith.constant 0 : index
      %c0_220 = arith.constant 0 : index
      %461 = vector.load %arg11[%c0_219, %c0_220] : memref<8x128xf32, #tpu.memory_space<vmem>>, vector<8x128xf32>
      tpu.vector_store %arg11[%c0_219, %c0_220], %460 {strides = array<i32>} : memref<8x128xf32, #tpu.memory_space<vmem>>, vector<8x128xf32>,
    } else {
    }
    return
  }
  func.func @transform_0(%arg0: i32) -> (i32, i32, i32) {
    %c0_i32 = arith.constant 0 : i32
    %c0_i32_0 = arith.constant 0 : i32
    %c0_i32_1 = arith.constant 0 : i32
    return %arg0, %c0_i32, %c0_i32_0 : i32, i32, i32
  }
  func.func @transform_1(%arg0: i32) -> (i32, i32) {
    %c0_i32 = arith.constant 0 : i32
    %c0_i32_0 = arith.constant 0 : i32
    %c0_i32_1 = arith.constant 0 : i32
    return %c0_i32, %c0_i32_0 : i32, i32
  }
  func.func @transform_2(%arg0: i32) -> (i32, i32) {
    %c0_i32 = arith.constant 0 : i32
    %c0_i32_0 = arith.constant 0 : i32
    %c0_i32_1 = arith.constant 0 : i32
    return %c0_i32, %c0_i32_0 : i32, i32
  }
  func.func @transform_3(%arg0: i32) -> (i32, i32) {
    %c0_i32 = arith.constant 0 : i32
    %c0_i32_0 = arith.constant 0 : i32
    %c0_i32_1 = arith.constant 0 : i32
    return %c0_i32, %c0_i32_0 : i32, i32
  }
  func.func @transform_4(%arg0: i32) -> (i32, i32) {
    %c0_i32 = arith.constant 0 : i32
    %c0_i32_0 = arith.constant 0 : i32
    %c0_i32_1 = arith.constant 0 : i32
    return %c0_i32, %c0_i32_0 : i32, i32
  }
  func.func @transform_5(%arg0: i32) -> (i32, i32) {
    %c0_i32 = arith.constant 0 : i32
    %c0_i32_0 = arith.constant 0 : i32
    %c0_i32_1 = arith.constant 0 : i32
    return %c0_i32, %c0_i32_0 : i32, i32
  }
  func.func @transform_6(%arg0: i32) -> (i32, i32) {
    %c0_i32 = arith.constant 0 : i32
    %c0_i32_0 = arith.constant 0 : i32
    %c0_i32_1 = arith.constant 0 : i32
    return %c0_i32, %c0_i32_0 : i32, i32
  }
  func.func @transform_7(%arg0: i32) -> (i32, i32) {
    %c0_i32 = arith.constant 0 : i32
    %c0_i32_0 = arith.constant 0 : i32
    %c0_i32_1 = arith.constant 0 : i32
    return %c0_i32, %c0_i32_0 : i32, i32
  }
  func.func @transform_8(%arg0: i32) -> (i32, i32) {
    %c0_i32 = arith.constant 0 : i32
    %c0_i32_0 = arith.constant 0 : i32
    %c0_i32_1 = arith.constant 0 : i32
    return %c0_i32, %c0_i32_0 : i32, i32
  }
  func.func @transform_9(%arg0: i32) -> (i32, i32) {
    %c0_i32 = arith.constant 0 : i32
    %c0_i32_0 = arith.constant 0 : i32
    %c0_i32_1 = arith.constant 0 : i32
    return %c0_i32, %c0_i32_0 : i32, i32
  }
  func.func @transform_10(%arg0: i32) -> (i32, i32) {
    %c0_i32 = arith.constant 0 : i32
    %c0_i32_0 = arith.constant 0 : i32
    %c0_i32_1 = arith.constant 0 : i32
    return %c0_i32, %c0_i32_0 : i32, i32
  }
}

module attributes {stable_mosaic.version = 11 : i64} {
  func.func @kernel(%arg0: i32, %arg1: memref<8x8x8xf32, #tpu.memory_space<vmem>>, %arg2: memref<8x1xi32, #tpu.memory_space<vmem>>, %arg3: memref<8x128xf32, #tpu.memory_space<vmem>>, %arg4: memref<32x128xf32, #tpu.memory_space<vmem>>, %arg5: memref<1x128xf32, #tpu.memory_space<vmem>>, %arg6: memref<32x128xf32, #tpu.memory_space<vmem>>, %arg7: memref<32x128xf32, #tpu.memory_space<vmem>>, %arg8: memref<1x128xf32, #tpu.memory_space<vmem>>, %arg9: memref<32x128xf32, #tpu.memory_space<vmem>>, %arg10: memref<1x128xf32, #tpu.memory_space<vmem>>, %arg11: memref<8x128xf32, #tpu.memory_space<vmem>>, %arg12: memref<8x8x128xf32, #tpu.memory_space<vmem>>, %arg13: memref<8x8x32xf32, #tpu.memory_space<vmem>>, %arg14: memref<2x8x32xf32, #tpu.memory_space<vmem>>, %arg15: memref<2x8x32xf32, #tpu.memory_space<vmem>>, %arg16: memref<8x32xf32, #tpu.memory_space<vmem>>) attributes {dimension_semantics = [#tpu.dimension_semantics<arbitrary>], iteration_bounds = array<i64: 1>, scalar_prefetch = 0 : i64, scratch_operands = 5 : i64, tpu.core_type = #tpu.core_type<tc>, window_params = [{transform_indices = @transform_0, window_bounds = array<i64: 8, 8, 8>}, {pipeline_mode = #tpu.pipeline_mode<synchronous>, transform_indices = @transform_1, window_bounds = array<i64: 8, 1>}, {pipeline_mode = #tpu.pipeline_mode<synchronous>, transform_indices = @transform_2, window_bounds = array<i64: 8, 128>}, {pipeline_mode = #tpu.pipeline_mode<synchronous>, transform_indices = @transform_3, window_bounds = array<i64: 32, 128>}, {pipeline_mode = #tpu.pipeline_mode<synchronous>, transform_indices = @transform_4, window_bounds = array<i64: 1, 128>}, {pipeline_mode = #tpu.pipeline_mode<synchronous>, transform_indices = @transform_5, window_bounds = array<i64: 32, 128>}, {pipeline_mode = #tpu.pipeline_mode<synchronous>, transform_indices = @transform_6, window_bounds = array<i64: 32, 128>}, {pipeline_mode = #tpu.pipeline_mode<synchronous>, transform_indices = @transform_7, window_bounds = array<i64: 1, 128>}, {pipeline_mode = #tpu.pipeline_mode<synchronous>, transform_indices = @transform_8, window_bounds = array<i64: 32, 128>}, {pipeline_mode = #tpu.pipeline_mode<synchronous>, transform_indices = @transform_9, window_bounds = array<i64: 1, 128>}, {pipeline_mode = #tpu.pipeline_mode<synchronous>, transform_indices = @transform_10, window_bounds = array<i64: 8, 128>}]} {
    %c0_i32 = arith.constant 0 : i32
    %0 = arith.cmpi eq, %arg0, %c0_i32 : i32
    %1 = arith.extui %0 : i1 to i32
    %c0_i32_0 = arith.constant 0 : i32
    %2 = arith.cmpi ne, %1, %c0_i32_0 : i32
    scf.if %2 {
      %cst_212 = arith.constant 0.000000e+00 : f32
      %455 = vector.broadcast %cst_212 : f32 to vector<2x8x32xf32>
      %c0_213 = arith.constant 0 : index
      %c0_214 = arith.constant 0 : index
      %c0_215 = arith.constant 0 : index
      %456 = vector.load %arg14[%c0_213, %c0_214, %c0_215] : memref<2x8x32xf32, #tpu.memory_space<vmem>>, vector<2x8x32xf32>
      tpu.vector_store %arg14[%c0_213, %c0_214, %c0_215], %455 {strides = array<i32>} : memref<2x8x32xf32, #tpu.memory_space<vmem>>, vector<2x8x32xf32>,
      %cst_216 = arith.constant 0.000000e+00 : f32
      %457 = vector.broadcast %cst_216 : f32 to vector<2x8x32xf32>
      %c0_217 = arith.constant 0 : index
      %c0_218 = arith.constant 0 : index
      %c0_219 = arith.constant 0 : index
      %458 = vector.load %arg15[%c0_217, %c0_218, %c0_219] : memref<2x8x32xf32, #tpu.memory_space<vmem>>, vector<2x8x32xf32>
      tpu.vector_store %arg15[%c0_217, %c0_218, %c0_219], %457 {strides = array<i32>} : memref<2x8x32xf32, #tpu.memory_space<vmem>>, vector<2x8x32xf32>,
      %cst_220 = arith.constant 0.000000e+00 : f32
      %459 = vector.broadcast %cst_220 : f32 to vector<8x32xf32>
      %c0_221 = arith.constant 0 : index
      %c0_222 = arith.constant 0 : index
      %460 = vector.load %arg16[%c0_221, %c0_222] : memref<8x32xf32, #tpu.memory_space<vmem>>, vector<8x32xf32>
      tpu.vector_store %arg16[%c0_221, %c0_222], %459 {strides = array<i32>} : memref<8x32xf32, #tpu.memory_space<vmem>>, vector<8x32xf32>,
    } else {
    }
    %c0 = arith.constant 0 : index
    %c0_1 = arith.constant 0 : index
    %3 = vector.load %arg2[%c0, %c0_1] : memref<8x1xi32, #tpu.memory_space<vmem>>, vector<8x1xi32>
    %c8_i32 = arith.constant 8 : i32
    %4 = arith.muli %arg0, %c8_i32 : i32
    %c0_2 = arith.constant 0 : index
    %c0_3 = arith.constant 0 : index
    %c0_4 = arith.constant 0 : index
    %5 = vector.load %arg1[%c0_2, %c0_3, %c0_4] : memref<8x8x8xf32, #tpu.memory_space<vmem>>, vector<8x8x8xf32>
    %6 = vector.shape_cast %5 : vector<8x8x8xf32> to vector<64x8xf32>
    %c0_5 = arith.constant 0 : index
    %c0_6 = arith.constant 0 : index
    %7 = vector.load %arg3[%c0_5, %c0_6] : memref<8x128xf32, #tpu.memory_space<vmem>>, vector<8x128xf32>
    %cst = arith.constant dense<0.000000e+00> : vector<64x128xf32>
    %8 = tpu.matmul %6, %7, %cst {dimension_numbers = #tpu.dot_dimension_numbers<[1], [0], [0], [1], [0, 0, 1, 1], [], []>} : vector<64x8xf32>, vector<8x128xf32>, vector<64x128xf32> -> vector<64x128xf32>
    %c0_7 = arith.constant 0 : index
    %c0_8 = arith.constant 0 : index
    %9 = vector.load %arg5[%c0_7, %c0_8] : memref<1x128xf32, #tpu.memory_space<vmem>>, vector<1x128xf32>
    %10 = vector.broadcast %9 : vector<1x128xf32> to vector<64x128xf32>
    %11 = arith.addf %8, %10 : vector<64x128xf32>
    %12 = vector.shape_cast %11 : vector<64x128xf32> to vector<8x8x128xf32>
    %c0_9 = arith.constant 0 : index
    %c0_10 = arith.constant 0 : index
    %c0_11 = arith.constant 0 : index
    %13 = vector.load %arg12[%c0_9, %c0_10, %c0_11] : memref<8x8x128xf32, #tpu.memory_space<vmem>>, vector<8x8x128xf32>
    tpu.vector_store %arg12[%c0_9, %c0_10, %c0_11], %12 {strides = array<i32>} : memref<8x8x128xf32, #tpu.memory_space<vmem>>, vector<8x8x128xf32>,
    %c0_12 = arith.constant 0 : index
    %c0_13 = arith.constant 0 : index
    %c0_14 = arith.constant 0 : index
    %14 = vector.load %arg14[%c0_12, %c0_13, %c0_14] : memref<2x8x32xf32, #tpu.memory_space<vmem>>, vector<1x8x32xf32>
    %15 = vector.shape_cast %14 : vector<1x8x32xf32> to vector<8x32xf32>
    %c0_15 = arith.constant 0 : index
    %c0_16 = arith.constant 0 : index
    %c0_17 = arith.constant 0 : index
    %16 = vector.load %arg15[%c0_15, %c0_16, %c0_17] : memref<2x8x32xf32, #tpu.memory_space<vmem>>, vector<1x8x32xf32>
    %17 = vector.shape_cast %16 : vector<1x8x32xf32> to vector<8x32xf32>
    %c0_18 = arith.constant 0 : index
    %c0_19 = arith.constant 0 : index
    %c0_20 = arith.constant 0 : index
    %18 = vector.load %arg12[%c0_18, %c0_19, %c0_20] : memref<8x8x128xf32, #tpu.memory_space<vmem>>, vector<1x8x128xf32>
    %19 = vector.shape_cast %18 : vector<1x8x128xf32> to vector<8x128xf32>
    %c0_21 = arith.constant 0 : index
    %c0_22 = arith.constant 0 : index
    %20 = vector.load %arg4[%c0_21, %c0_22] : memref<32x128xf32, #tpu.memory_space<vmem>>, vector<32x128xf32>
    %cst_23 = arith.constant dense<0.000000e+00> : vector<8x128xf32>
    %21 = tpu.matmul %15, %20, %cst_23 {dimension_numbers = #tpu.dot_dimension_numbers<[1], [0], [0], [1], [0, 0, 1, 1], [], []>} : vector<8x32xf32>, vector<32x128xf32>, vector<8x128xf32> -> vector<8x128xf32>
    %22 = arith.addf %19, %21 : vector<8x128xf32>
    %23 = vector.extract_strided_slice %22 {offsets = [0, 0], sizes = [8, 96], strides = [1, 1]} : vector<8x128xf32> to vector<8x96xf32>
    %24 = arith.negf %23 : vector<8x96xf32>
    %25 = math.exp %24 : vector<8x96xf32>
    %cst_24 = arith.constant 1.000000e+00 : f32
    %26 = vector.broadcast %cst_24 : f32 to vector<8x96xf32>
    %27 = arith.addf %26, %25 : vector<8x96xf32>
    %28 = arith.divf %26, %27 : vector<8x96xf32>
    %29 = vector.extract_strided_slice %22 {offsets = [0, 96], sizes = [8, 32], strides = [1, 1]} : vector<8x128xf32> to vector<8x32xf32>
    %30 = math.tanh %29 : vector<8x32xf32>
    %31 = vector.extract_strided_slice %28 {offsets = [0, 32], sizes = [8, 32], strides = [1, 1]} : vector<8x96xf32> to vector<8x32xf32>
    %32 = arith.mulf %31, %17 : vector<8x32xf32>
    %33 = vector.extract_strided_slice %28 {offsets = [0, 0], sizes = [8, 32], strides = [1, 1]} : vector<8x96xf32> to vector<8x32xf32>
    %34 = arith.mulf %33, %30 : vector<8x32xf32>
    %35 = arith.addf %32, %34 : vector<8x32xf32>
    %36 = vector.extract_strided_slice %28 {offsets = [0, 64], sizes = [8, 32], strides = [1, 1]} : vector<8x96xf32> to vector<8x32xf32>
    %37 = math.tanh %35 : vector<8x32xf32>
    %38 = arith.mulf %36, %37 : vector<8x32xf32>
    %c0_25 = arith.constant 0 : index
    %c0_26 = arith.constant 0 : index
    %c0_27 = arith.constant 0 : index
    %39 = vector.load %arg13[%c0_25, %c0_26, %c0_27] : memref<8x8x32xf32, #tpu.memory_space<vmem>>, vector<1x8x32xf32>
    %40 = vector.shape_cast %39 : vector<1x8x32xf32> to vector<8x32xf32>
    %41 = vector.shape_cast %38 : vector<8x32xf32> to vector<1x8x32xf32>
    tpu.vector_store %arg13[%c0_25, %c0_26, %c0_27], %41 {strides = array<i32>} : memref<8x8x32xf32, #tpu.memory_space<vmem>>, vector<1x8x32xf32>,
    %c1 = arith.constant 1 : index
    %c0_28 = arith.constant 0 : index
    %c0_29 = arith.constant 0 : index
    %42 = vector.load %arg12[%c1, %c0_28, %c0_29] : memref<8x8x128xf32, #tpu.memory_space<vmem>>, vector<1x8x128xf32>
    %43 = vector.shape_cast %42 : vector<1x8x128xf32> to vector<8x128xf32>
    %c0_30 = arith.constant 0 : index
    %c0_31 = arith.constant 0 : index
    %44 = vector.load %arg4[%c0_30, %c0_31] : memref<32x128xf32, #tpu.memory_space<vmem>>, vector<32x128xf32>
    %cst_32 = arith.constant dense<0.000000e+00> : vector<8x128xf32>
    %45 = tpu.matmul %38, %44, %cst_32 {dimension_numbers = #tpu.dot_dimension_numbers<[1], [0], [0], [1], [0, 0, 1, 1], [], []>} : vector<8x32xf32>, vector<32x128xf32>, vector<8x128xf32> -> vector<8x128xf32>
    %46 = arith.addf %43, %45 : vector<8x128xf32>
    %47 = vector.extract_strided_slice %46 {offsets = [0, 0], sizes = [8, 96], strides = [1, 1]} : vector<8x128xf32> to vector<8x96xf32>
    %48 = arith.negf %47 : vector<8x96xf32>
    %49 = math.exp %48 : vector<8x96xf32>
    %cst_33 = arith.constant 1.000000e+00 : f32
    %50 = vector.broadcast %cst_33 : f32 to vector<8x96xf32>
    %51 = arith.addf %50, %49 : vector<8x96xf32>
    %52 = arith.divf %50, %51 : vector<8x96xf32>
    %53 = vector.extract_strided_slice %46 {offsets = [0, 96], sizes = [8, 32], strides = [1, 1]} : vector<8x128xf32> to vector<8x32xf32>
    %54 = math.tanh %53 : vector<8x32xf32>
    %55 = vector.extract_strided_slice %52 {offsets = [0, 32], sizes = [8, 32], strides = [1, 1]} : vector<8x96xf32> to vector<8x32xf32>
    %56 = arith.mulf %55, %35 : vector<8x32xf32>
    %57 = vector.extract_strided_slice %52 {offsets = [0, 0], sizes = [8, 32], strides = [1, 1]} : vector<8x96xf32> to vector<8x32xf32>
    %58 = arith.mulf %57, %54 : vector<8x32xf32>
    %59 = arith.addf %56, %58 : vector<8x32xf32>
    %60 = vector.extract_strided_slice %52 {offsets = [0, 64], sizes = [8, 32], strides = [1, 1]} : vector<8x96xf32> to vector<8x32xf32>
    %61 = math.tanh %59 : vector<8x32xf32>
    %62 = arith.mulf %60, %61 : vector<8x32xf32>
    %c1_34 = arith.constant 1 : index
    %c0_35 = arith.constant 0 : index
    %c0_36 = arith.constant 0 : index
    %63 = vector.load %arg13[%c1_34, %c0_35, %c0_36] : memref<8x8x32xf32, #tpu.memory_space<vmem>>, vector<1x8x32xf32>
    %64 = vector.shape_cast %63 : vector<1x8x32xf32> to vector<8x32xf32>
    %65 = vector.shape_cast %62 : vector<8x32xf32> to vector<1x8x32xf32>
    tpu.vector_store %arg13[%c1_34, %c0_35, %c0_36], %65 {strides = array<i32>} : memref<8x8x32xf32, #tpu.memory_space<vmem>>, vector<1x8x32xf32>,
    %c2 = arith.constant 2 : index
    %c0_37 = arith.constant 0 : index
    %c0_38 = arith.constant 0 : index
    %66 = vector.load %arg12[%c2, %c0_37, %c0_38] : memref<8x8x128xf32, #tpu.memory_space<vmem>>, vector<1x8x128xf32>
    %67 = vector.shape_cast %66 : vector<1x8x128xf32> to vector<8x128xf32>
    %c0_39 = arith.constant 0 : index
    %c0_40 = arith.constant 0 : index
    %68 = vector.load %arg4[%c0_39, %c0_40] : memref<32x128xf32, #tpu.memory_space<vmem>>, vector<32x128xf32>
    %cst_41 = arith.constant dense<0.000000e+00> : vector<8x128xf32>
    %69 = tpu.matmul %62, %68, %cst_41 {dimension_numbers = #tpu.dot_dimension_numbers<[1], [0], [0], [1], [0, 0, 1, 1], [], []>} : vector<8x32xf32>, vector<32x128xf32>, vector<8x128xf32> -> vector<8x128xf32>
    %70 = arith.addf %67, %69 : vector<8x128xf32>
    %71 = vector.extract_strided_slice %70 {offsets = [0, 0], sizes = [8, 96], strides = [1, 1]} : vector<8x128xf32> to vector<8x96xf32>
    %72 = arith.negf %71 : vector<8x96xf32>
    %73 = math.exp %72 : vector<8x96xf32>
    %cst_42 = arith.constant 1.000000e+00 : f32
    %74 = vector.broadcast %cst_42 : f32 to vector<8x96xf32>
    %75 = arith.addf %74, %73 : vector<8x96xf32>
    %76 = arith.divf %74, %75 : vector<8x96xf32>
    %77 = vector.extract_strided_slice %70 {offsets = [0, 96], sizes = [8, 32], strides = [1, 1]} : vector<8x128xf32> to vector<8x32xf32>
    %78 = math.tanh %77 : vector<8x32xf32>
    %79 = vector.extract_strided_slice %76 {offsets = [0, 32], sizes = [8, 32], strides = [1, 1]} : vector<8x96xf32> to vector<8x32xf32>
    %80 = arith.mulf %79, %59 : vector<8x32xf32>
    %81 = vector.extract_strided_slice %76 {offsets = [0, 0], sizes = [8, 32], strides = [1, 1]} : vector<8x96xf32> to vector<8x32xf32>
    %82 = arith.mulf %81, %78 : vector<8x32xf32>
    %83 = arith.addf %80, %82 : vector<8x32xf32>
    %84 = vector.extract_strided_slice %76 {offsets = [0, 64], sizes = [8, 32], strides = [1, 1]} : vector<8x96xf32> to vector<8x32xf32>
    %85 = math.tanh %83 : vector<8x32xf32>
    %86 = arith.mulf %84, %85 : vector<8x32xf32>
    %c2_43 = arith.constant 2 : index
    %c0_44 = arith.constant 0 : index
    %c0_45 = arith.constant 0 : index
    %87 = vector.load %arg13[%c2_43, %c0_44, %c0_45] : memref<8x8x32xf32, #tpu.memory_space<vmem>>, vector<1x8x32xf32>
    %88 = vector.shape_cast %87 : vector<1x8x32xf32> to vector<8x32xf32>
    %89 = vector.shape_cast %86 : vector<8x32xf32> to vector<1x8x32xf32>
    tpu.vector_store %arg13[%c2_43, %c0_44, %c0_45], %89 {strides = array<i32>} : memref<8x8x32xf32, #tpu.memory_space<vmem>>, vector<1x8x32xf32>,
    %c3 = arith.constant 3 : index
    %c0_46 = arith.constant 0 : index
    %c0_47 = arith.constant 0 : index
    %90 = vector.load %arg12[%c3, %c0_46, %c0_47] : memref<8x8x128xf32, #tpu.memory_space<vmem>>, vector<1x8x128xf32>
    %91 = vector.shape_cast %90 : vector<1x8x128xf32> to vector<8x128xf32>
    %c0_48 = arith.constant 0 : index
    %c0_49 = arith.constant 0 : index
    %92 = vector.load %arg4[%c0_48, %c0_49] : memref<32x128xf32, #tpu.memory_space<vmem>>, vector<32x128xf32>
    %cst_50 = arith.constant dense<0.000000e+00> : vector<8x128xf32>
    %93 = tpu.matmul %86, %92, %cst_50 {dimension_numbers = #tpu.dot_dimension_numbers<[1], [0], [0], [1], [0, 0, 1, 1], [], []>} : vector<8x32xf32>, vector<32x128xf32>, vector<8x128xf32> -> vector<8x128xf32>
    %94 = arith.addf %91, %93 : vector<8x128xf32>
    %95 = vector.extract_strided_slice %94 {offsets = [0, 0], sizes = [8, 96], strides = [1, 1]} : vector<8x128xf32> to vector<8x96xf32>
    %96 = arith.negf %95 : vector<8x96xf32>
    %97 = math.exp %96 : vector<8x96xf32>
    %cst_51 = arith.constant 1.000000e+00 : f32
    %98 = vector.broadcast %cst_51 : f32 to vector<8x96xf32>
    %99 = arith.addf %98, %97 : vector<8x96xf32>
    %100 = arith.divf %98, %99 : vector<8x96xf32>
    %101 = vector.extract_strided_slice %94 {offsets = [0, 96], sizes = [8, 32], strides = [1, 1]} : vector<8x128xf32> to vector<8x32xf32>
    %102 = math.tanh %101 : vector<8x32xf32>
    %103 = vector.extract_strided_slice %100 {offsets = [0, 32], sizes = [8, 32], strides = [1, 1]} : vector<8x96xf32> to vector<8x32xf32>
    %104 = arith.mulf %103, %83 : vector<8x32xf32>
    %105 = vector.extract_strided_slice %100 {offsets = [0, 0], sizes = [8, 32], strides = [1, 1]} : vector<8x96xf32> to vector<8x32xf32>
    %106 = arith.mulf %105, %102 : vector<8x32xf32>
    %107 = arith.addf %104, %106 : vector<8x32xf32>
    %108 = vector.extract_strided_slice %100 {offsets = [0, 64], sizes = [8, 32], strides = [1, 1]} : vector<8x96xf32> to vector<8x32xf32>
    %109 = math.tanh %107 : vector<8x32xf32>
    %110 = arith.mulf %108, %109 : vector<8x32xf32>
    %c3_52 = arith.constant 3 : index
    %c0_53 = arith.constant 0 : index
    %c0_54 = arith.constant 0 : index
    %111 = vector.load %arg13[%c3_52, %c0_53, %c0_54] : memref<8x8x32xf32, #tpu.memory_space<vmem>>, vector<1x8x32xf32>
    %112 = vector.shape_cast %111 : vector<1x8x32xf32> to vector<8x32xf32>
    %113 = vector.shape_cast %110 : vector<8x32xf32> to vector<1x8x32xf32>
    tpu.vector_store %arg13[%c3_52, %c0_53, %c0_54], %113 {strides = array<i32>} : memref<8x8x32xf32, #tpu.memory_space<vmem>>, vector<1x8x32xf32>,
    %c4 = arith.constant 4 : index
    %c0_55 = arith.constant 0 : index
    %c0_56 = arith.constant 0 : index
    %114 = vector.load %arg12[%c4, %c0_55, %c0_56] : memref<8x8x128xf32, #tpu.memory_space<vmem>>, vector<1x8x128xf32>
    %115 = vector.shape_cast %114 : vector<1x8x128xf32> to vector<8x128xf32>
    %c0_57 = arith.constant 0 : index
    %c0_58 = arith.constant 0 : index
    %116 = vector.load %arg4[%c0_57, %c0_58] : memref<32x128xf32, #tpu.memory_space<vmem>>, vector<32x128xf32>
    %cst_59 = arith.constant dense<0.000000e+00> : vector<8x128xf32>
    %117 = tpu.matmul %110, %116, %cst_59 {dimension_numbers = #tpu.dot_dimension_numbers<[1], [0], [0], [1], [0, 0, 1, 1], [], []>} : vector<8x32xf32>, vector<32x128xf32>, vector<8x128xf32> -> vector<8x128xf32>
    %118 = arith.addf %115, %117 : vector<8x128xf32>
    %119 = vector.extract_strided_slice %118 {offsets = [0, 0], sizes = [8, 96], strides = [1, 1]} : vector<8x128xf32> to vector<8x96xf32>
    %120 = arith.negf %119 : vector<8x96xf32>
    %121 = math.exp %120 : vector<8x96xf32>
    %cst_60 = arith.constant 1.000000e+00 : f32
    %122 = vector.broadcast %cst_60 : f32 to vector<8x96xf32>
    %123 = arith.addf %122, %121 : vector<8x96xf32>
    %124 = arith.divf %122, %123 : vector<8x96xf32>
    %125 = vector.extract_strided_slice %118 {offsets = [0, 96], sizes = [8, 32], strides = [1, 1]} : vector<8x128xf32> to vector<8x32xf32>
    %126 = math.tanh %125 : vector<8x32xf32>
    %127 = vector.extract_strided_slice %124 {offsets = [0, 32], sizes = [8, 32], strides = [1, 1]} : vector<8x96xf32> to vector<8x32xf32>
    %128 = arith.mulf %127, %107 : vector<8x32xf32>
    %129 = vector.extract_strided_slice %124 {offsets = [0, 0], sizes = [8, 32], strides = [1, 1]} : vector<8x96xf32> to vector<8x32xf32>
    %130 = arith.mulf %129, %126 : vector<8x32xf32>
    %131 = arith.addf %128, %130 : vector<8x32xf32>
    %132 = vector.extract_strided_slice %124 {offsets = [0, 64], sizes = [8, 32], strides = [1, 1]} : vector<8x96xf32> to vector<8x32xf32>
    %133 = math.tanh %131 : vector<8x32xf32>
    %134 = arith.mulf %132, %133 : vector<8x32xf32>
    %c4_61 = arith.constant 4 : index
    %c0_62 = arith.constant 0 : index
    %c0_63 = arith.constant 0 : index
    %135 = vector.load %arg13[%c4_61, %c0_62, %c0_63] : memref<8x8x32xf32, #tpu.memory_space<vmem>>, vector<1x8x32xf32>
    %136 = vector.shape_cast %135 : vector<1x8x32xf32> to vector<8x32xf32>
    %137 = vector.shape_cast %134 : vector<8x32xf32> to vector<1x8x32xf32>
    tpu.vector_store %arg13[%c4_61, %c0_62, %c0_63], %137 {strides = array<i32>} : memref<8x8x32xf32, #tpu.memory_space<vmem>>, vector<1x8x32xf32>,
    %c5 = arith.constant 5 : index
    %c0_64 = arith.constant 0 : index
    %c0_65 = arith.constant 0 : index
    %138 = vector.load %arg12[%c5, %c0_64, %c0_65] : memref<8x8x128xf32, #tpu.memory_space<vmem>>, vector<1x8x128xf32>
    %139 = vector.shape_cast %138 : vector<1x8x128xf32> to vector<8x128xf32>
    %c0_66 = arith.constant 0 : index
    %c0_67 = arith.constant 0 : index
    %140 = vector.load %arg4[%c0_66, %c0_67] : memref<32x128xf32, #tpu.memory_space<vmem>>, vector<32x128xf32>
    %cst_68 = arith.constant dense<0.000000e+00> : vector<8x128xf32>
    %141 = tpu.matmul %134, %140, %cst_68 {dimension_numbers = #tpu.dot_dimension_numbers<[1], [0], [0], [1], [0, 0, 1, 1], [], []>} : vector<8x32xf32>, vector<32x128xf32>, vector<8x128xf32> -> vector<8x128xf32>
    %142 = arith.addf %139, %141 : vector<8x128xf32>
    %143 = vector.extract_strided_slice %142 {offsets = [0, 0], sizes = [8, 96], strides = [1, 1]} : vector<8x128xf32> to vector<8x96xf32>
    %144 = arith.negf %143 : vector<8x96xf32>
    %145 = math.exp %144 : vector<8x96xf32>
    %cst_69 = arith.constant 1.000000e+00 : f32
    %146 = vector.broadcast %cst_69 : f32 to vector<8x96xf32>
    %147 = arith.addf %146, %145 : vector<8x96xf32>
    %148 = arith.divf %146, %147 : vector<8x96xf32>
    %149 = vector.extract_strided_slice %142 {offsets = [0, 96], sizes = [8, 32], strides = [1, 1]} : vector<8x128xf32> to vector<8x32xf32>
    %150 = math.tanh %149 : vector<8x32xf32>
    %151 = vector.extract_strided_slice %148 {offsets = [0, 32], sizes = [8, 32], strides = [1, 1]} : vector<8x96xf32> to vector<8x32xf32>
    %152 = arith.mulf %151, %131 : vector<8x32xf32>
    %153 = vector.extract_strided_slice %148 {offsets = [0, 0], sizes = [8, 32], strides = [1, 1]} : vector<8x96xf32> to vector<8x32xf32>
    %154 = arith.mulf %153, %150 : vector<8x32xf32>
    %155 = arith.addf %152, %154 : vector<8x32xf32>
    %156 = vector.extract_strided_slice %148 {offsets = [0, 64], sizes = [8, 32], strides = [1, 1]} : vector<8x96xf32> to vector<8x32xf32>
    %157 = math.tanh %155 : vector<8x32xf32>
    %158 = arith.mulf %156, %157 : vector<8x32xf32>
    %c5_70 = arith.constant 5 : index
    %c0_71 = arith.constant 0 : index
    %c0_72 = arith.constant 0 : index
    %159 = vector.load %arg13[%c5_70, %c0_71, %c0_72] : memref<8x8x32xf32, #tpu.memory_space<vmem>>, vector<1x8x32xf32>
    %160 = vector.shape_cast %159 : vector<1x8x32xf32> to vector<8x32xf32>
    %161 = vector.shape_cast %158 : vector<8x32xf32> to vector<1x8x32xf32>
    tpu.vector_store %arg13[%c5_70, %c0_71, %c0_72], %161 {strides = array<i32>} : memref<8x8x32xf32, #tpu.memory_space<vmem>>, vector<1x8x32xf32>,
    %c6 = arith.constant 6 : index
    %c0_73 = arith.constant 0 : index
    %c0_74 = arith.constant 0 : index
    %162 = vector.load %arg12[%c6, %c0_73, %c0_74] : memref<8x8x128xf32, #tpu.memory_space<vmem>>, vector<1x8x128xf32>
    %163 = vector.shape_cast %162 : vector<1x8x128xf32> to vector<8x128xf32>
    %c0_75 = arith.constant 0 : index
    %c0_76 = arith.constant 0 : index
    %164 = vector.load %arg4[%c0_75, %c0_76] : memref<32x128xf32, #tpu.memory_space<vmem>>, vector<32x128xf32>
    %cst_77 = arith.constant dense<0.000000e+00> : vector<8x128xf32>
    %165 = tpu.matmul %158, %164, %cst_77 {dimension_numbers = #tpu.dot_dimension_numbers<[1], [0], [0], [1], [0, 0, 1, 1], [], []>} : vector<8x32xf32>, vector<32x128xf32>, vector<8x128xf32> -> vector<8x128xf32>
    %166 = arith.addf %163, %165 : vector<8x128xf32>
    %167 = vector.extract_strided_slice %166 {offsets = [0, 0], sizes = [8, 96], strides = [1, 1]} : vector<8x128xf32> to vector<8x96xf32>
    %168 = arith.negf %167 : vector<8x96xf32>
    %169 = math.exp %168 : vector<8x96xf32>
    %cst_78 = arith.constant 1.000000e+00 : f32
    %170 = vector.broadcast %cst_78 : f32 to vector<8x96xf32>
    %171 = arith.addf %170, %169 : vector<8x96xf32>
    %172 = arith.divf %170, %171 : vector<8x96xf32>
    %173 = vector.extract_strided_slice %166 {offsets = [0, 96], sizes = [8, 32], strides = [1, 1]} : vector<8x128xf32> to vector<8x32xf32>
    %174 = math.tanh %173 : vector<8x32xf32>
    %175 = vector.extract_strided_slice %172 {offsets = [0, 32], sizes = [8, 32], strides = [1, 1]} : vector<8x96xf32> to vector<8x32xf32>
    %176 = arith.mulf %175, %155 : vector<8x32xf32>
    %177 = vector.extract_strided_slice %172 {offsets = [0, 0], sizes = [8, 32], strides = [1, 1]} : vector<8x96xf32> to vector<8x32xf32>
    %178 = arith.mulf %177, %174 : vector<8x32xf32>
    %179 = arith.addf %176, %178 : vector<8x32xf32>
    %180 = vector.extract_strided_slice %172 {offsets = [0, 64], sizes = [8, 32], strides = [1, 1]} : vector<8x96xf32> to vector<8x32xf32>
    %181 = math.tanh %179 : vector<8x32xf32>
    %182 = arith.mulf %180, %181 : vector<8x32xf32>
    %c6_79 = arith.constant 6 : index
    %c0_80 = arith.constant 0 : index
    %c0_81 = arith.constant 0 : index
    %183 = vector.load %arg13[%c6_79, %c0_80, %c0_81] : memref<8x8x32xf32, #tpu.memory_space<vmem>>, vector<1x8x32xf32>
    %184 = vector.shape_cast %183 : vector<1x8x32xf32> to vector<8x32xf32>
    %185 = vector.shape_cast %182 : vector<8x32xf32> to vector<1x8x32xf32>
    tpu.vector_store %arg13[%c6_79, %c0_80, %c0_81], %185 {strides = array<i32>} : memref<8x8x32xf32, #tpu.memory_space<vmem>>, vector<1x8x32xf32>,
    %c7 = arith.constant 7 : index
    %c0_82 = arith.constant 0 : index
    %c0_83 = arith.constant 0 : index
    %186 = vector.load %arg12[%c7, %c0_82, %c0_83] : memref<8x8x128xf32, #tpu.memory_space<vmem>>, vector<1x8x128xf32>
    %187 = vector.shape_cast %186 : vector<1x8x128xf32> to vector<8x128xf32>
    %c0_84 = arith.constant 0 : index
    %c0_85 = arith.constant 0 : index
    %188 = vector.load %arg4[%c0_84, %c0_85] : memref<32x128xf32, #tpu.memory_space<vmem>>, vector<32x128xf32>
    %cst_86 = arith.constant dense<0.000000e+00> : vector<8x128xf32>
    %189 = tpu.matmul %182, %188, %cst_86 {dimension_numbers = #tpu.dot_dimension_numbers<[1], [0], [0], [1], [0, 0, 1, 1], [], []>} : vector<8x32xf32>, vector<32x128xf32>, vector<8x128xf32> -> vector<8x128xf32>
    %190 = arith.addf %187, %189 : vector<8x128xf32>
    %191 = vector.extract_strided_slice %190 {offsets = [0, 0], sizes = [8, 96], strides = [1, 1]} : vector<8x128xf32> to vector<8x96xf32>
    %192 = arith.negf %191 : vector<8x96xf32>
    %193 = math.exp %192 : vector<8x96xf32>
    %cst_87 = arith.constant 1.000000e+00 : f32
    %194 = vector.broadcast %cst_87 : f32 to vector<8x96xf32>
    %195 = arith.addf %194, %193 : vector<8x96xf32>
    %196 = arith.divf %194, %195 : vector<8x96xf32>
    %197 = vector.extract_strided_slice %190 {offsets = [0, 96], sizes = [8, 32], strides = [1, 1]} : vector<8x128xf32> to vector<8x32xf32>
    %198 = math.tanh %197 : vector<8x32xf32>
    %199 = vector.extract_strided_slice %196 {offsets = [0, 32], sizes = [8, 32], strides = [1, 1]} : vector<8x96xf32> to vector<8x32xf32>
    %200 = arith.mulf %199, %179 : vector<8x32xf32>
    %201 = vector.extract_strided_slice %196 {offsets = [0, 0], sizes = [8, 32], strides = [1, 1]} : vector<8x96xf32> to vector<8x32xf32>
    %202 = arith.mulf %201, %198 : vector<8x32xf32>
    %203 = arith.addf %200, %202 : vector<8x32xf32>
    %204 = vector.extract_strided_slice %196 {offsets = [0, 64], sizes = [8, 32], strides = [1, 1]} : vector<8x96xf32> to vector<8x32xf32>
    %205 = math.tanh %203 : vector<8x32xf32>
    %206 = arith.mulf %204, %205 : vector<8x32xf32>
    %c7_88 = arith.constant 7 : index
    %c0_89 = arith.constant 0 : index
    %c0_90 = arith.constant 0 : index
    %207 = vector.load %arg13[%c7_88, %c0_89, %c0_90] : memref<8x8x32xf32, #tpu.memory_space<vmem>>, vector<1x8x32xf32>
    %208 = vector.shape_cast %207 : vector<1x8x32xf32> to vector<8x32xf32>
    %209 = vector.shape_cast %206 : vector<8x32xf32> to vector<1x8x32xf32>
    tpu.vector_store %arg13[%c7_88, %c0_89, %c0_90], %209 {strides = array<i32>} : memref<8x8x32xf32, #tpu.memory_space<vmem>>, vector<1x8x32xf32>,
    %c0_91 = arith.constant 0 : index
    %c0_92 = arith.constant 0 : index
    %c0_93 = arith.constant 0 : index
    %210 = vector.load %arg14[%c0_91, %c0_92, %c0_93] : memref<2x8x32xf32, #tpu.memory_space<vmem>>, vector<1x8x32xf32>
    %211 = vector.shape_cast %210 : vector<1x8x32xf32> to vector<8x32xf32>
    %212 = vector.shape_cast %206 : vector<8x32xf32> to vector<1x8x32xf32>
    tpu.vector_store %arg14[%c0_91, %c0_92, %c0_93], %212 {strides = array<i32>} : memref<2x8x32xf32, #tpu.memory_space<vmem>>, vector<1x8x32xf32>,
    %c0_94 = arith.constant 0 : index
    %c0_95 = arith.constant 0 : index
    %c0_96 = arith.constant 0 : index
    %213 = vector.load %arg15[%c0_94, %c0_95, %c0_96] : memref<2x8x32xf32, #tpu.memory_space<vmem>>, vector<1x8x32xf32>
    %214 = vector.shape_cast %213 : vector<1x8x32xf32> to vector<8x32xf32>
    %215 = vector.shape_cast %203 : vector<8x32xf32> to vector<1x8x32xf32>
    tpu.vector_store %arg15[%c0_94, %c0_95, %c0_96], %215 {strides = array<i32>} : memref<2x8x32xf32, #tpu.memory_space<vmem>>, vector<1x8x32xf32>,
    %c0_97 = arith.constant 0 : index
    %c0_98 = arith.constant 0 : index
    %c0_99 = arith.constant 0 : index
    %216 = vector.load %arg13[%c0_97, %c0_98, %c0_99] : memref<8x8x32xf32, #tpu.memory_space<vmem>>, vector<8x8x32xf32>
    %217 = vector.shape_cast %216 : vector<8x8x32xf32> to vector<64x32xf32>
    %c0_100 = arith.constant 0 : index
    %c0_101 = arith.constant 0 : index
    %218 = vector.load %arg6[%c0_100, %c0_101] : memref<32x128xf32, #tpu.memory_space<vmem>>, vector<32x128xf32>
    %cst_102 = arith.constant dense<0.000000e+00> : vector<64x128xf32>
    %219 = tpu.matmul %217, %218, %cst_102 {dimension_numbers = #tpu.dot_dimension_numbers<[1], [0], [0], [1], [0, 0, 1, 1], [], []>} : vector<64x32xf32>, vector<32x128xf32>, vector<64x128xf32> -> vector<64x128xf32>
    %c0_103 = arith.constant 0 : index
    %c0_104 = arith.constant 0 : index
    %220 = vector.load %arg8[%c0_103, %c0_104] : memref<1x128xf32, #tpu.memory_space<vmem>>, vector<1x128xf32>
    %221 = vector.broadcast %220 : vector<1x128xf32> to vector<64x128xf32>
    %222 = arith.addf %219, %221 : vector<64x128xf32>
    %223 = vector.shape_cast %222 : vector<64x128xf32> to vector<8x8x128xf32>
    %c0_105 = arith.constant 0 : index
    %c0_106 = arith.constant 0 : index
    %c0_107 = arith.constant 0 : index
    %224 = vector.load %arg12[%c0_105, %c0_106, %c0_107] : memref<8x8x128xf32, #tpu.memory_space<vmem>>, vector<8x8x128xf32>
    tpu.vector_store %arg12[%c0_105, %c0_106, %c0_107], %223 {strides = array<i32>} : memref<8x8x128xf32, #tpu.memory_space<vmem>>, vector<8x8x128xf32>,
    %c1_108 = arith.constant 1 : index
    %c0_109 = arith.constant 0 : index
    %c0_110 = arith.constant 0 : index
    %225 = vector.load %arg14[%c1_108, %c0_109, %c0_110] : memref<2x8x32xf32, #tpu.memory_space<vmem>>, vector<1x8x32xf32>
    %226 = vector.shape_cast %225 : vector<1x8x32xf32> to vector<8x32xf32>
    %c1_111 = arith.constant 1 : index
    %c0_112 = arith.constant 0 : index
    %c0_113 = arith.constant 0 : index
    %227 = vector.load %arg15[%c1_111, %c0_112, %c0_113] : memref<2x8x32xf32, #tpu.memory_space<vmem>>, vector<1x8x32xf32>
    %228 = vector.shape_cast %227 : vector<1x8x32xf32> to vector<8x32xf32>
    %c0_114 = arith.constant 0 : index
    %c0_115 = arith.constant 0 : index
    %c0_116 = arith.constant 0 : index
    %229 = vector.load %arg12[%c0_114, %c0_115, %c0_116] : memref<8x8x128xf32, #tpu.memory_space<vmem>>, vector<1x8x128xf32>
    %230 = vector.shape_cast %229 : vector<1x8x128xf32> to vector<8x128xf32>
    %c0_117 = arith.constant 0 : index
    %c0_118 = arith.constant 0 : index
    %231 = vector.load %arg7[%c0_117, %c0_118] : memref<32x128xf32, #tpu.memory_space<vmem>>, vector<32x128xf32>
    %cst_119 = arith.constant dense<0.000000e+00> : vector<8x128xf32>
    %232 = tpu.matmul %226, %231, %cst_119 {dimension_numbers = #tpu.dot_dimension_numbers<[1], [0], [0], [1], [0, 0, 1, 1], [], []>} : vector<8x32xf32>, vector<32x128xf32>, vector<8x128xf32> -> vector<8x128xf32>
    %233 = arith.addf %230, %232 : vector<8x128xf32>
    %234 = vector.extract_strided_slice %233 {offsets = [0, 0], sizes = [8, 96], strides = [1, 1]} : vector<8x128xf32> to vector<8x96xf32>
    %235 = arith.negf %234 : vector<8x96xf32>
    %236 = math.exp %235 : vector<8x96xf32>
    %cst_120 = arith.constant 1.000000e+00 : f32
    %237 = vector.broadcast %cst_120 : f32 to vector<8x96xf32>
    %238 = arith.addf %237, %236 : vector<8x96xf32>
    %239 = arith.divf %237, %238 : vector<8x96xf32>
    %240 = vector.extract_strided_slice %233 {offsets = [0, 96], sizes = [8, 32], strides = [1, 1]} : vector<8x128xf32> to vector<8x32xf32>
    %241 = math.tanh %240 : vector<8x32xf32>
    %242 = vector.extract_strided_slice %239 {offsets = [0, 32], sizes = [8, 32], strides = [1, 1]} : vector<8x96xf32> to vector<8x32xf32>
    %243 = arith.mulf %242, %228 : vector<8x32xf32>
    %244 = vector.extract_strided_slice %239 {offsets = [0, 0], sizes = [8, 32], strides = [1, 1]} : vector<8x96xf32> to vector<8x32xf32>
    %245 = arith.mulf %244, %241 : vector<8x32xf32>
    %246 = arith.addf %243, %245 : vector<8x32xf32>
    %247 = vector.extract_strided_slice %239 {offsets = [0, 64], sizes = [8, 32], strides = [1, 1]} : vector<8x96xf32> to vector<8x32xf32>
    %248 = math.tanh %246 : vector<8x32xf32>
    %249 = arith.mulf %247, %248 : vector<8x32xf32>
    %c0_121 = arith.constant 0 : index
    %c0_122 = arith.constant 0 : index
    %c0_123 = arith.constant 0 : index
    %250 = vector.load %arg13[%c0_121, %c0_122, %c0_123] : memref<8x8x32xf32, #tpu.memory_space<vmem>>, vector<1x8x32xf32>
    %251 = vector.shape_cast %250 : vector<1x8x32xf32> to vector<8x32xf32>
    %252 = vector.shape_cast %249 : vector<8x32xf32> to vector<1x8x32xf32>
    tpu.vector_store %arg13[%c0_121, %c0_122, %c0_123], %252 {strides = array<i32>} : memref<8x8x32xf32, #tpu.memory_space<vmem>>, vector<1x8x32xf32>,
    %c1_124 = arith.constant 1 : index
    %c0_125 = arith.constant 0 : index
    %c0_126 = arith.constant 0 : index
    %253 = vector.load %arg12[%c1_124, %c0_125, %c0_126] : memref<8x8x128xf32, #tpu.memory_space<vmem>>, vector<1x8x128xf32>
    %254 = vector.shape_cast %253 : vector<1x8x128xf32> to vector<8x128xf32>
    %c0_127 = arith.constant 0 : index
    %c0_128 = arith.constant 0 : index
    %255 = vector.load %arg7[%c0_127, %c0_128] : memref<32x128xf32, #tpu.memory_space<vmem>>, vector<32x128xf32>
    %cst_129 = arith.constant dense<0.000000e+00> : vector<8x128xf32>
    %256 = tpu.matmul %249, %255, %cst_129 {dimension_numbers = #tpu.dot_dimension_numbers<[1], [0], [0], [1], [0, 0, 1, 1], [], []>} : vector<8x32xf32>, vector<32x128xf32>, vector<8x128xf32> -> vector<8x128xf32>
    %257 = arith.addf %254, %256 : vector<8x128xf32>
    %258 = vector.extract_strided_slice %257 {offsets = [0, 0], sizes = [8, 96], strides = [1, 1]} : vector<8x128xf32> to vector<8x96xf32>
    %259 = arith.negf %258 : vector<8x96xf32>
    %260 = math.exp %259 : vector<8x96xf32>
    %cst_130 = arith.constant 1.000000e+00 : f32
    %261 = vector.broadcast %cst_130 : f32 to vector<8x96xf32>
    %262 = arith.addf %261, %260 : vector<8x96xf32>
    %263 = arith.divf %261, %262 : vector<8x96xf32>
    %264 = vector.extract_strided_slice %257 {offsets = [0, 96], sizes = [8, 32], strides = [1, 1]} : vector<8x128xf32> to vector<8x32xf32>
    %265 = math.tanh %264 : vector<8x32xf32>
    %266 = vector.extract_strided_slice %263 {offsets = [0, 32], sizes = [8, 32], strides = [1, 1]} : vector<8x96xf32> to vector<8x32xf32>
    %267 = arith.mulf %266, %246 : vector<8x32xf32>
    %268 = vector.extract_strided_slice %263 {offsets = [0, 0], sizes = [8, 32], strides = [1, 1]} : vector<8x96xf32> to vector<8x32xf32>
    %269 = arith.mulf %268, %265 : vector<8x32xf32>
    %270 = arith.addf %267, %269 : vector<8x32xf32>
    %271 = vector.extract_strided_slice %263 {offsets = [0, 64], sizes = [8, 32], strides = [1, 1]} : vector<8x96xf32> to vector<8x32xf32>
    %272 = math.tanh %270 : vector<8x32xf32>
    %273 = arith.mulf %271, %272 : vector<8x32xf32>
    %c1_131 = arith.constant 1 : index
    %c0_132 = arith.constant 0 : index
    %c0_133 = arith.constant 0 : index
    %274 = vector.load %arg13[%c1_131, %c0_132, %c0_133] : memref<8x8x32xf32, #tpu.memory_space<vmem>>, vector<1x8x32xf32>
    %275 = vector.shape_cast %274 : vector<1x8x32xf32> to vector<8x32xf32>
    %276 = vector.shape_cast %273 : vector<8x32xf32> to vector<1x8x32xf32>
    tpu.vector_store %arg13[%c1_131, %c0_132, %c0_133], %276 {strides = array<i32>} : memref<8x8x32xf32, #tpu.memory_space<vmem>>, vector<1x8x32xf32>,
    %c2_134 = arith.constant 2 : index
    %c0_135 = arith.constant 0 : index
    %c0_136 = arith.constant 0 : index
    %277 = vector.load %arg12[%c2_134, %c0_135, %c0_136] : memref<8x8x128xf32, #tpu.memory_space<vmem>>, vector<1x8x128xf32>
    %278 = vector.shape_cast %277 : vector<1x8x128xf32> to vector<8x128xf32>
    %c0_137 = arith.constant 0 : index
    %c0_138 = arith.constant 0 : index
    %279 = vector.load %arg7[%c0_137, %c0_138] : memref<32x128xf32, #tpu.memory_space<vmem>>, vector<32x128xf32>
    %cst_139 = arith.constant dense<0.000000e+00> : vector<8x128xf32>
    %280 = tpu.matmul %273, %279, %cst_139 {dimension_numbers = #tpu.dot_dimension_numbers<[1], [0], [0], [1], [0, 0, 1, 1], [], []>} : vector<8x32xf32>, vector<32x128xf32>, vector<8x128xf32> -> vector<8x128xf32>
    %281 = arith.addf %278, %280 : vector<8x128xf32>
    %282 = vector.extract_strided_slice %281 {offsets = [0, 0], sizes = [8, 96], strides = [1, 1]} : vector<8x128xf32> to vector<8x96xf32>
    %283 = arith.negf %282 : vector<8x96xf32>
    %284 = math.exp %283 : vector<8x96xf32>
    %cst_140 = arith.constant 1.000000e+00 : f32
    %285 = vector.broadcast %cst_140 : f32 to vector<8x96xf32>
    %286 = arith.addf %285, %284 : vector<8x96xf32>
    %287 = arith.divf %285, %286 : vector<8x96xf32>
    %288 = vector.extract_strided_slice %281 {offsets = [0, 96], sizes = [8, 32], strides = [1, 1]} : vector<8x128xf32> to vector<8x32xf32>
    %289 = math.tanh %288 : vector<8x32xf32>
    %290 = vector.extract_strided_slice %287 {offsets = [0, 32], sizes = [8, 32], strides = [1, 1]} : vector<8x96xf32> to vector<8x32xf32>
    %291 = arith.mulf %290, %270 : vector<8x32xf32>
    %292 = vector.extract_strided_slice %287 {offsets = [0, 0], sizes = [8, 32], strides = [1, 1]} : vector<8x96xf32> to vector<8x32xf32>
    %293 = arith.mulf %292, %289 : vector<8x32xf32>
    %294 = arith.addf %291, %293 : vector<8x32xf32>
    %295 = vector.extract_strided_slice %287 {offsets = [0, 64], sizes = [8, 32], strides = [1, 1]} : vector<8x96xf32> to vector<8x32xf32>
    %296 = math.tanh %294 : vector<8x32xf32>
    %297 = arith.mulf %295, %296 : vector<8x32xf32>
    %c2_141 = arith.constant 2 : index
    %c0_142 = arith.constant 0 : index
    %c0_143 = arith.constant 0 : index
    %298 = vector.load %arg13[%c2_141, %c0_142, %c0_143] : memref<8x8x32xf32, #tpu.memory_space<vmem>>, vector<1x8x32xf32>
    %299 = vector.shape_cast %298 : vector<1x8x32xf32> to vector<8x32xf32>
    %300 = vector.shape_cast %297 : vector<8x32xf32> to vector<1x8x32xf32>
    tpu.vector_store %arg13[%c2_141, %c0_142, %c0_143], %300 {strides = array<i32>} : memref<8x8x32xf32, #tpu.memory_space<vmem>>, vector<1x8x32xf32>,
    %c3_144 = arith.constant 3 : index
    %c0_145 = arith.constant 0 : index
    %c0_146 = arith.constant 0 : index
    %301 = vector.load %arg12[%c3_144, %c0_145, %c0_146] : memref<8x8x128xf32, #tpu.memory_space<vmem>>, vector<1x8x128xf32>
    %302 = vector.shape_cast %301 : vector<1x8x128xf32> to vector<8x128xf32>
    %c0_147 = arith.constant 0 : index
    %c0_148 = arith.constant 0 : index
    %303 = vector.load %arg7[%c0_147, %c0_148] : memref<32x128xf32, #tpu.memory_space<vmem>>, vector<32x128xf32>
    %cst_149 = arith.constant dense<0.000000e+00> : vector<8x128xf32>
    %304 = tpu.matmul %297, %303, %cst_149 {dimension_numbers = #tpu.dot_dimension_numbers<[1], [0], [0], [1], [0, 0, 1, 1], [], []>} : vector<8x32xf32>, vector<32x128xf32>, vector<8x128xf32> -> vector<8x128xf32>
    %305 = arith.addf %302, %304 : vector<8x128xf32>
    %306 = vector.extract_strided_slice %305 {offsets = [0, 0], sizes = [8, 96], strides = [1, 1]} : vector<8x128xf32> to vector<8x96xf32>
    %307 = arith.negf %306 : vector<8x96xf32>
    %308 = math.exp %307 : vector<8x96xf32>
    %cst_150 = arith.constant 1.000000e+00 : f32
    %309 = vector.broadcast %cst_150 : f32 to vector<8x96xf32>
    %310 = arith.addf %309, %308 : vector<8x96xf32>
    %311 = arith.divf %309, %310 : vector<8x96xf32>
    %312 = vector.extract_strided_slice %305 {offsets = [0, 96], sizes = [8, 32], strides = [1, 1]} : vector<8x128xf32> to vector<8x32xf32>
    %313 = math.tanh %312 : vector<8x32xf32>
    %314 = vector.extract_strided_slice %311 {offsets = [0, 32], sizes = [8, 32], strides = [1, 1]} : vector<8x96xf32> to vector<8x32xf32>
    %315 = arith.mulf %314, %294 : vector<8x32xf32>
    %316 = vector.extract_strided_slice %311 {offsets = [0, 0], sizes = [8, 32], strides = [1, 1]} : vector<8x96xf32> to vector<8x32xf32>
    %317 = arith.mulf %316, %313 : vector<8x32xf32>
    %318 = arith.addf %315, %317 : vector<8x32xf32>
    %319 = vector.extract_strided_slice %311 {offsets = [0, 64], sizes = [8, 32], strides = [1, 1]} : vector<8x96xf32> to vector<8x32xf32>
    %320 = math.tanh %318 : vector<8x32xf32>
    %321 = arith.mulf %319, %320 : vector<8x32xf32>
    %c3_151 = arith.constant 3 : index
    %c0_152 = arith.constant 0 : index
    %c0_153 = arith.constant 0 : index
    %322 = vector.load %arg13[%c3_151, %c0_152, %c0_153] : memref<8x8x32xf32, #tpu.memory_space<vmem>>, vector<1x8x32xf32>
    %323 = vector.shape_cast %322 : vector<1x8x32xf32> to vector<8x32xf32>
    %324 = vector.shape_cast %321 : vector<8x32xf32> to vector<1x8x32xf32>
    tpu.vector_store %arg13[%c3_151, %c0_152, %c0_153], %324 {strides = array<i32>} : memref<8x8x32xf32, #tpu.memory_space<vmem>>, vector<1x8x32xf32>,
    %c4_154 = arith.constant 4 : index
    %c0_155 = arith.constant 0 : index
    %c0_156 = arith.constant 0 : index
    %325 = vector.load %arg12[%c4_154, %c0_155, %c0_156] : memref<8x8x128xf32, #tpu.memory_space<vmem>>, vector<1x8x128xf32>
    %326 = vector.shape_cast %325 : vector<1x8x128xf32> to vector<8x128xf32>
    %c0_157 = arith.constant 0 : index
    %c0_158 = arith.constant 0 : index
    %327 = vector.load %arg7[%c0_157, %c0_158] : memref<32x128xf32, #tpu.memory_space<vmem>>, vector<32x128xf32>
    %cst_159 = arith.constant dense<0.000000e+00> : vector<8x128xf32>
    %328 = tpu.matmul %321, %327, %cst_159 {dimension_numbers = #tpu.dot_dimension_numbers<[1], [0], [0], [1], [0, 0, 1, 1], [], []>} : vector<8x32xf32>, vector<32x128xf32>, vector<8x128xf32> -> vector<8x128xf32>
    %329 = arith.addf %326, %328 : vector<8x128xf32>
    %330 = vector.extract_strided_slice %329 {offsets = [0, 0], sizes = [8, 96], strides = [1, 1]} : vector<8x128xf32> to vector<8x96xf32>
    %331 = arith.negf %330 : vector<8x96xf32>
    %332 = math.exp %331 : vector<8x96xf32>
    %cst_160 = arith.constant 1.000000e+00 : f32
    %333 = vector.broadcast %cst_160 : f32 to vector<8x96xf32>
    %334 = arith.addf %333, %332 : vector<8x96xf32>
    %335 = arith.divf %333, %334 : vector<8x96xf32>
    %336 = vector.extract_strided_slice %329 {offsets = [0, 96], sizes = [8, 32], strides = [1, 1]} : vector<8x128xf32> to vector<8x32xf32>
    %337 = math.tanh %336 : vector<8x32xf32>
    %338 = vector.extract_strided_slice %335 {offsets = [0, 32], sizes = [8, 32], strides = [1, 1]} : vector<8x96xf32> to vector<8x32xf32>
    %339 = arith.mulf %338, %318 : vector<8x32xf32>
    %340 = vector.extract_strided_slice %335 {offsets = [0, 0], sizes = [8, 32], strides = [1, 1]} : vector<8x96xf32> to vector<8x32xf32>
    %341 = arith.mulf %340, %337 : vector<8x32xf32>
    %342 = arith.addf %339, %341 : vector<8x32xf32>
    %343 = vector.extract_strided_slice %335 {offsets = [0, 64], sizes = [8, 32], strides = [1, 1]} : vector<8x96xf32> to vector<8x32xf32>
    %344 = math.tanh %342 : vector<8x32xf32>
    %345 = arith.mulf %343, %344 : vector<8x32xf32>
    %c4_161 = arith.constant 4 : index
    %c0_162 = arith.constant 0 : index
    %c0_163 = arith.constant 0 : index
    %346 = vector.load %arg13[%c4_161, %c0_162, %c0_163] : memref<8x8x32xf32, #tpu.memory_space<vmem>>, vector<1x8x32xf32>
    %347 = vector.shape_cast %346 : vector<1x8x32xf32> to vector<8x32xf32>
    %348 = vector.shape_cast %345 : vector<8x32xf32> to vector<1x8x32xf32>
    tpu.vector_store %arg13[%c4_161, %c0_162, %c0_163], %348 {strides = array<i32>} : memref<8x8x32xf32, #tpu.memory_space<vmem>>, vector<1x8x32xf32>,
    %c5_164 = arith.constant 5 : index
    %c0_165 = arith.constant 0 : index
    %c0_166 = arith.constant 0 : index
    %349 = vector.load %arg12[%c5_164, %c0_165, %c0_166] : memref<8x8x128xf32, #tpu.memory_space<vmem>>, vector<1x8x128xf32>
    %350 = vector.shape_cast %349 : vector<1x8x128xf32> to vector<8x128xf32>
    %c0_167 = arith.constant 0 : index
    %c0_168 = arith.constant 0 : index
    %351 = vector.load %arg7[%c0_167, %c0_168] : memref<32x128xf32, #tpu.memory_space<vmem>>, vector<32x128xf32>
    %cst_169 = arith.constant dense<0.000000e+00> : vector<8x128xf32>
    %352 = tpu.matmul %345, %351, %cst_169 {dimension_numbers = #tpu.dot_dimension_numbers<[1], [0], [0], [1], [0, 0, 1, 1], [], []>} : vector<8x32xf32>, vector<32x128xf32>, vector<8x128xf32> -> vector<8x128xf32>
    %353 = arith.addf %350, %352 : vector<8x128xf32>
    %354 = vector.extract_strided_slice %353 {offsets = [0, 0], sizes = [8, 96], strides = [1, 1]} : vector<8x128xf32> to vector<8x96xf32>
    %355 = arith.negf %354 : vector<8x96xf32>
    %356 = math.exp %355 : vector<8x96xf32>
    %cst_170 = arith.constant 1.000000e+00 : f32
    %357 = vector.broadcast %cst_170 : f32 to vector<8x96xf32>
    %358 = arith.addf %357, %356 : vector<8x96xf32>
    %359 = arith.divf %357, %358 : vector<8x96xf32>
    %360 = vector.extract_strided_slice %353 {offsets = [0, 96], sizes = [8, 32], strides = [1, 1]} : vector<8x128xf32> to vector<8x32xf32>
    %361 = math.tanh %360 : vector<8x32xf32>
    %362 = vector.extract_strided_slice %359 {offsets = [0, 32], sizes = [8, 32], strides = [1, 1]} : vector<8x96xf32> to vector<8x32xf32>
    %363 = arith.mulf %362, %342 : vector<8x32xf32>
    %364 = vector.extract_strided_slice %359 {offsets = [0, 0], sizes = [8, 32], strides = [1, 1]} : vector<8x96xf32> to vector<8x32xf32>
    %365 = arith.mulf %364, %361 : vector<8x32xf32>
    %366 = arith.addf %363, %365 : vector<8x32xf32>
    %367 = vector.extract_strided_slice %359 {offsets = [0, 64], sizes = [8, 32], strides = [1, 1]} : vector<8x96xf32> to vector<8x32xf32>
    %368 = math.tanh %366 : vector<8x32xf32>
    %369 = arith.mulf %367, %368 : vector<8x32xf32>
    %c5_171 = arith.constant 5 : index
    %c0_172 = arith.constant 0 : index
    %c0_173 = arith.constant 0 : index
    %370 = vector.load %arg13[%c5_171, %c0_172, %c0_173] : memref<8x8x32xf32, #tpu.memory_space<vmem>>, vector<1x8x32xf32>
    %371 = vector.shape_cast %370 : vector<1x8x32xf32> to vector<8x32xf32>
    %372 = vector.shape_cast %369 : vector<8x32xf32> to vector<1x8x32xf32>
    tpu.vector_store %arg13[%c5_171, %c0_172, %c0_173], %372 {strides = array<i32>} : memref<8x8x32xf32, #tpu.memory_space<vmem>>, vector<1x8x32xf32>,
    %c6_174 = arith.constant 6 : index
    %c0_175 = arith.constant 0 : index
    %c0_176 = arith.constant 0 : index
    %373 = vector.load %arg12[%c6_174, %c0_175, %c0_176] : memref<8x8x128xf32, #tpu.memory_space<vmem>>, vector<1x8x128xf32>
    %374 = vector.shape_cast %373 : vector<1x8x128xf32> to vector<8x128xf32>
    %c0_177 = arith.constant 0 : index
    %c0_178 = arith.constant 0 : index
    %375 = vector.load %arg7[%c0_177, %c0_178] : memref<32x128xf32, #tpu.memory_space<vmem>>, vector<32x128xf32>
    %cst_179 = arith.constant dense<0.000000e+00> : vector<8x128xf32>
    %376 = tpu.matmul %369, %375, %cst_179 {dimension_numbers = #tpu.dot_dimension_numbers<[1], [0], [0], [1], [0, 0, 1, 1], [], []>} : vector<8x32xf32>, vector<32x128xf32>, vector<8x128xf32> -> vector<8x128xf32>
    %377 = arith.addf %374, %376 : vector<8x128xf32>
    %378 = vector.extract_strided_slice %377 {offsets = [0, 0], sizes = [8, 96], strides = [1, 1]} : vector<8x128xf32> to vector<8x96xf32>
    %379 = arith.negf %378 : vector<8x96xf32>
    %380 = math.exp %379 : vector<8x96xf32>
    %cst_180 = arith.constant 1.000000e+00 : f32
    %381 = vector.broadcast %cst_180 : f32 to vector<8x96xf32>
    %382 = arith.addf %381, %380 : vector<8x96xf32>
    %383 = arith.divf %381, %382 : vector<8x96xf32>
    %384 = vector.extract_strided_slice %377 {offsets = [0, 96], sizes = [8, 32], strides = [1, 1]} : vector<8x128xf32> to vector<8x32xf32>
    %385 = math.tanh %384 : vector<8x32xf32>
    %386 = vector.extract_strided_slice %383 {offsets = [0, 32], sizes = [8, 32], strides = [1, 1]} : vector<8x96xf32> to vector<8x32xf32>
    %387 = arith.mulf %386, %366 : vector<8x32xf32>
    %388 = vector.extract_strided_slice %383 {offsets = [0, 0], sizes = [8, 32], strides = [1, 1]} : vector<8x96xf32> to vector<8x32xf32>
    %389 = arith.mulf %388, %385 : vector<8x32xf32>
    %390 = arith.addf %387, %389 : vector<8x32xf32>
    %391 = vector.extract_strided_slice %383 {offsets = [0, 64], sizes = [8, 32], strides = [1, 1]} : vector<8x96xf32> to vector<8x32xf32>
    %392 = math.tanh %390 : vector<8x32xf32>
    %393 = arith.mulf %391, %392 : vector<8x32xf32>
    %c6_181 = arith.constant 6 : index
    %c0_182 = arith.constant 0 : index
    %c0_183 = arith.constant 0 : index
    %394 = vector.load %arg13[%c6_181, %c0_182, %c0_183] : memref<8x8x32xf32, #tpu.memory_space<vmem>>, vector<1x8x32xf32>
    %395 = vector.shape_cast %394 : vector<1x8x32xf32> to vector<8x32xf32>
    %396 = vector.shape_cast %393 : vector<8x32xf32> to vector<1x8x32xf32>
    tpu.vector_store %arg13[%c6_181, %c0_182, %c0_183], %396 {strides = array<i32>} : memref<8x8x32xf32, #tpu.memory_space<vmem>>, vector<1x8x32xf32>,
    %c7_184 = arith.constant 7 : index
    %c0_185 = arith.constant 0 : index
    %c0_186 = arith.constant 0 : index
    %397 = vector.load %arg12[%c7_184, %c0_185, %c0_186] : memref<8x8x128xf32, #tpu.memory_space<vmem>>, vector<1x8x128xf32>
    %398 = vector.shape_cast %397 : vector<1x8x128xf32> to vector<8x128xf32>
    %c0_187 = arith.constant 0 : index
    %c0_188 = arith.constant 0 : index
    %399 = vector.load %arg7[%c0_187, %c0_188] : memref<32x128xf32, #tpu.memory_space<vmem>>, vector<32x128xf32>
    %cst_189 = arith.constant dense<0.000000e+00> : vector<8x128xf32>
    %400 = tpu.matmul %393, %399, %cst_189 {dimension_numbers = #tpu.dot_dimension_numbers<[1], [0], [0], [1], [0, 0, 1, 1], [], []>} : vector<8x32xf32>, vector<32x128xf32>, vector<8x128xf32> -> vector<8x128xf32>
    %401 = arith.addf %398, %400 : vector<8x128xf32>
    %402 = vector.extract_strided_slice %401 {offsets = [0, 0], sizes = [8, 96], strides = [1, 1]} : vector<8x128xf32> to vector<8x96xf32>
    %403 = arith.negf %402 : vector<8x96xf32>
    %404 = math.exp %403 : vector<8x96xf32>
    %cst_190 = arith.constant 1.000000e+00 : f32
    %405 = vector.broadcast %cst_190 : f32 to vector<8x96xf32>
    %406 = arith.addf %405, %404 : vector<8x96xf32>
    %407 = arith.divf %405, %406 : vector<8x96xf32>
    %408 = vector.extract_strided_slice %401 {offsets = [0, 96], sizes = [8, 32], strides = [1, 1]} : vector<8x128xf32> to vector<8x32xf32>
    %409 = math.tanh %408 : vector<8x32xf32>
    %410 = vector.extract_strided_slice %407 {offsets = [0, 32], sizes = [8, 32], strides = [1, 1]} : vector<8x96xf32> to vector<8x32xf32>
    %411 = arith.mulf %410, %390 : vector<8x32xf32>
    %412 = vector.extract_strided_slice %407 {offsets = [0, 0], sizes = [8, 32], strides = [1, 1]} : vector<8x96xf32> to vector<8x32xf32>
    %413 = arith.mulf %412, %409 : vector<8x32xf32>
    %414 = arith.addf %411, %413 : vector<8x32xf32>
    %415 = vector.extract_strided_slice %407 {offsets = [0, 64], sizes = [8, 32], strides = [1, 1]} : vector<8x96xf32> to vector<8x32xf32>
    %416 = math.tanh %414 : vector<8x32xf32>
    %417 = arith.mulf %415, %416 : vector<8x32xf32>
    %c7_191 = arith.constant 7 : index
    %c0_192 = arith.constant 0 : index
    %c0_193 = arith.constant 0 : index
    %418 = vector.load %arg13[%c7_191, %c0_192, %c0_193] : memref<8x8x32xf32, #tpu.memory_space<vmem>>, vector<1x8x32xf32>
    %419 = vector.shape_cast %418 : vector<1x8x32xf32> to vector<8x32xf32>
    %420 = vector.shape_cast %417 : vector<8x32xf32> to vector<1x8x32xf32>
    tpu.vector_store %arg13[%c7_191, %c0_192, %c0_193], %420 {strides = array<i32>} : memref<8x8x32xf32, #tpu.memory_space<vmem>>, vector<1x8x32xf32>,
    %c1_194 = arith.constant 1 : index
    %c0_195 = arith.constant 0 : index
    %c0_196 = arith.constant 0 : index
    %421 = vector.load %arg14[%c1_194, %c0_195, %c0_196] : memref<2x8x32xf32, #tpu.memory_space<vmem>>, vector<1x8x32xf32>
    %422 = vector.shape_cast %421 : vector<1x8x32xf32> to vector<8x32xf32>
    %423 = vector.shape_cast %417 : vector<8x32xf32> to vector<1x8x32xf32>
    tpu.vector_store %arg14[%c1_194, %c0_195, %c0_196], %423 {strides = array<i32>} : memref<2x8x32xf32, #tpu.memory_space<vmem>>, vector<1x8x32xf32>,
    %c1_197 = arith.constant 1 : index
    %c0_198 = arith.constant 0 : index
    %c0_199 = arith.constant 0 : index
    %424 = vector.load %arg15[%c1_197, %c0_198, %c0_199] : memref<2x8x32xf32, #tpu.memory_space<vmem>>, vector<1x8x32xf32>
    %425 = vector.shape_cast %424 : vector<1x8x32xf32> to vector<8x32xf32>
    %426 = vector.shape_cast %414 : vector<8x32xf32> to vector<1x8x32xf32>
    tpu.vector_store %arg15[%c1_197, %c0_198, %c0_199], %426 {strides = array<i32>} : memref<2x8x32xf32, #tpu.memory_space<vmem>>, vector<1x8x32xf32>,
    %427 = tpu.iota {dimensions = array<i32: 0>} : vector<8x8x1xi32>
    %428 = vector.broadcast %4 : i32 to vector<8x8x1xi32>
    %429 = arith.addi %427, %428 : vector<8x8x1xi32>
    %430 = vector.shape_cast %3 : vector<8x1xi32> to vector<1x8x1xi32>
    %c1_i32 = arith.constant 1 : i32
    %431 = vector.broadcast %c1_i32 : i32 to vector<8x8x1xi32>
    %432 = arith.addi %429, %431 : vector<8x8x1xi32>
    %433 = vector.broadcast %430 : vector<1x8x1xi32> to vector<8x8x1xi32>
    %434 = arith.cmpi eq, %433, %432 : vector<8x8x1xi32>
    %c0_200 = arith.constant 0 : index
    %c0_201 = arith.constant 0 : index
    %c0_202 = arith.constant 0 : index
    %435 = vector.load %arg13[%c0_200, %c0_201, %c0_202] : memref<8x8x32xf32, #tpu.memory_space<vmem>>, vector<8x8x32xf32>
    %cst_203 = arith.constant 0.000000e+00 : f32
    %436 = vector.shape_cast %434 : vector<8x8x1xi1> to vector<8x8x1xi1>
    %437 = vector.broadcast %436 : vector<8x8x1xi1> to vector<8x8x32xi1>
    %438 = vector.broadcast %cst_203 : f32 to vector<8x8x32xf32>
    %439 = arith.select %437, %435, %438 : vector<8x8x32xi1>, vector<8x8x32xf32>
    %cst_204 = arith.constant dense<0.000000e+00> : vector<8x32xf32>
    %440 = vector.multi_reduction <add>, %439, %cst_204 [0] : vector<8x8x32xf32> to vector<8x32xf32>
    %441 = vector.broadcast %4 : i32 to vector<8x1xi32>
    %442 = arith.cmpi sgt, %3, %441 : vector<8x1xi32>
    %c8_i32_205 = arith.constant 8 : i32
    %443 = arith.addi %4, %c8_i32_205 : i32
    %444 = vector.broadcast %443 : i32 to vector<8x1xi32>
    %445 = arith.cmpi sle, %3, %444 : vector<8x1xi32>
    %446 = arith.andi %442, %445 : vector<8x1xi1>
    %c0_206 = arith.constant 0 : index
    %c0_207 = arith.constant 0 : index
    %447 = vector.load %arg16[%c0_206, %c0_207] : memref<8x32xf32, #tpu.memory_space<vmem>>, vector<8x32xf32>
    %448 = vector.shape_cast %446 : vector<8x1xi1> to vector<8x1xi1>
    %449 = vector.broadcast %448 : vector<8x1xi1> to vector<8x32xi1>
    %450 = arith.select %449, %440, %447 : vector<8x32xi1>, vector<8x32xf32>
    %c0_208 = arith.constant 0 : index
    %c0_209 = arith.constant 0 : index
    %451 = vector.load %arg16[%c0_208, %c0_209] : memref<8x32xf32, #tpu.memory_space<vmem>>, vector<8x32xf32>
    tpu.vector_store %arg16[%c0_208, %c0_209], %450 {strides = array<i32>} : memref<8x32xf32, #tpu.memory_space<vmem>>, vector<8x32xf32>,
    %c0_i32_210 = arith.constant 0 : i32
    %452 = arith.cmpi eq, %arg0, %c0_i32_210 : i32
    %453 = arith.extui %452 : i1 to i32
    %c0_i32_211 = arith.constant 0 : i32
    %454 = arith.cmpi ne, %453, %c0_i32_211 : i32
    scf.if %454 {
      %c0_212 = arith.constant 0 : index
      %c0_213 = arith.constant 0 : index
      %455 = vector.load %arg16[%c0_212, %c0_213] : memref<8x32xf32, #tpu.memory_space<vmem>>, vector<8x32xf32>
      %c0_214 = arith.constant 0 : index
      %c0_215 = arith.constant 0 : index
      %456 = vector.load %arg9[%c0_214, %c0_215] : memref<32x128xf32, #tpu.memory_space<vmem>>, vector<32x128xf32>
      %cst_216 = arith.constant dense<0.000000e+00> : vector<8x128xf32>
      %457 = tpu.matmul %455, %456, %cst_216 {dimension_numbers = #tpu.dot_dimension_numbers<[1], [0], [0], [1], [0, 0, 1, 1], [], []>} : vector<8x32xf32>, vector<32x128xf32>, vector<8x128xf32> -> vector<8x128xf32>
      %c0_217 = arith.constant 0 : index
      %c0_218 = arith.constant 0 : index
      %458 = vector.load %arg10[%c0_217, %c0_218] : memref<1x128xf32, #tpu.memory_space<vmem>>, vector<1x128xf32>
      %459 = vector.broadcast %458 : vector<1x128xf32> to vector<8x128xf32>
      %460 = arith.addf %457, %459 : vector<8x128xf32>
      %c0_219 = arith.constant 0 : index
      %c0_220 = arith.constant 0 : index
      %461 = vector.load %arg11[%c0_219, %c0_220] : memref<8x128xf32, #tpu.memory_space<vmem>>, vector<8x128xf32>
      tpu.vector_store %arg11[%c0_219, %c0_220], %460 {strides = array<i32>} : memref<8x128xf32, #tpu.memory_space<vmem>>, vector<8x128xf32>,
    } else {
    }
    return
  }
  func.func @transform_0(%arg0: i32) -> (i32, i32, i32) {
    %c0_i32 = arith.constant 0 : i32
    %c0_i32_0 = arith.constant 0 : i32
    %c0_i32_1 = arith.constant 0 : i32
    return %arg0, %c0_i32, %c0_i32_0 : i32, i32, i32
  }
  func.func @transform_1(%arg0: i32) -> (i32, i32) {
    %c0_i32 = arith.constant 0 : i32
    %c0_i32_0 = arith.constant 0 : i32
    %c0_i32_1 = arith.constant 0 : i32
    return %c0_i32, %c0_i32_0 : i32, i32
  }
  func.func @transform_2(%arg0: i32) -> (i32, i32) {
    %c0_i32 = arith.constant 0 : i32
    %c0_i32_0 = arith.constant 0 : i32
    %c0_i32_1 = arith.constant 0 : i32
    return %c0_i32, %c0_i32_0 : i32, i32
  }
  func.func @transform_3(%arg0: i32) -> (i32, i32) {
    %c0_i32 = arith.constant 0 : i32
    %c0_i32_0 = arith.constant 0 : i32
    %c0_i32_1 = arith.constant 0 : i32
    return %c0_i32, %c0_i32_0 : i32, i32
  }
  func.func @transform_4(%arg0: i32) -> (i32, i32) {
    %c0_i32 = arith.constant 0 : i32
    %c0_i32_0 = arith.constant 0 : i32
    %c0_i32_1 = arith.constant 0 : i32
    return %c0_i32, %c0_i32_0 : i32, i32
  }
  func.func @transform_5(%arg0: i32) -> (i32, i32) {
    %c0_i32 = arith.constant 0 : i32
    %c0_i32_0 = arith.constant 0 : i32
    %c0_i32_1 = arith.constant 0 : i32
    return %c0_i32, %c0_i32_0 : i32, i32
  }
  func.func @transform_6(%arg0: i32) -> (i32, i32) {
    %c0_i32 = arith.constant 0 : i32
    %c0_i32_0 = arith.constant 0 : i32
    %c0_i32_1 = arith.constant 0 : i32
    return %c0_i32, %c0_i32_0 : i32, i32
  }
  func.func @transform_7(%arg0: i32) -> (i32, i32) {
    %c0_i32 = arith.constant 0 : i32
    %c0_i32_0 = arith.constant 0 : i32
    %c0_i32_1 = arith.constant 0 : i32
    return %c0_i32, %c0_i32_0 : i32, i32
  }
  func.func @transform_8(%arg0: i32) -> (i32, i32) {
    %c0_i32 = arith.constant 0 : i32
    %c0_i32_0 = arith.constant 0 : i32
    %c0_i32_1 = arith.constant 0 : i32
    return %c0_i32, %c0_i32_0 : i32, i32
  }
  func.func @transform_9(%arg0: i32) -> (i32, i32) {
    %c0_i32 = arith.constant 0 : i32
    %c0_i32_0 = arith.constant 0 : i32
    %c0_i32_1 = arith.constant 0 : i32
    return %c0_i32, %c0_i32_0 : i32, i32
  }
  func.func @transform_10(%arg0: i32) -> (i32, i32) {
    %c0_i32 = arith.constant 0 : i32
    %c0_i32_0 = arith.constant 0 : i32
    %c0_i32_1 = arith.constant 0 : i32
    return %c0_i32, %c0_i32_0 : i32, i32
  }
}

</mosaic_0001>

<llo_original>
// kernel: tpu_custom_call.1
$region0: #{tpu_custom_call.1}
  #allocation0 [shape = 'u32[]', space=smem, size = 0x4, offset = 0x4, fixed_abs, tag = 'smem constant byte address 0x4 - core index']
  #allocation1 [shape = 'u32[144,128]{1,0:T(1,128)}', space=vmem, size = 0x12000, scoped, tag = 'internal scratch']
  #allocation2 [shape = 'f32[8,8,128]{2,1,0:T(8,128)}', space=vmem, size = 0x8000, scoped, tag = 'scratch operand']
  #allocation3 [shape = 'f32[8,8,32]{2,1,0:T(8,128)}', space=vmem, size = 0x8000, scoped, tag = 'scratch operand']
  #allocation4 [shape = 'f32[2,8,32]{2,1,0:T(8,128)}', space=vmem, size = 0x2000, scoped, tag = 'scratch operand']
  #allocation5 [shape = 'f32[2,8,32]{2,1,0:T(8,128)}', space=vmem, size = 0x2000, scoped, tag = 'scratch operand']
  #allocation6 [shape = 'f32[8,32]{1,0:T(8,128)}', space=vmem, size = 0x1000, scoped, tag = 'scratch operand']
  %s0 = inlined_call_operand.hbm [shape: f32[8,8,8], index: 0, kind: input, shape index: {}]
  %s1 = inlined_call_operand.vmem [shape: s32[8,1], index: 1, kind: input, shape index: {}]
  %s2 = inlined_call_operand.hbm [shape: f32[8,128], index: 2, kind: input, shape index: {}]
  %s3 = inlined_call_operand.hbm [shape: f32[32,128], index: 3, kind: input, shape index: {}]
  %s4 = inlined_call_operand.vmem [shape: f32[1,128], index: 4, kind: input, shape index: {}]
  %s5 = inlined_call_operand.hbm [shape: f32[32,128], index: 5, kind: input, shape index: {}]
  %s6 = inlined_call_operand.hbm [shape: f32[32,128], index: 6, kind: input, shape index: {}]
  %s7 = inlined_call_operand.vmem [shape: f32[1,128], index: 7, kind: input, shape index: {}]
  %s8 = inlined_call_operand.vmem [shape: f32[32,128], index: 8, kind: input, shape index: {}]
  %s9 = inlined_call_operand.vmem [shape: f32[1,128], index: 9, kind: input, shape index: {}]
  %s10 = inlined_call_operand.hbm [shape: f32[8,128], index: 10, kind: output, shape index: {}]
  %s11 = sld [smem:[#allocation0]]
  $region78: #{tpu_custom_call.1} parent=0
    _
  %s13 = ssub.s32 1, %s11
  %s14 = scalar_select 0, %s13, %s11
  $region1: #{tpu_custom_call.1} parent=0
    #allocation7 [shape = 'u8[32768]{0}', space=vmem, size = 0x8000, scoped, tag = 'input window, operand 0, single buffered']
    #allocation8 [shape = 's32[1]{0}', space=sflag, size = 0x4, scoped, tag = 'scoped memory for tpu_custom_call.1']
    #allocation9 [shape = 's32[1]{0}', space=sflag, size = 0x4, scoped, tag = 'scoped memory for tpu_custom_call.1']
    #allocation10 [shape = 'u8[4096]{0}', space=vmem, size = 0x1000, scoped, tag = 'input window, operand 2, single buffered']
    #allocation11 [shape = 's32[1]{0}', space=sflag, size = 0x4, scoped, tag = 'scoped memory for tpu_custom_call.1']
    #allocation12 [shape = 'u8[16384]{0}', space=vmem, size = 0x4000, scoped, tag = 'input window, operand 3, single buffered']
    #allocation13 [shape = 'u8[16384]{0}', space=vmem, size = 0x4000, scoped, tag = 'input window, operand 5, single buffered']
    #allocation14 [shape = 's32[1]{0}', space=sflag, size = 0x4, scoped, tag = 'scoped memory for tpu_custom_call.1']
    #allocation15 [shape = 'u8[16384]{0}', space=vmem, size = 0x4000, scoped, tag = 'input window, operand 6, single buffered']
    #allocation16 [shape = 'u8[4096]{0}', space=vmem, size = 0x1000, scoped, tag = 'output window, operand 0, single buffered']
    %15 = vsyncpa [#allocation8], 0
    %16 = vsyncpa [#allocation11], 0
    %17 = vsyncpa [#allocation14], 0
    %18 = vsyncpa [#allocation9], 0
    // Predicated region
    $region2: #{tpu_custom_call.1} parent=1 // pred_check
      _
    $region3: #{tpu_custom_call.1} parent=1 // pred_check_branch
      %20 = sbr.rel (0) target = $region5
    $region4: #{tpu_custom_call.1} parent=1 // pred_region
      %s22 = ssub.s32 1024, 1024
      %23 = vsyncadd [#allocation8], %s22
      %s24 = sshll.u32 [#allocation7], 4
      %s25 = int_to_ptr.vmem [resolvable:$true] %s24
      %30 = dma.hbm_to_vmem [thread:$0]  %s0, 1024, %s25, [#allocation8], 128, 128, 8
    $region5: #{tpu_custom_call.1} parent=1 // pred_fallthru
      _
    // Predicated region
    $region6: #{tpu_custom_call.1} parent=1 // pred_check
      _
    $region7: #{tpu_custom_call.1} parent=1 // pred_check_branch
      %32 = sbr.rel (0) target = $region9
    $region8: #{tpu_custom_call.1} parent=1 // pred_region
      _
    $region9: #{tpu_custom_call.1} parent=1 // pred_fallthru
      _
    // Predicated region
    $region10: #{tpu_custom_call.1} parent=1 // pred_check
      _
    $region11: #{tpu_custom_call.1} parent=1 // pred_check_branch
      %34 = sbr.rel (0) target = $region13
    $region12: #{tpu_custom_call.1} parent=1 // pred_region
      %s36 = ssub.s32 128, 128
      %37 = vsyncadd [#allocation11], %s36
      %s39 = sshll.u32 [#allocation10], 4
      %s40 = int_to_ptr.vmem [resolvable:$true] %s39
      %42 = dma.hbm_to_vmem [thread:$0]  %s2, 128, %s40, [#allocation11]
    $region13: #{tpu_custom_call.1} parent=1 // pred_fallthru
      _
    // Predicated region
    $region14: #{tpu_custom_call.1} parent=1 // pred_check
      _
    $region15: #{tpu_custom_call.1} parent=1 // pred_check_branch
      %44 = sbr.rel (0) target = $region17
    $region16: #{tpu_custom_call.1} parent=1 // pred_region
      %s46 = ssub.s32 512, 512
      %47 = vsyncadd [#allocation11], %s46
      %s48 = sshll.u32 [#allocation12], 4
      %s49 = int_to_ptr.vmem [resolvable:$true] %s48
      %54 = dma.hbm_to_vmem [thread:$0]  %s3, 512, %s49, [#allocation11], 128, 128, 8
    $region17: #{tpu_custom_call.1} parent=1 // pred_fallthru
      _
    // Predicated region
    $region18: #{tpu_custom_call.1} parent=1 // pred_check
      _
    $region19: #{tpu_custom_call.1} parent=1 // pred_check_branch
      %56 = sbr.rel (0) target = $region21
    $region20: #{tpu_custom_call.1} parent=1 // pred_region
      _
    $region21: #{tpu_custom_call.1} parent=1 // pred_fallthru
      _
    // Predicated region
    $region22: #{tpu_custom_call.1} parent=1 // pred_check
      _
    $region23: #{tpu_custom_call.1} parent=1 // pred_check_branch
      %58 = sbr.rel (0) target = $region25
    $region24: #{tpu_custom_call.1} parent=1 // pred_region
      %s60 = ssub.s32 512, 512
      %61 = vsyncadd [#allocation14], %s60
      %s62 = sshll.u32 [#allocation13], 4
      %s63 = int_to_ptr.vmem [resolvable:$true] %s62
      %68 = dma.hbm_to_vmem [thread:$0]  %s5, 512, %s63, [#allocation14], 128, 128, 8
    $region25: #{tpu_custom_call.1} parent=1 // pred_fallthru
      _
    // Predicated region
    $region26: #{tpu_custom_call.1} parent=1 // pred_check
      _
    $region27: #{tpu_custom_call.1} parent=1 // pred_check_branch
      %70 = sbr.rel (0) target = $region29
    $region28: #{tpu_custom_call.1} parent=1 // pred_region
      %s72 = ssub.s32 512, 512
      %73 = vsyncadd [#allocation14], %s72
      %s74 = sshll.u32 [#allocation15], 4
      %s75 = int_to_ptr.vmem [resolvable:$true] %s74
      %80 = dma.hbm_to_vmem [thread:$0]  %s6, 512, %s75, [#allocation14], 128, 128, 8
    $region29: #{tpu_custom_call.1} parent=1 // pred_fallthru
      _
    // Predicated region
    $region30: #{tpu_custom_call.1} parent=1 // pred_check
      _
    $region31: #{tpu_custom_call.1} parent=1 // pred_check_branch
      %82 = sbr.rel (0) target = $region33
    $region32: #{tpu_custom_call.1} parent=1 // pred_region
      _
    $region33: #{tpu_custom_call.1} parent=1 // pred_fallthru
      _
    // Predicated region
    $region34: #{tpu_custom_call.1} parent=1 // pred_check
      _
    $region35: #{tpu_custom_call.1} parent=1 // pred_check_branch
      %84 = sbr.rel (0) target = $region37
    $region36: #{tpu_custom_call.1} parent=1 // pred_region
      _
    $region37: #{tpu_custom_call.1} parent=1 // pred_fallthru
      _
    // Predicated region
    $region38: #{tpu_custom_call.1} parent=1 // pred_check
      _
    $region39: #{tpu_custom_call.1} parent=1 // pred_check_branch
      %86 = sbr.rel (0) target = $region41
    $region40: #{tpu_custom_call.1} parent=1 // pred_region
      _
    $region41: #{tpu_custom_call.1} parent=1 // pred_fallthru
      _
    // Predicated region
    $region42: #{tpu_custom_call.1} parent=1 // pred_check
      _
    $region43: #{tpu_custom_call.1} parent=1 // pred_check_branch
      %88 = sbr.rel (0) target = $region45
    $region44: #{tpu_custom_call.1} parent=1 // pred_region
      %89 = dma.done [#allocation8], 1024
    $region45: #{tpu_custom_call.1} parent=1 // pred_fallthru
      _
    // Predicated region
    $region46: #{tpu_custom_call.1} parent=1 // pred_check
      _
    $region47: #{tpu_custom_call.1} parent=1 // pred_check_branch
      %91 = sbr.rel (0) target = $region49
    $region48: #{tpu_custom_call.1} parent=1 // pred_region
      %92 = dma.done [#allocation11], 128
    $region49: #{tpu_custom_call.1} parent=1 // pred_fallthru
      _
    // Predicated region
    $region50: #{tpu_custom_call.1} parent=1 // pred_check
      _
    $region51: #{tpu_custom_call.1} parent=1 // pred_check_branch
      %94 = sbr.rel (0) target = $region53
    $region52: #{tpu_custom_call.1} parent=1 // pred_region
      %95 = dma.done [#allocation11], 512
    $region53: #{tpu_custom_call.1} parent=1 // pred_fallthru
      _
    // Predicated region
    $region54: #{tpu_custom_call.1} parent=1 // pred_check
      _
    $region55: #{tpu_custom_call.1} parent=1 // pred_check_branch
      %97 = sbr.rel (0) target = $region57
    $region56: #{tpu_custom_call.1} parent=1 // pred_region
      %98 = dma.done [#allocation14], 512
    $region57: #{tpu_custom_call.1} parent=1 // pred_fallthru
      _
    // Predicated region
    $region58: #{tpu_custom_call.1} parent=1 // pred_check
      _
    $region59: #{tpu_custom_call.1} parent=1 // pred_check_branch
      %100 = sbr.rel (0) target = $region61
    $region60: #{tpu_custom_call.1} parent=1 // pred_region
      %101 = dma.done [#allocation14], 512
    $region61: #{tpu_custom_call.1} parent=1 // pred_fallthru
      _
    %p102 = scmp.eq.s32.totalorder 0, 0
    // Predicated region
    $region62: #{tpu_custom_call.1} parent=1 // pred_check
      %p103 = pneg %p102
    $region63: #{tpu_custom_call.1} parent=1 // pred_check_branch
      %105 = sbr.rel (%p103) target = $region65
    $region64: #{tpu_custom_call.1} parent=1 // pred_region
      %vm106 = vcmask 261120
      %107 = vst.msk [vmem:[#allocation4] sm:$0xff] %vm106, 0.0
      %108 = vst.msk [vmem:[#allocation4 + $0x8] sm:$0xff] %vm106, 0.0
      %109 = vst.msk [vmem:[#allocation5] sm:$0xff] %vm106, 0.0
      %110 = vst.msk [vmem:[#allocation5 + $0x8] sm:$0xff] %vm106, 0.0
      %111 = vst.msk [vmem:[#allocation6] sm:$0xff] %vm106, 0.0
    $region65: #{tpu_custom_call.1} parent=1 // pred_fallthru
      _
    %v112 = vld [vmem:[%s1] sm:$0xff]
    %s113 = smul.u32 0, 8
    %v114 = vld [vmem:[#allocation7] sm:$0xff]
    %v115 = vld [vmem:[#allocation7 + $0x8] sm:$0xff]
    %v116 = vld [vmem:[#allocation7 + $0x10] sm:$0xff]
    %v117 = vld [vmem:[#allocation7 + $0x18] sm:$0xff]
    %v118 = vld [vmem:[#allocation7 + $0x20] sm:$0xff]
    %v119 = vld [vmem:[#allocation7 + $0x28] sm:$0xff]
    %v120 = vld [vmem:[#allocation7 + $0x30] sm:$0xff]
    %v121 = vld [vmem:[#allocation7 + $0x38] sm:$0xff]
    %v122 = vld [vmem:[#allocation10] sm:$0xff]
    %v123 = vld [vmem:[%s4] sm:$0x1]
    %v125 = vlaneseq
    %v126 = vshrl.u32 %v125, 7
    %v127 = vsub.s32 0, %v126
    %v128 = vrot.slane %v123, %v127
    %vm130 = vcmask 64512
    %v132 = vsel %vm130, %v114, 0
    %v135 = vsel %vm130, %v115, 0
    %v138 = vsel %vm130, %v116, 0
    %v141 = vsel %vm130, %v117, 0
    %v144 = vsel %vm130, %v118, 0
    %v147 = vsel %vm130, %v119, 0
    %v150 = vsel %vm130, %v120, 0
    %v153 = vsel %vm130, %v121, 0
    %155 = vmatprep.subr.mxu0 0.0
    %156 = vmatpush1.msra.mxu0 %v122
    %157 = vmatprep.subr.mxu0 0.0
    %158 = vmatpush1.msra.mxu0 0.0
    %159 = vmatprep.subr.mxu0 0.0
    %160 = vmatpush1.msra.mxu0 0.0
    %161 = vmatprep.subr.mxu0 0.0
    %162 = vmatpush1.msra.mxu0 0.0
    %163 = vmatprep.subr.mxu0 0.0
    %164 = vmatpush1.msra.mxu0 0.0
    %165 = vmatprep.subr.mxu0 0.0
    %166 = vmatpush1.msra.mxu0 0.0
    %167 = vmatprep.subr.mxu0 0.0
    %168 = vmatpush1.msra.mxu0 0.0
    %169 = vmatprep.subr.mxu0 0.0
    %170 = vmatpush1.msra.mxu0 0.0
    %171 = vmatprep.subr.mxu0 0.0
    %172 = vmatpush1.msra.mxu0 0.0
    %173 = vmatprep.subr.mxu0 0.0
    %174 = vmatpush1.msra.mxu0 0.0
    %175 = vmatprep.subr.mxu0 0.0
    %176 = vmatpush1.msra.mxu0 0.0
    %177 = vmatprep.subr.mxu0 0.0
    %178 = vmatpush1.msra.mxu0 0.0
    %179 = vmatprep.subr.mxu0 0.0
    %180 = vmatpush1.msra.mxu0 0.0
    %181 = vmatprep.subr.mxu0 0.0
    %182 = vmatpush1.msra.mxu0 0.0
    %183 = vmatprep.subr.mxu0 0.0
    %184 = vmatpush1.msra.mxu0 0.0
    %185 = vmatprep.subr.mxu0 0.0
    %186 = vmatpush1.msra.mxu0 0.0
    %187 = vmatprep.subr.mxu0 0.0
    %188 = vmatpush1.msra.mxu0 0.0
    %189 = vmatprep.subr.mxu0 0.0
    %190 = vmatpush1.msra.mxu0 0.0
    %191 = vmatprep.subr.mxu0 0.0
    %192 = vmatpush1.msra.mxu0 0.0
    %193 = vmatprep.subr.mxu0 0.0
    %194 = vmatpush1.msra.mxu0 0.0
    %195 = vmatprep.subr.mxu0 0.0
    %196 = vmatpush1.msra.mxu0 0.0
    %197 = vmatprep.subr.mxu0 0.0
    %198 = vmatpush1.msra.mxu0 0.0
    %199 = vmatprep.subr.mxu0 0.0
    %200 = vmatpush1.msra.mxu0 0.0
    %201 = vmatprep.subr.mxu0 0.0
    %202 = vmatpush1.msra.mxu0 0.0
    %203 = vmatprep.subr.mxu0 0.0
    %204 = vmatpush1.msra.mxu0 0.0
    %205 = vmatprep.subr.mxu0 0.0
    %206 = vmatpush1.msra.mxu0 0.0
    %207 = vmatprep.subr.mxu0 0.0
    %208 = vmatpush1.msra.mxu0 0.0
    %209 = vmatprep.subr.mxu0 0.0
    %210 = vmatpush1.msra.mxu0 0.0
    %211 = vmatprep.subr.mxu0 0.0
    %212 = vmatpush1.msra.mxu0 0.0
    %213 = vmatprep.subr.mxu0 0.0
    %214 = vmatpush1.msra.mxu0 0.0
    %215 = vmatprep.subr.mxu0 0.0
    %216 = vmatpush1.msra.mxu0 0.0
    %217 = vmatprep.subr.mxu0 0.0
    %218 = vmatpush1.msra.mxu0 0.0
    %219 = vmatprep.mubr.f32.mxu0 0.0
    %220 = vmatmul.mubr.f32.gmra.mrb[0].mxu0 %v132
    %v221 = vpop.f32.mrb[0].mxu0
    %v222 = vadd.f32 %v128, %v221
    %v223 = vpop.f32.mrb[0].mxu0
    %224 = vmatprep.mubr.f32.mxu0 0.0
    %225 = vmatmul.mubr.f32.gmra.mrb[0].mxu0 %v135
    %v226 = vpop.f32.mrb[0].mxu0
    %v227 = vadd.f32 %v128, %v226
    %v228 = vpop.f32.mrb[0].mxu0
    %229 = vmatprep.mubr.f32.mxu0 0.0
    %230 = vmatmul.mubr.f32.gmra.mrb[0].mxu0 %v138
    %v231 = vpop.f32.mrb[0].mxu0
    %v232 = vadd.f32 %v128, %v231
    %v233 = vpop.f32.mrb[0].mxu0
    %234 = vmatprep.mubr.f32.mxu0 0.0
    %235 = vmatmul.mubr.f32.gmra.mrb[0].mxu0 %v141
    %v236 = vpop.f32.mrb[0].mxu0
    %v237 = vadd.f32 %v128, %v236
    %v238 = vpop.f32.mrb[0].mxu0
    %239 = vmatprep.mubr.f32.mxu0 0.0
    %240 = vmatmul.mubr.f32.gmra.mrb[0].mxu0 %v144
    %v241 = vpop.f32.mrb[0].mxu0
    %v242 = vadd.f32 %v128, %v241
    %v243 = vpop.f32.mrb[0].mxu0
    %244 = vmatprep.mubr.f32.mxu0 0.0
    %245 = vmatmul.mubr.f32.gmra.mrb[0].mxu0 %v147
    %v246 = vpop.f32.mrb[0].mxu0
    %v247 = vadd.f32 %v128, %v246
    %v248 = vpop.f32.mrb[0].mxu0
    %249 = vmatprep.mubr.f32.mxu0 0.0
    %250 = vmatmul.mubr.f32.gmra.mrb[0].mxu0 %v150
    %v251 = vpop.f32.mrb[0].mxu0
    %v252 = vadd.f32 %v128, %v251
    %v253 = vpop.f32.mrb[0].mxu0
    %254 = vmatprep.mubr.f32.mxu0 0.0
    %255 = vmatmul.mubr.f32.gmra.mrb[0].mxu0 %v153
    %v256 = vpop.f32.mrb[0].mxu0
    %v257 = vadd.f32 %v128, %v256
    %v258 = vpop.f32.mrb[0].mxu0
    %259 = vdwg.mxu0
    %260 = vst [vmem:[#allocation2] sm:$0xff] %v222
    %261 = vst [vmem:[#allocation2 + $0x8] sm:$0xff] %v227
    %262 = vst [vmem:[#allocation2 + $0x10] sm:$0xff] %v232
    %263 = vst [vmem:[#allocation2 + $0x18] sm:$0xff] %v237
    %264 = vst [vmem:[#allocation2 + $0x20] sm:$0xff] %v242
    %265 = vst [vmem:[#allocation2 + $0x28] sm:$0xff] %v247
    %266 = vst [vmem:[#allocation2 + $0x30] sm:$0xff] %v252
    %267 = vst [vmem:[#allocation2 + $0x38] sm:$0xff] %v257
    %v268 = vld [vmem:[#allocation4] sm:$0xff]
    %v269 = vld [vmem:[#allocation5] sm:$0xff]
    %v270 = vld [vmem:[#allocation2] sm:$0xff]
    %v271 = vld [vmem:[#allocation12] sm:$0xff]
    %v272 = vld [vmem:[#allocation12 + $0x8] sm:$0xff]
    %v273 = vld [vmem:[#allocation12 + $0x10] sm:$0xff]
    %v274 = vld [vmem:[#allocation12 + $0x18] sm:$0xff]
    %vm275 = vcmask 261120
    %v277 = vsel %vm275, %v268, 0
    %279 = vmatprep.subr.mxu0 0.0
    %280 = vmatpush1.msra.mxu0 %v271
    %281 = vmatprep.subr.mxu0 0.0
    %282 = vmatpush1.msra.mxu0 %v272
    %283 = vmatprep.subr.mxu0 0.0
    %284 = vmatpush1.msra.mxu0 %v273
    %285 = vmatprep.subr.mxu0 0.0
    %286 = vmatpush1.msra.mxu0 %v274
    %287 = vmatprep.subr.mxu0 0.0
    %288 = vmatpush1.msra.mxu0 0.0
    %289 = vmatprep.subr.mxu0 0.0
    %290 = vmatpush1.msra.mxu0 0.0
    %291 = vmatprep.subr.mxu0 0.0
    %292 = vmatpush1.msra.mxu0 0.0
    %293 = vmatprep.subr.mxu0 0.0
    %294 = vmatpush1.msra.mxu0 0.0
    %295 = vmatprep.subr.mxu0 0.0
    %296 = vmatpush1.msra.mxu0 0.0
    %297 = vmatprep.subr.mxu0 0.0
    %298 = vmatpush1.msra.mxu0 0.0
    %299 = vmatprep.subr.mxu0 0.0
    %300 = vmatpush1.msra.mxu0 0.0
    %301 = vmatprep.subr.mxu0 0.0
    %302 = vmatpush1.msra.mxu0 0.0
    %303 = vmatprep.subr.mxu0 0.0
    %304 = vmatpush1.msra.mxu0 0.0
    %305 = vmatprep.subr.mxu0 0.0
    %306 = vmatpush1.msra.mxu0 0.0
    %307 = vmatprep.subr.mxu0 0.0
    %308 = vmatpush1.msra.mxu0 0.0
    %309 = vmatprep.subr.mxu0 0.0
    %310 = vmatpush1.msra.mxu0 0.0
    %311 = vmatprep.subr.mxu0 0.0
    %312 = vmatpush1.msra.mxu0 0.0
    %313 = vmatprep.subr.mxu0 0.0
    %314 = vmatpush1.msra.mxu0 0.0
    %315 = vmatprep.subr.mxu0 0.0
    %316 = vmatpush1.msra.mxu0 0.0
    %317 = vmatprep.subr.mxu0 0.0
    %318 = vmatpush1.msra.mxu0 0.0
    %319 = vmatprep.subr.mxu0 0.0
    %320 = vmatpush1.msra.mxu0 0.0
    %321 = vmatprep.subr.mxu0 0.0
    %322 = vmatpush1.msra.mxu0 0.0
    %323 = vmatprep.subr.mxu0 0.0
    %324 = vmatpush1.msra.mxu0 0.0
    %325 = vmatprep.subr.mxu0 0.0
    %326 = vmatpush1.msra.mxu0 0.0
    %327 = vmatprep.subr.mxu0 0.0
    %328 = vmatpush1.msra.mxu0 0.0
    %329 = vmatprep.subr.mxu0 0.0
    %330 = vmatpush1.msra.mxu0 0.0
    %331 = vmatprep.subr.mxu0 0.0
    %332 = vmatpush1.msra.mxu0 0.0
    %333 = vmatprep.subr.mxu0 0.0
    %334 = vmatpush1.msra.mxu0 0.0
    %335 = vmatprep.subr.mxu0 0.0
    %336 = vmatpush1.msra.mxu0 0.0
    %337 = vmatprep.subr.mxu0 0.0
    %338 = vmatpush1.msra.mxu0 0.0
    %339 = vmatprep.subr.mxu0 0.0
    %340 = vmatpush1.msra.mxu0 0.0
    %341 = vmatprep.subr.mxu0 0.0
    %342 = vmatpush1.msra.mxu0 0.0
    %343 = vmatprep.mubr.f32.mxu0 0.0
    %344 = vmatmul.mubr.f32.gmra.mrb[0].mxu0 %v277
    %v345 = vpop.f32.mrb[0].mxu0
    %v346 = vadd.f32 0.0, %v345
    %v347 = vpop.f32.mrb[0].mxu0
    %348 = vdwg.mxu0
    %v349 = vadd.f32 %v270, %v346
    %v350 = vxor.u32 %v349, 2147483648
    %v351 = vmul.f32 %v350, 1.442695
    %v352 = vpow.pop %v351
    %v353 = vadd.f32 %v352, 1.0
    %v354 = vrcp.pop %v353
    %v355 = vmul.f32 1.0, %v354
    %v356 = vtanh.pop %v349
    %358 = vrot.lane.b32.xlu0 %v269, 32
    %v359 = vpop.permute.xlu0 %358
    %v361 = vmul.f32 %v355, %v359
    %363 = vrot.lane.b32.xlu0 %v356, 32
    %v364 = vpop.permute.xlu0 %363
    %v366 = vmul.f32 %v355, %v364
    %368 = vrot.lane.b32.xlu0 %v366, 32
    %v369 = vpop.permute.xlu0 %368
    %v371 = vadd.f32 %v361, %v369
    %v372 = vtanh.pop %v371
    %374 = vrot.lane.b32.xlu0 %v372, 32
    %v375 = vpop.permute.xlu0 %374
    %v377 = vmul.f32 %v355, %v375
    %379 = vrot.lane.b32.xlu0 %v377, 64
    %v380 = vpop.permute.xlu0 %379
    %382 = vst.msk [vmem:[#allocation3] sm:$0xff] %vm275, %v380
    %s383 = scalar_lea.vmem [#allocation2], 8
    %v384 = vld [vmem:[%s383] sm:$0xff]
    %v385 = vld [vmem:[#allocation12] sm:$0xff]
    %v386 = vld [vmem:[#allocation12 + $0x8] sm:$0xff]
    %v387 = vld [vmem:[#allocation12 + $0x10] sm:$0xff]
    %v388 = vld [vmem:[#allocation12 + $0x18] sm:$0xff]
    %v389 = vsel %vm275, %v380, 0
    %391 = vmatprep.subr.mxu0 0.0
    %392 = vmatpush1.msra.mxu0 %v385
    %393 = vmatprep.subr.mxu0 0.0
    %394 = vmatpush1.msra.mxu0 %v386
    %395 = vmatprep.subr.mxu0 0.0
    %396 = vmatpush1.msra.mxu0 %v387
    %397 = vmatprep.subr.mxu0 0.0
    %398 = vmatpush1.msra.mxu0 %v388
    %399 = vmatprep.subr.mxu0 0.0
    %400 = vmatpush1.msra.mxu0 0.0
    %401 = vmatprep.subr.mxu0 0.0
    %402 = vmatpush1.msra.mxu0 0.0
    %403 = vmatprep.subr.mxu0 0.0
    %404 = vmatpush1.msra.mxu0 0.0
    %405 = vmatprep.subr.mxu0 0.0
    %406 = vmatpush1.msra.mxu0 0.0
    %407 = vmatprep.subr.mxu0 0.0
    %408 = vmatpush1.msra.mxu0 0.0
    %409 = vmatprep.subr.mxu0 0.0
    %410 = vmatpush1.msra.mxu0 0.0
    %411 = vmatprep.subr.mxu0 0.0
    %412 = vmatpush1.msra.mxu0 0.0
    %413 = vmatprep.subr.mxu0 0.0
    %414 = vmatpush1.msra.mxu0 0.0
    %415 = vmatprep.subr.mxu0 0.0
    %416 = vmatpush1.msra.mxu0 0.0
    %417 = vmatprep.subr.mxu0 0.0
    %418 = vmatpush1.msra.mxu0 0.0
    %419 = vmatprep.subr.mxu0 0.0
    %420 = vmatpush1.msra.mxu0 0.0
    %421 = vmatprep.subr.mxu0 0.0
    %422 = vmatpush1.msra.mxu0 0.0
    %423 = vmatprep.subr.mxu0 0.0
    %424 = vmatpush1.msra.mxu0 0.0
    %425 = vmatprep.subr.mxu0 0.0
    %426 = vmatpush1.msra.mxu0 0.0
    %427 = vmatprep.subr.mxu0 0.0
    %428 = vmatpush1.msra.mxu0 0.0
    %429 = vmatprep.subr.mxu0 0.0
    %430 = vmatpush1.msra.mxu0 0.0
    %431 = vmatprep.subr.mxu0 0.0
    %432 = vmatpush1.msra.mxu0 0.0
    %433 = vmatprep.subr.mxu0 0.0
    %434 = vmatpush1.msra.mxu0 0.0
    %435 = vmatprep.subr.mxu0 0.0
    %436 = vmatpush1.msra.mxu0 0.0
    %437 = vmatprep.subr.mxu0 0.0
    %438 = vmatpush1.msra.mxu0 0.0
    %439 = vmatprep.subr.mxu0 0.0
    %440 = vmatpush1.msra.mxu0 0.0
    %441 = vmatprep.subr.mxu0 0.0
    %442 = vmatpush1.msra.mxu0 0.0
    %443 = vmatprep.subr.mxu0 0.0
    %444 = vmatpush1.msra.mxu0 0.0
    %445 = vmatprep.subr.mxu0 0.0
    %446 = vmatpush1.msra.mxu0 0.0
    %447 = vmatprep.subr.mxu0 0.0
    %448 = vmatpush1.msra.mxu0 0.0
    %449 = vmatprep.subr.mxu0 0.0
    %450 = vmatpush1.msra.mxu0 0.0
    %451 = vmatprep.subr.mxu0 0.0
    %452 = vmatpush1.msra.mxu0 0.0
    %453 = vmatprep.subr.mxu0 0.0
    %454 = vmatpush1.msra.mxu0 0.0
    %455 = vmatprep.mubr.f32.mxu0 0.0
    %456 = vmatmul.mubr.f32.gmra.mrb[0].mxu0 %v389
    %v457 = vpop.f32.mrb[0].mxu0
    %v458 = vadd.f32 0.0, %v457
    %v459 = vpop.f32.mrb[0].mxu0
    %460 = vdwg.mxu0
    %v461 = vadd.f32 %v384, %v458
    %v462 = vxor.u32 %v461, 2147483648
    %v463 = vmul.f32 %v462, 1.442695
    %v464 = vpow.pop %v463
    %v465 = vadd.f32 %v464, 1.0
    %v466 = vrcp.pop %v465
    %v467 = vmul.f32 1.0, %v466
    %v468 = vtanh.pop %v461
    %v469 = vmul.f32 %v467, %v371
    %471 = vrot.lane.b32.xlu0 %v468, 32
    %v472 = vpop.permute.xlu0 %471
    %v474 = vmul.f32 %v467, %v472
    %476 = vrot.lane.b32.xlu0 %v474, 32
    %v477 = vpop.permute.xlu0 %476
    %v479 = vadd.f32 %v469, %v477
    %v480 = vtanh.pop %v479
    %482 = vrot.lane.b32.xlu0 %v480, 32
    %v483 = vpop.permute.xlu0 %482
    %v485 = vmul.f32 %v467, %v483
    %487 = vrot.lane.b32.xlu0 %v485, 64
    %v488 = vpop.permute.xlu0 %487
    %s490 = scalar_lea.vmem [#allocation3], 8
    %491 = vst.msk [vmem:[%s490] sm:$0xff] %vm275, %v488
    %s492 = scalar_lea.vmem [#allocation2], 16
    %v493 = vld [vmem:[%s492] sm:$0xff]
    %v494 = vld [vmem:[#allocation12] sm:$0xff]
    %v495 = vld [vmem:[#allocation12 + $0x8] sm:$0xff]
    %v496 = vld [vmem:[#allocation12 + $0x10] sm:$0xff]
    %v497 = vld [vmem:[#allocation12 + $0x18] sm:$0xff]
    %v498 = vsel %vm275, %v488, 0
    %500 = vmatprep.subr.mxu0 0.0
    %501 = vmatpush1.msra.mxu0 %v494
    %502 = vmatprep.subr.mxu0 0.0
    %503 = vmatpush1.msra.mxu0 %v495
    %504 = vmatprep.subr.mxu0 0.0
    %505 = vmatpush1.msra.mxu0 %v496
    %506 = vmatprep.subr.mxu0 0.0
    %507 = vmatpush1.msra.mxu0 %v497
    %508 = vmatprep.subr.mxu0 0.0
    %509 = vmatpush1.msra.mxu0 0.0
    %510 = vmatprep.subr.mxu0 0.0
    %511 = vmatpush1.msra.mxu0 0.0
    %512 = vmatprep.subr.mxu0 0.0
    %513 = vmatpush1.msra.mxu0 0.0
    %514 = vmatprep.subr.mxu0 0.0
    %515 = vmatpush1.msra.mxu0 0.0
    %516 = vmatprep.subr.mxu0 0.0
    %517 = vmatpush1.msra.mxu0 0.0
    %518 = vmatprep.subr.mxu0 0.0
    %519 = vmatpush1.msra.mxu0 0.0
    %520 = vmatprep.subr.mxu0 0.0
    %521 = vmatpush1.msra.mxu0 0.0
    %522 = vmatprep.subr.mxu0 0.0
    %523 = vmatpush1.msra.mxu0 0.0
    %524 = vmatprep.subr.mxu0 0.0
    %525 = vmatpush1.msra.mxu0 0.0
    %526 = vmatprep.subr.mxu0 0.0
    %527 = vmatpush1.msra.mxu0 0.0
    %528 = vmatprep.subr.mxu0 0.0
    %529 = vmatpush1.msra.mxu0 0.0
    %530 = vmatprep.subr.mxu0 0.0
    %531 = vmatpush1.msra.mxu0 0.0
    %532 = vmatprep.subr.mxu0 0.0
    %533 = vmatpush1.msra.mxu0 0.0
    %534 = vmatprep.subr.mxu0 0.0
    %535 = vmatpush1.msra.mxu0 0.0
    %536 = vmatprep.subr.mxu0 0.0
    %537 = vmatpush1.msra.mxu0 0.0
    %538 = vmatprep.subr.mxu0 0.0
    %539 = vmatpush1.msra.mxu0 0.0
    %540 = vmatprep.subr.mxu0 0.0
    %541 = vmatpush1.msra.mxu0 0.0
    %542 = vmatprep.subr.mxu0 0.0
    %543 = vmatpush1.msra.mxu0 0.0
    %544 = vmatprep.subr.mxu0 0.0
    %545 = vmatpush1.msra.mxu0 0.0
    %546 = vmatprep.subr.mxu0 0.0
    %547 = vmatpush1.msra.mxu0 0.0
    %548 = vmatprep.subr.mxu0 0.0
    %549 = vmatpush1.msra.mxu0 0.0
    %550 = vmatprep.subr.mxu0 0.0
    %551 = vmatpush1.msra.mxu0 0.0
    %552 = vmatprep.subr.mxu0 0.0
    %553 = vmatpush1.msra.mxu0 0.0
    %554 = vmatprep.subr.mxu0 0.0
    %555 = vmatpush1.msra.mxu0 0.0
    %556 = vmatprep.subr.mxu0 0.0
    %557 = vmatpush1.msra.mxu0 0.0
    %558 = vmatprep.subr.mxu0 0.0
    %559 = vmatpush1.msra.mxu0 0.0
    %560 = vmatprep.subr.mxu0 0.0
    %561 = vmatpush1.msra.mxu0 0.0
    %562 = vmatprep.subr.mxu0 0.0
    %563 = vmatpush1.msra.mxu0 0.0
    %564 = vmatprep.mubr.f32.mxu0 0.0
    %565 = vmatmul.mubr.f32.gmra.mrb[0].mxu0 %v498
    %v566 = vpop.f32.mrb[0].mxu0
    %v567 = vadd.f32 0.0, %v566
    %v568 = vpop.f32.mrb[0].mxu0
    %569 = vdwg.mxu0
    %v570 = vadd.f32 %v493, %v567
    %v571 = vxor.u32 %v570, 2147483648
    %v572 = vmul.f32 %v571, 1.442695
    %v573 = vpow.pop %v572
    %v574 = vadd.f32 %v573, 1.0
    %v575 = vrcp.pop %v574
    %v576 = vmul.f32 1.0, %v575
    %v577 = vtanh.pop %v570
    %v578 = vmul.f32 %v576, %v479
    %580 = vrot.lane.b32.xlu0 %v577, 32
    %v581 = vpop.permute.xlu0 %580
    %v583 = vmul.f32 %v576, %v581
    %585 = vrot.lane.b32.xlu0 %v583, 32
    %v586 = vpop.permute.xlu0 %585
    %v588 = vadd.f32 %v578, %v586
    %v589 = vtanh.pop %v588
    %591 = vrot.lane.b32.xlu0 %v589, 32
    %v592 = vpop.permute.xlu0 %591
    %v594 = vmul.f32 %v576, %v592
    %596 = vrot.lane.b32.xlu0 %v594, 64
    %v597 = vpop.permute.xlu0 %596
    %s599 = scalar_lea.vmem [#allocation3], 16
    %600 = vst.msk [vmem:[%s599] sm:$0xff] %vm275, %v597
    %s601 = scalar_lea.vmem [#allocation2], 24
    %v602 = vld [vmem:[%s601] sm:$0xff]
    %v603 = vld [vmem:[#allocation12] sm:$0xff]
    %v604 = vld [vmem:[#allocation12 + $0x8] sm:$0xff]
    %v605 = vld [vmem:[#allocation12 + $0x10] sm:$0xff]
    %v606 = vld [vmem:[#allocation12 + $0x18] sm:$0xff]
    %v607 = vsel %vm275, %v597, 0
    %609 = vmatprep.subr.mxu0 0.0
    %610 = vmatpush1.msra.mxu0 %v603
    %611 = vmatprep.subr.mxu0 0.0
    %612 = vmatpush1.msra.mxu0 %v604
    %613 = vmatprep.subr.mxu0 0.0
    %614 = vmatpush1.msra.mxu0 %v605
    %615 = vmatprep.subr.mxu0 0.0
    %616 = vmatpush1.msra.mxu0 %v606
    %617 = vmatprep.subr.mxu0 0.0
    %618 = vmatpush1.msra.mxu0 0.0
    %619 = vmatprep.subr.mxu0 0.0
    %620 = vmatpush1.msra.mxu0 0.0
    %621 = vmatprep.subr.mxu0 0.0
    %622 = vmatpush1.msra.mxu0 0.0
    %623 = vmatprep.subr.mxu0 0.0
    %624 = vmatpush1.msra.mxu0 0.0
    %625 = vmatprep.subr.mxu0 0.0
    %626 = vmatpush1.msra.mxu0 0.0
    %627 = vmatprep.subr.mxu0 0.0
    %628 = vmatpush1.msra.mxu0 0.0
    %629 = vmatprep.subr.mxu0 0.0
    %630 = vmatpush1.msra.mxu0 0.0
    %631 = vmatprep.subr.mxu0 0.0
    %632 = vmatpush1.msra.mxu0 0.0
    %633 = vmatprep.subr.mxu0 0.0
    %634 = vmatpush1.msra.mxu0 0.0
    %635 = vmatprep.subr.mxu0 0.0
    %636 = vmatpush1.msra.mxu0 0.0
    %637 = vmatprep.subr.mxu0 0.0
    %638 = vmatpush1.msra.mxu0 0.0
    %639 = vmatprep.subr.mxu0 0.0
    %640 = vmatpush1.msra.mxu0 0.0
    %641 = vmatprep.subr.mxu0 0.0
    %642 = vmatpush1.msra.mxu0 0.0
    %643 = vmatprep.subr.mxu0 0.0
    %644 = vmatpush1.msra.mxu0 0.0
    %645 = vmatprep.subr.mxu0 0.0
    %646 = vmatpush1.msra.mxu0 0.0
    %647 = vmatprep.subr.mxu0 0.0
    %648 = vmatpush1.msra.mxu0 0.0
    %649 = vmatprep.subr.mxu0 0.0
    %650 = vmatpush1.msra.mxu0 0.0
    %651 = vmatprep.subr.mxu0 0.0
    %652 = vmatpush1.msra.mxu0 0.0
    %653 = vmatprep.subr.mxu0 0.0
    %654 = vmatpush1.msra.mxu0 0.0
    %655 = vmatprep.subr.mxu0 0.0
    %656 = vmatpush1.msra.mxu0 0.0
    %657 = vmatprep.subr.mxu0 0.0
    %658 = vmatpush1.msra.mxu0 0.0
    %659 = vmatprep.subr.mxu0 0.0
    %660 = vmatpush1.msra.mxu0 0.0
    %661 = vmatprep.subr.mxu0 0.0
    %662 = vmatpush1.msra.mxu0 0.0
    %663 = vmatprep.subr.mxu0 0.0
    %664 = vmatpush1.msra.mxu0 0.0
    %665 = vmatprep.subr.mxu0 0.0
    %666 = vmatpush1.msra.mxu0 0.0
    %667 = vmatprep.subr.mxu0 0.0
    %668 = vmatpush1.msra.mxu0 0.0
    %669 = vmatprep.subr.mxu0 0.0
    %670 = vmatpush1.msra.mxu0 0.0
    %671 = vmatprep.subr.mxu0 0.0
    %672 = vmatpush1.msra.mxu0 0.0
    %673 = vmatprep.mubr.f32.mxu0 0.0
    %674 = vmatmul.mubr.f32.gmra.mrb[0].mxu0 %v607
    %v675 = vpop.f32.mrb[0].mxu0
    %v676 = vadd.f32 0.0, %v675
    %v677 = vpop.f32.mrb[0].mxu0
    %678 = vdwg.mxu0
    %v679 = vadd.f32 %v602, %v676
    %v680 = vxor.u32 %v679, 2147483648
    %v681 = vmul.f32 %v680, 1.442695
    %v682 = vpow.pop %v681
    %v683 = vadd.f32 %v682, 1.0
    %v684 = vrcp.pop %v683
    %v685 = vmul.f32 1.0, %v684
    %v686 = vtanh.pop %v679
    %v687 = vmul.f32 %v685, %v588
    %689 = vrot.lane.b32.xlu0 %v686, 32
    %v690 = vpop.permute.xlu0 %689
    %v692 = vmul.f32 %v685, %v690
    %694 = vrot.lane.b32.xlu0 %v692, 32
    %v695 = vpop.permute.xlu0 %694
    %v697 = vadd.f32 %v687, %v695
    %v698 = vtanh.pop %v697
    %700 = vrot.lane.b32.xlu0 %v698, 32
    %v701 = vpop.permute.xlu0 %700
    %v703 = vmul.f32 %v685, %v701
    %705 = vrot.lane.b32.xlu0 %v703, 64
    %v706 = vpop.permute.xlu0 %705
    %s708 = scalar_lea.vmem [#allocation3], 24
    %709 = vst.msk [vmem:[%s708] sm:$0xff] %vm275, %v706
    %s710 = scalar_lea.vmem [#allocation2], 32
    %v711 = vld [vmem:[%s710] sm:$0xff]
    %v712 = vld [vmem:[#allocation12] sm:$0xff]
    %v713 = vld [vmem:[#allocation12 + $0x8] sm:$0xff]
    %v714 = vld [vmem:[#allocation12 + $0x10] sm:$0xff]
    %v715 = vld [vmem:[#allocation12 + $0x18] sm:$0xff]
    %v716 = vsel %vm275, %v706, 0
    %718 = vmatprep.subr.mxu0 0.0
    %719 = vmatpush1.msra.mxu0 %v712
    %720 = vmatprep.subr.mxu0 0.0
    %721 = vmatpush1.msra.mxu0 %v713
    %722 = vmatprep.subr.mxu0 0.0
    %723 = vmatpush1.msra.mxu0 %v714
    %724 = vmatprep.subr.mxu0 0.0
    %725 = vmatpush1.msra.mxu0 %v715
    %726 = vmatprep.subr.mxu0 0.0
    %727 = vmatpush1.msra.mxu0 0.0
    %728 = vmatprep.subr.mxu0 0.0
    %729 = vmatpush1.msra.mxu0 0.0
    %730 = vmatprep.subr.mxu0 0.0
    %731 = vmatpush1.msra.mxu0 0.0
    %732 = vmatprep.subr.mxu0 0.0
    %733 = vmatpush1.msra.mxu0 0.0
    %734 = vmatprep.subr.mxu0 0.0
    %735 = vmatpush1.msra.mxu0 0.0
    %736 = vmatprep.subr.mxu0 0.0
    %737 = vmatpush1.msra.mxu0 0.0
    %738 = vmatprep.subr.mxu0 0.0
    %739 = vmatpush1.msra.mxu0 0.0
    %740 = vmatprep.subr.mxu0 0.0
    %741 = vmatpush1.msra.mxu0 0.0
    %742 = vmatprep.subr.mxu0 0.0
    %743 = vmatpush1.msra.mxu0 0.0
    %744 = vmatprep.subr.mxu0 0.0
    %745 = vmatpush1.msra.mxu0 0.0
    %746 = vmatprep.subr.mxu0 0.0
    %747 = vmatpush1.msra.mxu0 0.0
    %748 = vmatprep.subr.mxu0 0.0
    %749 = vmatpush1.msra.mxu0 0.0
    %750 = vmatprep.subr.mxu0 0.0
    %751 = vmatpush1.msra.mxu0 0.0
    %752 = vmatprep.subr.mxu0 0.0
    %753 = vmatpush1.msra.mxu0 0.0
    %754 = vmatprep.subr.mxu0 0.0
    %755 = vmatpush1.msra.mxu0 0.0
    %756 = vmatprep.subr.mxu0 0.0
    %757 = vmatpush1.msra.mxu0 0.0
    %758 = vmatprep.subr.mxu0 0.0
    %759 = vmatpush1.msra.mxu0 0.0
    %760 = vmatprep.subr.mxu0 0.0
    %761 = vmatpush1.msra.mxu0 0.0
    %762 = vmatprep.subr.mxu0 0.0
    %763 = vmatpush1.msra.mxu0 0.0
    %764 = vmatprep.subr.mxu0 0.0
    %765 = vmatpush1.msra.mxu0 0.0
    %766 = vmatprep.subr.mxu0 0.0
    %767 = vmatpush1.msra.mxu0 0.0
    %768 = vmatprep.subr.mxu0 0.0
    %769 = vmatpush1.msra.mxu0 0.0
    %770 = vmatprep.subr.mxu0 0.0
    %771 = vmatpush1.msra.mxu0 0.0
    %772 = vmatprep.subr.mxu0 0.0
    %773 = vmatpush1.msra.mxu0 0.0
    %774 = vmatprep.subr.mxu0 0.0
    %775 = vmatpush1.msra.mxu0 0.0
    %776 = vmatprep.subr.mxu0 0.0
    %777 = vmatpush1.msra.mxu0 0.0
    %778 = vmatprep.subr.mxu0 0.0
    %779 = vmatpush1.msra.mxu0 0.0
    %780 = vmatprep.subr.mxu0 0.0
    %781 = vmatpush1.msra.mxu0 0.0
    %782 = vmatprep.mubr.f32.mxu0 0.0
    %783 = vmatmul.mubr.f32.gmra.mrb[0].mxu0 %v716
    %v784 = vpop.f32.mrb[0].mxu0
    %v785 = vadd.f32 0.0, %v784
    %v786 = vpop.f32.mrb[0].mxu0
    %787 = vdwg.mxu0
    %v788 = vadd.f32 %v711, %v785
    %v789 = vxor.u32 %v788, 2147483648
    %v790 = vmul.f32 %v789, 1.442695
    %v791 = vpow.pop %v790
    %v792 = vadd.f32 %v791, 1.0
    %v793 = vrcp.pop %v792
    %v794 = vmul.f32 1.0, %v793
    %v795 = vtanh.pop %v788
    %v796 = vmul.f32 %v794, %v697
    %798 = vrot.lane.b32.xlu0 %v795, 32
    %v799 = vpop.permute.xlu0 %798
    %v801 = vmul.f32 %v794, %v799
    %803 = vrot.lane.b32.xlu0 %v801, 32
    %v804 = vpop.permute.xlu0 %803
    %v806 = vadd.f32 %v796, %v804
    %v807 = vtanh.pop %v806
    %809 = vrot.lane.b32.xlu0 %v807, 32
    %v810 = vpop.permute.xlu0 %809
    %v812 = vmul.f32 %v794, %v810
    %814 = vrot.lane.b32.xlu0 %v812, 64
    %v815 = vpop.permute.xlu0 %814
    %s817 = scalar_lea.vmem [#allocation3], 32
    %818 = vst.msk [vmem:[%s817] sm:$0xff] %vm275, %v815
    %s819 = scalar_lea.vmem [#allocation2], 40
    %v820 = vld [vmem:[%s819] sm:$0xff]
    %v821 = vld [vmem:[#allocation12] sm:$0xff]
    %v822 = vld [vmem:[#allocation12 + $0x8] sm:$0xff]
    %v823 = vld [vmem:[#allocation12 + $0x10] sm:$0xff]
    %v824 = vld [vmem:[#allocation12 + $0x18] sm:$0xff]
    %v825 = vsel %vm275, %v815, 0
    %827 = vmatprep.subr.mxu0 0.0
    %828 = vmatpush1.msra.mxu0 %v821
    %829 = vmatprep.subr.mxu0 0.0
    %830 = vmatpush1.msra.mxu0 %v822
    %831 = vmatprep.subr.mxu0 0.0
    %832 = vmatpush1.msra.mxu0 %v823
    %833 = vmatprep.subr.mxu0 0.0
    %834 = vmatpush1.msra.mxu0 %v824
    %835 = vmatprep.subr.mxu0 0.0
    %836 = vmatpush1.msra.mxu0 0.0
    %837 = vmatprep.subr.mxu0 0.0
    %838 = vmatpush1.msra.mxu0 0.0
    %839 = vmatprep.subr.mxu0 0.0
    %840 = vmatpush1.msra.mxu0 0.0
    %841 = vmatprep.subr.mxu0 0.0
    %842 = vmatpush1.msra.mxu0 0.0
    %843 = vmatprep.subr.mxu0 0.0
    %844 = vmatpush1.msra.mxu0 0.0
    %845 = vmatprep.subr.mxu0 0.0
    %846 = vmatpush1.msra.mxu0 0.0
    %847 = vmatprep.subr.mxu0 0.0
    %848 = vmatpush1.msra.mxu0 0.0
    %849 = vmatprep.subr.mxu0 0.0
    %850 = vmatpush1.msra.mxu0 0.0
    %851 = vmatprep.subr.mxu0 0.0
    %852 = vmatpush1.msra.mxu0 0.0
    %853 = vmatprep.subr.mxu0 0.0
    %854 = vmatpush1.msra.mxu0 0.0
    %855 = vmatprep.subr.mxu0 0.0
    %856 = vmatpush1.msra.mxu0 0.0
    %857 = vmatprep.subr.mxu0 0.0
    %858 = vmatpush1.msra.mxu0 0.0
    %859 = vmatprep.subr.mxu0 0.0
    %860 = vmatpush1.msra.mxu0 0.0
    %861 = vmatprep.subr.mxu0 0.0
    %862 = vmatpush1.msra.mxu0 0.0
    %863 = vmatprep.subr.mxu0 0.0
    %864 = vmatpush1.msra.mxu0 0.0
    %865 = vmatprep.subr.mxu0 0.0
    %866 = vmatpush1.msra.mxu0 0.0
    %867 = vmatprep.subr.mxu0 0.0
    %868 = vmatpush1.msra.mxu0 0.0
    %869 = vmatprep.subr.mxu0 0.0
    %870 = vmatpush1.msra.mxu0 0.0
    %871 = vmatprep.subr.mxu0 0.0
    %872 = vmatpush1.msra.mxu0 0.0
    %873 = vmatprep.subr.mxu0 0.0
    %874 = vmatpush1.msra.mxu0 0.0
    %875 = vmatprep.subr.mxu0 0.0
    %876 = vmatpush1.msra.mxu0 0.0
    %877 = vmatprep.subr.mxu0 0.0
    %878 = vmatpush1.msra.mxu0 0.0
    %879 = vmatprep.subr.mxu0 0.0
    %880 = vmatpush1.msra.mxu0 0.0
    %881 = vmatprep.subr.mxu0 0.0
    %882 = vmatpush1.msra.mxu0 0.0
    %883 = vmatprep.subr.mxu0 0.0
    %884 = vmatpush1.msra.mxu0 0.0
    %885 = vmatprep.subr.mxu0 0.0
    %886 = vmatpush1.msra.mxu0 0.0
    %887 = vmatprep.subr.mxu0 0.0
    %888 = vmatpush1.msra.mxu0 0.0
    %889 = vmatprep.subr.mxu0 0.0
    %890 = vmatpush1.msra.mxu0 0.0
    %891 = vmatprep.mubr.f32.mxu0 0.0
    %892 = vmatmul.mubr.f32.gmra.mrb[0].mxu0 %v825
    %v893 = vpop.f32.mrb[0].mxu0
    %v894 = vadd.f32 0.0, %v893
    %v895 = vpop.f32.mrb[0].mxu0
    %896 = vdwg.mxu0
    %v897 = vadd.f32 %v820, %v894
    %v898 = vxor.u32 %v897, 2147483648
    %v899 = vmul.f32 %v898, 1.442695
    %v900 = vpow.pop %v899
    %v901 = vadd.f32 %v900, 1.0
    %v902 = vrcp.pop %v901
    %v903 = vmul.f32 1.0, %v902
    %v904 = vtanh.pop %v897
    %v905 = vmul.f32 %v903, %v806
    %907 = vrot.lane.b32.xlu0 %v904, 32
    %v908 = vpop.permute.xlu0 %907
    %v910 = vmul.f32 %v903, %v908
    %912 = vrot.lane.b32.xlu0 %v910, 32
    %v913 = vpop.permute.xlu0 %912
    %v915 = vadd.f32 %v905, %v913
    %v916 = vtanh.pop %v915
    %918 = vrot.lane.b32.xlu0 %v916, 32
    %v919 = vpop.permute.xlu0 %918
    %v921 = vmul.f32 %v903, %v919
    %923 = vrot.lane.b32.xlu0 %v921, 64
    %v924 = vpop.permute.xlu0 %923
    %s926 = scalar_lea.vmem [#allocation3], 40
    %927 = vst.msk [vmem:[%s926] sm:$0xff] %vm275, %v924
    %s928 = scalar_lea.vmem [#allocation2], 48
    %v929 = vld [vmem:[%s928] sm:$0xff]
    %v930 = vld [vmem:[#allocation12] sm:$0xff]
    %v931 = vld [vmem:[#allocation12 + $0x8] sm:$0xff]
    %v932 = vld [vmem:[#allocation12 + $0x10] sm:$0xff]
    %v933 = vld [vmem:[#allocation12 + $0x18] sm:$0xff]
    %v934 = vsel %vm275, %v924, 0
    %936 = vmatprep.subr.mxu0 0.0
    %937 = vmatpush1.msra.mxu0 %v930
    %938 = vmatprep.subr.mxu0 0.0
    %939 = vmatpush1.msra.mxu0 %v931
    %940 = vmatprep.subr.mxu0 0.0
    %941 = vmatpush1.msra.mxu0 %v932
    %942 = vmatprep.subr.mxu0 0.0
    %943 = vmatpush1.msra.mxu0 %v933
    %944 = vmatprep.subr.mxu0 0.0
    %945 = vmatpush1.msra.mxu0 0.0
    %946 = vmatprep.subr.mxu0 0.0
    %947 = vmatpush1.msra.mxu0 0.0
    %948 = vmatprep.subr.mxu0 0.0
    %949 = vmatpush1.msra.mxu0 0.0
    %950 = vmatprep.subr.mxu0 0.0
    %951 = vmatpush1.msra.mxu0 0.0
    %952 = vmatprep.subr.mxu0 0.0
    %953 = vmatpush1.msra.mxu0 0.0
    %954 = vmatprep.subr.mxu0 0.0
    %955 = vmatpush1.msra.mxu0 0.0
    %956 = vmatprep.subr.mxu0 0.0
    %957 = vmatpush1.msra.mxu0 0.0
    %958 = vmatprep.subr.mxu0 0.0
    %959 = vmatpush1.msra.mxu0 0.0
    %960 = vmatprep.subr.mxu0 0.0
    %961 = vmatpush1.msra.mxu0 0.0
    %962 = vmatprep.subr.mxu0 0.0
    %963 = vmatpush1.msra.mxu0 0.0
    %964 = vmatprep.subr.mxu0 0.0
    %965 = vmatpush1.msra.mxu0 0.0
    %966 = vmatprep.subr.mxu0 0.0
    %967 = vmatpush1.msra.mxu0 0.0
    %968 = vmatprep.subr.mxu0 0.0
    %969 = vmatpush1.msra.mxu0 0.0
    %970 = vmatprep.subr.mxu0 0.0
    %971 = vmatpush1.msra.mxu0 0.0
    %972 = vmatprep.subr.mxu0 0.0
    %973 = vmatpush1.msra.mxu0 0.0
    %974 = vmatprep.subr.mxu0 0.0
    %975 = vmatpush1.msra.mxu0 0.0
    %976 = vmatprep.subr.mxu0 0.0
    %977 = vmatpush1.msra.mxu0 0.0
    %978 = vmatprep.subr.mxu0 0.0
    %979 = vmatpush1.msra.mxu0 0.0
    %980 = vmatprep.subr.mxu0 0.0
    %981 = vmatpush1.msra.mxu0 0.0
    %982 = vmatprep.subr.mxu0 0.0
    %983 = vmatpush1.msra.mxu0 0.0
    %984 = vmatprep.subr.mxu0 0.0
    %985 = vmatpush1.msra.mxu0 0.0
    %986 = vmatprep.subr.mxu0 0.0
    %987 = vmatpush1.msra.mxu0 0.0
    %988 = vmatprep.subr.mxu0 0.0
    %989 = vmatpush1.msra.mxu0 0.0
    %990 = vmatprep.subr.mxu0 0.0
    %991 = vmatpush1.msra.mxu0 0.0
    %992 = vmatprep.subr.mxu0 0.0
    %993 = vmatpush1.msra.mxu0 0.0
    %994 = vmatprep.subr.mxu0 0.0
    %995 = vmatpush1.msra.mxu0 0.0
    %996 = vmatprep.subr.mxu0 0.0
    %997 = vmatpush1.msra.mxu0 0.0
    %998 = vmatprep.subr.mxu0 0.0
    %999 = vmatpush1.msra.mxu0 0.0
    %1000 = vmatprep.mubr.f32.mxu0 0.0
    %1001 = vmatmul.mubr.f32.gmra.mrb[0].mxu0 %v934
    %v1002 = vpop.f32.mrb[0].mxu0
    %v1003 = vadd.f32 0.0, %v1002
    %v1004 = vpop.f32.mrb[0].mxu0
    %1005 = vdwg.mxu0
    %v1006 = vadd.f32 %v929, %v1003
    %v1007 = vxor.u32 %v1006, 2147483648
    %v1008 = vmul.f32 %v1007, 1.442695
    %v1009 = vpow.pop %v1008
    %v1010 = vadd.f32 %v1009, 1.0
    %v1011 = vrcp.pop %v1010
    %v1012 = vmul.f32 1.0, %v1011
    %v1013 = vtanh.pop %v1006
    %v1014 = vmul.f32 %v1012, %v915
    %1016 = vrot.lane.b32.xlu0 %v1013, 32
    %v1017 = vpop.permute.xlu0 %1016
    %v1019 = vmul.f32 %v1012, %v1017
    %1021 = vrot.lane.b32.xlu0 %v1019, 32
    %v1022 = vpop.permute.xlu0 %1021
    %v1024 = vadd.f32 %v1014, %v1022
    %v1025 = vtanh.pop %v1024
    %1027 = vrot.lane.b32.xlu0 %v1025, 32
    %v1028 = vpop.permute.xlu0 %1027
    %v1030 = vmul.f32 %v1012, %v1028
    %1032 = vrot.lane.b32.xlu0 %v1030, 64
    %v1033 = vpop.permute.xlu0 %1032
    %s1035 = scalar_lea.vmem [#allocation3], 48
    %1036 = vst.msk [vmem:[%s1035] sm:$0xff] %vm275, %v1033
    %s1037 = scalar_lea.vmem [#allocation2], 56
    %v1038 = vld [vmem:[%s1037] sm:$0xff]
    %v1039 = vld [vmem:[#allocation12] sm:$0xff]
    %v1040 = vld [vmem:[#allocation12 + $0x8] sm:$0xff]
    %v1041 = vld [vmem:[#allocation12 + $0x10] sm:$0xff]
    %v1042 = vld [vmem:[#allocation12 + $0x18] sm:$0xff]
    %v1043 = vsel %vm275, %v1033, 0
    %1045 = vmatprep.subr.mxu0 0.0
    %1046 = vmatpush1.msra.mxu0 %v1039
    %1047 = vmatprep.subr.mxu0 0.0
    %1048 = vmatpush1.msra.mxu0 %v1040
    %1049 = vmatprep.subr.mxu0 0.0
    %1050 = vmatpush1.msra.mxu0 %v1041
    %1051 = vmatprep.subr.mxu0 0.0
    %1052 = vmatpush1.msra.mxu0 %v1042
    %1053 = vmatprep.subr.mxu0 0.0
    %1054 = vmatpush1.msra.mxu0 0.0
    %1055 = vmatprep.subr.mxu0 0.0
    %1056 = vmatpush1.msra.mxu0 0.0
    %1057 = vmatprep.subr.mxu0 0.0
    %1058 = vmatpush1.msra.mxu0 0.0
    %1059 = vmatprep.subr.mxu0 0.0
    %1060 = vmatpush1.msra.mxu0 0.0
    %1061 = vmatprep.subr.mxu0 0.0
    %1062 = vmatpush1.msra.mxu0 0.0
    %1063 = vmatprep.subr.mxu0 0.0
    %1064 = vmatpush1.msra.mxu0 0.0
    %1065 = vmatprep.subr.mxu0 0.0
    %1066 = vmatpush1.msra.mxu0 0.0
    %1067 = vmatprep.subr.mxu0 0.0
    %1068 = vmatpush1.msra.mxu0 0.0
    %1069 = vmatprep.subr.mxu0 0.0
    %1070 = vmatpush1.msra.mxu0 0.0
    %1071 = vmatprep.subr.mxu0 0.0
    %1072 = vmatpush1.msra.mxu0 0.0
    %1073 = vmatprep.subr.mxu0 0.0
    %1074 = vmatpush1.msra.mxu0 0.0
    %1075 = vmatprep.subr.mxu0 0.0
    %1076 = vmatpush1.msra.mxu0 0.0
    %1077 = vmatprep.subr.mxu0 0.0
    %1078 = vmatpush1.msra.mxu0 0.0
    %1079 = vmatprep.subr.mxu0 0.0
    %1080 = vmatpush1.msra.mxu0 0.0
    %1081 = vmatprep.subr.mxu0 0.0
    %1082 = vmatpush1.msra.mxu0 0.0
    %1083 = vmatprep.subr.mxu0 0.0
    %1084 = vmatpush1.msra.mxu0 0.0
    %1085 = vmatprep.subr.mxu0 0.0
    %1086 = vmatpush1.msra.mxu0 0.0
    %1087 = vmatprep.subr.mxu0 0.0
    %1088 = vmatpush1.msra.mxu0 0.0
    %1089 = vmatprep.subr.mxu0 0.0
    %1090 = vmatpush1.msra.mxu0 0.0
    %1091 = vmatprep.subr.mxu0 0.0
    %1092 = vmatpush1.msra.mxu0 0.0
    %1093 = vmatprep.subr.mxu0 0.0
    %1094 = vmatpush1.msra.mxu0 0.0
    %1095 = vmatprep.subr.mxu0 0.0
    %1096 = vmatpush1.msra.mxu0 0.0
    %1097 = vmatprep.subr.mxu0 0.0
    %1098 = vmatpush1.msra.mxu0 0.0
    %1099 = vmatprep.subr.mxu0 0.0
    %1100 = vmatpush1.msra.mxu0 0.0
    %1101 = vmatprep.subr.mxu0 0.0
    %1102 = vmatpush1.msra.mxu0 0.0
    %1103 = vmatprep.subr.mxu0 0.0
    %1104 = vmatpush1.msra.mxu0 0.0
    %1105 = vmatprep.subr.mxu0 0.0
    %1106 = vmatpush1.msra.mxu0 0.0
    %1107 = vmatprep.subr.mxu0 0.0
    %1108 = vmatpush1.msra.mxu0 0.0
    %1109 = vmatprep.mubr.f32.mxu0 0.0
    %1110 = vmatmul.mubr.f32.gmra.mrb[0].mxu0 %v1043
    %v1111 = vpop.f32.mrb[0].mxu0
    %v1112 = vadd.f32 0.0, %v1111
    %v1113 = vpop.f32.mrb[0].mxu0
    %1114 = vdwg.mxu0
    %v1115 = vadd.f32 %v1038, %v1112
    %v1116 = vxor.u32 %v1115, 2147483648
    %v1117 = vmul.f32 %v1116, 1.442695
    %v1118 = vpow.pop %v1117
    %v1119 = vadd.f32 %v1118, 1.0
    %v1120 = vrcp.pop %v1119
    %v1121 = vmul.f32 1.0, %v1120
    %v1122 = vtanh.pop %v1115
    %v1123 = vmul.f32 %v1121, %v1024
    %1125 = vrot.lane.b32.xlu0 %v1122, 32
    %v1126 = vpop.permute.xlu0 %1125
    %v1128 = vmul.f32 %v1121, %v1126
    %1130 = vrot.lane.b32.xlu0 %v1128, 32
    %v1131 = vpop.permute.xlu0 %1130
    %v1133 = vadd.f32 %v1123, %v1131
    %v1134 = vtanh.pop %v1133
    %1136 = vrot.lane.b32.xlu0 %v1134, 32
    %v1137 = vpop.permute.xlu0 %1136
    %v1139 = vmul.f32 %v1121, %v1137
    %1141 = vrot.lane.b32.xlu0 %v1139, 64
    %v1142 = vpop.permute.xlu0 %1141
    %s1144 = scalar_lea.vmem [#allocation3], 56
    %1145 = vst.msk [vmem:[%s1144] sm:$0xff] %vm275, %v1142
    %1146 = vst.msk [vmem:[#allocation4] sm:$0xff] %vm275, %v1142
    %1148 = vrot.lane.b32.xlu0 %v1133, 96
    %v1149 = vpop.permute.xlu0 %1148
    %1151 = vst.msk [vmem:[#allocation5] sm:$0xff] %vm275, %v1149
    %v1152 = vld [vmem:[#allocation3] sm:$0xff]
    %v1153 = vld [vmem:[#allocation3 + $0x8] sm:$0xff]
    %v1154 = vld [vmem:[#allocation3 + $0x10] sm:$0xff]
    %v1155 = vld [vmem:[#allocation3 + $0x18] sm:$0xff]
    %v1156 = vld [vmem:[#allocation3 + $0x20] sm:$0xff]
    %v1157 = vld [vmem:[#allocation3 + $0x28] sm:$0xff]
    %v1158 = vld [vmem:[#allocation3 + $0x30] sm:$0xff]
    %v1159 = vld [vmem:[#allocation3 + $0x38] sm:$0xff]
    %v1160 = vld [vmem:[#allocation13] sm:$0xff]
    %v1161 = vld [vmem:[#allocation13 + $0x8] sm:$0xff]
    %v1162 = vld [vmem:[#allocation13 + $0x10] sm:$0xff]
    %v1163 = vld [vmem:[#allocation13 + $0x18] sm:$0xff]
    %v1164 = vld [vmem:[%s7] sm:$0x1]
    %v1166 = vlaneseq
    %v1167 = vshrl.u32 %v1166, 7
    %v1168 = vsub.s32 0, %v1167
    %v1169 = vrot.slane %v1164, %v1168
    %v1172 = vsel %vm275, %v1152, 0
    %v1175 = vsel %vm275, %v1153, 0
    %v1178 = vsel %vm275, %v1154, 0
    %v1181 = vsel %vm275, %v1155, 0
    %v1184 = vsel %vm275, %v1156, 0
    %v1187 = vsel %vm275, %v1157, 0
    %v1190 = vsel %vm275, %v1158, 0
    %v1193 = vsel %vm275, %v1159, 0
    %1195 = vmatprep.subr.mxu0 0.0
    %1196 = vmatpush1.msra.mxu0 %v1160
    %1197 = vmatprep.subr.mxu0 0.0
    %1198 = vmatpush1.msra.mxu0 %v1161
    %1199 = vmatprep.subr.mxu0 0.0
    %1200 = vmatpush1.msra.mxu0 %v1162
    %1201 = vmatprep.subr.mxu0 0.0
    %1202 = vmatpush1.msra.mxu0 %v1163
    %1203 = vmatprep.subr.mxu0 0.0
    %1204 = vmatpush1.msra.mxu0 0.0
    %1205 = vmatprep.subr.mxu0 0.0
    %1206 = vmatpush1.msra.mxu0 0.0
    %1207 = vmatprep.subr.mxu0 0.0
    %1208 = vmatpush1.msra.mxu0 0.0
    %1209 = vmatprep.subr.mxu0 0.0
    %1210 = vmatpush1.msra.mxu0 0.0
    %1211 = vmatprep.subr.mxu0 0.0
    %1212 = vmatpush1.msra.mxu0 0.0
    %1213 = vmatprep.subr.mxu0 0.0
    %1214 = vmatpush1.msra.mxu0 0.0
    %1215 = vmatprep.subr.mxu0 0.0
    %1216 = vmatpush1.msra.mxu0 0.0
    %1217 = vmatprep.subr.mxu0 0.0
    %1218 = vmatpush1.msra.mxu0 0.0
    %1219 = vmatprep.subr.mxu0 0.0
    %1220 = vmatpush1.msra.mxu0 0.0
    %1221 = vmatprep.subr.mxu0 0.0
    %1222 = vmatpush1.msra.mxu0 0.0
    %1223 = vmatprep.subr.mxu0 0.0
    %1224 = vmatpush1.msra.mxu0 0.0
    %1225 = vmatprep.subr.mxu0 0.0
    %1226 = vmatpush1.msra.mxu0 0.0
    %1227 = vmatprep.subr.mxu0 0.0
    %1228 = vmatpush1.msra.mxu0 0.0
    %1229 = vmatprep.subr.mxu0 0.0
    %1230 = vmatpush1.msra.mxu0 0.0
    %1231 = vmatprep.subr.mxu0 0.0
    %1232 = vmatpush1.msra.mxu0 0.0
    %1233 = vmatprep.subr.mxu0 0.0
    %1234 = vmatpush1.msra.mxu0 0.0
    %1235 = vmatprep.subr.mxu0 0.0
    %1236 = vmatpush1.msra.mxu0 0.0
    %1237 = vmatprep.subr.mxu0 0.0
    %1238 = vmatpush1.msra.mxu0 0.0
    %1239 = vmatprep.subr.mxu0 0.0
    %1240 = vmatpush1.msra.mxu0 0.0
    %1241 = vmatprep.subr.mxu0 0.0
    %1242 = vmatpush1.msra.mxu0 0.0
    %1243 = vmatprep.subr.mxu0 0.0
    %1244 = vmatpush1.msra.mxu0 0.0
    %1245 = vmatprep.subr.mxu0 0.0
    %1246 = vmatpush1.msra.mxu0 0.0
    %1247 = vmatprep.subr.mxu0 0.0
    %1248 = vmatpush1.msra.mxu0 0.0
    %1249 = vmatprep.subr.mxu0 0.0
    %1250 = vmatpush1.msra.mxu0 0.0
    %1251 = vmatprep.subr.mxu0 0.0
    %1252 = vmatpush1.msra.mxu0 0.0
    %1253 = vmatprep.subr.mxu0 0.0
    %1254 = vmatpush1.msra.mxu0 0.0
    %1255 = vmatprep.subr.mxu0 0.0
    %1256 = vmatpush1.msra.mxu0 0.0
    %1257 = vmatprep.subr.mxu0 0.0
    %1258 = vmatpush1.msra.mxu0 0.0
    %1259 = vmatprep.mubr.f32.mxu0 0.0
    %1260 = vmatmul.mubr.f32.gmra.mrb[0].mxu0 %v1172
    %v1261 = vpop.f32.mrb[0].mxu0
    %v1262 = vadd.f32 %v1169, %v1261
    %v1263 = vpop.f32.mrb[0].mxu0
    %1264 = vmatprep.mubr.f32.mxu0 0.0
    %1265 = vmatmul.mubr.f32.gmra.mrb[0].mxu0 %v1175
    %v1266 = vpop.f32.mrb[0].mxu0
    %v1267 = vadd.f32 %v1169, %v1266
    %v1268 = vpop.f32.mrb[0].mxu0
    %1269 = vmatprep.mubr.f32.mxu0 0.0
    %1270 = vmatmul.mubr.f32.gmra.mrb[0].mxu0 %v1178
    %v1271 = vpop.f32.mrb[0].mxu0
    %v1272 = vadd.f32 %v1169, %v1271
    %v1273 = vpop.f32.mrb[0].mxu0
    %1274 = vmatprep.mubr.f32.mxu0 0.0
    %1275 = vmatmul.mubr.f32.gmra.mrb[0].mxu0 %v1181
    %v1276 = vpop.f32.mrb[0].mxu0
    %v1277 = vadd.f32 %v1169, %v1276
    %v1278 = vpop.f32.mrb[0].mxu0
    %1279 = vmatprep.mubr.f32.mxu0 0.0
    %1280 = vmatmul.mubr.f32.gmra.mrb[0].mxu0 %v1184
    %v1281 = vpop.f32.mrb[0].mxu0
    %v1282 = vadd.f32 %v1169, %v1281
    %v1283 = vpop.f32.mrb[0].mxu0
    %1284 = vmatprep.mubr.f32.mxu0 0.0
    %1285 = vmatmul.mubr.f32.gmra.mrb[0].mxu0 %v1187
    %v1286 = vpop.f32.mrb[0].mxu0
    %v1287 = vadd.f32 %v1169, %v1286
    %v1288 = vpop.f32.mrb[0].mxu0
    %1289 = vmatprep.mubr.f32.mxu0 0.0
    %1290 = vmatmul.mubr.f32.gmra.mrb[0].mxu0 %v1190
    %v1291 = vpop.f32.mrb[0].mxu0
    %v1292 = vadd.f32 %v1169, %v1291
    %v1293 = vpop.f32.mrb[0].mxu0
    %1294 = vmatprep.mubr.f32.mxu0 0.0
    %1295 = vmatmul.mubr.f32.gmra.mrb[0].mxu0 %v1193
    %v1296 = vpop.f32.mrb[0].mxu0
    %v1297 = vadd.f32 %v1169, %v1296
    %v1298 = vpop.f32.mrb[0].mxu0
    %1299 = vdwg.mxu0
    %1300 = vst [vmem:[#allocation2] sm:$0xff] %v1262
    %1301 = vst [vmem:[#allocation2 + $0x8] sm:$0xff] %v1267
    %1302 = vst [vmem:[#allocation2 + $0x10] sm:$0xff] %v1272
    %1303 = vst [vmem:[#allocation2 + $0x18] sm:$0xff] %v1277
    %1304 = vst [vmem:[#allocation2 + $0x20] sm:$0xff] %v1282
    %1305 = vst [vmem:[#allocation2 + $0x28] sm:$0xff] %v1287
    %1306 = vst [vmem:[#allocation2 + $0x30] sm:$0xff] %v1292
    %1307 = vst [vmem:[#allocation2 + $0x38] sm:$0xff] %v1297
    %s1308 = scalar_lea.vmem [#allocation4], 8
    %v1309 = vld [vmem:[%s1308] sm:$0xff]
    %s1310 = scalar_lea.vmem [#allocation5], 8
    %v1311 = vld [vmem:[%s1310] sm:$0xff]
    %v1312 = vld [vmem:[#allocation2] sm:$0xff]
    %v1313 = vld [vmem:[#allocation15] sm:$0xff]
    %v1314 = vld [vmem:[#allocation15 + $0x8] sm:$0xff]
    %v1315 = vld [vmem:[#allocation15 + $0x10] sm:$0xff]
    %v1316 = vld [vmem:[#allocation15 + $0x18] sm:$0xff]
    %v1318 = vsel %vm275, %v1309, 0
    %1320 = vmatprep.subr.mxu0 0.0
    %1321 = vmatpush1.msra.mxu0 %v1313
    %1322 = vmatprep.subr.mxu0 0.0
    %1323 = vmatpush1.msra.mxu0 %v1314
    %1324 = vmatprep.subr.mxu0 0.0
    %1325 = vmatpush1.msra.mxu0 %v1315
    %1326 = vmatprep.subr.mxu0 0.0
    %1327 = vmatpush1.msra.mxu0 %v1316
    %1328 = vmatprep.subr.mxu0 0.0
    %1329 = vmatpush1.msra.mxu0 0.0
    %1330 = vmatprep.subr.mxu0 0.0
    %1331 = vmatpush1.msra.mxu0 0.0
    %1332 = vmatprep.subr.mxu0 0.0
    %1333 = vmatpush1.msra.mxu0 0.0
    %1334 = vmatprep.subr.mxu0 0.0
    %1335 = vmatpush1.msra.mxu0 0.0
    %1336 = vmatprep.subr.mxu0 0.0
    %1337 = vmatpush1.msra.mxu0 0.0
    %1338 = vmatprep.subr.mxu0 0.0
    %1339 = vmatpush1.msra.mxu0 0.0
    %1340 = vmatprep.subr.mxu0 0.0
    %1341 = vmatpush1.msra.mxu0 0.0
    %1342 = vmatprep.subr.mxu0 0.0
    %1343 = vmatpush1.msra.mxu0 0.0
    %1344 = vmatprep.subr.mxu0 0.0
    %1345 = vmatpush1.msra.mxu0 0.0
    %1346 = vmatprep.subr.mxu0 0.0
    %1347 = vmatpush1.msra.mxu0 0.0
    %1348 = vmatprep.subr.mxu0 0.0
    %1349 = vmatpush1.msra.mxu0 0.0
    %1350 = vmatprep.subr.mxu0 0.0
    %1351 = vmatpush1.msra.mxu0 0.0
    %1352 = vmatprep.subr.mxu0 0.0
    %1353 = vmatpush1.msra.mxu0 0.0
    %1354 = vmatprep.subr.mxu0 0.0
    %1355 = vmatpush1.msra.mxu0 0.0
    %1356 = vmatprep.subr.mxu0 0.0
    %1357 = vmatpush1.msra.mxu0 0.0
    %1358 = vmatprep.subr.mxu0 0.0
    %1359 = vmatpush1.msra.mxu0 0.0
    %1360 = vmatprep.subr.mxu0 0.0
    %1361 = vmatpush1.msra.mxu0 0.0
    %1362 = vmatprep.subr.mxu0 0.0
    %1363 = vmatpush1.msra.mxu0 0.0
    %1364 = vmatprep.subr.mxu0 0.0
    %1365 = vmatpush1.msra.mxu0 0.0
    %1366 = vmatprep.subr.mxu0 0.0
    %1367 = vmatpush1.msra.mxu0 0.0
    %1368 = vmatprep.subr.mxu0 0.0
    %1369 = vmatpush1.msra.mxu0 0.0
    %1370 = vmatprep.subr.mxu0 0.0
    %1371 = vmatpush1.msra.mxu0 0.0
    %1372 = vmatprep.subr.mxu0 0.0
    %1373 = vmatpush1.msra.mxu0 0.0
    %1374 = vmatprep.subr.mxu0 0.0
    %1375 = vmatpush1.msra.mxu0 0.0
    %1376 = vmatprep.subr.mxu0 0.0
    %1377 = vmatpush1.msra.mxu0 0.0
    %1378 = vmatprep.subr.mxu0 0.0
    %1379 = vmatpush1.msra.mxu0 0.0
    %1380 = vmatprep.subr.mxu0 0.0
    %1381 = vmatpush1.msra.mxu0 0.0
    %1382 = vmatprep.subr.mxu0 0.0
    %1383 = vmatpush1.msra.mxu0 0.0
    %1384 = vmatprep.mubr.f32.mxu0 0.0
    %1385 = vmatmul.mubr.f32.gmra.mrb[0].mxu0 %v1318
    %v1386 = vpop.f32.mrb[0].mxu0
    %v1387 = vadd.f32 0.0, %v1386
    %v1388 = vpop.f32.mrb[0].mxu0
    %1389 = vdwg.mxu0
    %v1390 = vadd.f32 %v1312, %v1387
    %v1391 = vxor.u32 %v1390, 2147483648
    %v1392 = vmul.f32 %v1391, 1.442695
    %v1393 = vpow.pop %v1392
    %v1394 = vadd.f32 %v1393, 1.0
    %v1395 = vrcp.pop %v1394
    %v1396 = vmul.f32 1.0, %v1395
    %v1397 = vtanh.pop %v1390
    %1399 = vrot.lane.b32.xlu0 %v1311, 32
    %v1400 = vpop.permute.xlu0 %1399
    %v1402 = vmul.f32 %v1396, %v1400
    %1404 = vrot.lane.b32.xlu0 %v1397, 32
    %v1405 = vpop.permute.xlu0 %1404
    %v1407 = vmul.f32 %v1396, %v1405
    %1409 = vrot.lane.b32.xlu0 %v1407, 32
    %v1410 = vpop.permute.xlu0 %1409
    %v1412 = vadd.f32 %v1402, %v1410
    %v1413 = vtanh.pop %v1412
    %1415 = vrot.lane.b32.xlu0 %v1413, 32
    %v1416 = vpop.permute.xlu0 %1415
    %v1418 = vmul.f32 %v1396, %v1416
    %1420 = vrot.lane.b32.xlu0 %v1418, 64
    %v1421 = vpop.permute.xlu0 %1420
    %1423 = vst.msk [vmem:[#allocation3] sm:$0xff] %vm275, %v1421
    %v1424 = vld [vmem:[%s383] sm:$0xff]
    %v1425 = vld [vmem:[#allocation15] sm:$0xff]
    %v1426 = vld [vmem:[#allocation15 + $0x8] sm:$0xff]
    %v1427 = vld [vmem:[#allocation15 + $0x10] sm:$0xff]
    %v1428 = vld [vmem:[#allocation15 + $0x18] sm:$0xff]
    %v1429 = vsel %vm275, %v1421, 0
    %1431 = vmatprep.subr.mxu0 0.0
    %1432 = vmatpush1.msra.mxu0 %v1425
    %1433 = vmatprep.subr.mxu0 0.0
    %1434 = vmatpush1.msra.mxu0 %v1426
    %1435 = vmatprep.subr.mxu0 0.0
    %1436 = vmatpush1.msra.mxu0 %v1427
    %1437 = vmatprep.subr.mxu0 0.0
    %1438 = vmatpush1.msra.mxu0 %v1428
    %1439 = vmatprep.subr.mxu0 0.0
    %1440 = vmatpush1.msra.mxu0 0.0
    %1441 = vmatprep.subr.mxu0 0.0
    %1442 = vmatpush1.msra.mxu0 0.0
    %1443 = vmatprep.subr.mxu0 0.0
    %1444 = vmatpush1.msra.mxu0 0.0
    %1445 = vmatprep.subr.mxu0 0.0
    %1446 = vmatpush1.msra.mxu0 0.0
    %1447 = vmatprep.subr.mxu0 0.0
    %1448 = vmatpush1.msra.mxu0 0.0
    %1449 = vmatprep.subr.mxu0 0.0
    %1450 = vmatpush1.msra.mxu0 0.0
    %1451 = vmatprep.subr.mxu0 0.0
    %1452 = vmatpush1.msra.mxu0 0.0
    %1453 = vmatprep.subr.mxu0 0.0
    %1454 = vmatpush1.msra.mxu0 0.0
    %1455 = vmatprep.subr.mxu0 0.0
    %1456 = vmatpush1.msra.mxu0 0.0
    %1457 = vmatprep.subr.mxu0 0.0
    %1458 = vmatpush1.msra.mxu0 0.0
    %1459 = vmatprep.subr.mxu0 0.0
    %1460 = vmatpush1.msra.mxu0 0.0
    %1461 = vmatprep.subr.mxu0 0.0
    %1462 = vmatpush1.msra.mxu0 0.0
    %1463 = vmatprep.subr.mxu0 0.0
    %1464 = vmatpush1.msra.mxu0 0.0
    %1465 = vmatprep.subr.mxu0 0.0
    %1466 = vmatpush1.msra.mxu0 0.0
    %1467 = vmatprep.subr.mxu0 0.0
    %1468 = vmatpush1.msra.mxu0 0.0
    %1469 = vmatprep.subr.mxu0 0.0
    %1470 = vmatpush1.msra.mxu0 0.0
    %1471 = vmatprep.subr.mxu0 0.0
    %1472 = vmatpush1.msra.mxu0 0.0
    %1473 = vmatprep.subr.mxu0 0.0
    %1474 = vmatpush1.msra.mxu0 0.0
    %1475 = vmatprep.subr.mxu0 0.0
    %1476 = vmatpush1.msra.mxu0 0.0
    %1477 = vmatprep.subr.mxu0 0.0
    %1478 = vmatpush1.msra.mxu0 0.0
    %1479 = vmatprep.subr.mxu0 0.0
    %1480 = vmatpush1.msra.mxu0 0.0
    %1481 = vmatprep.subr.mxu0 0.0
    %1482 = vmatpush1.msra.mxu0 0.0
    %1483 = vmatprep.subr.mxu0 0.0
    %1484 = vmatpush1.msra.mxu0 0.0
    %1485 = vmatprep.subr.mxu0 0.0
    %1486 = vmatpush1.msra.mxu0 0.0
    %1487 = vmatprep.subr.mxu0 0.0
    %1488 = vmatpush1.msra.mxu0 0.0
    %1489 = vmatprep.subr.mxu0 0.0
    %1490 = vmatpush1.msra.mxu0 0.0
    %1491 = vmatprep.subr.mxu0 0.0
    %1492 = vmatpush1.msra.mxu0 0.0
    %1493 = vmatprep.subr.mxu0 0.0
    %1494 = vmatpush1.msra.mxu0 0.0
    %1495 = vmatprep.mubr.f32.mxu0 0.0
    %1496 = vmatmul.mubr.f32.gmra.mrb[0].mxu0 %v1429
    %v1497 = vpop.f32.mrb[0].mxu0
    %v1498 = vadd.f32 0.0, %v1497
    %v1499 = vpop.f32.mrb[0].mxu0
    %1500 = vdwg.mxu0
    %v1501 = vadd.f32 %v1424, %v1498
    %v1502 = vxor.u32 %v1501, 2147483648
    %v1503 = vmul.f32 %v1502, 1.442695
    %v1504 = vpow.pop %v1503
    %v1505 = vadd.f32 %v1504, 1.0
    %v1506 = vrcp.pop %v1505
    %v1507 = vmul.f32 1.0, %v1506
    %v1508 = vtanh.pop %v1501
    %v1509 = vmul.f32 %v1507, %v1412
    %1511 = vrot.lane.b32.xlu0 %v1508, 32
    %v1512 = vpop.permute.xlu0 %1511
    %v1514 = vmul.f32 %v1507, %v1512
    %1516 = vrot.lane.b32.xlu0 %v1514, 32
    %v1517 = vpop.permute.xlu0 %1516
    %v1519 = vadd.f32 %v1509, %v1517
    %v1520 = vtanh.pop %v1519
    %1522 = vrot.lane.b32.xlu0 %v1520, 32
    %v1523 = vpop.permute.xlu0 %1522
    %v1525 = vmul.f32 %v1507, %v1523
    %1527 = vrot.lane.b32.xlu0 %v1525, 64
    %v1528 = vpop.permute.xlu0 %1527
    %1530 = vst.msk [vmem:[%s490] sm:$0xff] %vm275, %v1528
    %v1531 = vld [vmem:[%s492] sm:$0xff]
    %v1532 = vld [vmem:[#allocation15] sm:$0xff]
    %v1533 = vld [vmem:[#allocation15 + $0x8] sm:$0xff]
    %v1534 = vld [vmem:[#allocation15 + $0x10] sm:$0xff]
    %v1535 = vld [vmem:[#allocation15 + $0x18] sm:$0xff]
    %v1536 = vsel %vm275, %v1528, 0
    %1538 = vmatprep.subr.mxu0 0.0
    %1539 = vmatpush1.msra.mxu0 %v1532
    %1540 = vmatprep.subr.mxu0 0.0
    %1541 = vmatpush1.msra.mxu0 %v1533
    %1542 = vmatprep.subr.mxu0 0.0
    %1543 = vmatpush1.msra.mxu0 %v1534
    %1544 = vmatprep.subr.mxu0 0.0
    %1545 = vmatpush1.msra.mxu0 %v1535
    %1546 = vmatprep.subr.mxu0 0.0
    %1547 = vmatpush1.msra.mxu0 0.0
    %1548 = vmatprep.subr.mxu0 0.0
    %1549 = vmatpush1.msra.mxu0 0.0
    %1550 = vmatprep.subr.mxu0 0.0
    %1551 = vmatpush1.msra.mxu0 0.0
    %1552 = vmatprep.subr.mxu0 0.0
    %1553 = vmatpush1.msra.mxu0 0.0
    %1554 = vmatprep.subr.mxu0 0.0
    %1555 = vmatpush1.msra.mxu0 0.0
    %1556 = vmatprep.subr.mxu0 0.0
    %1557 = vmatpush1.msra.mxu0 0.0
    %1558 = vmatprep.subr.mxu0 0.0
    %1559 = vmatpush1.msra.mxu0 0.0
    %1560 = vmatprep.subr.mxu0 0.0
    %1561 = vmatpush1.msra.mxu0 0.0
    %1562 = vmatprep.subr.mxu0 0.0
    %1563 = vmatpush1.msra.mxu0 0.0
    %1564 = vmatprep.subr.mxu0 0.0
    %1565 = vmatpush1.msra.mxu0 0.0
    %1566 = vmatprep.subr.mxu0 0.0
    %1567 = vmatpush1.msra.mxu0 0.0
    %1568 = vmatprep.subr.mxu0 0.0
    %1569 = vmatpush1.msra.mxu0 0.0
    %1570 = vmatprep.subr.mxu0 0.0
    %1571 = vmatpush1.msra.mxu0 0.0
    %1572 = vmatprep.subr.mxu0 0.0
    %1573 = vmatpush1.msra.mxu0 0.0
    %1574 = vmatprep.subr.mxu0 0.0
    %1575 = vmatpush1.msra.mxu0 0.0
    %1576 = vmatprep.subr.mxu0 0.0
    %1577 = vmatpush1.msra.mxu0 0.0
    %1578 = vmatprep.subr.mxu0 0.0
    %1579 = vmatpush1.msra.mxu0 0.0
    %1580 = vmatprep.subr.mxu0 0.0
    %1581 = vmatpush1.msra.mxu0 0.0
    %1582 = vmatprep.subr.mxu0 0.0
    %1583 = vmatpush1.msra.mxu0 0.0
    %1584 = vmatprep.subr.mxu0 0.0
    %1585 = vmatpush1.msra.mxu0 0.0
    %1586 = vmatprep.subr.mxu0 0.0
    %1587 = vmatpush1.msra.mxu0 0.0
    %1588 = vmatprep.subr.mxu0 0.0
    %1589 = vmatpush1.msra.mxu0 0.0
    %1590 = vmatprep.subr.mxu0 0.0
    %1591 = vmatpush1.msra.mxu0 0.0
    %1592 = vmatprep.subr.mxu0 0.0
    %1593 = vmatpush1.msra.mxu0 0.0
    %1594 = vmatprep.subr.mxu0 0.0
    %1595 = vmatpush1.msra.mxu0 0.0
    %1596 = vmatprep.subr.mxu0 0.0
    %1597 = vmatpush1.msra.mxu0 0.0
    %1598 = vmatprep.subr.mxu0 0.0
    %1599 = vmatpush1.msra.mxu0 0.0
    %1600 = vmatprep.subr.mxu0 0.0
    %1601 = vmatpush1.msra.mxu0 0.0
    %1602 = vmatprep.mubr.f32.mxu0 0.0
    %1603 = vmatmul.mubr.f32.gmra.mrb[0].mxu0 %v1536
    %v1604 = vpop.f32.mrb[0].mxu0
    %v1605 = vadd.f32 0.0, %v1604
    %v1606 = vpop.f32.mrb[0].mxu0
    %1607 = vdwg.mxu0
    %v1608 = vadd.f32 %v1531, %v1605
    %v1609 = vxor.u32 %v1608, 2147483648
    %v1610 = vmul.f32 %v1609, 1.442695
    %v1611 = vpow.pop %v1610
    %v1612 = vadd.f32 %v1611, 1.0
    %v1613 = vrcp.pop %v1612
    %v1614 = vmul.f32 1.0, %v1613
    %v1615 = vtanh.pop %v1608
    %v1616 = vmul.f32 %v1614, %v1519
    %1618 = vrot.lane.b32.xlu0 %v1615, 32
    %v1619 = vpop.permute.xlu0 %1618
    %v1621 = vmul.f32 %v1614, %v1619
    %1623 = vrot.lane.b32.xlu0 %v1621, 32
    %v1624 = vpop.permute.xlu0 %1623
    %v1626 = vadd.f32 %v1616, %v1624
    %v1627 = vtanh.pop %v1626
    %1629 = vrot.lane.b32.xlu0 %v1627, 32
    %v1630 = vpop.permute.xlu0 %1629
    %v1632 = vmul.f32 %v1614, %v1630
    %1634 = vrot.lane.b32.xlu0 %v1632, 64
    %v1635 = vpop.permute.xlu0 %1634
    %1637 = vst.msk [vmem:[%s599] sm:$0xff] %vm275, %v1635
    %v1638 = vld [vmem:[%s601] sm:$0xff]
    %v1639 = vld [vmem:[#allocation15] sm:$0xff]
    %v1640 = vld [vmem:[#allocation15 + $0x8] sm:$0xff]
    %v1641 = vld [vmem:[#allocation15 + $0x10] sm:$0xff]
    %v1642 = vld [vmem:[#allocation15 + $0x18] sm:$0xff]
    %v1643 = vsel %vm275, %v1635, 0
    %1645 = vmatprep.subr.mxu0 0.0
    %1646 = vmatpush1.msra.mxu0 %v1639
    %1647 = vmatprep.subr.mxu0 0.0
    %1648 = vmatpush1.msra.mxu0 %v1640
    %1649 = vmatprep.subr.mxu0 0.0
    %1650 = vmatpush1.msra.mxu0 %v1641
    %1651 = vmatprep.subr.mxu0 0.0
    %1652 = vmatpush1.msra.mxu0 %v1642
    %1653 = vmatprep.subr.mxu0 0.0
    %1654 = vmatpush1.msra.mxu0 0.0
    %1655 = vmatprep.subr.mxu0 0.0
    %1656 = vmatpush1.msra.mxu0 0.0
    %1657 = vmatprep.subr.mxu0 0.0
    %1658 = vmatpush1.msra.mxu0 0.0
    %1659 = vmatprep.subr.mxu0 0.0
    %1660 = vmatpush1.msra.mxu0 0.0
    %1661 = vmatprep.subr.mxu0 0.0
    %1662 = vmatpush1.msra.mxu0 0.0
    %1663 = vmatprep.subr.mxu0 0.0
    %1664 = vmatpush1.msra.mxu0 0.0
    %1665 = vmatprep.subr.mxu0 0.0
    %1666 = vmatpush1.msra.mxu0 0.0
    %1667 = vmatprep.subr.mxu0 0.0
    %1668 = vmatpush1.msra.mxu0 0.0
    %1669 = vmatprep.subr.mxu0 0.0
    %1670 = vmatpush1.msra.mxu0 0.0
    %1671 = vmatprep.subr.mxu0 0.0
    %1672 = vmatpush1.msra.mxu0 0.0
    %1673 = vmatprep.subr.mxu0 0.0
    %1674 = vmatpush1.msra.mxu0 0.0
    %1675 = vmatprep.subr.mxu0 0.0
    %1676 = vmatpush1.msra.mxu0 0.0
    %1677 = vmatprep.subr.mxu0 0.0
    %1678 = vmatpush1.msra.mxu0 0.0
    %1679 = vmatprep.subr.mxu0 0.0
    %1680 = vmatpush1.msra.mxu0 0.0
    %1681 = vmatprep.subr.mxu0 0.0
    %1682 = vmatpush1.msra.mxu0 0.0
    %1683 = vmatprep.subr.mxu0 0.0
    %1684 = vmatpush1.msra.mxu0 0.0
    %1685 = vmatprep.subr.mxu0 0.0
    %1686 = vmatpush1.msra.mxu0 0.0
    %1687 = vmatprep.subr.mxu0 0.0
    %1688 = vmatpush1.msra.mxu0 0.0
    %1689 = vmatprep.subr.mxu0 0.0
    %1690 = vmatpush1.msra.mxu0 0.0
    %1691 = vmatprep.subr.mxu0 0.0
    %1692 = vmatpush1.msra.mxu0 0.0
    %1693 = vmatprep.subr.mxu0 0.0
    %1694 = vmatpush1.msra.mxu0 0.0
    %1695 = vmatprep.subr.mxu0 0.0
    %1696 = vmatpush1.msra.mxu0 0.0
    %1697 = vmatprep.subr.mxu0 0.0
    %1698 = vmatpush1.msra.mxu0 0.0
    %1699 = vmatprep.subr.mxu0 0.0
    %1700 = vmatpush1.msra.mxu0 0.0
    %1701 = vmatprep.subr.mxu0 0.0
    %1702 = vmatpush1.msra.mxu0 0.0
    %1703 = vmatprep.subr.mxu0 0.0
    %1704 = vmatpush1.msra.mxu0 0.0
    %1705 = vmatprep.subr.mxu0 0.0
    %1706 = vmatpush1.msra.mxu0 0.0
    %1707 = vmatprep.subr.mxu0 0.0
    %1708 = vmatpush1.msra.mxu0 0.0
    %1709 = vmatprep.mubr.f32.mxu0 0.0
    %1710 = vmatmul.mubr.f32.gmra.mrb[0].mxu0 %v1643
    %v1711 = vpop.f32.mrb[0].mxu0
    %v1712 = vadd.f32 0.0, %v1711
    %v1713 = vpop.f32.mrb[0].mxu0
    %1714 = vdwg.mxu0
    %v1715 = vadd.f32 %v1638, %v1712
    %v1716 = vxor.u32 %v1715, 2147483648
    %v1717 = vmul.f32 %v1716, 1.442695
    %v1718 = vpow.pop %v1717
    %v1719 = vadd.f32 %v1718, 1.0
    %v1720 = vrcp.pop %v1719
    %v1721 = vmul.f32 1.0, %v1720
    %v1722 = vtanh.pop %v1715
    %v1723 = vmul.f32 %v1721, %v1626
    %1725 = vrot.lane.b32.xlu0 %v1722, 32
    %v1726 = vpop.permute.xlu0 %1725
    %v1728 = vmul.f32 %v1721, %v1726
    %1730 = vrot.lane.b32.xlu0 %v1728, 32
    %v1731 = vpop.permute.xlu0 %1730
    %v1733 = vadd.f32 %v1723, %v1731
    %v1734 = vtanh.pop %v1733
    %1736 = vrot.lane.b32.xlu0 %v1734, 32
    %v1737 = vpop.permute.xlu0 %1736
    %v1739 = vmul.f32 %v1721, %v1737
    %1741 = vrot.lane.b32.xlu0 %v1739, 64
    %v1742 = vpop.permute.xlu0 %1741
    %1744 = vst.msk [vmem:[%s708] sm:$0xff] %vm275, %v1742
    %v1745 = vld [vmem:[%s710] sm:$0xff]
    %v1746 = vld [vmem:[#allocation15] sm:$0xff]
    %v1747 = vld [vmem:[#allocation15 + $0x8] sm:$0xff]
    %v1748 = vld [vmem:[#allocation15 + $0x10] sm:$0xff]
    %v1749 = vld [vmem:[#allocation15 + $0x18] sm:$0xff]
    %v1750 = vsel %vm275, %v1742, 0
    %1752 = vmatprep.subr.mxu0 0.0
    %1753 = vmatpush1.msra.mxu0 %v1746
    %1754 = vmatprep.subr.mxu0 0.0
    %1755 = vmatpush1.msra.mxu0 %v1747
    %1756 = vmatprep.subr.mxu0 0.0
    %1757 = vmatpush1.msra.mxu0 %v1748
    %1758 = vmatprep.subr.mxu0 0.0
    %1759 = vmatpush1.msra.mxu0 %v1749
    %1760 = vmatprep.subr.mxu0 0.0
    %1761 = vmatpush1.msra.mxu0 0.0
    %1762 = vmatprep.subr.mxu0 0.0
    %1763 = vmatpush1.msra.mxu0 0.0
    %1764 = vmatprep.subr.mxu0 0.0
    %1765 = vmatpush1.msra.mxu0 0.0
    %1766 = vmatprep.subr.mxu0 0.0
    %1767 = vmatpush1.msra.mxu0 0.0
    %1768 = vmatprep.subr.mxu0 0.0
    %1769 = vmatpush1.msra.mxu0 0.0
    %1770 = vmatprep.subr.mxu0 0.0
    %1771 = vmatpush1.msra.mxu0 0.0
    %1772 = vmatprep.subr.mxu0 0.0
    %1773 = vmatpush1.msra.mxu0 0.0
    %1774 = vmatprep.subr.mxu0 0.0
    %1775 = vmatpush1.msra.mxu0 0.0
    %1776 = vmatprep.subr.mxu0 0.0
    %1777 = vmatpush1.msra.mxu0 0.0
    %1778 = vmatprep.subr.mxu0 0.0
    %1779 = vmatpush1.msra.mxu0 0.0
    %1780 = vmatprep.subr.mxu0 0.0
    %1781 = vmatpush1.msra.mxu0 0.0
    %1782 = vmatprep.subr.mxu0 0.0
    %1783 = vmatpush1.msra.mxu0 0.0
    %1784 = vmatprep.subr.mxu0 0.0
    %1785 = vmatpush1.msra.mxu0 0.0
    %1786 = vmatprep.subr.mxu0 0.0
    %1787 = vmatpush1.msra.mxu0 0.0
    %1788 = vmatprep.subr.mxu0 0.0
    %1789 = vmatpush1.msra.mxu0 0.0
    %1790 = vmatprep.subr.mxu0 0.0
    %1791 = vmatpush1.msra.mxu0 0.0
    %1792 = vmatprep.subr.mxu0 0.0
    %1793 = vmatpush1.msra.mxu0 0.0
    %1794 = vmatprep.subr.mxu0 0.0
    %1795 = vmatpush1.msra.mxu0 0.0
    %1796 = vmatprep.subr.mxu0 0.0
    %1797 = vmatpush1.msra.mxu0 0.0
    %1798 = vmatprep.subr.mxu0 0.0
    %1799 = vmatpush1.msra.mxu0 0.0
    %1800 = vmatprep.subr.mxu0 0.0
    %1801 = vmatpush1.msra.mxu0 0.0
    %1802 = vmatprep.subr.mxu0 0.0
    %1803 = vmatpush1.msra.mxu0 0.0
    %1804 = vmatprep.subr.mxu0 0.0
    %1805 = vmatpush1.msra.mxu0 0.0
    %1806 = vmatprep.subr.mxu0 0.0
    %1807 = vmatpush1.msra.mxu0 0.0
    %1808 = vmatprep.subr.mxu0 0.0
    %1809 = vmatpush1.msra.mxu0 0.0
    %1810 = vmatprep.subr.mxu0 0.0
    %1811 = vmatpush1.msra.mxu0 0.0
    %1812 = vmatprep.subr.mxu0 0.0
    %1813 = vmatpush1.msra.mxu0 0.0
    %1814 = vmatprep.subr.mxu0 0.0
    %1815 = vmatpush1.msra.mxu0 0.0
    %1816 = vmatprep.mubr.f32.mxu0 0.0
    %1817 = vmatmul.mubr.f32.gmra.mrb[0].mxu0 %v1750
    %v1818 = vpop.f32.mrb[0].mxu0
    %v1819 = vadd.f32 0.0, %v1818
    %v1820 = vpop.f32.mrb[0].mxu0
    %1821 = vdwg.mxu0
    %v1822 = vadd.f32 %v1745, %v1819
    %v1823 = vxor.u32 %v1822, 2147483648
    %v1824 = vmul.f32 %v1823, 1.442695
    %v1825 = vpow.pop %v1824
    %v1826 = vadd.f32 %v1825, 1.0
    %v1827 = vrcp.pop %v1826
    %v1828 = vmul.f32 1.0, %v1827
    %v1829 = vtanh.pop %v1822
    %v1830 = vmul.f32 %v1828, %v1733
    %1832 = vrot.lane.b32.xlu0 %v1829, 32
    %v1833 = vpop.permute.xlu0 %1832
    %v1835 = vmul.f32 %v1828, %v1833
    %1837 = vrot.lane.b32.xlu0 %v1835, 32
    %v1838 = vpop.permute.xlu0 %1837
    %v1840 = vadd.f32 %v1830, %v1838
    %v1841 = vtanh.pop %v1840
    %1843 = vrot.lane.b32.xlu0 %v1841, 32
    %v1844 = vpop.permute.xlu0 %1843
    %v1846 = vmul.f32 %v1828, %v1844
    %1848 = vrot.lane.b32.xlu0 %v1846, 64
    %v1849 = vpop.permute.xlu0 %1848
    %1851 = vst.msk [vmem:[%s817] sm:$0xff] %vm275, %v1849
    %v1852 = vld [vmem:[%s819] sm:$0xff]
    %v1853 = vld [vmem:[#allocation15] sm:$0xff]
    %v1854 = vld [vmem:[#allocation15 + $0x8] sm:$0xff]
    %v1855 = vld [vmem:[#allocation15 + $0x10] sm:$0xff]
    %v1856 = vld [vmem:[#allocation15 + $0x18] sm:$0xff]
    %v1857 = vsel %vm275, %v1849, 0
    %1859 = vmatprep.subr.mxu0 0.0
    %1860 = vmatpush1.msra.mxu0 %v1853
    %1861 = vmatprep.subr.mxu0 0.0
    %1862 = vmatpush1.msra.mxu0 %v1854
    %1863 = vmatprep.subr.mxu0 0.0
    %1864 = vmatpush1.msra.mxu0 %v1855
    %1865 = vmatprep.subr.mxu0 0.0
    %1866 = vmatpush1.msra.mxu0 %v1856
    %1867 = vmatprep.subr.mxu0 0.0
    %1868 = vmatpush1.msra.mxu0 0.0
    %1869 = vmatprep.subr.mxu0 0.0
    %1870 = vmatpush1.msra.mxu0 0.0
    %1871 = vmatprep.subr.mxu0 0.0
    %1872 = vmatpush1.msra.mxu0 0.0
    %1873 = vmatprep.subr.mxu0 0.0
    %1874 = vmatpush1.msra.mxu0 0.0
    %1875 = vmatprep.subr.mxu0 0.0
    %1876 = vmatpush1.msra.mxu0 0.0
    %1877 = vmatprep.subr.mxu0 0.0
    %1878 = vmatpush1.msra.mxu0 0.0
    %1879 = vmatprep.subr.mxu0 0.0
    %1880 = vmatpush1.msra.mxu0 0.0
    %1881 = vmatprep.subr.mxu0 0.0
    %1882 = vmatpush1.msra.mxu0 0.0
    %1883 = vmatprep.subr.mxu0 0.0
    %1884 = vmatpush1.msra.mxu0 0.0
    %1885 = vmatprep.subr.mxu0 0.0
    %1886 = vmatpush1.msra.mxu0 0.0
    %1887 = vmatprep.subr.mxu0 0.0
    %1888 = vmatpush1.msra.mxu0 0.0
    %1889 = vmatprep.subr.mxu0 0.0
    %1890 = vmatpush1.msra.mxu0 0.0
    %1891 = vmatprep.subr.mxu0 0.0
    %1892 = vmatpush1.msra.mxu0 0.0
    %1893 = vmatprep.subr.mxu0 0.0
    %1894 = vmatpush1.msra.mxu0 0.0
    %1895 = vmatprep.subr.mxu0 0.0
    %1896 = vmatpush1.msra.mxu0 0.0
    %1897 = vmatprep.subr.mxu0 0.0
    %1898 = vmatpush1.msra.mxu0 0.0
    %1899 = vmatprep.subr.mxu0 0.0
    %1900 = vmatpush1.msra.mxu0 0.0
    %1901 = vmatprep.subr.mxu0 0.0
    %1902 = vmatpush1.msra.mxu0 0.0
    %1903 = vmatprep.subr.mxu0 0.0
    %1904 = vmatpush1.msra.mxu0 0.0
    %1905 = vmatprep.subr.mxu0 0.0
    %1906 = vmatpush1.msra.mxu0 0.0
    %1907 = vmatprep.subr.mxu0 0.0
    %1908 = vmatpush1.msra.mxu0 0.0
    %1909 = vmatprep.subr.mxu0 0.0
    %1910 = vmatpush1.msra.mxu0 0.0
    %1911 = vmatprep.subr.mxu0 0.0
    %1912 = vmatpush1.msra.mxu0 0.0
    %1913 = vmatprep.subr.mxu0 0.0
    %1914 = vmatpush1.msra.mxu0 0.0
    %1915 = vmatprep.subr.mxu0 0.0
    %1916 = vmatpush1.msra.mxu0 0.0
    %1917 = vmatprep.subr.mxu0 0.0
    %1918 = vmatpush1.msra.mxu0 0.0
    %1919 = vmatprep.subr.mxu0 0.0
    %1920 = vmatpush1.msra.mxu0 0.0
    %1921 = vmatprep.subr.mxu0 0.0
    %1922 = vmatpush1.msra.mxu0 0.0
    %1923 = vmatprep.mubr.f32.mxu0 0.0
    %1924 = vmatmul.mubr.f32.gmra.mrb[0].mxu0 %v1857
    %v1925 = vpop.f32.mrb[0].mxu0
    %v1926 = vadd.f32 0.0, %v1925
    %v1927 = vpop.f32.mrb[0].mxu0
    %1928 = vdwg.mxu0
    %v1929 = vadd.f32 %v1852, %v1926
    %v1930 = vxor.u32 %v1929, 2147483648
    %v1931 = vmul.f32 %v1930, 1.442695
    %v1932 = vpow.pop %v1931
    %v1933 = vadd.f32 %v1932, 1.0
    %v1934 = vrcp.pop %v1933
    %v1935 = vmul.f32 1.0, %v1934
    %v1936 = vtanh.pop %v1929
    %v1937 = vmul.f32 %v1935, %v1840
    %1939 = vrot.lane.b32.xlu0 %v1936, 32
    %v1940 = vpop.permute.xlu0 %1939
    %v1942 = vmul.f32 %v1935, %v1940
    %1944 = vrot.lane.b32.xlu0 %v1942, 32
    %v1945 = vpop.permute.xlu0 %1944
    %v1947 = vadd.f32 %v1937, %v1945
    %v1948 = vtanh.pop %v1947
    %1950 = vrot.lane.b32.xlu0 %v1948, 32
    %v1951 = vpop.permute.xlu0 %1950
    %v1953 = vmul.f32 %v1935, %v1951
    %1955 = vrot.lane.b32.xlu0 %v1953, 64
    %v1956 = vpop.permute.xlu0 %1955
    %1958 = vst.msk [vmem:[%s926] sm:$0xff] %vm275, %v1956
    %v1959 = vld [vmem:[%s928] sm:$0xff]
    %v1960 = vld [vmem:[#allocation15] sm:$0xff]
    %v1961 = vld [vmem:[#allocation15 + $0x8] sm:$0xff]
    %v1962 = vld [vmem:[#allocation15 + $0x10] sm:$0xff]
    %v1963 = vld [vmem:[#allocation15 + $0x18] sm:$0xff]
    %v1964 = vsel %vm275, %v1956, 0
    %1966 = vmatprep.subr.mxu0 0.0
    %1967 = vmatpush1.msra.mxu0 %v1960
    %1968 = vmatprep.subr.mxu0 0.0
    %1969 = vmatpush1.msra.mxu0 %v1961
    %1970 = vmatprep.subr.mxu0 0.0
    %1971 = vmatpush1.msra.mxu0 %v1962
    %1972 = vmatprep.subr.mxu0 0.0
    %1973 = vmatpush1.msra.mxu0 %v1963
    %1974 = vmatprep.subr.mxu0 0.0
    %1975 = vmatpush1.msra.mxu0 0.0
    %1976 = vmatprep.subr.mxu0 0.0
    %1977 = vmatpush1.msra.mxu0 0.0
    %1978 = vmatprep.subr.mxu0 0.0
    %1979 = vmatpush1.msra.mxu0 0.0
    %1980 = vmatprep.subr.mxu0 0.0
    %1981 = vmatpush1.msra.mxu0 0.0
    %1982 = vmatprep.subr.mxu0 0.0
    %1983 = vmatpush1.msra.mxu0 0.0
    %1984 = vmatprep.subr.mxu0 0.0
    %1985 = vmatpush1.msra.mxu0 0.0
    %1986 = vmatprep.subr.mxu0 0.0
    %1987 = vmatpush1.msra.mxu0 0.0
    %1988 = vmatprep.subr.mxu0 0.0
    %1989 = vmatpush1.msra.mxu0 0.0
    %1990 = vmatprep.subr.mxu0 0.0
    %1991 = vmatpush1.msra.mxu0 0.0
    %1992 = vmatprep.subr.mxu0 0.0
    %1993 = vmatpush1.msra.mxu0 0.0
    %1994 = vmatprep.subr.mxu0 0.0
    %1995 = vmatpush1.msra.mxu0 0.0
    %1996 = vmatprep.subr.mxu0 0.0
    %1997 = vmatpush1.msra.mxu0 0.0
    %1998 = vmatprep.subr.mxu0 0.0
    %1999 = vmatpush1.msra.mxu0 0.0
    %2000 = vmatprep.subr.mxu0 0.0
    %2001 = vmatpush1.msra.mxu0 0.0
    %2002 = vmatprep.subr.mxu0 0.0
    %2003 = vmatpush1.msra.mxu0 0.0
    %2004 = vmatprep.subr.mxu0 0.0
    %2005 = vmatpush1.msra.mxu0 0.0
    %2006 = vmatprep.subr.mxu0 0.0
    %2007 = vmatpush1.msra.mxu0 0.0
    %2008 = vmatprep.subr.mxu0 0.0
    %2009 = vmatpush1.msra.mxu0 0.0
    %2010 = vmatprep.subr.mxu0 0.0
    %2011 = vmatpush1.msra.mxu0 0.0
    %2012 = vmatprep.subr.mxu0 0.0
    %2013 = vmatpush1.msra.mxu0 0.0
    %2014 = vmatprep.subr.mxu0 0.0
    %2015 = vmatpush1.msra.mxu0 0.0
    %2016 = vmatprep.subr.mxu0 0.0
    %2017 = vmatpush1.msra.mxu0 0.0
    %2018 = vmatprep.subr.mxu0 0.0
    %2019 = vmatpush1.msra.mxu0 0.0
    %2020 = vmatprep.subr.mxu0 0.0
    %2021 = vmatpush1.msra.mxu0 0.0
    %2022 = vmatprep.subr.mxu0 0.0
    %2023 = vmatpush1.msra.mxu0 0.0
    %2024 = vmatprep.subr.mxu0 0.0
    %2025 = vmatpush1.msra.mxu0 0.0
    %2026 = vmatprep.subr.mxu0 0.0
    %2027 = vmatpush1.msra.mxu0 0.0
    %2028 = vmatprep.subr.mxu0 0.0
    %2029 = vmatpush1.msra.mxu0 0.0
    %2030 = vmatprep.mubr.f32.mxu0 0.0
    %2031 = vmatmul.mubr.f32.gmra.mrb[0].mxu0 %v1964
    %v2032 = vpop.f32.mrb[0].mxu0
    %v2033 = vadd.f32 0.0, %v2032
    %v2034 = vpop.f32.mrb[0].mxu0
    %2035 = vdwg.mxu0
    %v2036 = vadd.f32 %v1959, %v2033
    %v2037 = vxor.u32 %v2036, 2147483648
    %v2038 = vmul.f32 %v2037, 1.442695
    %v2039 = vpow.pop %v2038
    %v2040 = vadd.f32 %v2039, 1.0
    %v2041 = vrcp.pop %v2040
    %v2042 = vmul.f32 1.0, %v2041
    %v2043 = vtanh.pop %v2036
    %v2044 = vmul.f32 %v2042, %v1947
    %2046 = vrot.lane.b32.xlu0 %v2043, 32
    %v2047 = vpop.permute.xlu0 %2046
    %v2049 = vmul.f32 %v2042, %v2047
    %2051 = vrot.lane.b32.xlu0 %v2049, 32
    %v2052 = vpop.permute.xlu0 %2051
    %v2054 = vadd.f32 %v2044, %v2052
    %v2055 = vtanh.pop %v2054
    %2057 = vrot.lane.b32.xlu0 %v2055, 32
    %v2058 = vpop.permute.xlu0 %2057
    %v2060 = vmul.f32 %v2042, %v2058
    %2062 = vrot.lane.b32.xlu0 %v2060, 64
    %v2063 = vpop.permute.xlu0 %2062
    %2065 = vst.msk [vmem:[%s1035] sm:$0xff] %vm275, %v2063
    %v2066 = vld [vmem:[%s1037] sm:$0xff]
    %v2067 = vld [vmem:[#allocation15] sm:$0xff]
    %v2068 = vld [vmem:[#allocation15 + $0x8] sm:$0xff]
    %v2069 = vld [vmem:[#allocation15 + $0x10] sm:$0xff]
    %v2070 = vld [vmem:[#allocation15 + $0x18] sm:$0xff]
    %v2071 = vsel %vm275, %v2063, 0
    %2073 = vmatprep.subr.mxu0 0.0
    %2074 = vmatpush1.msra.mxu0 %v2067
    %2075 = vmatprep.subr.mxu0 0.0
    %2076 = vmatpush1.msra.mxu0 %v2068
    %2077 = vmatprep.subr.mxu0 0.0
    %2078 = vmatpush1.msra.mxu0 %v2069
    %2079 = vmatprep.subr.mxu0 0.0
    %2080 = vmatpush1.msra.mxu0 %v2070
    %2081 = vmatprep.subr.mxu0 0.0
    %2082 = vmatpush1.msra.mxu0 0.0
    %2083 = vmatprep.subr.mxu0 0.0
    %2084 = vmatpush1.msra.mxu0 0.0
    %2085 = vmatprep.subr.mxu0 0.0
    %2086 = vmatpush1.msra.mxu0 0.0
    %2087 = vmatprep.subr.mxu0 0.0
    %2088 = vmatpush1.msra.mxu0 0.0
    %2089 = vmatprep.subr.mxu0 0.0
    %2090 = vmatpush1.msra.mxu0 0.0
    %2091 = vmatprep.subr.mxu0 0.0
    %2092 = vmatpush1.msra.mxu0 0.0
    %2093 = vmatprep.subr.mxu0 0.0
    %2094 = vmatpush1.msra.mxu0 0.0
    %2095 = vmatprep.subr.mxu0 0.0
    %2096 = vmatpush1.msra.mxu0 0.0
    %2097 = vmatprep.subr.mxu0 0.0
    %2098 = vmatpush1.msra.mxu0 0.0
    %2099 = vmatprep.subr.mxu0 0.0
    %2100 = vmatpush1.msra.mxu0 0.0
    %2101 = vmatprep.subr.mxu0 0.0
    %2102 = vmatpush1.msra.mxu0 0.0
    %2103 = vmatprep.subr.mxu0 0.0
    %2104 = vmatpush1.msra.mxu0 0.0
    %2105 = vmatprep.subr.mxu0 0.0
    %2106 = vmatpush1.msra.mxu0 0.0
    %2107 = vmatprep.subr.mxu0 0.0
    %2108 = vmatpush1.msra.mxu0 0.0
    %2109 = vmatprep.subr.mxu0 0.0
    %2110 = vmatpush1.msra.mxu0 0.0
    %2111 = vmatprep.subr.mxu0 0.0
    %2112 = vmatpush1.msra.mxu0 0.0
    %2113 = vmatprep.subr.mxu0 0.0
    %2114 = vmatpush1.msra.mxu0 0.0
    %2115 = vmatprep.subr.mxu0 0.0
    %2116 = vmatpush1.msra.mxu0 0.0
    %2117 = vmatprep.subr.mxu0 0.0
    %2118 = vmatpush1.msra.mxu0 0.0
    %2119 = vmatprep.subr.mxu0 0.0
    %2120 = vmatpush1.msra.mxu0 0.0
    %2121 = vmatprep.subr.mxu0 0.0
    %2122 = vmatpush1.msra.mxu0 0.0
    %2123 = vmatprep.subr.mxu0 0.0
    %2124 = vmatpush1.msra.mxu0 0.0
    %2125 = vmatprep.subr.mxu0 0.0
    %2126 = vmatpush1.msra.mxu0 0.0
    %2127 = vmatprep.subr.mxu0 0.0
    %2128 = vmatpush1.msra.mxu0 0.0
    %2129 = vmatprep.subr.mxu0 0.0
    %2130 = vmatpush1.msra.mxu0 0.0
    %2131 = vmatprep.subr.mxu0 0.0
    %2132 = vmatpush1.msra.mxu0 0.0
    %2133 = vmatprep.subr.mxu0 0.0
    %2134 = vmatpush1.msra.mxu0 0.0
    %2135 = vmatprep.subr.mxu0 0.0
    %2136 = vmatpush1.msra.mxu0 0.0
    %2137 = vmatprep.mubr.f32.mxu0 0.0
    %2138 = vmatmul.mubr.f32.gmra.mrb[0].mxu0 %v2071
    %v2139 = vpop.f32.mrb[0].mxu0
    %v2140 = vadd.f32 0.0, %v2139
    %v2141 = vpop.f32.mrb[0].mxu0
    %2142 = vdwg.mxu0
    %v2143 = vadd.f32 %v2066, %v2140
    %v2144 = vxor.u32 %v2143, 2147483648
    %v2145 = vmul.f32 %v2144, 1.442695
    %v2146 = vpow.pop %v2145
    %v2147 = vadd.f32 %v2146, 1.0
    %v2148 = vrcp.pop %v2147
    %v2149 = vmul.f32 1.0, %v2148
    %v2150 = vtanh.pop %v2143
    %v2151 = vmul.f32 %v2149, %v2054
    %2153 = vrot.lane.b32.xlu0 %v2150, 32
    %v2154 = vpop.permute.xlu0 %2153
    %v2156 = vmul.f32 %v2149, %v2154
    %2158 = vrot.lane.b32.xlu0 %v2156, 32
    %v2159 = vpop.permute.xlu0 %2158
    %v2161 = vadd.f32 %v2151, %v2159
    %v2162 = vtanh.pop %v2161
    %2164 = vrot.lane.b32.xlu0 %v2162, 32
    %v2165 = vpop.permute.xlu0 %2164
    %v2167 = vmul.f32 %v2149, %v2165
    %2169 = vrot.lane.b32.xlu0 %v2167, 64
    %v2170 = vpop.permute.xlu0 %2169
    %2172 = vst.msk [vmem:[%s1144] sm:$0xff] %vm275, %v2170
    %2173 = vst.msk [vmem:[%s1308] sm:$0xff] %vm275, %v2170
    %2175 = vrot.lane.b32.xlu0 %v2161, 96
    %v2176 = vpop.permute.xlu0 %2175
    %2178 = vst.msk [vmem:[%s1310] sm:$0xff] %vm275, %v2176
    %v2179 = vstv %s113
    %v2180 = vadd.s32 %v2179, 1
    %v2181 = vadd.s32 %v2179, 2
    %v2182 = vadd.s32 %v2179, 3
    %v2183 = vadd.s32 %v2179, 4
    %v2184 = vadd.s32 %v2179, 5
    %v2185 = vadd.s32 %v2179, 6
    %v2186 = vadd.s32 %v2179, 7
    %v2187 = vadd.s32 %v2180, 1
    %v2188 = vadd.s32 %v2181, 1
    %v2189 = vadd.s32 %v2182, 1
    %v2190 = vadd.s32 %v2183, 1
    %v2191 = vadd.s32 %v2184, 1
    %v2192 = vadd.s32 %v2185, 1
    %v2193 = vadd.s32 %v2186, 1
    %vm2194 = vcmp.eq.s32.totalorder %v112, %v2180
    %vm2195 = vcmp.eq.s32.totalorder %v112, %v2187
    %vm2196 = vcmp.eq.s32.totalorder %v112, %v2188
    %vm2197 = vcmp.eq.s32.totalorder %v112, %v2189
    %vm2198 = vcmp.eq.s32.totalorder %v112, %v2190
    %vm2199 = vcmp.eq.s32.totalorder %v112, %v2191
    %vm2200 = vcmp.eq.s32.totalorder %v112, %v2192
    %vm2201 = vcmp.eq.s32.totalorder %v112, %v2193
    %v2202 = vld [vmem:[#allocation3] sm:$0xff]
    %v2203 = vld [vmem:[#allocation3 + $0x8] sm:$0xff]
    %v2204 = vld [vmem:[#allocation3 + $0x10] sm:$0xff]
    %v2205 = vld [vmem:[#allocation3 + $0x18] sm:$0xff]
    %v2206 = vld [vmem:[#allocation3 + $0x20] sm:$0xff]
    %v2207 = vld [vmem:[#allocation3 + $0x28] sm:$0xff]
    %v2208 = vld [vmem:[#allocation3 + $0x30] sm:$0xff]
    %v2209 = vld [vmem:[#allocation3 + $0x38] sm:$0xff]
    %v2210 = vsel %vm2194, 1, 0
    %v2211 = vsel %vm2195, 1, 0
    %v2212 = vsel %vm2196, 1, 0
    %v2213 = vsel %vm2197, 1, 0
    %v2214 = vsel %vm2198, 1, 0
    %v2215 = vsel %vm2199, 1, 0
    %v2216 = vsel %vm2200, 1, 0
    %v2217 = vsel %vm2201, 1, 0
    %2218 = vset.pattern.permute.xlu0 0
    %2219 = vperm.xlu0 %2218, %v2210
    %v2220 = vpop.permute.xlu0 %2219
    %2221 = vset.pattern.permute.xlu0 0
    %2222 = vperm.xlu0 %2221, %v2211
    %v2223 = vpop.permute.xlu0 %2222
    %2224 = vset.pattern.permute.xlu0 0
    %2225 = vperm.xlu0 %2224, %v2212
    %v2226 = vpop.permute.xlu0 %2225
    %2227 = vset.pattern.permute.xlu0 0
    %2228 = vperm.xlu0 %2227, %v2213
    %v2229 = vpop.permute.xlu0 %2228
    %2230 = vset.pattern.permute.xlu0 0
    %2231 = vperm.xlu0 %2230, %v2214
    %v2232 = vpop.permute.xlu0 %2231
    %2233 = vset.pattern.permute.xlu0 0
    %2234 = vperm.xlu0 %2233, %v2215
    %v2235 = vpop.permute.xlu0 %2234
    %2236 = vset.pattern.permute.xlu0 0
    %2237 = vperm.xlu0 %2236, %v2216
    %v2238 = vpop.permute.xlu0 %2237
    %2239 = vset.pattern.permute.xlu0 0
    %2240 = vperm.xlu0 %2239, %v2217
    %v2241 = vpop.permute.xlu0 %2240
    %vm2242 = vcmp.eq.s32.totalorder %v2220, 1
    %vm2243 = vcmp.eq.s32.totalorder %v2223, 1
    %vm2244 = vcmp.eq.s32.totalorder %v2226, 1
    %vm2245 = vcmp.eq.s32.totalorder %v2229, 1
    %vm2246 = vcmp.eq.s32.totalorder %v2232, 1
    %vm2247 = vcmp.eq.s32.totalorder %v2235, 1
    %vm2248 = vcmp.eq.s32.totalorder %v2238, 1
    %vm2249 = vcmp.eq.s32.totalorder %v2241, 1
    %v2250 = vsel %vm2242, %v2202, 0.0
    %v2251 = vsel %vm2243, %v2203, 0.0
    %v2252 = vsel %vm2244, %v2204, 0.0
    %v2253 = vsel %vm2245, %v2205, 0.0
    %v2254 = vsel %vm2246, %v2206, 0.0
    %v2255 = vsel %vm2247, %v2207, 0.0
    %v2256 = vsel %vm2248, %v2208, 0.0
    %v2257 = vsel %vm2249, %v2209, 0.0
    %v2258 = vsel %vm275, %v2250, 0.0
    %v2259 = vsel %vm275, %v2251, 0.0
    %v2260 = vadd.f32 %v2258, %v2259
    %v2261 = vsel %vm275, %v2252, 0.0
    %v2262 = vadd.f32 %v2260, %v2261
    %v2263 = vsel %vm275, %v2253, 0.0
    %v2264 = vadd.f32 %v2262, %v2263
    %v2265 = vsel %vm275, %v2254, 0.0
    %v2266 = vadd.f32 %v2264, %v2265
    %v2267 = vsel %vm275, %v2255, 0.0
    %v2268 = vadd.f32 %v2266, %v2267
    %v2269 = vsel %vm275, %v2256, 0.0
    %v2270 = vadd.f32 %v2268, %v2269
    %v2271 = vsel %vm275, %v2257, 0.0
    %v2272 = vadd.f32 %v2270, %v2271
    %vm2273 = vcmp.gt.s32.totalorder %v112, %v2179
    %s2274 = sadd.s32 %s113, 8
    %v2275 = vstv %s2274
    %vm2276 = vcmp.le.s32.totalorder %v112, %v2275
    %vm2277 = vmand %vm2273, %vm2276
    %v2278 = vld [vmem:[#allocation6] sm:$0xff]
    %v2279 = vsel %vm2277, 1, 0
    %2280 = vset.pattern.permute.xlu0 0
    %2281 = vperm.xlu0 %2280, %v2279
    %v2282 = vpop.permute.xlu0 %2281
    %vm2283 = vcmp.eq.s32.totalorder %v2282, 1
    %v2284 = vsel %vm2283, %v2272, %v2278
    %2285 = vst.msk [vmem:[#allocation6] sm:$0xff] %vm275, %v2284
    // Predicated region
    $region66: #{tpu_custom_call.1} parent=1 // pred_check
      %p2286 = pneg %p102
    $region67: #{tpu_custom_call.1} parent=1 // pred_check_branch
      %2288 = sbr.rel (%p2286) target = $region69
    $region68: #{tpu_custom_call.1} parent=1 // pred_region
      %v2289 = vld [vmem:[#allocation6] sm:$0xff]
      %v2290 = vld [vmem:[%s8] sm:$0xff]
      %v2291 = vld [vmem:[%s8 + $0x8] sm:$0xff]
      %v2292 = vld [vmem:[%s8 + $0x10] sm:$0xff]
      %v2293 = vld [vmem:[%s8 + $0x18] sm:$0xff]
      %v2294 = vld [vmem:[%s9] sm:$0x1]
      %v2296 = vlaneseq
      %v2297 = vshrl.u32 %v2296, 7
      %v2298 = vsub.s32 0, %v2297
      %v2299 = vrot.slane %v2294, %v2298
      %v2302 = vsel %vm275, %v2289, 0
      %2304 = vmatprep.subr.mxu0 0.0
      %2305 = vmatpush1.msra.mxu0 %v2290
      %2306 = vmatprep.subr.mxu0 0.0
      %2307 = vmatpush1.msra.mxu0 %v2291
      %2308 = vmatprep.subr.mxu0 0.0
      %2309 = vmatpush1.msra.mxu0 %v2292
      %2310 = vmatprep.subr.mxu0 0.0
      %2311 = vmatpush1.msra.mxu0 %v2293
      %2312 = vmatprep.subr.mxu0 0.0
      %2313 = vmatpush1.msra.mxu0 0.0
      %2314 = vmatprep.subr.mxu0 0.0
      %2315 = vmatpush1.msra.mxu0 0.0
      %2316 = vmatprep.subr.mxu0 0.0
      %2317 = vmatpush1.msra.mxu0 0.0
      %2318 = vmatprep.subr.mxu0 0.0
      %2319 = vmatpush1.msra.mxu0 0.0
      %2320 = vmatprep.subr.mxu0 0.0
      %2321 = vmatpush1.msra.mxu0 0.0
      %2322 = vmatprep.subr.mxu0 0.0
      %2323 = vmatpush1.msra.mxu0 0.0
      %2324 = vmatprep.subr.mxu0 0.0
      %2325 = vmatpush1.msra.mxu0 0.0
      %2326 = vmatprep.subr.mxu0 0.0
      %2327 = vmatpush1.msra.mxu0 0.0
      %2328 = vmatprep.subr.mxu0 0.0
      %2329 = vmatpush1.msra.mxu0 0.0
      %2330 = vmatprep.subr.mxu0 0.0
      %2331 = vmatpush1.msra.mxu0 0.0
      %2332 = vmatprep.subr.mxu0 0.0
      %2333 = vmatpush1.msra.mxu0 0.0
      %2334 = vmatprep.subr.mxu0 0.0
      %2335 = vmatpush1.msra.mxu0 0.0
      %2336 = vmatprep.subr.mxu0 0.0
      %2337 = vmatpush1.msra.mxu0 0.0
      %2338 = vmatprep.subr.mxu0 0.0
      %2339 = vmatpush1.msra.mxu0 0.0
      %2340 = vmatprep.subr.mxu0 0.0
      %2341 = vmatpush1.msra.mxu0 0.0
      %2342 = vmatprep.subr.mxu0 0.0
      %2343 = vmatpush1.msra.mxu0 0.0
      %2344 = vmatprep.subr.mxu0 0.0
      %2345 = vmatpush1.msra.mxu0 0.0
      %2346 = vmatprep.subr.mxu0 0.0
      %2347 = vmatpush1.msra.mxu0 0.0
      %2348 = vmatprep.subr.mxu0 0.0
      %2349 = vmatpush1.msra.mxu0 0.0
      %2350 = vmatprep.subr.mxu0 0.0
      %2351 = vmatpush1.msra.mxu0 0.0
      %2352 = vmatprep.subr.mxu0 0.0
      %2353 = vmatpush1.msra.mxu0 0.0
      %2354 = vmatprep.subr.mxu0 0.0
      %2355 = vmatpush1.msra.mxu0 0.0
      %2356 = vmatprep.subr.mxu0 0.0
      %2357 = vmatpush1.msra.mxu0 0.0
      %2358 = vmatprep.subr.mxu0 0.0
      %2359 = vmatpush1.msra.mxu0 0.0
      %2360 = vmatprep.subr.mxu0 0.0
      %2361 = vmatpush1.msra.mxu0 0.0
      %2362 = vmatprep.subr.mxu0 0.0
      %2363 = vmatpush1.msra.mxu0 0.0
      %2364 = vmatprep.subr.mxu0 0.0
      %2365 = vmatpush1.msra.mxu0 0.0
      %2366 = vmatprep.subr.mxu0 0.0
      %2367 = vmatpush1.msra.mxu0 0.0
      %2368 = vmatprep.mubr.f32.mxu0 0.0
      %2369 = vmatmul.mubr.f32.gmra.mrb[0].mxu0 %v2302
      %v2370 = vpop.f32.mrb[0].mxu0
      %v2371 = vadd.f32 %v2299, %v2370
      %v2372 = vpop.f32.mrb[0].mxu0
      %2373 = vdwg.mxu0
      %2374 = vst [vmem:[#allocation16] sm:$0xff] %v2371
    $region69: #{tpu_custom_call.1} parent=1 // pred_fallthru
      _
    // Predicated region
    $region70: #{tpu_custom_call.1} parent=1 // pred_check
      _
    $region71: #{tpu_custom_call.1} parent=1 // pred_check_branch
      %2376 = sbr.rel (0) target = $region73
    $region72: #{tpu_custom_call.1} parent=1 // pred_region
      %s2378 = ssub.s32 128, 128
      %2379 = vsyncadd [#allocation9], %s2378
      %s2381 = sshll.u32 [#allocation16], 4
      %s2382 = int_to_ptr.vmem [resolvable:$true] %s2381
      %2384 = dma.vmem_to_hbm [thread:$0]  %s2382, 128, %s10, [#allocation9]
    $region73: #{tpu_custom_call.1} parent=1 // pred_fallthru
      _
    // Predicated region
    $region74: #{tpu_custom_call.1} parent=1 // pred_check
      _
    $region75: #{tpu_custom_call.1} parent=1 // pred_check_branch
      %2386 = sbr.rel (0) target = $region77
    $region76: #{tpu_custom_call.1} parent=1 // pred_region
      %2387 = dma.done [#allocation9], 128
    $region77: #{tpu_custom_call.1} parent=1 // pred_fallthru
      _
    %2388 = vsyncpa [#allocation8], 1
    %2389 = vsyncpa [#allocation11], 1
    %2390 = vsyncpa [#allocation14], 1
    %2391 = vsyncpa [#allocation9], 1

// kernel: tpu_custom_call.1
$region0: #{tpu_custom_call.1}
  #allocation0 [shape = 'u32[]', space=smem, size = 0x4, offset = 0x4, fixed_abs, tag = 'smem constant byte address 0x4 - core index']
  #allocation1 [shape = 'u32[144,128]{1,0:T(1,128)}', space=vmem, size = 0x12000, scoped, tag = 'internal scratch']
  #allocation2 [shape = 'f32[8,8,128]{2,1,0:T(8,128)}', space=vmem, size = 0x8000, scoped, tag = 'scratch operand']
  #allocation3 [shape = 'f32[8,8,32]{2,1,0:T(8,128)}', space=vmem, size = 0x8000, scoped, tag = 'scratch operand']
  #allocation4 [shape = 'f32[2,8,32]{2,1,0:T(8,128)}', space=vmem, size = 0x2000, scoped, tag = 'scratch operand']
  #allocation5 [shape = 'f32[2,8,32]{2,1,0:T(8,128)}', space=vmem, size = 0x2000, scoped, tag = 'scratch operand']
  #allocation6 [shape = 'f32[8,32]{1,0:T(8,128)}', space=vmem, size = 0x1000, scoped, tag = 'scratch operand']
  %s0 = inlined_call_operand.hbm [shape: f32[8,8,8], index: 0, kind: input, shape index: {}]
  %s1 = inlined_call_operand.vmem [shape: s32[8,1], index: 1, kind: input, shape index: {}]
  %s2 = inlined_call_operand.hbm [shape: f32[8,128], index: 2, kind: input, shape index: {}]
  %s3 = inlined_call_operand.hbm [shape: f32[32,128], index: 3, kind: input, shape index: {}]
  %s4 = inlined_call_operand.vmem [shape: f32[1,128], index: 4, kind: input, shape index: {}]
  %s5 = inlined_call_operand.hbm [shape: f32[32,128], index: 5, kind: input, shape index: {}]
  %s6 = inlined_call_operand.hbm [shape: f32[32,128], index: 6, kind: input, shape index: {}]
  %s7 = inlined_call_operand.vmem [shape: f32[1,128], index: 7, kind: input, shape index: {}]
  %s8 = inlined_call_operand.vmem [shape: f32[32,128], index: 8, kind: input, shape index: {}]
  %s9 = inlined_call_operand.vmem [shape: f32[1,128], index: 9, kind: input, shape index: {}]
  %s10 = inlined_call_operand.hbm [shape: f32[8,128], index: 10, kind: output, shape index: {}]
  %s11 = sld [smem:[#allocation0]]
  $region78: #{tpu_custom_call.1} parent=0
    _
  %s13 = ssub.s32 1, %s11
  %s14 = scalar_select 0, %s13, %s11
  $region1: #{tpu_custom_call.1} parent=0
    #allocation7 [shape = 'u8[32768]{0}', space=vmem, size = 0x8000, scoped, tag = 'input window, operand 0, single buffered']
    #allocation8 [shape = 's32[1]{0}', space=sflag, size = 0x4, scoped, tag = 'scoped memory for tpu_custom_call.1']
    #allocation9 [shape = 's32[1]{0}', space=sflag, size = 0x4, scoped, tag = 'scoped memory for tpu_custom_call.1']
    #allocation10 [shape = 'u8[4096]{0}', space=vmem, size = 0x1000, scoped, tag = 'input window, operand 2, single buffered']
    #allocation11 [shape = 's32[1]{0}', space=sflag, size = 0x4, scoped, tag = 'scoped memory for tpu_custom_call.1']
    #allocation12 [shape = 'u8[16384]{0}', space=vmem, size = 0x4000, scoped, tag = 'input window, operand 3, single buffered']
    #allocation13 [shape = 'u8[16384]{0}', space=vmem, size = 0x4000, scoped, tag = 'input window, operand 5, single buffered']
    #allocation14 [shape = 's32[1]{0}', space=sflag, size = 0x4, scoped, tag = 'scoped memory for tpu_custom_call.1']
    #allocation15 [shape = 'u8[16384]{0}', space=vmem, size = 0x4000, scoped, tag = 'input window, operand 6, single buffered']
    #allocation16 [shape = 'u8[4096]{0}', space=vmem, size = 0x1000, scoped, tag = 'output window, operand 0, single buffered']
    %15 = vsyncpa [#allocation8], 0
    %16 = vsyncpa [#allocation11], 0
    %17 = vsyncpa [#allocation14], 0
    %18 = vsyncpa [#allocation9], 0
    // Predicated region
    $region2: #{tpu_custom_call.1} parent=1 // pred_check
      _
    $region3: #{tpu_custom_call.1} parent=1 // pred_check_branch
      %20 = sbr.rel (0) target = $region5
    $region4: #{tpu_custom_call.1} parent=1 // pred_region
      %s22 = ssub.s32 1024, 1024
      %23 = vsyncadd [#allocation8], %s22
      %s24 = sshll.u32 [#allocation7], 4
      %s25 = int_to_ptr.vmem [resolvable:$true] %s24
      %30 = dma.hbm_to_vmem [thread:$0]  %s0, 1024, %s25, [#allocation8], 128, 128, 8
    $region5: #{tpu_custom_call.1} parent=1 // pred_fallthru
      _
    // Predicated region
    $region6: #{tpu_custom_call.1} parent=1 // pred_check
      _
    $region7: #{tpu_custom_call.1} parent=1 // pred_check_branch
      %32 = sbr.rel (0) target = $region9
    $region8: #{tpu_custom_call.1} parent=1 // pred_region
      _
    $region9: #{tpu_custom_call.1} parent=1 // pred_fallthru
      _
    // Predicated region
    $region10: #{tpu_custom_call.1} parent=1 // pred_check
      _
    $region11: #{tpu_custom_call.1} parent=1 // pred_check_branch
      %34 = sbr.rel (0) target = $region13
    $region12: #{tpu_custom_call.1} parent=1 // pred_region
      %s36 = ssub.s32 128, 128
      %37 = vsyncadd [#allocation11], %s36
      %s39 = sshll.u32 [#allocation10], 4
      %s40 = int_to_ptr.vmem [resolvable:$true] %s39
      %42 = dma.hbm_to_vmem [thread:$0]  %s2, 128, %s40, [#allocation11]
    $region13: #{tpu_custom_call.1} parent=1 // pred_fallthru
      _
    // Predicated region
    $region14: #{tpu_custom_call.1} parent=1 // pred_check
      _
    $region15: #{tpu_custom_call.1} parent=1 // pred_check_branch
      %44 = sbr.rel (0) target = $region17
    $region16: #{tpu_custom_call.1} parent=1 // pred_region
      %s46 = ssub.s32 512, 512
      %47 = vsyncadd [#allocation11], %s46
      %s48 = sshll.u32 [#allocation12], 4
      %s49 = int_to_ptr.vmem [resolvable:$true] %s48
      %54 = dma.hbm_to_vmem [thread:$0]  %s3, 512, %s49, [#allocation11], 128, 128, 8
    $region17: #{tpu_custom_call.1} parent=1 // pred_fallthru
      _
    // Predicated region
    $region18: #{tpu_custom_call.1} parent=1 // pred_check
      _
    $region19: #{tpu_custom_call.1} parent=1 // pred_check_branch
      %56 = sbr.rel (0) target = $region21
    $region20: #{tpu_custom_call.1} parent=1 // pred_region
      _
    $region21: #{tpu_custom_call.1} parent=1 // pred_fallthru
      _
    // Predicated region
    $region22: #{tpu_custom_call.1} parent=1 // pred_check
      _
    $region23: #{tpu_custom_call.1} parent=1 // pred_check_branch
      %58 = sbr.rel (0) target = $region25
    $region24: #{tpu_custom_call.1} parent=1 // pred_region
      %s60 = ssub.s32 512, 512
      %61 = vsyncadd [#allocation14], %s60
      %s62 = sshll.u32 [#allocation13], 4
      %s63 = int_to_ptr.vmem [resolvable:$true] %s62
      %68 = dma.hbm_to_vmem [thread:$0]  %s5, 512, %s63, [#allocation14], 128, 128, 8
    $region25: #{tpu_custom_call.1} parent=1 // pred_fallthru
      _
    // Predicated region
    $region26: #{tpu_custom_call.1} parent=1 // pred_check
      _
    $region27: #{tpu_custom_call.1} parent=1 // pred_check_branch
      %70 = sbr.rel (0) target = $region29
    $region28: #{tpu_custom_call.1} parent=1 // pred_region
      %s72 = ssub.s32 512, 512
      %73 = vsyncadd [#allocation14], %s72
      %s74 = sshll.u32 [#allocation15], 4
      %s75 = int_to_ptr.vmem [resolvable:$true] %s74
      %80 = dma.hbm_to_vmem [thread:$0]  %s6, 512, %s75, [#allocation14], 128, 128, 8
    $region29: #{tpu_custom_call.1} parent=1 // pred_fallthru
      _
    // Predicated region
    $region30: #{tpu_custom_call.1} parent=1 // pred_check
      _
    $region31: #{tpu_custom_call.1} parent=1 // pred_check_branch
      %82 = sbr.rel (0) target = $region33
    $region32: #{tpu_custom_call.1} parent=1 // pred_region
      _
    $region33: #{tpu_custom_call.1} parent=1 // pred_fallthru
      _
    // Predicated region
    $region34: #{tpu_custom_call.1} parent=1 // pred_check
      _
    $region35: #{tpu_custom_call.1} parent=1 // pred_check_branch
      %84 = sbr.rel (0) target = $region37
    $region36: #{tpu_custom_call.1} parent=1 // pred_region
      _
    $region37: #{tpu_custom_call.1} parent=1 // pred_fallthru
      _
    // Predicated region
    $region38: #{tpu_custom_call.1} parent=1 // pred_check
      _
    $region39: #{tpu_custom_call.1} parent=1 // pred_check_branch
      %86 = sbr.rel (0) target = $region41
    $region40: #{tpu_custom_call.1} parent=1 // pred_region
      _
    $region41: #{tpu_custom_call.1} parent=1 // pred_fallthru
      _
    // Predicated region
    $region42: #{tpu_custom_call.1} parent=1 // pred_check
      _
    $region43: #{tpu_custom_call.1} parent=1 // pred_check_branch
      %88 = sbr.rel (0) target = $region45
    $region44: #{tpu_custom_call.1} parent=1 // pred_region
      %89 = dma.done [#allocation8], 1024
    $region45: #{tpu_custom_call.1} parent=1 // pred_fallthru
      _
    // Predicated region
    $region46: #{tpu_custom_call.1} parent=1 // pred_check
      _
    $region47: #{tpu_custom_call.1} parent=1 // pred_check_branch
      %91 = sbr.rel (0) target = $region49
    $region48: #{tpu_custom_call.1} parent=1 // pred_region
      %92 = dma.done [#allocation11], 128
    $region49: #{tpu_custom_call.1} parent=1 // pred_fallthru
      _
    // Predicated region
    $region50: #{tpu_custom_call.1} parent=1 // pred_check
      _
    $region51: #{tpu_custom_call.1} parent=1 // pred_check_branch
      %94 = sbr.rel (0) target = $region53
    $region52: #{tpu_custom_call.1} parent=1 // pred_region
      %95 = dma.done [#allocation11], 512
    $region53: #{tpu_custom_call.1} parent=1 // pred_fallthru
      _
    // Predicated region
    $region54: #{tpu_custom_call.1} parent=1 // pred_check
      _
    $region55: #{tpu_custom_call.1} parent=1 // pred_check_branch
      %97 = sbr.rel (0) target = $region57
    $region56: #{tpu_custom_call.1} parent=1 // pred_region
      %98 = dma.done [#allocation14], 512
    $region57: #{tpu_custom_call.1} parent=1 // pred_fallthru
      _
    // Predicated region
    $region58: #{tpu_custom_call.1} parent=1 // pred_check
      _
    $region59: #{tpu_custom_call.1} parent=1 // pred_check_branch
      %100 = sbr.rel (0) target = $region61
    $region60: #{tpu_custom_call.1} parent=1 // pred_region
      %101 = dma.done [#allocation14], 512
    $region61: #{tpu_custom_call.1} parent=1 // pred_fallthru
      _
    %p102 = scmp.eq.s32.totalorder 0, 0
    // Predicated region
    $region62: #{tpu_custom_call.1} parent=1 // pred_check
      %p103 = pneg %p102
    $region63: #{tpu_custom_call.1} parent=1 // pred_check_branch
      %105 = sbr.rel (%p103) target = $region65
    $region64: #{tpu_custom_call.1} parent=1 // pred_region
      %vm106 = vcmask 261120
      %107 = vst.msk [vmem:[#allocation4] sm:$0xff] %vm106, 0.0
      %108 = vst.msk [vmem:[#allocation4 + $0x8] sm:$0xff] %vm106, 0.0
      %109 = vst.msk [vmem:[#allocation5] sm:$0xff] %vm106, 0.0
      %110 = vst.msk [vmem:[#allocation5 + $0x8] sm:$0xff] %vm106, 0.0
      %111 = vst.msk [vmem:[#allocation6] sm:$0xff] %vm106, 0.0
    $region65: #{tpu_custom_call.1} parent=1 // pred_fallthru
      _
    %v112 = vld [vmem:[%s1] sm:$0xff]
    %s113 = smul.u32 0, 8
    %v114 = vld [vmem:[#allocation7] sm:$0xff]
    %v115 = vld [vmem:[#allocation7 + $0x8] sm:$0xff]
    %v116 = vld [vmem:[#allocation7 + $0x10] sm:$0xff]
    %v117 = vld [vmem:[#allocation7 + $0x18] sm:$0xff]
    %v118 = vld [vmem:[#allocation7 + $0x20] sm:$0xff]
    %v119 = vld [vmem:[#allocation7 + $0x28] sm:$0xff]
    %v120 = vld [vmem:[#allocation7 + $0x30] sm:$0xff]
    %v121 = vld [vmem:[#allocation7 + $0x38] sm:$0xff]
    %v122 = vld [vmem:[#allocation10] sm:$0xff]
    %v123 = vld [vmem:[%s4] sm:$0x1]
    %v125 = vlaneseq
    %v126 = vshrl.u32 %v125, 7
    %v127 = vsub.s32 0, %v126
    %v128 = vrot.slane %v123, %v127
    %vm130 = vcmask 64512
    %v132 = vsel %vm130, %v114, 0
    %v135 = vsel %vm130, %v115, 0
    %v138 = vsel %vm130, %v116, 0
    %v141 = vsel %vm130, %v117, 0
    %v144 = vsel %vm130, %v118, 0
    %v147 = vsel %vm130, %v119, 0
    %v150 = vsel %vm130, %v120, 0
    %v153 = vsel %vm130, %v121, 0
    %155 = vmatprep.subr.mxu0 0.0
    %156 = vmatpush1.msra.mxu0 %v122
    %157 = vmatprep.subr.mxu0 0.0
    %158 = vmatpush1.msra.mxu0 0.0
    %159 = vmatprep.subr.mxu0 0.0
    %160 = vmatpush1.msra.mxu0 0.0
    %161 = vmatprep.subr.mxu0 0.0
    %162 = vmatpush1.msra.mxu0 0.0
    %163 = vmatprep.subr.mxu0 0.0
    %164 = vmatpush1.msra.mxu0 0.0
    %165 = vmatprep.subr.mxu0 0.0
    %166 = vmatpush1.msra.mxu0 0.0
    %167 = vmatprep.subr.mxu0 0.0
    %168 = vmatpush1.msra.mxu0 0.0
    %169 = vmatprep.subr.mxu0 0.0
    %170 = vmatpush1.msra.mxu0 0.0
    %171 = vmatprep.subr.mxu0 0.0
    %172 = vmatpush1.msra.mxu0 0.0
    %173 = vmatprep.subr.mxu0 0.0
    %174 = vmatpush1.msra.mxu0 0.0
    %175 = vmatprep.subr.mxu0 0.0
    %176 = vmatpush1.msra.mxu0 0.0
    %177 = vmatprep.subr.mxu0 0.0
    %178 = vmatpush1.msra.mxu0 0.0
    %179 = vmatprep.subr.mxu0 0.0
    %180 = vmatpush1.msra.mxu0 0.0
    %181 = vmatprep.subr.mxu0 0.0
    %182 = vmatpush1.msra.mxu0 0.0
    %183 = vmatprep.subr.mxu0 0.0
    %184 = vmatpush1.msra.mxu0 0.0
    %185 = vmatprep.subr.mxu0 0.0
    %186 = vmatpush1.msra.mxu0 0.0
    %187 = vmatprep.subr.mxu0 0.0
    %188 = vmatpush1.msra.mxu0 0.0
    %189 = vmatprep.subr.mxu0 0.0
    %190 = vmatpush1.msra.mxu0 0.0
    %191 = vmatprep.subr.mxu0 0.0
    %192 = vmatpush1.msra.mxu0 0.0
    %193 = vmatprep.subr.mxu0 0.0
    %194 = vmatpush1.msra.mxu0 0.0
    %195 = vmatprep.subr.mxu0 0.0
    %196 = vmatpush1.msra.mxu0 0.0
    %197 = vmatprep.subr.mxu0 0.0
    %198 = vmatpush1.msra.mxu0 0.0
    %199 = vmatprep.subr.mxu0 0.0
    %200 = vmatpush1.msra.mxu0 0.0
    %201 = vmatprep.subr.mxu0 0.0
    %202 = vmatpush1.msra.mxu0 0.0
    %203 = vmatprep.subr.mxu0 0.0
    %204 = vmatpush1.msra.mxu0 0.0
    %205 = vmatprep.subr.mxu0 0.0
    %206 = vmatpush1.msra.mxu0 0.0
    %207 = vmatprep.subr.mxu0 0.0
    %208 = vmatpush1.msra.mxu0 0.0
    %209 = vmatprep.subr.mxu0 0.0
    %210 = vmatpush1.msra.mxu0 0.0
    %211 = vmatprep.subr.mxu0 0.0
    %212 = vmatpush1.msra.mxu0 0.0
    %213 = vmatprep.subr.mxu0 0.0
    %214 = vmatpush1.msra.mxu0 0.0
    %215 = vmatprep.subr.mxu0 0.0
    %216 = vmatpush1.msra.mxu0 0.0
    %217 = vmatprep.subr.mxu0 0.0
    %218 = vmatpush1.msra.mxu0 0.0
    %219 = vmatprep.mubr.f32.mxu0 0.0
    %220 = vmatmul.mubr.f32.gmra.mrb[0].mxu0 %v132
    %v221 = vpop.f32.mrb[0].mxu0
    %v222 = vadd.f32 %v128, %v221
    %v223 = vpop.f32.mrb[0].mxu0
    %224 = vmatprep.mubr.f32.mxu0 0.0
    %225 = vmatmul.mubr.f32.gmra.mrb[0].mxu0 %v135
    %v226 = vpop.f32.mrb[0].mxu0
    %v227 = vadd.f32 %v128, %v226
    %v228 = vpop.f32.mrb[0].mxu0
    %229 = vmatprep.mubr.f32.mxu0 0.0
    %230 = vmatmul.mubr.f32.gmra.mrb[0].mxu0 %v138
    %v231 = vpop.f32.mrb[0].mxu0
    %v232 = vadd.f32 %v128, %v231
    %v233 = vpop.f32.mrb[0].mxu0
    %234 = vmatprep.mubr.f32.mxu0 0.0
    %235 = vmatmul.mubr.f32.gmra.mrb[0].mxu0 %v141
    %v236 = vpop.f32.mrb[0].mxu0
    %v237 = vadd.f32 %v128, %v236
    %v238 = vpop.f32.mrb[0].mxu0
    %239 = vmatprep.mubr.f32.mxu0 0.0
    %240 = vmatmul.mubr.f32.gmra.mrb[0].mxu0 %v144
    %v241 = vpop.f32.mrb[0].mxu0
    %v242 = vadd.f32 %v128, %v241
    %v243 = vpop.f32.mrb[0].mxu0
    %244 = vmatprep.mubr.f32.mxu0 0.0
    %245 = vmatmul.mubr.f32.gmra.mrb[0].mxu0 %v147
    %v246 = vpop.f32.mrb[0].mxu0
    %v247 = vadd.f32 %v128, %v246
    %v248 = vpop.f32.mrb[0].mxu0
    %249 = vmatprep.mubr.f32.mxu0 0.0
    %250 = vmatmul.mubr.f32.gmra.mrb[0].mxu0 %v150
    %v251 = vpop.f32.mrb[0].mxu0
    %v252 = vadd.f32 %v128, %v251
    %v253 = vpop.f32.mrb[0].mxu0
    %254 = vmatprep.mubr.f32.mxu0 0.0
    %255 = vmatmul.mubr.f32.gmra.mrb[0].mxu0 %v153
    %v256 = vpop.f32.mrb[0].mxu0
    %v257 = vadd.f32 %v128, %v256
    %v258 = vpop.f32.mrb[0].mxu0
    %259 = vdwg.mxu0
    %260 = vst [vmem:[#allocation2] sm:$0xff] %v222
    %261 = vst [vmem:[#allocation2 + $0x8] sm:$0xff] %v227
    %262 = vst [vmem:[#allocation2 + $0x10] sm:$0xff] %v232
    %263 = vst [vmem:[#allocation2 + $0x18] sm:$0xff] %v237
    %264 = vst [vmem:[#allocation2 + $0x20] sm:$0xff] %v242
    %265 = vst [vmem:[#allocation2 + $0x28] sm:$0xff] %v247
    %266 = vst [vmem:[#allocation2 + $0x30] sm:$0xff] %v252
    %267 = vst [vmem:[#allocation2 + $0x38] sm:$0xff] %v257
    %v268 = vld [vmem:[#allocation4] sm:$0xff]
    %v269 = vld [vmem:[#allocation5] sm:$0xff]
    %v270 = vld [vmem:[#allocation2] sm:$0xff]
    %v271 = vld [vmem:[#allocation12] sm:$0xff]
    %v272 = vld [vmem:[#allocation12 + $0x8] sm:$0xff]
    %v273 = vld [vmem:[#allocation12 + $0x10] sm:$0xff]
    %v274 = vld [vmem:[#allocation12 + $0x18] sm:$0xff]
    %vm275 = vcmask 261120
    %v277 = vsel %vm275, %v268, 0
    %279 = vmatprep.subr.mxu0 0.0
    %280 = vmatpush1.msra.mxu0 %v271
    %281 = vmatprep.subr.mxu0 0.0
    %282 = vmatpush1.msra.mxu0 %v272
    %283 = vmatprep.subr.mxu0 0.0
    %284 = vmatpush1.msra.mxu0 %v273
    %285 = vmatprep.subr.mxu0 0.0
    %286 = vmatpush1.msra.mxu0 %v274
    %287 = vmatprep.subr.mxu0 0.0
    %288 = vmatpush1.msra.mxu0 0.0
    %289 = vmatprep.subr.mxu0 0.0
    %290 = vmatpush1.msra.mxu0 0.0
    %291 = vmatprep.subr.mxu0 0.0
    %292 = vmatpush1.msra.mxu0 0.0
    %293 = vmatprep.subr.mxu0 0.0
    %294 = vmatpush1.msra.mxu0 0.0
    %295 = vmatprep.subr.mxu0 0.0
    %296 = vmatpush1.msra.mxu0 0.0
    %297 = vmatprep.subr.mxu0 0.0
    %298 = vmatpush1.msra.mxu0 0.0
    %299 = vmatprep.subr.mxu0 0.0
    %300 = vmatpush1.msra.mxu0 0.0
    %301 = vmatprep.subr.mxu0 0.0
    %302 = vmatpush1.msra.mxu0 0.0
    %303 = vmatprep.subr.mxu0 0.0
    %304 = vmatpush1.msra.mxu0 0.0
    %305 = vmatprep.subr.mxu0 0.0
    %306 = vmatpush1.msra.mxu0 0.0
    %307 = vmatprep.subr.mxu0 0.0
    %308 = vmatpush1.msra.mxu0 0.0
    %309 = vmatprep.subr.mxu0 0.0
    %310 = vmatpush1.msra.mxu0 0.0
    %311 = vmatprep.subr.mxu0 0.0
    %312 = vmatpush1.msra.mxu0 0.0
    %313 = vmatprep.subr.mxu0 0.0
    %314 = vmatpush1.msra.mxu0 0.0
    %315 = vmatprep.subr.mxu0 0.0
    %316 = vmatpush1.msra.mxu0 0.0
    %317 = vmatprep.subr.mxu0 0.0
    %318 = vmatpush1.msra.mxu0 0.0
    %319 = vmatprep.subr.mxu0 0.0
    %320 = vmatpush1.msra.mxu0 0.0
    %321 = vmatprep.subr.mxu0 0.0
    %322 = vmatpush1.msra.mxu0 0.0
    %323 = vmatprep.subr.mxu0 0.0
    %324 = vmatpush1.msra.mxu0 0.0
    %325 = vmatprep.subr.mxu0 0.0
    %326 = vmatpush1.msra.mxu0 0.0
    %327 = vmatprep.subr.mxu0 0.0
    %328 = vmatpush1.msra.mxu0 0.0
    %329 = vmatprep.subr.mxu0 0.0
    %330 = vmatpush1.msra.mxu0 0.0
    %331 = vmatprep.subr.mxu0 0.0
    %332 = vmatpush1.msra.mxu0 0.0
    %333 = vmatprep.subr.mxu0 0.0
    %334 = vmatpush1.msra.mxu0 0.0
    %335 = vmatprep.subr.mxu0 0.0
    %336 = vmatpush1.msra.mxu0 0.0
    %337 = vmatprep.subr.mxu0 0.0
    %338 = vmatpush1.msra.mxu0 0.0
    %339 = vmatprep.subr.mxu0 0.0
    %340 = vmatpush1.msra.mxu0 0.0
    %341 = vmatprep.subr.mxu0 0.0
    %342 = vmatpush1.msra.mxu0 0.0
    %343 = vmatprep.mubr.f32.mxu0 0.0
    %344 = vmatmul.mubr.f32.gmra.mrb[0].mxu0 %v277
    %v345 = vpop.f32.mrb[0].mxu0
    %v346 = vadd.f32 0.0, %v345
    %v347 = vpop.f32.mrb[0].mxu0
    %348 = vdwg.mxu0
    %v349 = vadd.f32 %v270, %v346
    %v350 = vxor.u32 %v349, 2147483648
    %v351 = vmul.f32 %v350, 1.442695
    %v352 = vpow.pop %v351
    %v353 = vadd.f32 %v352, 1.0
    %v354 = vrcp.pop %v353
    %v355 = vmul.f32 1.0, %v354
    %v356 = vtanh.pop %v349
    %358 = vrot.lane.b32.xlu0 %v269, 32
    %v359 = vpop.permute.xlu0 %358
    %v361 = vmul.f32 %v355, %v359
    %363 = vrot.lane.b32.xlu0 %v356, 32
    %v364 = vpop.permute.xlu0 %363
    %v366 = vmul.f32 %v355, %v364
    %368 = vrot.lane.b32.xlu0 %v366, 32
    %v369 = vpop.permute.xlu0 %368
    %v371 = vadd.f32 %v361, %v369
    %v372 = vtanh.pop %v371
    %374 = vrot.lane.b32.xlu0 %v372, 32
    %v375 = vpop.permute.xlu0 %374
    %v377 = vmul.f32 %v355, %v375
    %379 = vrot.lane.b32.xlu0 %v377, 64
    %v380 = vpop.permute.xlu0 %379
    %382 = vst.msk [vmem:[#allocation3] sm:$0xff] %vm275, %v380
    %s383 = scalar_lea.vmem [#allocation2], 8
    %v384 = vld [vmem:[%s383] sm:$0xff]
    %v385 = vld [vmem:[#allocation12] sm:$0xff]
    %v386 = vld [vmem:[#allocation12 + $0x8] sm:$0xff]
    %v387 = vld [vmem:[#allocation12 + $0x10] sm:$0xff]
    %v388 = vld [vmem:[#allocation12 + $0x18] sm:$0xff]
    %v389 = vsel %vm275, %v380, 0
    %391 = vmatprep.subr.mxu0 0.0
    %392 = vmatpush1.msra.mxu0 %v385
    %393 = vmatprep.subr.mxu0 0.0
    %394 = vmatpush1.msra.mxu0 %v386
    %395 = vmatprep.subr.mxu0 0.0
    %396 = vmatpush1.msra.mxu0 %v387
    %397 = vmatprep.subr.mxu0 0.0
    %398 = vmatpush1.msra.mxu0 %v388
    %399 = vmatprep.subr.mxu0 0.0
    %400 = vmatpush1.msra.mxu0 0.0
    %401 = vmatprep.subr.mxu0 0.0
    %402 = vmatpush1.msra.mxu0 0.0
    %403 = vmatprep.subr.mxu0 0.0
    %404 = vmatpush1.msra.mxu0 0.0
    %405 = vmatprep.subr.mxu0 0.0
    %406 = vmatpush1.msra.mxu0 0.0
    %407 = vmatprep.subr.mxu0 0.0
    %408 = vmatpush1.msra.mxu0 0.0
    %409 = vmatprep.subr.mxu0 0.0
    %410 = vmatpush1.msra.mxu0 0.0
    %411 = vmatprep.subr.mxu0 0.0
    %412 = vmatpush1.msra.mxu0 0.0
    %413 = vmatprep.subr.mxu0 0.0
    %414 = vmatpush1.msra.mxu0 0.0
    %415 = vmatprep.subr.mxu0 0.0
    %416 = vmatpush1.msra.mxu0 0.0
    %417 = vmatprep.subr.mxu0 0.0
    %418 = vmatpush1.msra.mxu0 0.0
    %419 = vmatprep.subr.mxu0 0.0
    %420 = vmatpush1.msra.mxu0 0.0
    %421 = vmatprep.subr.mxu0 0.0
    %422 = vmatpush1.msra.mxu0 0.0
    %423 = vmatprep.subr.mxu0 0.0
    %424 = vmatpush1.msra.mxu0 0.0
    %425 = vmatprep.subr.mxu0 0.0
    %426 = vmatpush1.msra.mxu0 0.0
    %427 = vmatprep.subr.mxu0 0.0
    %428 = vmatpush1.msra.mxu0 0.0
    %429 = vmatprep.subr.mxu0 0.0
    %430 = vmatpush1.msra.mxu0 0.0
    %431 = vmatprep.subr.mxu0 0.0
    %432 = vmatpush1.msra.mxu0 0.0
    %433 = vmatprep.subr.mxu0 0.0
    %434 = vmatpush1.msra.mxu0 0.0
    %435 = vmatprep.subr.mxu0 0.0
    %436 = vmatpush1.msra.mxu0 0.0
    %437 = vmatprep.subr.mxu0 0.0
    %438 = vmatpush1.msra.mxu0 0.0
    %439 = vmatprep.subr.mxu0 0.0
    %440 = vmatpush1.msra.mxu0 0.0
    %441 = vmatprep.subr.mxu0 0.0
    %442 = vmatpush1.msra.mxu0 0.0
    %443 = vmatprep.subr.mxu0 0.0
    %444 = vmatpush1.msra.mxu0 0.0
    %445 = vmatprep.subr.mxu0 0.0
    %446 = vmatpush1.msra.mxu0 0.0
    %447 = vmatprep.subr.mxu0 0.0
    %448 = vmatpush1.msra.mxu0 0.0
    %449 = vmatprep.subr.mxu0 0.0
    %450 = vmatpush1.msra.mxu0 0.0
    %451 = vmatprep.subr.mxu0 0.0
    %452 = vmatpush1.msra.mxu0 0.0
    %453 = vmatprep.subr.mxu0 0.0
    %454 = vmatpush1.msra.mxu0 0.0
    %455 = vmatprep.mubr.f32.mxu0 0.0
    %456 = vmatmul.mubr.f32.gmra.mrb[0].mxu0 %v389
    %v457 = vpop.f32.mrb[0].mxu0
    %v458 = vadd.f32 0.0, %v457
    %v459 = vpop.f32.mrb[0].mxu0
    %460 = vdwg.mxu0
    %v461 = vadd.f32 %v384, %v458
    %v462 = vxor.u32 %v461, 2147483648
    %v463 = vmul.f32 %v462, 1.442695
    %v464 = vpow.pop %v463
    %v465 = vadd.f32 %v464, 1.0
    %v466 = vrcp.pop %v465
    %v467 = vmul.f32 1.0, %v466
    %v468 = vtanh.pop %v461
    %v469 = vmul.f32 %v467, %v371
    %471 = vrot.lane.b32.xlu0 %v468, 32
    %v472 = vpop.permute.xlu0 %471
    %v474 = vmul.f32 %v467, %v472
    %476 = vrot.lane.b32.xlu0 %v474, 32
    %v477 = vpop.permute.xlu0 %476
    %v479 = vadd.f32 %v469, %v477
    %v480 = vtanh.pop %v479
    %482 = vrot.lane.b32.xlu0 %v480, 32
    %v483 = vpop.permute.xlu0 %482
    %v485 = vmul.f32 %v467, %v483
    %487 = vrot.lane.b32.xlu0 %v485, 64
    %v488 = vpop.permute.xlu0 %487
    %s490 = scalar_lea.vmem [#allocation3], 8
    %491 = vst.msk [vmem:[%s490] sm:$0xff] %vm275, %v488
    %s492 = scalar_lea.vmem [#allocation2], 16
    %v493 = vld [vmem:[%s492] sm:$0xff]
    %v494 = vld [vmem:[#allocation12] sm:$0xff]
    %v495 = vld [vmem:[#allocation12 + $0x8] sm:$0xff]
    %v496 = vld [vmem:[#allocation12 + $0x10] sm:$0xff]
    %v497 = vld [vmem:[#allocation12 + $0x18] sm:$0xff]
    %v498 = vsel %vm275, %v488, 0
    %500 = vmatprep.subr.mxu0 0.0
    %501 = vmatpush1.msra.mxu0 %v494
    %502 = vmatprep.subr.mxu0 0.0
    %503 = vmatpush1.msra.mxu0 %v495
    %504 = vmatprep.subr.mxu0 0.0
    %505 = vmatpush1.msra.mxu0 %v496
    %506 = vmatprep.subr.mxu0 0.0
    %507 = vmatpush1.msra.mxu0 %v497
    %508 = vmatprep.subr.mxu0 0.0
    %509 = vmatpush1.msra.mxu0 0.0
    %510 = vmatprep.subr.mxu0 0.0
    %511 = vmatpush1.msra.mxu0 0.0
    %512 = vmatprep.subr.mxu0 0.0
    %513 = vmatpush1.msra.mxu0 0.0
    %514 = vmatprep.subr.mxu0 0.0
    %515 = vmatpush1.msra.mxu0 0.0
    %516 = vmatprep.subr.mxu0 0.0
    %517 = vmatpush1.msra.mxu0 0.0
    %518 = vmatprep.subr.mxu0 0.0
    %519 = vmatpush1.msra.mxu0 0.0
    %520 = vmatprep.subr.mxu0 0.0
    %521 = vmatpush1.msra.mxu0 0.0
    %522 = vmatprep.subr.mxu0 0.0
    %523 = vmatpush1.msra.mxu0 0.0
    %524 = vmatprep.subr.mxu0 0.0
    %525 = vmatpush1.msra.mxu0 0.0
    %526 = vmatprep.subr.mxu0 0.0
    %527 = vmatpush1.msra.mxu0 0.0
    %528 = vmatprep.subr.mxu0 0.0
    %529 = vmatpush1.msra.mxu0 0.0
    %530 = vmatprep.subr.mxu0 0.0
    %531 = vmatpush1.msra.mxu0 0.0
    %532 = vmatprep.subr.mxu0 0.0
    %533 = vmatpush1.msra.mxu0 0.0
    %534 = vmatprep.subr.mxu0 0.0
    %535 = vmatpush1.msra.mxu0 0.0
    %536 = vmatprep.subr.mxu0 0.0
    %537 = vmatpush1.msra.mxu0 0.0
    %538 = vmatprep.subr.mxu0 0.0
    %539 = vmatpush1.msra.mxu0 0.0
    %540 = vmatprep.subr.mxu0 0.0
    %541 = vmatpush1.msra.mxu0 0.0
    %542 = vmatprep.subr.mxu0 0.0
    %543 = vmatpush1.msra.mxu0 0.0
    %544 = vmatprep.subr.mxu0 0.0
    %545 = vmatpush1.msra.mxu0 0.0
    %546 = vmatprep.subr.mxu0 0.0
    %547 = vmatpush1.msra.mxu0 0.0
    %548 = vmatprep.subr.mxu0 0.0
    %549 = vmatpush1.msra.mxu0 0.0
    %550 = vmatprep.subr.mxu0 0.0
    %551 = vmatpush1.msra.mxu0 0.0
    %552 = vmatprep.subr.mxu0 0.0
    %553 = vmatpush1.msra.mxu0 0.0
    %554 = vmatprep.subr.mxu0 0.0
    %555 = vmatpush1.msra.mxu0 0.0
    %556 = vmatprep.subr.mxu0 0.0
    %557 = vmatpush1.msra.mxu0 0.0
    %558 = vmatprep.subr.mxu0 0.0
    %559 = vmatpush1.msra.mxu0 0.0
    %560 = vmatprep.subr.mxu0 0.0
    %561 = vmatpush1.msra.mxu0 0.0
    %562 = vmatprep.subr.mxu0 0.0
    %563 = vmatpush1.msra.mxu0 0.0
    %564 = vmatprep.mubr.f32.mxu0 0.0
    %565 = vmatmul.mubr.f32.gmra.mrb[0].mxu0 %v498
    %v566 = vpop.f32.mrb[0].mxu0
    %v567 = vadd.f32 0.0, %v566
    %v568 = vpop.f32.mrb[0].mxu0
    %569 = vdwg.mxu0
    %v570 = vadd.f32 %v493, %v567
    %v571 = vxor.u32 %v570, 2147483648
    %v572 = vmul.f32 %v571, 1.442695
    %v573 = vpow.pop %v572
    %v574 = vadd.f32 %v573, 1.0
    %v575 = vrcp.pop %v574
    %v576 = vmul.f32 1.0, %v575
    %v577 = vtanh.pop %v570
    %v578 = vmul.f32 %v576, %v479
    %580 = vrot.lane.b32.xlu0 %v577, 32
    %v581 = vpop.permute.xlu0 %580
    %v583 = vmul.f32 %v576, %v581
    %585 = vrot.lane.b32.xlu0 %v583, 32
    %v586 = vpop.permute.xlu0 %585
    %v588 = vadd.f32 %v578, %v586
    %v589 = vtanh.pop %v588
    %591 = vrot.lane.b32.xlu0 %v589, 32
    %v592 = vpop.permute.xlu0 %591
    %v594 = vmul.f32 %v576, %v592
    %596 = vrot.lane.b32.xlu0 %v594, 64
    %v597 = vpop.permute.xlu0 %596
    %s599 = scalar_lea.vmem [#allocation3], 16
    %600 = vst.msk [vmem:[%s599] sm:$0xff] %vm275, %v597
    %s601 = scalar_lea.vmem [#allocation2], 24
    %v602 = vld [vmem:[%s601] sm:$0xff]
    %v603 = vld [vmem:[#allocation12] sm:$0xff]
    %v604 = vld [vmem:[#allocation12 + $0x8] sm:$0xff]
    %v605 = vld [vmem:[#allocation12 + $0x10] sm:$0xff]
    %v606 = vld [vmem:[#allocation12 + $0x18] sm:$0xff]
    %v607 = vsel %vm275, %v597, 0
    %609 = vmatprep.subr.mxu0 0.0
    %610 = vmatpush1.msra.mxu0 %v603
    %611 = vmatprep.subr.mxu0 0.0
    %612 = vmatpush1.msra.mxu0 %v604
    %613 = vmatprep.subr.mxu0 0.0
    %614 = vmatpush1.msra.mxu0 %v605
    %615 = vmatprep.subr.mxu0 0.0
    %616 = vmatpush1.msra.mxu0 %v606
    %617 = vmatprep.subr.mxu0 0.0
    %618 = vmatpush1.msra.mxu0 0.0
    %619 = vmatprep.subr.mxu0 0.0
    %620 = vmatpush1.msra.mxu0 0.0
    %621 = vmatprep.subr.mxu0 0.0
    %622 = vmatpush1.msra.mxu0 0.0
    %623 = vmatprep.subr.mxu0 0.0
    %624 = vmatpush1.msra.mxu0 0.0
    %625 = vmatprep.subr.mxu0 0.0
    %626 = vmatpush1.msra.mxu0 0.0
    %627 = vmatprep.subr.mxu0 0.0
    %628 = vmatpush1.msra.mxu0 0.0
    %629 = vmatprep.subr.mxu0 0.0
    %630 = vmatpush1.msra.mxu0 0.0
    %631 = vmatprep.subr.mxu0 0.0
    %632 = vmatpush1.msra.mxu0 0.0
    %633 = vmatprep.subr.mxu0 0.0
    %634 = vmatpush1.msra.mxu0 0.0
    %635 = vmatprep.subr.mxu0 0.0
    %636 = vmatpush1.msra.mxu0 0.0
    %637 = vmatprep.subr.mxu0 0.0
    %638 = vmatpush1.msra.mxu0 0.0
    %639 = vmatprep.subr.mxu0 0.0
    %640 = vmatpush1.msra.mxu0 0.0
    %641 = vmatprep.subr.mxu0 0.0
    %642 = vmatpush1.msra.mxu0 0.0
    %643 = vmatprep.subr.mxu0 0.0
    %644 = vmatpush1.msra.mxu0 0.0
    %645 = vmatprep.subr.mxu0 0.0
    %646 = vmatpush1.msra.mxu0 0.0
    %647 = vmatprep.subr.mxu0 0.0
    %648 = vmatpush1.msra.mxu0 0.0
    %649 = vmatprep.subr.mxu0 0.0
    %650 = vmatpush1.msra.mxu0 0.0
    %651 = vmatprep.subr.mxu0 0.0
    %652 = vmatpush1.msra.mxu0 0.0
    %653 = vmatprep.subr.mxu0 0.0
    %654 = vmatpush1.msra.mxu0 0.0
    %655 = vmatprep.subr.mxu0 0.0
    %656 = vmatpush1.msra.mxu0 0.0
    %657 = vmatprep.subr.mxu0 0.0
    %658 = vmatpush1.msra.mxu0 0.0
    %659 = vmatprep.subr.mxu0 0.0
    %660 = vmatpush1.msra.mxu0 0.0
    %661 = vmatprep.subr.mxu0 0.0
    %662 = vmatpush1.msra.mxu0 0.0
    %663 = vmatprep.subr.mxu0 0.0
    %664 = vmatpush1.msra.mxu0 0.0
    %665 = vmatprep.subr.mxu0 0.0
    %666 = vmatpush1.msra.mxu0 0.0
    %667 = vmatprep.subr.mxu0 0.0
    %668 = vmatpush1.msra.mxu0 0.0
    %669 = vmatprep.subr.mxu0 0.0
    %670 = vmatpush1.msra.mxu0 0.0
    %671 = vmatprep.subr.mxu0 0.0
    %672 = vmatpush1.msra.mxu0 0.0
    %673 = vmatprep.mubr.f32.mxu0 0.0
    %674 = vmatmul.mubr.f32.gmra.mrb[0].mxu0 %v607
    %v675 = vpop.f32.mrb[0].mxu0
    %v676 = vadd.f32 0.0, %v675
    %v677 = vpop.f32.mrb[0].mxu0
    %678 = vdwg.mxu0
    %v679 = vadd.f32 %v602, %v676
    %v680 = vxor.u32 %v679, 2147483648
    %v681 = vmul.f32 %v680, 1.442695
    %v682 = vpow.pop %v681
    %v683 = vadd.f32 %v682, 1.0
    %v684 = vrcp.pop %v683
    %v685 = vmul.f32 1.0, %v684
    %v686 = vtanh.pop %v679
    %v687 = vmul.f32 %v685, %v588
    %689 = vrot.lane.b32.xlu0 %v686, 32
    %v690 = vpop.permute.xlu0 %689
    %v692 = vmul.f32 %v685, %v690
    %694 = vrot.lane.b32.xlu0 %v692, 32
    %v695 = vpop.permute.xlu0 %694
    %v697 = vadd.f32 %v687, %v695
    %v698 = vtanh.pop %v697
    %700 = vrot.lane.b32.xlu0 %v698, 32
    %v701 = vpop.permute.xlu0 %700
    %v703 = vmul.f32 %v685, %v701
    %705 = vrot.lane.b32.xlu0 %v703, 64
    %v706 = vpop.permute.xlu0 %705
    %s708 = scalar_lea.vmem [#allocation3], 24
    %709 = vst.msk [vmem:[%s708] sm:$0xff] %vm275, %v706
    %s710 = scalar_lea.vmem [#allocation2], 32
    %v711 = vld [vmem:[%s710] sm:$0xff]
    %v712 = vld [vmem:[#allocation12] sm:$0xff]
    %v713 = vld [vmem:[#allocation12 + $0x8] sm:$0xff]
    %v714 = vld [vmem:[#allocation12 + $0x10] sm:$0xff]
    %v715 = vld [vmem:[#allocation12 + $0x18] sm:$0xff]
    %v716 = vsel %vm275, %v706, 0
    %718 = vmatprep.subr.mxu0 0.0
    %719 = vmatpush1.msra.mxu0 %v712
    %720 = vmatprep.subr.mxu0 0.0
    %721 = vmatpush1.msra.mxu0 %v713
    %722 = vmatprep.subr.mxu0 0.0
    %723 = vmatpush1.msra.mxu0 %v714
    %724 = vmatprep.subr.mxu0 0.0
    %725 = vmatpush1.msra.mxu0 %v715
    %726 = vmatprep.subr.mxu0 0.0
    %727 = vmatpush1.msra.mxu0 0.0
    %728 = vmatprep.subr.mxu0 0.0
    %729 = vmatpush1.msra.mxu0 0.0
    %730 = vmatprep.subr.mxu0 0.0
    %731 = vmatpush1.msra.mxu0 0.0
    %732 = vmatprep.subr.mxu0 0.0
    %733 = vmatpush1.msra.mxu0 0.0
    %734 = vmatprep.subr.mxu0 0.0
    %735 = vmatpush1.msra.mxu0 0.0
    %736 = vmatprep.subr.mxu0 0.0
    %737 = vmatpush1.msra.mxu0 0.0
    %738 = vmatprep.subr.mxu0 0.0
    %739 = vmatpush1.msra.mxu0 0.0
    %740 = vmatprep.subr.mxu0 0.0
    %741 = vmatpush1.msra.mxu0 0.0
    %742 = vmatprep.subr.mxu0 0.0
    %743 = vmatpush1.msra.mxu0 0.0
    %744 = vmatprep.subr.mxu0 0.0
    %745 = vmatpush1.msra.mxu0 0.0
    %746 = vmatprep.subr.mxu0 0.0
    %747 = vmatpush1.msra.mxu0 0.0
    %748 = vmatprep.subr.mxu0 0.0
    %749 = vmatpush1.msra.mxu0 0.0
    %750 = vmatprep.subr.mxu0 0.0
    %751 = vmatpush1.msra.mxu0 0.0
    %752 = vmatprep.subr.mxu0 0.0
    %753 = vmatpush1.msra.mxu0 0.0
    %754 = vmatprep.subr.mxu0 0.0
    %755 = vmatpush1.msra.mxu0 0.0
    %756 = vmatprep.subr.mxu0 0.0
    %757 = vmatpush1.msra.mxu0 0.0
    %758 = vmatprep.subr.mxu0 0.0
    %759 = vmatpush1.msra.mxu0 0.0
    %760 = vmatprep.subr.mxu0 0.0
    %761 = vmatpush1.msra.mxu0 0.0
    %762 = vmatprep.subr.mxu0 0.0
    %763 = vmatpush1.msra.mxu0 0.0
    %764 = vmatprep.subr.mxu0 0.0
    %765 = vmatpush1.msra.mxu0 0.0
    %766 = vmatprep.subr.mxu0 0.0
    %767 = vmatpush1.msra.mxu0 0.0
    %768 = vmatprep.subr.mxu0 0.0
    %769 = vmatpush1.msra.mxu0 0.0
    %770 = vmatprep.subr.mxu0 0.0
    %771 = vmatpush1.msra.mxu0 0.0
    %772 = vmatprep.subr.mxu0 0.0
    %773 = vmatpush1.msra.mxu0 0.0
    %774 = vmatprep.subr.mxu0 0.0
    %775 = vmatpush1.msra.mxu0 0.0
    %776 = vmatprep.subr.mxu0 0.0
    %777 = vmatpush1.msra.mxu0 0.0
    %778 = vmatprep.subr.mxu0 0.0
    %779 = vmatpush1.msra.mxu0 0.0
    %780 = vmatprep.subr.mxu0 0.0
    %781 = vmatpush1.msra.mxu0 0.0
    %782 = vmatprep.mubr.f32.mxu0 0.0
    %783 = vmatmul.mubr.f32.gmra.mrb[0].mxu0 %v716
    %v784 = vpop.f32.mrb[0].mxu0
    %v785 = vadd.f32 0.0, %v784
    %v786 = vpop.f32.mrb[0].mxu0
    %787 = vdwg.mxu0
    %v788 = vadd.f32 %v711, %v785
    %v789 = vxor.u32 %v788, 2147483648
    %v790 = vmul.f32 %v789, 1.442695
    %v791 = vpow.pop %v790
    %v792 = vadd.f32 %v791, 1.0
    %v793 = vrcp.pop %v792
    %v794 = vmul.f32 1.0, %v793
    %v795 = vtanh.pop %v788
    %v796 = vmul.f32 %v794, %v697
    %798 = vrot.lane.b32.xlu0 %v795, 32
    %v799 = vpop.permute.xlu0 %798
    %v801 = vmul.f32 %v794, %v799
    %803 = vrot.lane.b32.xlu0 %v801, 32
    %v804 = vpop.permute.xlu0 %803
    %v806 = vadd.f32 %v796, %v804
    %v807 = vtanh.pop %v806
    %809 = vrot.lane.b32.xlu0 %v807, 32
    %v810 = vpop.permute.xlu0 %809
    %v812 = vmul.f32 %v794, %v810
    %814 = vrot.lane.b32.xlu0 %v812, 64
    %v815 = vpop.permute.xlu0 %814
    %s817 = scalar_lea.vmem [#allocation3], 32
    %818 = vst.msk [vmem:[%s817] sm:$0xff] %vm275, %v815
    %s819 = scalar_lea.vmem [#allocation2], 40
    %v820 = vld [vmem:[%s819] sm:$0xff]
    %v821 = vld [vmem:[#allocation12] sm:$0xff]
    %v822 = vld [vmem:[#allocation12 + $0x8] sm:$0xff]
    %v823 = vld [vmem:[#allocation12 + $0x10] sm:$0xff]
    %v824 = vld [vmem:[#allocation12 + $0x18] sm:$0xff]
    %v825 = vsel %vm275, %v815, 0
    %827 = vmatprep.subr.mxu0 0.0
    %828 = vmatpush1.msra.mxu0 %v821
    %829 = vmatprep.subr.mxu0 0.0
    %830 = vmatpush1.msra.mxu0 %v822
    %831 = vmatprep.subr.mxu0 0.0
    %832 = vmatpush1.msra.mxu0 %v823
    %833 = vmatprep.subr.mxu0 0.0
    %834 = vmatpush1.msra.mxu0 %v824
    %835 = vmatprep.subr.mxu0 0.0
    %836 = vmatpush1.msra.mxu0 0.0
    %837 = vmatprep.subr.mxu0 0.0
    %838 = vmatpush1.msra.mxu0 0.0
    %839 = vmatprep.subr.mxu0 0.0
    %840 = vmatpush1.msra.mxu0 0.0
    %841 = vmatprep.subr.mxu0 0.0
    %842 = vmatpush1.msra.mxu0 0.0
    %843 = vmatprep.subr.mxu0 0.0
    %844 = vmatpush1.msra.mxu0 0.0
    %845 = vmatprep.subr.mxu0 0.0
    %846 = vmatpush1.msra.mxu0 0.0
    %847 = vmatprep.subr.mxu0 0.0
    %848 = vmatpush1.msra.mxu0 0.0
    %849 = vmatprep.subr.mxu0 0.0
    %850 = vmatpush1.msra.mxu0 0.0
    %851 = vmatprep.subr.mxu0 0.0
    %852 = vmatpush1.msra.mxu0 0.0
    %853 = vmatprep.subr.mxu0 0.0
    %854 = vmatpush1.msra.mxu0 0.0
    %855 = vmatprep.subr.mxu0 0.0
    %856 = vmatpush1.msra.mxu0 0.0
    %857 = vmatprep.subr.mxu0 0.0
    %858 = vmatpush1.msra.mxu0 0.0
    %859 = vmatprep.subr.mxu0 0.0
    %860 = vmatpush1.msra.mxu0 0.0
    %861 = vmatprep.subr.mxu0 0.0
    %862 = vmatpush1.msra.mxu0 0.0
    %863 = vmatprep.subr.mxu0 0.0
    %864 = vmatpush1.msra.mxu0 0.0
    %865 = vmatprep.subr.mxu0 0.0
    %866 = vmatpush1.msra.mxu0 0.0
    %867 = vmatprep.subr.mxu0 0.0
    %868 = vmatpush1.msra.mxu0 0.0
    %869 = vmatprep.subr.mxu0 0.0
    %870 = vmatpush1.msra.mxu0 0.0
    %871 = vmatprep.subr.mxu0 0.0
    %872 = vmatpush1.msra.mxu0 0.0
    %873 = vmatprep.subr.mxu0 0.0
    %874 = vmatpush1.msra.mxu0 0.0
    %875 = vmatprep.subr.mxu0 0.0
    %876 = vmatpush1.msra.mxu0 0.0
    %877 = vmatprep.subr.mxu0 0.0
    %878 = vmatpush1.msra.mxu0 0.0
    %879 = vmatprep.subr.mxu0 0.0
    %880 = vmatpush1.msra.mxu0 0.0
    %881 = vmatprep.subr.mxu0 0.0
    %882 = vmatpush1.msra.mxu0 0.0
    %883 = vmatprep.subr.mxu0 0.0
    %884 = vmatpush1.msra.mxu0 0.0
    %885 = vmatprep.subr.mxu0 0.0
    %886 = vmatpush1.msra.mxu0 0.0
    %887 = vmatprep.subr.mxu0 0.0
    %888 = vmatpush1.msra.mxu0 0.0
    %889 = vmatprep.subr.mxu0 0.0
    %890 = vmatpush1.msra.mxu0 0.0
    %891 = vmatprep.mubr.f32.mxu0 0.0
    %892 = vmatmul.mubr.f32.gmra.mrb[0].mxu0 %v825
    %v893 = vpop.f32.mrb[0].mxu0
    %v894 = vadd.f32 0.0, %v893
    %v895 = vpop.f32.mrb[0].mxu0
    %896 = vdwg.mxu0
    %v897 = vadd.f32 %v820, %v894
    %v898 = vxor.u32 %v897, 2147483648
    %v899 = vmul.f32 %v898, 1.442695
    %v900 = vpow.pop %v899
    %v901 = vadd.f32 %v900, 1.0
    %v902 = vrcp.pop %v901
    %v903 = vmul.f32 1.0, %v902
    %v904 = vtanh.pop %v897
    %v905 = vmul.f32 %v903, %v806
    %907 = vrot.lane.b32.xlu0 %v904, 32
    %v908 = vpop.permute.xlu0 %907
    %v910 = vmul.f32 %v903, %v908
    %912 = vrot.lane.b32.xlu0 %v910, 32
    %v913 = vpop.permute.xlu0 %912
    %v915 = vadd.f32 %v905, %v913
    %v916 = vtanh.pop %v915
    %918 = vrot.lane.b32.xlu0 %v916, 32
    %v919 = vpop.permute.xlu0 %918
    %v921 = vmul.f32 %v903, %v919
    %923 = vrot.lane.b32.xlu0 %v921, 64
    %v924 = vpop.permute.xlu0 %923
    %s926 = scalar_lea.vmem [#allocation3], 40
    %927 = vst.msk [vmem:[%s926] sm:$0xff] %vm275, %v924
    %s928 = scalar_lea.vmem [#allocation2], 48
    %v929 = vld [vmem:[%s928] sm:$0xff]
    %v930 = vld [vmem:[#allocation12] sm:$0xff]
    %v931 = vld [vmem:[#allocation12 + $0x8] sm:$0xff]
    %v932 = vld [vmem:[#allocation12 + $0x10] sm:$0xff]
    %v933 = vld [vmem:[#allocation12 + $0x18] sm:$0xff]
    %v934 = vsel %vm275, %v924, 0
    %936 = vmatprep.subr.mxu0 0.0
    %937 = vmatpush1.msra.mxu0 %v930
    %938 = vmatprep.subr.mxu0 0.0
    %939 = vmatpush1.msra.mxu0 %v931
    %940 = vmatprep.subr.mxu0 0.0
    %941 = vmatpush1.msra.mxu0 %v932
    %942 = vmatprep.subr.mxu0 0.0
    %943 = vmatpush1.msra.mxu0 %v933
    %944 = vmatprep.subr.mxu0 0.0
    %945 = vmatpush1.msra.mxu0 0.0
    %946 = vmatprep.subr.mxu0 0.0
    %947 = vmatpush1.msra.mxu0 0.0
    %948 = vmatprep.subr.mxu0 0.0
    %949 = vmatpush1.msra.mxu0 0.0
    %950 = vmatprep.subr.mxu0 0.0
    %951 = vmatpush1.msra.mxu0 0.0
    %952 = vmatprep.subr.mxu0 0.0
    %953 = vmatpush1.msra.mxu0 0.0
    %954 = vmatprep.subr.mxu0 0.0
    %955 = vmatpush1.msra.mxu0 0.0
    %956 = vmatprep.subr.mxu0 0.0
    %957 = vmatpush1.msra.mxu0 0.0
    %958 = vmatprep.subr.mxu0 0.0
    %959 = vmatpush1.msra.mxu0 0.0
    %960 = vmatprep.subr.mxu0 0.0
    %961 = vmatpush1.msra.mxu0 0.0
    %962 = vmatprep.subr.mxu0 0.0
    %963 = vmatpush1.msra.mxu0 0.0
    %964 = vmatprep.subr.mxu0 0.0
    %965 = vmatpush1.msra.mxu0 0.0
    %966 = vmatprep.subr.mxu0 0.0
    %967 = vmatpush1.msra.mxu0 0.0
    %968 = vmatprep.subr.mxu0 0.0
    %969 = vmatpush1.msra.mxu0 0.0
    %970 = vmatprep.subr.mxu0 0.0
    %971 = vmatpush1.msra.mxu0 0.0
    %972 = vmatprep.subr.mxu0 0.0
    %973 = vmatpush1.msra.mxu0 0.0
    %974 = vmatprep.subr.mxu0 0.0
    %975 = vmatpush1.msra.mxu0 0.0
    %976 = vmatprep.subr.mxu0 0.0
    %977 = vmatpush1.msra.mxu0 0.0
    %978 = vmatprep.subr.mxu0 0.0
    %979 = vmatpush1.msra.mxu0 0.0
    %980 = vmatprep.subr.mxu0 0.0
    %981 = vmatpush1.msra.mxu0 0.0
    %982 = vmatprep.subr.mxu0 0.0
    %983 = vmatpush1.msra.mxu0 0.0
    %984 = vmatprep.subr.mxu0 0.0
    %985 = vmatpush1.msra.mxu0 0.0
    %986 = vmatprep.subr.mxu0 0.0
    %987 = vmatpush1.msra.mxu0 0.0
    %988 = vmatprep.subr.mxu0 0.0
    %989 = vmatpush1.msra.mxu0 0.0
    %990 = vmatprep.subr.mxu0 0.0
    %991 = vmatpush1.msra.mxu0 0.0
    %992 = vmatprep.subr.mxu0 0.0
    %993 = vmatpush1.msra.mxu0 0.0
    %994 = vmatprep.subr.mxu0 0.0
    %995 = vmatpush1.msra.mxu0 0.0
    %996 = vmatprep.subr.mxu0 0.0
    %997 = vmatpush1.msra.mxu0 0.0
    %998 = vmatprep.subr.mxu0 0.0
    %999 = vmatpush1.msra.mxu0 0.0
    %1000 = vmatprep.mubr.f32.mxu0 0.0
    %1001 = vmatmul.mubr.f32.gmra.mrb[0].mxu0 %v934
    %v1002 = vpop.f32.mrb[0].mxu0
    %v1003 = vadd.f32 0.0, %v1002
    %v1004 = vpop.f32.mrb[0].mxu0
    %1005 = vdwg.mxu0
    %v1006 = vadd.f32 %v929, %v1003
    %v1007 = vxor.u32 %v1006, 2147483648
    %v1008 = vmul.f32 %v1007, 1.442695
    %v1009 = vpow.pop %v1008
    %v1010 = vadd.f32 %v1009, 1.0
    %v1011 = vrcp.pop %v1010
    %v1012 = vmul.f32 1.0, %v1011
    %v1013 = vtanh.pop %v1006
    %v1014 = vmul.f32 %v1012, %v915
    %1016 = vrot.lane.b32.xlu0 %v1013, 32
    %v1017 = vpop.permute.xlu0 %1016
    %v1019 = vmul.f32 %v1012, %v1017
    %1021 = vrot.lane.b32.xlu0 %v1019, 32
    %v1022 = vpop.permute.xlu0 %1021
    %v1024 = vadd.f32 %v1014, %v1022
    %v1025 = vtanh.pop %v1024
    %1027 = vrot.lane.b32.xlu0 %v1025, 32
    %v1028 = vpop.permute.xlu0 %1027
    %v1030 = vmul.f32 %v1012, %v1028
    %1032 = vrot.lane.b32.xlu0 %v1030, 64
    %v1033 = vpop.permute.xlu0 %1032
    %s1035 = scalar_lea.vmem [#allocation3], 48
    %1036 = vst.msk [vmem:[%s1035] sm:$0xff] %vm275, %v1033
    %s1037 = scalar_lea.vmem [#allocation2], 56
    %v1038 = vld [vmem:[%s1037] sm:$0xff]
    %v1039 = vld [vmem:[#allocation12] sm:$0xff]
    %v1040 = vld [vmem:[#allocation12 + $0x8] sm:$0xff]
    %v1041 = vld [vmem:[#allocation12 + $0x10] sm:$0xff]
    %v1042 = vld [vmem:[#allocation12 + $0x18] sm:$0xff]
    %v1043 = vsel %vm275, %v1033, 0
    %1045 = vmatprep.subr.mxu0 0.0
    %1046 = vmatpush1.msra.mxu0 %v1039
    %1047 = vmatprep.subr.mxu0 0.0
    %1048 = vmatpush1.msra.mxu0 %v1040
    %1049 = vmatprep.subr.mxu0 0.0
    %1050 = vmatpush1.msra.mxu0 %v1041
    %1051 = vmatprep.subr.mxu0 0.0
    %1052 = vmatpush1.msra.mxu0 %v1042
    %1053 = vmatprep.subr.mxu0 0.0
    %1054 = vmatpush1.msra.mxu0 0.0
    %1055 = vmatprep.subr.mxu0 0.0
    %1056 = vmatpush1.msra.mxu0 0.0
    %1057 = vmatprep.subr.mxu0 0.0
    %1058 = vmatpush1.msra.mxu0 0.0
    %1059 = vmatprep.subr.mxu0 0.0
    %1060 = vmatpush1.msra.mxu0 0.0
    %1061 = vmatprep.subr.mxu0 0.0
    %1062 = vmatpush1.msra.mxu0 0.0
    %1063 = vmatprep.subr.mxu0 0.0
    %1064 = vmatpush1.msra.mxu0 0.0
    %1065 = vmatprep.subr.mxu0 0.0
    %1066 = vmatpush1.msra.mxu0 0.0
    %1067 = vmatprep.subr.mxu0 0.0
    %1068 = vmatpush1.msra.mxu0 0.0
    %1069 = vmatprep.subr.mxu0 0.0
    %1070 = vmatpush1.msra.mxu0 0.0
    %1071 = vmatprep.subr.mxu0 0.0
    %1072 = vmatpush1.msra.mxu0 0.0
    %1073 = vmatprep.subr.mxu0 0.0
    %1074 = vmatpush1.msra.mxu0 0.0
    %1075 = vmatprep.subr.mxu0 0.0
    %1076 = vmatpush1.msra.mxu0 0.0
    %1077 = vmatprep.subr.mxu0 0.0
    %1078 = vmatpush1.msra.mxu0 0.0
    %1079 = vmatprep.subr.mxu0 0.0
    %1080 = vmatpush1.msra.mxu0 0.0
    %1081 = vmatprep.subr.mxu0 0.0
    %1082 = vmatpush1.msra.mxu0 0.0
    %1083 = vmatprep.subr.mxu0 0.0
    %1084 = vmatpush1.msra.mxu0 0.0
    %1085 = vmatprep.subr.mxu0 0.0
    %1086 = vmatpush1.msra.mxu0 0.0
    %1087 = vmatprep.subr.mxu0 0.0
    %1088 = vmatpush1.msra.mxu0 0.0
    %1089 = vmatprep.subr.mxu0 0.0
    %1090 = vmatpush1.msra.mxu0 0.0
    %1091 = vmatprep.subr.mxu0 0.0
    %1092 = vmatpush1.msra.mxu0 0.0
    %1093 = vmatprep.subr.mxu0 0.0
    %1094 = vmatpush1.msra.mxu0 0.0
    %1095 = vmatprep.subr.mxu0 0.0
    %1096 = vmatpush1.msra.mxu0 0.0
    %1097 = vmatprep.subr.mxu0 0.0
    %1098 = vmatpush1.msra.mxu0 0.0
    %1099 = vmatprep.subr.mxu0 0.0
    %1100 = vmatpush1.msra.mxu0 0.0
    %1101 = vmatprep.subr.mxu0 0.0
    %1102 = vmatpush1.msra.mxu0 0.0
    %1103 = vmatprep.subr.mxu0 0.0
    %1104 = vmatpush1.msra.mxu0 0.0
    %1105 = vmatprep.subr.mxu0 0.0
    %1106 = vmatpush1.msra.mxu0 0.0
    %1107 = vmatprep.subr.mxu0 0.0
    %1108 = vmatpush1.msra.mxu0 0.0
    %1109 = vmatprep.mubr.f32.mxu0 0.0
    %1110 = vmatmul.mubr.f32.gmra.mrb[0].mxu0 %v1043
    %v1111 = vpop.f32.mrb[0].mxu0
    %v1112 = vadd.f32 0.0, %v1111
    %v1113 = vpop.f32.mrb[0].mxu0
    %1114 = vdwg.mxu0
    %v1115 = vadd.f32 %v1038, %v1112
    %v1116 = vxor.u32 %v1115, 2147483648
    %v1117 = vmul.f32 %v1116, 1.442695
    %v1118 = vpow.pop %v1117
    %v1119 = vadd.f32 %v1118, 1.0
    %v1120 = vrcp.pop %v1119
    %v1121 = vmul.f32 1.0, %v1120
    %v1122 = vtanh.pop %v1115
    %v1123 = vmul.f32 %v1121, %v1024
    %1125 = vrot.lane.b32.xlu0 %v1122, 32
    %v1126 = vpop.permute.xlu0 %1125
    %v1128 = vmul.f32 %v1121, %v1126
    %1130 = vrot.lane.b32.xlu0 %v1128, 32
    %v1131 = vpop.permute.xlu0 %1130
    %v1133 = vadd.f32 %v1123, %v1131
    %v1134 = vtanh.pop %v1133
    %1136 = vrot.lane.b32.xlu0 %v1134, 32
    %v1137 = vpop.permute.xlu0 %1136
    %v1139 = vmul.f32 %v1121, %v1137
    %1141 = vrot.lane.b32.xlu0 %v1139, 64
    %v1142 = vpop.permute.xlu0 %1141
    %s1144 = scalar_lea.vmem [#allocation3], 56
    %1145 = vst.msk [vmem:[%s1144] sm:$0xff] %vm275, %v1142
    %1146 = vst.msk [vmem:[#allocation4] sm:$0xff] %vm275, %v1142
    %1148 = vrot.lane.b32.xlu0 %v1133, 96
    %v1149 = vpop.permute.xlu0 %1148
    %1151 = vst.msk [vmem:[#allocation5] sm:$0xff] %vm275, %v1149
    %v1152 = vld [vmem:[#allocation3] sm:$0xff]
    %v1153 = vld [vmem:[#allocation3 + $0x8] sm:$0xff]
    %v1154 = vld [vmem:[#allocation3 + $0x10] sm:$0xff]
    %v1155 = vld [vmem:[#allocation3 + $0x18] sm:$0xff]
    %v1156 = vld [vmem:[#allocation3 + $0x20] sm:$0xff]
    %v1157 = vld [vmem:[#allocation3 + $0x28] sm:$0xff]
    %v1158 = vld [vmem:[#allocation3 + $0x30] sm:$0xff]
    %v1159 = vld [vmem:[#allocation3 + $0x38] sm:$0xff]
    %v1160 = vld [vmem:[#allocation13] sm:$0xff]
    %v1161 = vld [vmem:[#allocation13 + $0x8] sm:$0xff]
    %v1162 = vld [vmem:[#allocation13 + $0x10] sm:$0xff]
    %v1163 = vld [vmem:[#allocation13 + $0x18] sm:$0xff]
    %v1164 = vld [vmem:[%s7] sm:$0x1]
    %v1166 = vlaneseq
    %v1167 = vshrl.u32 %v1166, 7
    %v1168 = vsub.s32 0, %v1167
    %v1169 = vrot.slane %v1164, %v1168
    %v1172 = vsel %vm275, %v1152, 0
    %v1175 = vsel %vm275, %v1153, 0
    %v1178 = vsel %vm275, %v1154, 0
    %v1181 = vsel %vm275, %v1155, 0
    %v1184 = vsel %vm275, %v1156, 0
    %v1187 = vsel %vm275, %v1157, 0
    %v1190 = vsel %vm275, %v1158, 0
    %v1193 = vsel %vm275, %v1159, 0
    %1195 = vmatprep.subr.mxu0 0.0
    %1196 = vmatpush1.msra.mxu0 %v1160
    %1197 = vmatprep.subr.mxu0 0.0
    %1198 = vmatpush1.msra.mxu0 %v1161
    %1199 = vmatprep.subr.mxu0 0.0
    %1200 = vmatpush1.msra.mxu0 %v1162
    %1201 = vmatprep.subr.mxu0 0.0
    %1202 = vmatpush1.msra.mxu0 %v1163
    %1203 = vmatprep.subr.mxu0 0.0
    %1204 = vmatpush1.msra.mxu0 0.0
    %1205 = vmatprep.subr.mxu0 0.0
    %1206 = vmatpush1.msra.mxu0 0.0
    %1207 = vmatprep.subr.mxu0 0.0
    %1208 = vmatpush1.msra.mxu0 0.0
    %1209 = vmatprep.subr.mxu0 0.0
    %1210 = vmatpush1.msra.mxu0 0.0
    %1211 = vmatprep.subr.mxu0 0.0
    %1212 = vmatpush1.msra.mxu0 0.0
    %1213 = vmatprep.subr.mxu0 0.0
    %1214 = vmatpush1.msra.mxu0 0.0
    %1215 = vmatprep.subr.mxu0 0.0
    %1216 = vmatpush1.msra.mxu0 0.0
    %1217 = vmatprep.subr.mxu0 0.0
    %1218 = vmatpush1.msra.mxu0 0.0
    %1219 = vmatprep.subr.mxu0 0.0
    %1220 = vmatpush1.msra.mxu0 0.0
    %1221 = vmatprep.subr.mxu0 0.0
    %1222 = vmatpush1.msra.mxu0 0.0
    %1223 = vmatprep.subr.mxu0 0.0
    %1224 = vmatpush1.msra.mxu0 0.0
    %1225 = vmatprep.subr.mxu0 0.0
    %1226 = vmatpush1.msra.mxu0 0.0
    %1227 = vmatprep.subr.mxu0 0.0
    %1228 = vmatpush1.msra.mxu0 0.0
    %1229 = vmatprep.subr.mxu0 0.0
    %1230 = vmatpush1.msra.mxu0 0.0
    %1231 = vmatprep.subr.mxu0 0.0
    %1232 = vmatpush1.msra.mxu0 0.0
    %1233 = vmatprep.subr.mxu0 0.0
    %1234 = vmatpush1.msra.mxu0 0.0
    %1235 = vmatprep.subr.mxu0 0.0
    %1236 = vmatpush1.msra.mxu0 0.0
    %1237 = vmatprep.subr.mxu0 0.0
    %1238 = vmatpush1.msra.mxu0 0.0
    %1239 = vmatprep.subr.mxu0 0.0
    %1240 = vmatpush1.msra.mxu0 0.0
    %1241 = vmatprep.subr.mxu0 0.0
    %1242 = vmatpush1.msra.mxu0 0.0
    %1243 = vmatprep.subr.mxu0 0.0
    %1244 = vmatpush1.msra.mxu0 0.0
    %1245 = vmatprep.subr.mxu0 0.0
    %1246 = vmatpush1.msra.mxu0 0.0
    %1247 = vmatprep.subr.mxu0 0.0
    %1248 = vmatpush1.msra.mxu0 0.0
    %1249 = vmatprep.subr.mxu0 0.0
    %1250 = vmatpush1.msra.mxu0 0.0
    %1251 = vmatprep.subr.mxu0 0.0
    %1252 = vmatpush1.msra.mxu0 0.0
    %1253 = vmatprep.subr.mxu0 0.0
    %1254 = vmatpush1.msra.mxu0 0.0
    %1255 = vmatprep.subr.mxu0 0.0
    %1256 = vmatpush1.msra.mxu0 0.0
    %1257 = vmatprep.subr.mxu0 0.0
    %1258 = vmatpush1.msra.mxu0 0.0
    %1259 = vmatprep.mubr.f32.mxu0 0.0
    %1260 = vmatmul.mubr.f32.gmra.mrb[0].mxu0 %v1172
    %v1261 = vpop.f32.mrb[0].mxu0
    %v1262 = vadd.f32 %v1169, %v1261
    %v1263 = vpop.f32.mrb[0].mxu0
    %1264 = vmatprep.mubr.f32.mxu0 0.0
    %1265 = vmatmul.mubr.f32.gmra.mrb[0].mxu0 %v1175
    %v1266 = vpop.f32.mrb[0].mxu0
    %v1267 = vadd.f32 %v1169, %v1266
    %v1268 = vpop.f32.mrb[0].mxu0
    %1269 = vmatprep.mubr.f32.mxu0 0.0
    %1270 = vmatmul.mubr.f32.gmra.mrb[0].mxu0 %v1178
    %v1271 = vpop.f32.mrb[0].mxu0
    %v1272 = vadd.f32 %v1169, %v1271
    %v1273 = vpop.f32.mrb[0].mxu0
    %1274 = vmatprep.mubr.f32.mxu0 0.0
    %1275 = vmatmul.mubr.f32.gmra.mrb[0].mxu0 %v1181
    %v1276 = vpop.f32.mrb[0].mxu0
    %v1277 = vadd.f32 %v1169, %v1276
    %v1278 = vpop.f32.mrb[0].mxu0
    %1279 = vmatprep.mubr.f32.mxu0 0.0
    %1280 = vmatmul.mubr.f32.gmra.mrb[0].mxu0 %v1184
    %v1281 = vpop.f32.mrb[0].mxu0
    %v1282 = vadd.f32 %v1169, %v1281
    %v1283 = vpop.f32.mrb[0].mxu0
    %1284 = vmatprep.mubr.f32.mxu0 0.0
    %1285 = vmatmul.mubr.f32.gmra.mrb[0].mxu0 %v1187
    %v1286 = vpop.f32.mrb[0].mxu0
    %v1287 = vadd.f32 %v1169, %v1286
    %v1288 = vpop.f32.mrb[0].mxu0
    %1289 = vmatprep.mubr.f32.mxu0 0.0
    %1290 = vmatmul.mubr.f32.gmra.mrb[0].mxu0 %v1190
    %v1291 = vpop.f32.mrb[0].mxu0
    %v1292 = vadd.f32 %v1169, %v1291
    %v1293 = vpop.f32.mrb[0].mxu0
    %1294 = vmatprep.mubr.f32.mxu0 0.0
    %1295 = vmatmul.mubr.f32.gmra.mrb[0].mxu0 %v1193
    %v1296 = vpop.f32.mrb[0].mxu0
    %v1297 = vadd.f32 %v1169, %v1296
    %v1298 = vpop.f32.mrb[0].mxu0
    %1299 = vdwg.mxu0
    %1300 = vst [vmem:[#allocation2] sm:$0xff] %v1262
    %1301 = vst [vmem:[#allocation2 + $0x8] sm:$0xff] %v1267
    %1302 = vst [vmem:[#allocation2 + $0x10] sm:$0xff] %v1272
    %1303 = vst [vmem:[#allocation2 + $0x18] sm:$0xff] %v1277
    %1304 = vst [vmem:[#allocation2 + $0x20] sm:$0xff] %v1282
    %1305 = vst [vmem:[#allocation2 + $0x28] sm:$0xff] %v1287
    %1306 = vst [vmem:[#allocation2 + $0x30] sm:$0xff] %v1292
    %1307 = vst [vmem:[#allocation2 + $0x38] sm:$0xff] %v1297
    %s1308 = scalar_lea.vmem [#allocation4], 8
    %v1309 = vld [vmem:[%s1308] sm:$0xff]
    %s1310 = scalar_lea.vmem [#allocation5], 8
    %v1311 = vld [vmem:[%s1310] sm:$0xff]
    %v1312 = vld [vmem:[#allocation2] sm:$0xff]
    %v1313 = vld [vmem:[#allocation15] sm:$0xff]
    %v1314 = vld [vmem:[#allocation15 + $0x8] sm:$0xff]
    %v1315 = vld [vmem:[#allocation15 + $0x10] sm:$0xff]
    %v1316 = vld [vmem:[#allocation15 + $0x18] sm:$0xff]
    %v1318 = vsel %vm275, %v1309, 0
    %1320 = vmatprep.subr.mxu0 0.0
    %1321 = vmatpush1.msra.mxu0 %v1313
    %1322 = vmatprep.subr.mxu0 0.0
    %1323 = vmatpush1.msra.mxu0 %v1314
    %1324 = vmatprep.subr.mxu0 0.0
    %1325 = vmatpush1.msra.mxu0 %v1315
    %1326 = vmatprep.subr.mxu0 0.0
    %1327 = vmatpush1.msra.mxu0 %v1316
    %1328 = vmatprep.subr.mxu0 0.0
    %1329 = vmatpush1.msra.mxu0 0.0
    %1330 = vmatprep.subr.mxu0 0.0
    %1331 = vmatpush1.msra.mxu0 0.0
    %1332 = vmatprep.subr.mxu0 0.0
    %1333 = vmatpush1.msra.mxu0 0.0
    %1334 = vmatprep.subr.mxu0 0.0
    %1335 = vmatpush1.msra.mxu0 0.0
    %1336 = vmatprep.subr.mxu0 0.0
    %1337 = vmatpush1.msra.mxu0 0.0
    %1338 = vmatprep.subr.mxu0 0.0
    %1339 = vmatpush1.msra.mxu0 0.0
    %1340 = vmatprep.subr.mxu0 0.0
    %1341 = vmatpush1.msra.mxu0 0.0
    %1342 = vmatprep.subr.mxu0 0.0
    %1343 = vmatpush1.msra.mxu0 0.0
    %1344 = vmatprep.subr.mxu0 0.0
    %1345 = vmatpush1.msra.mxu0 0.0
    %1346 = vmatprep.subr.mxu0 0.0
    %1347 = vmatpush1.msra.mxu0 0.0
    %1348 = vmatprep.subr.mxu0 0.0
    %1349 = vmatpush1.msra.mxu0 0.0
    %1350 = vmatprep.subr.mxu0 0.0
    %1351 = vmatpush1.msra.mxu0 0.0
    %1352 = vmatprep.subr.mxu0 0.0
    %1353 = vmatpush1.msra.mxu0 0.0
    %1354 = vmatprep.subr.mxu0 0.0
    %1355 = vmatpush1.msra.mxu0 0.0
    %1356 = vmatprep.subr.mxu0 0.0
    %1357 = vmatpush1.msra.mxu0 0.0
    %1358 = vmatprep.subr.mxu0 0.0
    %1359 = vmatpush1.msra.mxu0 0.0
    %1360 = vmatprep.subr.mxu0 0.0
    %1361 = vmatpush1.msra.mxu0 0.0
    %1362 = vmatprep.subr.mxu0 0.0
    %1363 = vmatpush1.msra.mxu0 0.0
    %1364 = vmatprep.subr.mxu0 0.0
    %1365 = vmatpush1.msra.mxu0 0.0
    %1366 = vmatprep.subr.mxu0 0.0
    %1367 = vmatpush1.msra.mxu0 0.0
    %1368 = vmatprep.subr.mxu0 0.0
    %1369 = vmatpush1.msra.mxu0 0.0
    %1370 = vmatprep.subr.mxu0 0.0
    %1371 = vmatpush1.msra.mxu0 0.0
    %1372 = vmatprep.subr.mxu0 0.0
    %1373 = vmatpush1.msra.mxu0 0.0
    %1374 = vmatprep.subr.mxu0 0.0
    %1375 = vmatpush1.msra.mxu0 0.0
    %1376 = vmatprep.subr.mxu0 0.0
    %1377 = vmatpush1.msra.mxu0 0.0
    %1378 = vmatprep.subr.mxu0 0.0
    %1379 = vmatpush1.msra.mxu0 0.0
    %1380 = vmatprep.subr.mxu0 0.0
    %1381 = vmatpush1.msra.mxu0 0.0
    %1382 = vmatprep.subr.mxu0 0.0
    %1383 = vmatpush1.msra.mxu0 0.0
    %1384 = vmatprep.mubr.f32.mxu0 0.0
    %1385 = vmatmul.mubr.f32.gmra.mrb[0].mxu0 %v1318
    %v1386 = vpop.f32.mrb[0].mxu0
    %v1387 = vadd.f32 0.0, %v1386
    %v1388 = vpop.f32.mrb[0].mxu0
    %1389 = vdwg.mxu0
    %v1390 = vadd.f32 %v1312, %v1387
    %v1391 = vxor.u32 %v1390, 2147483648
    %v1392 = vmul.f32 %v1391, 1.442695
    %v1393 = vpow.pop %v1392
    %v1394 = vadd.f32 %v1393, 1.0
    %v1395 = vrcp.pop %v1394
    %v1396 = vmul.f32 1.0, %v1395
    %v1397 = vtanh.pop %v1390
    %1399 = vrot.lane.b32.xlu0 %v1311, 32
    %v1400 = vpop.permute.xlu0 %1399
    %v1402 = vmul.f32 %v1396, %v1400
    %1404 = vrot.lane.b32.xlu0 %v1397, 32
    %v1405 = vpop.permute.xlu0 %1404
    %v1407 = vmul.f32 %v1396, %v1405
    %1409 = vrot.lane.b32.xlu0 %v1407, 32
    %v1410 = vpop.permute.xlu0 %1409
    %v1412 = vadd.f32 %v1402, %v1410
    %v1413 = vtanh.pop %v1412
    %1415 = vrot.lane.b32.xlu0 %v1413, 32
    %v1416 = vpop.permute.xlu0 %1415
    %v1418 = vmul.f32 %v1396, %v1416
    %1420 = vrot.lane.b32.xlu0 %v1418, 64
    %v1421 = vpop.permute.xlu0 %1420
    %1423 = vst.msk [vmem:[#allocation3] sm:$0xff] %vm275, %v1421
    %v1424 = vld [vmem:[%s383] sm:$0xff]
    %v1425 = vld [vmem:[#allocation15] sm:$0xff]
    %v1426 = vld [vmem:[#allocation15 + $0x8] sm:$0xff]
    %v1427 = vld [vmem:[#allocation15 + $0x10] sm:$0xff]
    %v1428 = vld [vmem:[#allocation15 + $0x18] sm:$0xff]
    %v1429 = vsel %vm275, %v1421, 0
    %1431 = vmatprep.subr.mxu0 0.0
    %1432 = vmatpush1.msra.mxu0 %v1425
    %1433 = vmatprep.subr.mxu0 0.0
    %1434 = vmatpush1.msra.mxu0 %v1426
    %1435 = vmatprep.subr.mxu0 0.0
    %1436 = vmatpush1.msra.mxu0 %v1427
    %1437 = vmatprep.subr.mxu0 0.0
    %1438 = vmatpush1.msra.mxu0 %v1428
    %1439 = vmatprep.subr.mxu0 0.0
    %1440 = vmatpush1.msra.mxu0 0.0
    %1441 = vmatprep.subr.mxu0 0.0
    %1442 = vmatpush1.msra.mxu0 0.0
    %1443 = vmatprep.subr.mxu0 0.0
    %1444 = vmatpush1.msra.mxu0 0.0
    %1445 = vmatprep.subr.mxu0 0.0
    %1446 = vmatpush1.msra.mxu0 0.0
    %1447 = vmatprep.subr.mxu0 0.0
    %1448 = vmatpush1.msra.mxu0 0.0
    %1449 = vmatprep.subr.mxu0 0.0
    %1450 = vmatpush1.msra.mxu0 0.0
    %1451 = vmatprep.subr.mxu0 0.0
    %1452 = vmatpush1.msra.mxu0 0.0
    %1453 = vmatprep.subr.mxu0 0.0
    %1454 = vmatpush1.msra.mxu0 0.0
    %1455 = vmatprep.subr.mxu0 0.0
    %1456 = vmatpush1.msra.mxu0 0.0
    %1457 = vmatprep.subr.mxu0 0.0
    %1458 = vmatpush1.msra.mxu0 0.0
    %1459 = vmatprep.subr.mxu0 0.0
    %1460 = vmatpush1.msra.mxu0 0.0
    %1461 = vmatprep.subr.mxu0 0.0
    %1462 = vmatpush1.msra.mxu0 0.0
    %1463 = vmatprep.subr.mxu0 0.0
    %1464 = vmatpush1.msra.mxu0 0.0
    %1465 = vmatprep.subr.mxu0 0.0
    %1466 = vmatpush1.msra.mxu0 0.0
    %1467 = vmatprep.subr.mxu0 0.0
    %1468 = vmatpush1.msra.mxu0 0.0
    %1469 = vmatprep.subr.mxu0 0.0
    %1470 = vmatpush1.msra.mxu0 0.0
    %1471 = vmatprep.subr.mxu0 0.0
    %1472 = vmatpush1.msra.mxu0 0.0
    %1473 = vmatprep.subr.mxu0 0.0
    %1474 = vmatpush1.msra.mxu0 0.0
    %1475 = vmatprep.subr.mxu0 0.0
    %1476 = vmatpush1.msra.mxu0 0.0
    %1477 = vmatprep.subr.mxu0 0.0
    %1478 = vmatpush1.msra.mxu0 0.0
    %1479 = vmatprep.subr.mxu0 0.0
    %1480 = vmatpush1.msra.mxu0 0.0
    %1481 = vmatprep.subr.mxu0 0.0
    %1482 = vmatpush1.msra.mxu0 0.0
    %1483 = vmatprep.subr.mxu0 0.0
    %1484 = vmatpush1.msra.mxu0 0.0
    %1485 = vmatprep.subr.mxu0 0.0
    %1486 = vmatpush1.msra.mxu0 0.0
    %1487 = vmatprep.subr.mxu0 0.0
    %1488 = vmatpush1.msra.mxu0 0.0
    %1489 = vmatprep.subr.mxu0 0.0
    %1490 = vmatpush1.msra.mxu0 0.0
    %1491 = vmatprep.subr.mxu0 0.0
    %1492 = vmatpush1.msra.mxu0 0.0
    %1493 = vmatprep.subr.mxu0 0.0
    %1494 = vmatpush1.msra.mxu0 0.0
    %1495 = vmatprep.mubr.f32.mxu0 0.0
    %1496 = vmatmul.mubr.f32.gmra.mrb[0].mxu0 %v1429
    %v1497 = vpop.f32.mrb[0].mxu0
    %v1498 = vadd.f32 0.0, %v1497
    %v1499 = vpop.f32.mrb[0].mxu0
    %1500 = vdwg.mxu0
    %v1501 = vadd.f32 %v1424, %v1498
    %v1502 = vxor.u32 %v1501, 2147483648
    %v1503 = vmul.f32 %v1502, 1.442695
    %v1504 = vpow.pop %v1503
    %v1505 = vadd.f32 %v1504, 1.0
    %v1506 = vrcp.pop %v1505
    %v1507 = vmul.f32 1.0, %v1506
    %v1508 = vtanh.pop %v1501
    %v1509 = vmul.f32 %v1507, %v1412
    %1511 = vrot.lane.b32.xlu0 %v1508, 32
    %v1512 = vpop.permute.xlu0 %1511
    %v1514 = vmul.f32 %v1507, %v1512
    %1516 = vrot.lane.b32.xlu0 %v1514, 32
    %v1517 = vpop.permute.xlu0 %1516
    %v1519 = vadd.f32 %v1509, %v1517
    %v1520 = vtanh.pop %v1519
    %1522 = vrot.lane.b32.xlu0 %v1520, 32
    %v1523 = vpop.permute.xlu0 %1522
    %v1525 = vmul.f32 %v1507, %v1523
    %1527 = vrot.lane.b32.xlu0 %v1525, 64
    %v1528 = vpop.permute.xlu0 %1527
    %1530 = vst.msk [vmem:[%s490] sm:$0xff] %vm275, %v1528
    %v1531 = vld [vmem:[%s492] sm:$0xff]
    %v1532 = vld [vmem:[#allocation15] sm:$0xff]
    %v1533 = vld [vmem:[#allocation15 + $0x8] sm:$0xff]
    %v1534 = vld [vmem:[#allocation15 + $0x10] sm:$0xff]
    %v1535 = vld [vmem:[#allocation15 + $0x18] sm:$0xff]
    %v1536 = vsel %vm275, %v1528, 0
    %1538 = vmatprep.subr.mxu0 0.0
    %1539 = vmatpush1.msra.mxu0 %v1532
    %1540 = vmatprep.subr.mxu0 0.0
    %1541 = vmatpush1.msra.mxu0 %v1533
    %1542 = vmatprep.subr.mxu0 0.0
    %1543 = vmatpush1.msra.mxu0 %v1534
    %1544 = vmatprep.subr.mxu0 0.0
    %1545 = vmatpush1.msra.mxu0 %v1535
    %1546 = vmatprep.subr.mxu0 0.0
    %1547 = vmatpush1.msra.mxu0 0.0
    %1548 = vmatprep.subr.mxu0 0.0
    %1549 = vmatpush1.msra.mxu0 0.0
    %1550 = vmatprep.subr.mxu0 0.0
    %1551 = vmatpush1.msra.mxu0 0.0
    %1552 = vmatprep.subr.mxu0 0.0
    %1553 = vmatpush1.msra.mxu0 0.0
    %1554 = vmatprep.subr.mxu0 0.0
    %1555 = vmatpush1.msra.mxu0 0.0
    %1556 = vmatprep.subr.mxu0 0.0
    %1557 = vmatpush1.msra.mxu0 0.0
    %1558 = vmatprep.subr.mxu0 0.0
    %1559 = vmatpush1.msra.mxu0 0.0
    %1560 = vmatprep.subr.mxu0 0.0
    %1561 = vmatpush1.msra.mxu0 0.0
    %1562 = vmatprep.subr.mxu0 0.0
    %1563 = vmatpush1.msra.mxu0 0.0
    %1564 = vmatprep.subr.mxu0 0.0
    %1565 = vmatpush1.msra.mxu0 0.0
    %1566 = vmatprep.subr.mxu0 0.0
    %1567 = vmatpush1.msra.mxu0 0.0
    %1568 = vmatprep.subr.mxu0 0.0
    %1569 = vmatpush1.msra.mxu0 0.0
    %1570 = vmatprep.subr.mxu0 0.0
    %1571 = vmatpush1.msra.mxu0 0.0
    %1572 = vmatprep.subr.mxu0 0.0
    %1573 = vmatpush1.msra.mxu0 0.0
    %1574 = vmatprep.subr.mxu0 0.0
    %1575 = vmatpush1.msra.mxu0 0.0
    %1576 = vmatprep.subr.mxu0 0.0
    %1577 = vmatpush1.msra.mxu0 0.0
    %1578 = vmatprep.subr.mxu0 0.0
    %1579 = vmatpush1.msra.mxu0 0.0
    %1580 = vmatprep.subr.mxu0 0.0
    %1581 = vmatpush1.msra.mxu0 0.0
    %1582 = vmatprep.subr.mxu0 0.0
    %1583 = vmatpush1.msra.mxu0 0.0
    %1584 = vmatprep.subr.mxu0 0.0
    %1585 = vmatpush1.msra.mxu0 0.0
    %1586 = vmatprep.subr.mxu0 0.0
    %1587 = vmatpush1.msra.mxu0 0.0
    %1588 = vmatprep.subr.mxu0 0.0
    %1589 = vmatpush1.msra.mxu0 0.0
    %1590 = vmatprep.subr.mxu0 0.0
    %1591 = vmatpush1.msra.mxu0 0.0
    %1592 = vmatprep.subr.mxu0 0.0
    %1593 = vmatpush1.msra.mxu0 0.0
    %1594 = vmatprep.subr.mxu0 0.0
    %1595 = vmatpush1.msra.mxu0 0.0
    %1596 = vmatprep.subr.mxu0 0.0
    %1597 = vmatpush1.msra.mxu0 0.0
    %1598 = vmatprep.subr.mxu0 0.0
    %1599 = vmatpush1.msra.mxu0 0.0
    %1600 = vmatprep.subr.mxu0 0.0
    %1601 = vmatpush1.msra.mxu0 0.0
    %1602 = vmatprep.mubr.f32.mxu0 0.0
    %1603 = vmatmul.mubr.f32.gmra.mrb[0].mxu0 %v1536
    %v1604 = vpop.f32.mrb[0].mxu0
    %v1605 = vadd.f32 0.0, %v1604
    %v1606 = vpop.f32.mrb[0].mxu0
    %1607 = vdwg.mxu0
    %v1608 = vadd.f32 %v1531, %v1605
    %v1609 = vxor.u32 %v1608, 2147483648
    %v1610 = vmul.f32 %v1609, 1.442695
    %v1611 = vpow.pop %v1610
    %v1612 = vadd.f32 %v1611, 1.0
    %v1613 = vrcp.pop %v1612
    %v1614 = vmul.f32 1.0, %v1613
    %v1615 = vtanh.pop %v1608
    %v1616 = vmul.f32 %v1614, %v1519
    %1618 = vrot.lane.b32.xlu0 %v1615, 32
    %v1619 = vpop.permute.xlu0 %1618
    %v1621 = vmul.f32 %v1614, %v1619
    %1623 = vrot.lane.b32.xlu0 %v1621, 32
    %v1624 = vpop.permute.xlu0 %1623
    %v1626 = vadd.f32 %v1616, %v1624
    %v1627 = vtanh.pop %v1626
    %1629 = vrot.lane.b32.xlu0 %v1627, 32
    %v1630 = vpop.permute.xlu0 %1629
    %v1632 = vmul.f32 %v1614, %v1630
    %1634 = vrot.lane.b32.xlu0 %v1632, 64
    %v1635 = vpop.permute.xlu0 %1634
    %1637 = vst.msk [vmem:[%s599] sm:$0xff] %vm275, %v1635
    %v1638 = vld [vmem:[%s601] sm:$0xff]
    %v1639 = vld [vmem:[#allocation15] sm:$0xff]
    %v1640 = vld [vmem:[#allocation15 + $0x8] sm:$0xff]
    %v1641 = vld [vmem:[#allocation15 + $0x10] sm:$0xff]
    %v1642 = vld [vmem:[#allocation15 + $0x18] sm:$0xff]
    %v1643 = vsel %vm275, %v1635, 0
    %1645 = vmatprep.subr.mxu0 0.0
    %1646 = vmatpush1.msra.mxu0 %v1639
    %1647 = vmatprep.subr.mxu0 0.0
    %1648 = vmatpush1.msra.mxu0 %v1640
    %1649 = vmatprep.subr.mxu0 0.0
    %1650 = vmatpush1.msra.mxu0 %v1641
    %1651 = vmatprep.subr.mxu0 0.0
    %1652 = vmatpush1.msra.mxu0 %v1642
    %1653 = vmatprep.subr.mxu0 0.0
    %1654 = vmatpush1.msra.mxu0 0.0
    %1655 = vmatprep.subr.mxu0 0.0
    %1656 = vmatpush1.msra.mxu0 0.0
    %1657 = vmatprep.subr.mxu0 0.0
    %1658 = vmatpush1.msra.mxu0 0.0
    %1659 = vmatprep.subr.mxu0 0.0
    %1660 = vmatpush1.msra.mxu0 0.0
    %1661 = vmatprep.subr.mxu0 0.0
    %1662 = vmatpush1.msra.mxu0 0.0
    %1663 = vmatprep.subr.mxu0 0.0
    %1664 = vmatpush1.msra.mxu0 0.0
    %1665 = vmatprep.subr.mxu0 0.0
    %1666 = vmatpush1.msra.mxu0 0.0
    %1667 = vmatprep.subr.mxu0 0.0
    %1668 = vmatpush1.msra.mxu0 0.0
    %1669 = vmatprep.subr.mxu0 0.0
    %1670 = vmatpush1.msra.mxu0 0.0
    %1671 = vmatprep.subr.mxu0 0.0
    %1672 = vmatpush1.msra.mxu0 0.0
    %1673 = vmatprep.subr.mxu0 0.0
    %1674 = vmatpush1.msra.mxu0 0.0
    %1675 = vmatprep.subr.mxu0 0.0
    %1676 = vmatpush1.msra.mxu0 0.0
    %1677 = vmatprep.subr.mxu0 0.0
    %1678 = vmatpush1.msra.mxu0 0.0
    %1679 = vmatprep.subr.mxu0 0.0
    %1680 = vmatpush1.msra.mxu0 0.0
    %1681 = vmatprep.subr.mxu0 0.0
    %1682 = vmatpush1.msra.mxu0 0.0
    %1683 = vmatprep.subr.mxu0 0.0
    %1684 = vmatpush1.msra.mxu0 0.0
    %1685 = vmatprep.subr.mxu0 0.0
    %1686 = vmatpush1.msra.mxu0 0.0
    %1687 = vmatprep.subr.mxu0 0.0
    %1688 = vmatpush1.msra.mxu0 0.0
    %1689 = vmatprep.subr.mxu0 0.0
    %1690 = vmatpush1.msra.mxu0 0.0
    %1691 = vmatprep.subr.mxu0 0.0
    %1692 = vmatpush1.msra.mxu0 0.0
    %1693 = vmatprep.subr.mxu0 0.0
    %1694 = vmatpush1.msra.mxu0 0.0
    %1695 = vmatprep.subr.mxu0 0.0
    %1696 = vmatpush1.msra.mxu0 0.0
    %1697 = vmatprep.subr.mxu0 0.0
    %1698 = vmatpush1.msra.mxu0 0.0
    %1699 = vmatprep.subr.mxu0 0.0
    %1700 = vmatpush1.msra.mxu0 0.0
    %1701 = vmatprep.subr.mxu0 0.0
    %1702 = vmatpush1.msra.mxu0 0.0
    %1703 = vmatprep.subr.mxu0 0.0
    %1704 = vmatpush1.msra.mxu0 0.0
    %1705 = vmatprep.subr.mxu0 0.0
    %1706 = vmatpush1.msra.mxu0 0.0
    %1707 = vmatprep.subr.mxu0 0.0
    %1708 = vmatpush1.msra.mxu0 0.0
    %1709 = vmatprep.mubr.f32.mxu0 0.0
    %1710 = vmatmul.mubr.f32.gmra.mrb[0].mxu0 %v1643
    %v1711 = vpop.f32.mrb[0].mxu0
    %v1712 = vadd.f32 0.0, %v1711
    %v1713 = vpop.f32.mrb[0].mxu0
    %1714 = vdwg.mxu0
    %v1715 = vadd.f32 %v1638, %v1712
    %v1716 = vxor.u32 %v1715, 2147483648
    %v1717 = vmul.f32 %v1716, 1.442695
    %v1718 = vpow.pop %v1717
    %v1719 = vadd.f32 %v1718, 1.0
    %v1720 = vrcp.pop %v1719
    %v1721 = vmul.f32 1.0, %v1720
    %v1722 = vtanh.pop %v1715
    %v1723 = vmul.f32 %v1721, %v1626
    %1725 = vrot.lane.b32.xlu0 %v1722, 32
    %v1726 = vpop.permute.xlu0 %1725
    %v1728 = vmul.f32 %v1721, %v1726
    %1730 = vrot.lane.b32.xlu0 %v1728, 32
    %v1731 = vpop.permute.xlu0 %1730
    %v1733 = vadd.f32 %v1723, %v1731
    %v1734 = vtanh.pop %v1733
    %1736 = vrot.lane.b32.xlu0 %v1734, 32
    %v1737 = vpop.permute.xlu0 %1736
    %v1739 = vmul.f32 %v1721, %v1737
    %1741 = vrot.lane.b32.xlu0 %v1739, 64
    %v1742 = vpop.permute.xlu0 %1741
    %1744 = vst.msk [vmem:[%s708] sm:$0xff] %vm275, %v1742
    %v1745 = vld [vmem:[%s710] sm:$0xff]
    %v1746 = vld [vmem:[#allocation15] sm:$0xff]
    %v1747 = vld [vmem:[#allocation15 + $0x8] sm:$0xff]
    %v1748 = vld [vmem:[#allocation15 + $0x10] sm:$0xff]
    %v1749 = vld [vmem:[#allocation15 + $0x18] sm:$0xff]
    %v1750 = vsel %vm275, %v1742, 0
    %1752 = vmatprep.subr.mxu0 0.0
    %1753 = vmatpush1.msra.mxu0 %v1746
    %1754 = vmatprep.subr.mxu0 0.0
    %1755 = vmatpush1.msra.mxu0 %v1747
    %1756 = vmatprep.subr.mxu0 0.0
    %1757 = vmatpush1.msra.mxu0 %v1748
    %1758 = vmatprep.subr.mxu0 0.0
    %1759 = vmatpush1.msra.mxu0 %v1749
    %1760 = vmatprep.subr.mxu0 0.0
    %1761 = vmatpush1.msra.mxu0 0.0
    %1762 = vmatprep.subr.mxu0 0.0
    %1763 = vmatpush1.msra.mxu0 0.0
    %1764 = vmatprep.subr.mxu0 0.0
    %1765 = vmatpush1.msra.mxu0 0.0
    %1766 = vmatprep.subr.mxu0 0.0
    %1767 = vmatpush1.msra.mxu0 0.0
    %1768 = vmatprep.subr.mxu0 0.0
    %1769 = vmatpush1.msra.mxu0 0.0
    %1770 = vmatprep.subr.mxu0 0.0
    %1771 = vmatpush1.msra.mxu0 0.0
    %1772 = vmatprep.subr.mxu0 0.0
    %1773 = vmatpush1.msra.mxu0 0.0
    %1774 = vmatprep.subr.mxu0 0.0
    %1775 = vmatpush1.msra.mxu0 0.0
    %1776 = vmatprep.subr.mxu0 0.0
    %1777 = vmatpush1.msra.mxu0 0.0
    %1778 = vmatprep.subr.mxu0 0.0
    %1779 = vmatpush1.msra.mxu0 0.0
    %1780 = vmatprep.subr.mxu0 0.0
    %1781 = vmatpush1.msra.mxu0 0.0
    %1782 = vmatprep.subr.mxu0 0.0
    %1783 = vmatpush1.msra.mxu0 0.0
    %1784 = vmatprep.subr.mxu0 0.0
    %1785 = vmatpush1.msra.mxu0 0.0
    %1786 = vmatprep.subr.mxu0 0.0
    %1787 = vmatpush1.msra.mxu0 0.0
    %1788 = vmatprep.subr.mxu0 0.0
    %1789 = vmatpush1.msra.mxu0 0.0
    %1790 = vmatprep.subr.mxu0 0.0
    %1791 = vmatpush1.msra.mxu0 0.0
    %1792 = vmatprep.subr.mxu0 0.0
    %1793 = vmatpush1.msra.mxu0 0.0
    %1794 = vmatprep.subr.mxu0 0.0
    %1795 = vmatpush1.msra.mxu0 0.0
    %1796 = vmatprep.subr.mxu0 0.0
    %1797 = vmatpush1.msra.mxu0 0.0
    %1798 = vmatprep.subr.mxu0 0.0
    %1799 = vmatpush1.msra.mxu0 0.0
    %1800 = vmatprep.subr.mxu0 0.0
    %1801 = vmatpush1.msra.mxu0 0.0
    %1802 = vmatprep.subr.mxu0 0.0
    %1803 = vmatpush1.msra.mxu0 0.0
    %1804 = vmatprep.subr.mxu0 0.0
    %1805 = vmatpush1.msra.mxu0 0.0
    %1806 = vmatprep.subr.mxu0 0.0
    %1807 = vmatpush1.msra.mxu0 0.0
    %1808 = vmatprep.subr.mxu0 0.0
    %1809 = vmatpush1.msra.mxu0 0.0
    %1810 = vmatprep.subr.mxu0 0.0
    %1811 = vmatpush1.msra.mxu0 0.0
    %1812 = vmatprep.subr.mxu0 0.0
    %1813 = vmatpush1.msra.mxu0 0.0
    %1814 = vmatprep.subr.mxu0 0.0
    %1815 = vmatpush1.msra.mxu0 0.0
    %1816 = vmatprep.mubr.f32.mxu0 0.0
    %1817 = vmatmul.mubr.f32.gmra.mrb[0].mxu0 %v1750
    %v1818 = vpop.f32.mrb[0].mxu0
    %v1819 = vadd.f32 0.0, %v1818
    %v1820 = vpop.f32.mrb[0].mxu0
    %1821 = vdwg.mxu0
    %v1822 = vadd.f32 %v1745, %v1819
    %v1823 = vxor.u32 %v1822, 2147483648
    %v1824 = vmul.f32 %v1823, 1.442695
    %v1825 = vpow.pop %v1824
    %v1826 = vadd.f32 %v1825, 1.0
    %v1827 = vrcp.pop %v1826
    %v1828 = vmul.f32 1.0, %v1827
    %v1829 = vtanh.pop %v1822
    %v1830 = vmul.f32 %v1828, %v1733
    %1832 = vrot.lane.b32.xlu0 %v1829, 32
    %v1833 = vpop.permute.xlu0 %1832
    %v1835 = vmul.f32 %v1828, %v1833
    %1837 = vrot.lane.b32.xlu0 %v1835, 32
    %v1838 = vpop.permute.xlu0 %1837
    %v1840 = vadd.f32 %v1830, %v1838
    %v1841 = vtanh.pop %v1840
    %1843 = vrot.lane.b32.xlu0 %v1841, 32
    %v1844 = vpop.permute.xlu0 %1843
    %v1846 = vmul.f32 %v1828, %v1844
    %1848 = vrot.lane.b32.xlu0 %v1846, 64
    %v1849 = vpop.permute.xlu0 %1848
    %1851 = vst.msk [vmem:[%s817] sm:$0xff] %vm275, %v1849
    %v1852 = vld [vmem:[%s819] sm:$0xff]
    %v1853 = vld [vmem:[#allocation15] sm:$0xff]
    %v1854 = vld [vmem:[#allocation15 + $0x8] sm:$0xff]
    %v1855 = vld [vmem:[#allocation15 + $0x10] sm:$0xff]
    %v1856 = vld [vmem:[#allocation15 + $0x18] sm:$0xff]
    %v1857 = vsel %vm275, %v1849, 0
    %1859 = vmatprep.subr.mxu0 0.0
    %1860 = vmatpush1.msra.mxu0 %v1853
    %1861 = vmatprep.subr.mxu0 0.0
    %1862 = vmatpush1.msra.mxu0 %v1854
    %1863 = vmatprep.subr.mxu0 0.0
    %1864 = vmatpush1.msra.mxu0 %v1855
    %1865 = vmatprep.subr.mxu0 0.0
    %1866 = vmatpush1.msra.mxu0 %v1856
    %1867 = vmatprep.subr.mxu0 0.0
    %1868 = vmatpush1.msra.mxu0 0.0
    %1869 = vmatprep.subr.mxu0 0.0
    %1870 = vmatpush1.msra.mxu0 0.0
    %1871 = vmatprep.subr.mxu0 0.0
    %1872 = vmatpush1.msra.mxu0 0.0
    %1873 = vmatprep.subr.mxu0 0.0
    %1874 = vmatpush1.msra.mxu0 0.0
    %1875 = vmatprep.subr.mxu0 0.0
    %1876 = vmatpush1.msra.mxu0 0.0
    %1877 = vmatprep.subr.mxu0 0.0
    %1878 = vmatpush1.msra.mxu0 0.0
    %1879 = vmatprep.subr.mxu0 0.0
    %1880 = vmatpush1.msra.mxu0 0.0
    %1881 = vmatprep.subr.mxu0 0.0
    %1882 = vmatpush1.msra.mxu0 0.0
    %1883 = vmatprep.subr.mxu0 0.0
    %1884 = vmatpush1.msra.mxu0 0.0
    %1885 = vmatprep.subr.mxu0 0.0
    %1886 = vmatpush1.msra.mxu0 0.0
    %1887 = vmatprep.subr.mxu0 0.0
    %1888 = vmatpush1.msra.mxu0 0.0
    %1889 = vmatprep.subr.mxu0 0.0
    %1890 = vmatpush1.msra.mxu0 0.0
    %1891 = vmatprep.subr.mxu0 0.0
    %1892 = vmatpush1.msra.mxu0 0.0
    %1893 = vmatprep.subr.mxu0 0.0
    %1894 = vmatpush1.msra.mxu0 0.0
    %1895 = vmatprep.subr.mxu0 0.0
    %1896 = vmatpush1.msra.mxu0 0.0
    %1897 = vmatprep.subr.mxu0 0.0
    %1898 = vmatpush1.msra.mxu0 0.0
    %1899 = vmatprep.subr.mxu0 0.0
    %1900 = vmatpush1.msra.mxu0 0.0
    %1901 = vmatprep.subr.mxu0 0.0
    %1902 = vmatpush1.msra.mxu0 0.0
    %1903 = vmatprep.subr.mxu0 0.0
    %1904 = vmatpush1.msra.mxu0 0.0
    %1905 = vmatprep.subr.mxu0 0.0
    %1906 = vmatpush1.msra.mxu0 0.0
    %1907 = vmatprep.subr.mxu0 0.0
    %1908 = vmatpush1.msra.mxu0 0.0
    %1909 = vmatprep.subr.mxu0 0.0
    %1910 = vmatpush1.msra.mxu0 0.0
    %1911 = vmatprep.subr.mxu0 0.0
    %1912 = vmatpush1.msra.mxu0 0.0
    %1913 = vmatprep.subr.mxu0 0.0
    %1914 = vmatpush1.msra.mxu0 0.0
    %1915 = vmatprep.subr.mxu0 0.0
    %1916 = vmatpush1.msra.mxu0 0.0
    %1917 = vmatprep.subr.mxu0 0.0
    %1918 = vmatpush1.msra.mxu0 0.0
    %1919 = vmatprep.subr.mxu0 0.0
    %1920 = vmatpush1.msra.mxu0 0.0
    %1921 = vmatprep.subr.mxu0 0.0
    %1922 = vmatpush1.msra.mxu0 0.0
    %1923 = vmatprep.mubr.f32.mxu0 0.0
    %1924 = vmatmul.mubr.f32.gmra.mrb[0].mxu0 %v1857
    %v1925 = vpop.f32.mrb[0].mxu0
    %v1926 = vadd.f32 0.0, %v1925
    %v1927 = vpop.f32.mrb[0].mxu0
    %1928 = vdwg.mxu0
    %v1929 = vadd.f32 %v1852, %v1926
    %v1930 = vxor.u32 %v1929, 2147483648
    %v1931 = vmul.f32 %v1930, 1.442695
    %v1932 = vpow.pop %v1931
    %v1933 = vadd.f32 %v1932, 1.0
    %v1934 = vrcp.pop %v1933
    %v1935 = vmul.f32 1.0, %v1934
    %v1936 = vtanh.pop %v1929
    %v1937 = vmul.f32 %v1935, %v1840
    %1939 = vrot.lane.b32.xlu0 %v1936, 32
    %v1940 = vpop.permute.xlu0 %1939
    %v1942 = vmul.f32 %v1935, %v1940
    %1944 = vrot.lane.b32.xlu0 %v1942, 32
    %v1945 = vpop.permute.xlu0 %1944
    %v1947 = vadd.f32 %v1937, %v1945
    %v1948 = vtanh.pop %v1947
    %1950 = vrot.lane.b32.xlu0 %v1948, 32
    %v1951 = vpop.permute.xlu0 %1950
    %v1953 = vmul.f32 %v1935, %v1951
    %1955 = vrot.lane.b32.xlu0 %v1953, 64
    %v1956 = vpop.permute.xlu0 %1955
    %1958 = vst.msk [vmem:[%s926] sm:$0xff] %vm275, %v1956
    %v1959 = vld [vmem:[%s928] sm:$0xff]
    %v1960 = vld [vmem:[#allocation15] sm:$0xff]
    %v1961 = vld [vmem:[#allocation15 + $0x8] sm:$0xff]
    %v1962 = vld [vmem:[#allocation15 + $0x10] sm:$0xff]
    %v1963 = vld [vmem:[#allocation15 + $0x18] sm:$0xff]
    %v1964 = vsel %vm275, %v1956, 0
    %1966 = vmatprep.subr.mxu0 0.0
    %1967 = vmatpush1.msra.mxu0 %v1960
    %1968 = vmatprep.subr.mxu0 0.0
    %1969 = vmatpush1.msra.mxu0 %v1961
    %1970 = vmatprep.subr.mxu0 0.0
    %1971 = vmatpush1.msra.mxu0 %v1962
    %1972 = vmatprep.subr.mxu0 0.0
    %1973 = vmatpush1.msra.mxu0 %v1963
    %1974 = vmatprep.subr.mxu0 0.0
    %1975 = vmatpush1.msra.mxu0 0.0
    %1976 = vmatprep.subr.mxu0 0.0
    %1977 = vmatpush1.msra.mxu0 0.0
    %1978 = vmatprep.subr.mxu0 0.0
    %1979 = vmatpush1.msra.mxu0 0.0
    %1980 = vmatprep.subr.mxu0 0.0
    %1981 = vmatpush1.msra.mxu0 0.0
    %1982 = vmatprep.subr.mxu0 0.0
    %1983 = vmatpush1.msra.mxu0 0.0
    %1984 = vmatprep.subr.mxu0 0.0
    %1985 = vmatpush1.msra.mxu0 0.0
    %1986 = vmatprep.subr.mxu0 0.0
    %1987 = vmatpush1.msra.mxu0 0.0
    %1988 = vmatprep.subr.mxu0 0.0
    %1989 = vmatpush1.msra.mxu0 0.0
    %1990 = vmatprep.subr.mxu0 0.0
    %1991 = vmatpush1.msra.mxu0 0.0
    %1992 = vmatprep.subr.mxu0 0.0
    %1993 = vmatpush1.msra.mxu0 0.0
    %1994 = vmatprep.subr.mxu0 0.0
    %1995 = vmatpush1.msra.mxu0 0.0
    %1996 = vmatprep.subr.mxu0 0.0
    %1997 = vmatpush1.msra.mxu0 0.0
    %1998 = vmatprep.subr.mxu0 0.0
    %1999 = vmatpush1.msra.mxu0 0.0
    %2000 = vmatprep.subr.mxu0 0.0
    %2001 = vmatpush1.msra.mxu0 0.0
    %2002 = vmatprep.subr.mxu0 0.0
    %2003 = vmatpush1.msra.mxu0 0.0
    %2004 = vmatprep.subr.mxu0 0.0
    %2005 = vmatpush1.msra.mxu0 0.0
    %2006 = vmatprep.subr.mxu0 0.0
    %2007 = vmatpush1.msra.mxu0 0.0
    %2008 = vmatprep.subr.mxu0 0.0
    %2009 = vmatpush1.msra.mxu0 0.0
    %2010 = vmatprep.subr.mxu0 0.0
    %2011 = vmatpush1.msra.mxu0 0.0
    %2012 = vmatprep.subr.mxu0 0.0
    %2013 = vmatpush1.msra.mxu0 0.0
    %2014 = vmatprep.subr.mxu0 0.0
    %2015 = vmatpush1.msra.mxu0 0.0
    %2016 = vmatprep.subr.mxu0 0.0
    %2017 = vmatpush1.msra.mxu0 0.0
    %2018 = vmatprep.subr.mxu0 0.0
    %2019 = vmatpush1.msra.mxu0 0.0
    %2020 = vmatprep.subr.mxu0 0.0
    %2021 = vmatpush1.msra.mxu0 0.0
    %2022 = vmatprep.subr.mxu0 0.0
    %2023 = vmatpush1.msra.mxu0 0.0
    %2024 = vmatprep.subr.mxu0 0.0
    %2025 = vmatpush1.msra.mxu0 0.0
    %2026 = vmatprep.subr.mxu0 0.0
    %2027 = vmatpush1.msra.mxu0 0.0
    %2028 = vmatprep.subr.mxu0 0.0
    %2029 = vmatpush1.msra.mxu0 0.0
    %2030 = vmatprep.mubr.f32.mxu0 0.0
    %2031 = vmatmul.mubr.f32.gmra.mrb[0].mxu0 %v1964
    %v2032 = vpop.f32.mrb[0].mxu0
    %v2033 = vadd.f32 0.0, %v2032
    %v2034 = vpop.f32.mrb[0].mxu0
    %2035 = vdwg.mxu0
    %v2036 = vadd.f32 %v1959, %v2033
    %v2037 = vxor.u32 %v2036, 2147483648
    %v2038 = vmul.f32 %v2037, 1.442695
    %v2039 = vpow.pop %v2038
    %v2040 = vadd.f32 %v2039, 1.0
    %v2041 = vrcp.pop %v2040
    %v2042 = vmul.f32 1.0, %v2041
    %v2043 = vtanh.pop %v2036
    %v2044 = vmul.f32 %v2042, %v1947
    %2046 = vrot.lane.b32.xlu0 %v2043, 32
    %v2047 = vpop.permute.xlu0 %2046
    %v2049 = vmul.f32 %v2042, %v2047
    %2051 = vrot.lane.b32.xlu0 %v2049, 32
    %v2052 = vpop.permute.xlu0 %2051
    %v2054 = vadd.f32 %v2044, %v2052
    %v2055 = vtanh.pop %v2054
    %2057 = vrot.lane.b32.xlu0 %v2055, 32
    %v2058 = vpop.permute.xlu0 %2057
    %v2060 = vmul.f32 %v2042, %v2058
    %2062 = vrot.lane.b32.xlu0 %v2060, 64
    %v2063 = vpop.permute.xlu0 %2062
    %2065 = vst.msk [vmem:[%s1035] sm:$0xff] %vm275, %v2063
    %v2066 = vld [vmem:[%s1037] sm:$0xff]
    %v2067 = vld [vmem:[#allocation15] sm:$0xff]
    %v2068 = vld [vmem:[#allocation15 + $0x8] sm:$0xff]
    %v2069 = vld [vmem:[#allocation15 + $0x10] sm:$0xff]
    %v2070 = vld [vmem:[#allocation15 + $0x18] sm:$0xff]
    %v2071 = vsel %vm275, %v2063, 0
    %2073 = vmatprep.subr.mxu0 0.0
    %2074 = vmatpush1.msra.mxu0 %v2067
    %2075 = vmatprep.subr.mxu0 0.0
    %2076 = vmatpush1.msra.mxu0 %v2068
    %2077 = vmatprep.subr.mxu0 0.0
    %2078 = vmatpush1.msra.mxu0 %v2069
    %2079 = vmatprep.subr.mxu0 0.0
    %2080 = vmatpush1.msra.mxu0 %v2070
    %2081 = vmatprep.subr.mxu0 0.0
    %2082 = vmatpush1.msra.mxu0 0.0
    %2083 = vmatprep.subr.mxu0 0.0
    %2084 = vmatpush1.msra.mxu0 0.0
    %2085 = vmatprep.subr.mxu0 0.0
    %2086 = vmatpush1.msra.mxu0 0.0
    %2087 = vmatprep.subr.mxu0 0.0
    %2088 = vmatpush1.msra.mxu0 0.0
    %2089 = vmatprep.subr.mxu0 0.0
    %2090 = vmatpush1.msra.mxu0 0.0
    %2091 = vmatprep.subr.mxu0 0.0
    %2092 = vmatpush1.msra.mxu0 0.0
    %2093 = vmatprep.subr.mxu0 0.0
    %2094 = vmatpush1.msra.mxu0 0.0
    %2095 = vmatprep.subr.mxu0 0.0
    %2096 = vmatpush1.msra.mxu0 0.0
    %2097 = vmatprep.subr.mxu0 0.0
    %2098 = vmatpush1.msra.mxu0 0.0
    %2099 = vmatprep.subr.mxu0 0.0
    %2100 = vmatpush1.msra.mxu0 0.0
    %2101 = vmatprep.subr.mxu0 0.0
    %2102 = vmatpush1.msra.mxu0 0.0
    %2103 = vmatprep.subr.mxu0 0.0
    %2104 = vmatpush1.msra.mxu0 0.0
    %2105 = vmatprep.subr.mxu0 0.0
    %2106 = vmatpush1.msra.mxu0 0.0
    %2107 = vmatprep.subr.mxu0 0.0
    %2108 = vmatpush1.msra.mxu0 0.0
    %2109 = vmatprep.subr.mxu0 0.0
    %2110 = vmatpush1.msra.mxu0 0.0
    %2111 = vmatprep.subr.mxu0 0.0
    %2112 = vmatpush1.msra.mxu0 0.0
    %2113 = vmatprep.subr.mxu0 0.0
    %2114 = vmatpush1.msra.mxu0 0.0
    %2115 = vmatprep.subr.mxu0 0.0
    %2116 = vmatpush1.msra.mxu0 0.0
    %2117 = vmatprep.subr.mxu0 0.0
    %2118 = vmatpush1.msra.mxu0 0.0
    %2119 = vmatprep.subr.mxu0 0.0
    %2120 = vmatpush1.msra.mxu0 0.0
    %2121 = vmatprep.subr.mxu0 0.0
    %2122 = vmatpush1.msra.mxu0 0.0
    %2123 = vmatprep.subr.mxu0 0.0
    %2124 = vmatpush1.msra.mxu0 0.0
    %2125 = vmatprep.subr.mxu0 0.0
    %2126 = vmatpush1.msra.mxu0 0.0
    %2127 = vmatprep.subr.mxu0 0.0
    %2128 = vmatpush1.msra.mxu0 0.0
    %2129 = vmatprep.subr.mxu0 0.0
    %2130 = vmatpush1.msra.mxu0 0.0
    %2131 = vmatprep.subr.mxu0 0.0
    %2132 = vmatpush1.msra.mxu0 0.0
    %2133 = vmatprep.subr.mxu0 0.0
    %2134 = vmatpush1.msra.mxu0 0.0
    %2135 = vmatprep.subr.mxu0 0.0
    %2136 = vmatpush1.msra.mxu0 0.0
    %2137 = vmatprep.mubr.f32.mxu0 0.0
    %2138 = vmatmul.mubr.f32.gmra.mrb[0].mxu0 %v2071
    %v2139 = vpop.f32.mrb[0].mxu0
    %v2140 = vadd.f32 0.0, %v2139
    %v2141 = vpop.f32.mrb[0].mxu0
    %2142 = vdwg.mxu0
    %v2143 = vadd.f32 %v2066, %v2140
    %v2144 = vxor.u32 %v2143, 2147483648
    %v2145 = vmul.f32 %v2144, 1.442695
    %v2146 = vpow.pop %v2145
    %v2147 = vadd.f32 %v2146, 1.0
    %v2148 = vrcp.pop %v2147
    %v2149 = vmul.f32 1.0, %v2148
    %v2150 = vtanh.pop %v2143
    %v2151 = vmul.f32 %v2149, %v2054
    %2153 = vrot.lane.b32.xlu0 %v2150, 32
    %v2154 = vpop.permute.xlu0 %2153
    %v2156 = vmul.f32 %v2149, %v2154
    %2158 = vrot.lane.b32.xlu0 %v2156, 32
    %v2159 = vpop.permute.xlu0 %2158
    %v2161 = vadd.f32 %v2151, %v2159
    %v2162 = vtanh.pop %v2161
    %2164 = vrot.lane.b32.xlu0 %v2162, 32
    %v2165 = vpop.permute.xlu0 %2164
    %v2167 = vmul.f32 %v2149, %v2165
    %2169 = vrot.lane.b32.xlu0 %v2167, 64
    %v2170 = vpop.permute.xlu0 %2169
    %2172 = vst.msk [vmem:[%s1144] sm:$0xff] %vm275, %v2170
    %2173 = vst.msk [vmem:[%s1308] sm:$0xff] %vm275, %v2170
    %2175 = vrot.lane.b32.xlu0 %v2161, 96
    %v2176 = vpop.permute.xlu0 %2175
    %2178 = vst.msk [vmem:[%s1310] sm:$0xff] %vm275, %v2176
    %v2179 = vstv %s113
    %v2180 = vadd.s32 %v2179, 1
    %v2181 = vadd.s32 %v2179, 2
    %v2182 = vadd.s32 %v2179, 3
    %v2183 = vadd.s32 %v2179, 4
    %v2184 = vadd.s32 %v2179, 5
    %v2185 = vadd.s32 %v2179, 6
    %v2186 = vadd.s32 %v2179, 7
    %v2187 = vadd.s32 %v2180, 1
    %v2188 = vadd.s32 %v2181, 1
    %v2189 = vadd.s32 %v2182, 1
    %v2190 = vadd.s32 %v2183, 1
    %v2191 = vadd.s32 %v2184, 1
    %v2192 = vadd.s32 %v2185, 1
    %v2193 = vadd.s32 %v2186, 1
    %vm2194 = vcmp.eq.s32.totalorder %v112, %v2180
    %vm2195 = vcmp.eq.s32.totalorder %v112, %v2187
    %vm2196 = vcmp.eq.s32.totalorder %v112, %v2188
    %vm2197 = vcmp.eq.s32.totalorder %v112, %v2189
    %vm2198 = vcmp.eq.s32.totalorder %v112, %v2190
    %vm2199 = vcmp.eq.s32.totalorder %v112, %v2191
    %vm2200 = vcmp.eq.s32.totalorder %v112, %v2192
    %vm2201 = vcmp.eq.s32.totalorder %v112, %v2193
    %v2202 = vld [vmem:[#allocation3] sm:$0xff]
    %v2203 = vld [vmem:[#allocation3 + $0x8] sm:$0xff]
    %v2204 = vld [vmem:[#allocation3 + $0x10] sm:$0xff]
    %v2205 = vld [vmem:[#allocation3 + $0x18] sm:$0xff]
    %v2206 = vld [vmem:[#allocation3 + $0x20] sm:$0xff]
    %v2207 = vld [vmem:[#allocation3 + $0x28] sm:$0xff]
    %v2208 = vld [vmem:[#allocation3 + $0x30] sm:$0xff]
    %v2209 = vld [vmem:[#allocation3 + $0x38] sm:$0xff]
    %v2210 = vsel %vm2194, 1, 0
    %v2211 = vsel %vm2195, 1, 0
    %v2212 = vsel %vm2196, 1, 0
    %v2213 = vsel %vm2197, 1, 0
    %v2214 = vsel %vm2198, 1, 0
    %v2215 = vsel %vm2199, 1, 0
    %v2216 = vsel %vm2200, 1, 0
    %v2217 = vsel %vm2201, 1, 0
    %2218 = vset.pattern.permute.xlu0 0
    %2219 = vperm.xlu0 %2218, %v2210
    %v2220 = vpop.permute.xlu0 %2219
    %2221 = vset.pattern.permute.xlu0 0
    %2222 = vperm.xlu0 %2221, %v2211
    %v2223 = vpop.permute.xlu0 %2222
    %2224 = vset.pattern.permute.xlu0 0
    %2225 = vperm.xlu0 %2224, %v2212
    %v2226 = vpop.permute.xlu0 %2225
    %2227 = vset.pattern.permute.xlu0 0
    %2228 = vperm.xlu0 %2227, %v2213
    %v2229 = vpop.permute.xlu0 %2228
    %2230 = vset.pattern.permute.xlu0 0
    %2231 = vperm.xlu0 %2230, %v2214
    %v2232 = vpop.permute.xlu0 %2231
    %2233 = vset.pattern.permute.xlu0 0
    %2234 = vperm.xlu0 %2233, %v2215
    %v2235 = vpop.permute.xlu0 %2234
    %2236 = vset.pattern.permute.xlu0 0
    %2237 = vperm.xlu0 %2236, %v2216
    %v2238 = vpop.permute.xlu0 %2237
    %2239 = vset.pattern.permute.xlu0 0
    %2240 = vperm.xlu0 %2239, %v2217
    %v2241 = vpop.permute.xlu0 %2240
    %vm2242 = vcmp.eq.s32.totalorder %v2220, 1
    %vm2243 = vcmp.eq.s32.totalorder %v2223, 1
    %vm2244 = vcmp.eq.s32.totalorder %v2226, 1
    %vm2245 = vcmp.eq.s32.totalorder %v2229, 1
    %vm2246 = vcmp.eq.s32.totalorder %v2232, 1
    %vm2247 = vcmp.eq.s32.totalorder %v2235, 1
    %vm2248 = vcmp.eq.s32.totalorder %v2238, 1
    %vm2249 = vcmp.eq.s32.totalorder %v2241, 1
    %v2250 = vsel %vm2242, %v2202, 0.0
    %v2251 = vsel %vm2243, %v2203, 0.0
    %v2252 = vsel %vm2244, %v2204, 0.0
    %v2253 = vsel %vm2245, %v2205, 0.0
    %v2254 = vsel %vm2246, %v2206, 0.0
    %v2255 = vsel %vm2247, %v2207, 0.0
    %v2256 = vsel %vm2248, %v2208, 0.0
    %v2257 = vsel %vm2249, %v2209, 0.0
    %v2258 = vsel %vm275, %v2250, 0.0
    %v2259 = vsel %vm275, %v2251, 0.0
    %v2260 = vadd.f32 %v2258, %v2259
    %v2261 = vsel %vm275, %v2252, 0.0
    %v2262 = vadd.f32 %v2260, %v2261
    %v2263 = vsel %vm275, %v2253, 0.0
    %v2264 = vadd.f32 %v2262, %v2263
    %v2265 = vsel %vm275, %v2254, 0.0
    %v2266 = vadd.f32 %v2264, %v2265
    %v2267 = vsel %vm275, %v2255, 0.0
    %v2268 = vadd.f32 %v2266, %v2267
    %v2269 = vsel %vm275, %v2256, 0.0
    %v2270 = vadd.f32 %v2268, %v2269
    %v2271 = vsel %vm275, %v2257, 0.0
    %v2272 = vadd.f32 %v2270, %v2271
    %vm2273 = vcmp.gt.s32.totalorder %v112, %v2179
    %s2274 = sadd.s32 %s113, 8
    %v2275 = vstv %s2274
    %vm2276 = vcmp.le.s32.totalorder %v112, %v2275
    %vm2277 = vmand %vm2273, %vm2276
    %v2278 = vld [vmem:[#allocation6] sm:$0xff]
    %v2279 = vsel %vm2277, 1, 0
    %2280 = vset.pattern.permute.xlu0 0
    %2281 = vperm.xlu0 %2280, %v2279
    %v2282 = vpop.permute.xlu0 %2281
    %vm2283 = vcmp.eq.s32.totalorder %v2282, 1
    %v2284 = vsel %vm2283, %v2272, %v2278
    %2285 = vst.msk [vmem:[#allocation6] sm:$0xff] %vm275, %v2284
    // Predicated region
    $region66: #{tpu_custom_call.1} parent=1 // pred_check
      %p2286 = pneg %p102
    $region67: #{tpu_custom_call.1} parent=1 // pred_check_branch
      %2288 = sbr.rel (%p2286) target = $region69
    $region68: #{tpu_custom_call.1} parent=1 // pred_region
      %v2289 = vld [vmem:[#allocation6] sm:$0xff]
      %v2290 = vld [vmem:[%s8] sm:$0xff]
      %v2291 = vld [vmem:[%s8 + $0x8] sm:$0xff]
      %v2292 = vld [vmem:[%s8 + $0x10] sm:$0xff]
      %v2293 = vld [vmem:[%s8 + $0x18] sm:$0xff]
      %v2294 = vld [vmem:[%s9] sm:$0x1]
      %v2296 = vlaneseq
      %v2297 = vshrl.u32 %v2296, 7
      %v2298 = vsub.s32 0, %v2297
      %v2299 = vrot.slane %v2294, %v2298
      %v2302 = vsel %vm275, %v2289, 0
      %2304 = vmatprep.subr.mxu0 0.0
      %2305 = vmatpush1.msra.mxu0 %v2290
      %2306 = vmatprep.subr.mxu0 0.0
      %2307 = vmatpush1.msra.mxu0 %v2291
      %2308 = vmatprep.subr.mxu0 0.0
      %2309 = vmatpush1.msra.mxu0 %v2292
      %2310 = vmatprep.subr.mxu0 0.0
      %2311 = vmatpush1.msra.mxu0 %v2293
      %2312 = vmatprep.subr.mxu0 0.0
      %2313 = vmatpush1.msra.mxu0 0.0
      %2314 = vmatprep.subr.mxu0 0.0
      %2315 = vmatpush1.msra.mxu0 0.0
      %2316 = vmatprep.subr.mxu0 0.0
      %2317 = vmatpush1.msra.mxu0 0.0
      %2318 = vmatprep.subr.mxu0 0.0
      %2319 = vmatpush1.msra.mxu0 0.0
      %2320 = vmatprep.subr.mxu0 0.0
      %2321 = vmatpush1.msra.mxu0 0.0
      %2322 = vmatprep.subr.mxu0 0.0
      %2323 = vmatpush1.msra.mxu0 0.0
      %2324 = vmatprep.subr.mxu0 0.0
      %2325 = vmatpush1.msra.mxu0 0.0
      %2326 = vmatprep.subr.mxu0 0.0
      %2327 = vmatpush1.msra.mxu0 0.0
      %2328 = vmatprep.subr.mxu0 0.0
      %2329 = vmatpush1.msra.mxu0 0.0
      %2330 = vmatprep.subr.mxu0 0.0
      %2331 = vmatpush1.msra.mxu0 0.0
      %2332 = vmatprep.subr.mxu0 0.0
      %2333 = vmatpush1.msra.mxu0 0.0
      %2334 = vmatprep.subr.mxu0 0.0
      %2335 = vmatpush1.msra.mxu0 0.0
      %2336 = vmatprep.subr.mxu0 0.0
      %2337 = vmatpush1.msra.mxu0 0.0
      %2338 = vmatprep.subr.mxu0 0.0
      %2339 = vmatpush1.msra.mxu0 0.0
      %2340 = vmatprep.subr.mxu0 0.0
      %2341 = vmatpush1.msra.mxu0 0.0
      %2342 = vmatprep.subr.mxu0 0.0
      %2343 = vmatpush1.msra.mxu0 0.0
      %2344 = vmatprep.subr.mxu0 0.0
      %2345 = vmatpush1.msra.mxu0 0.0
      %2346 = vmatprep.subr.mxu0 0.0
      %2347 = vmatpush1.msra.mxu0 0.0
      %2348 = vmatprep.subr.mxu0 0.0
      %2349 = vmatpush1.msra.mxu0 0.0
      %2350 = vmatprep.subr.mxu0 0.0
      %2351 = vmatpush1.msra.mxu0 0.0
      %2352 = vmatprep.subr.mxu0 0.0
      %2353 = vmatpush1.msra.mxu0 0.0
      %2354 = vmatprep.subr.mxu0 0.0
      %2355 = vmatpush1.msra.mxu0 0.0
      %2356 = vmatprep.subr.mxu0 0.0
      %2357 = vmatpush1.msra.mxu0 0.0
      %2358 = vmatprep.subr.mxu0 0.0
      %2359 = vmatpush1.msra.mxu0 0.0
      %2360 = vmatprep.subr.mxu0 0.0
      %2361 = vmatpush1.msra.mxu0 0.0
      %2362 = vmatprep.subr.mxu0 0.0
      %2363 = vmatpush1.msra.mxu0 0.0
      %2364 = vmatprep.subr.mxu0 0.0
      %2365 = vmatpush1.msra.mxu0 0.0
      %2366 = vmatprep.subr.mxu0 0.0
      %2367 = vmatpush1.msra.mxu0 0.0
      %2368 = vmatprep.mubr.f32.mxu0 0.0
      %2369 = vmatmul.mubr.f32.gmra.mrb[0].mxu0 %v2302
      %v2370 = vpop.f32.mrb[0].mxu0
      %v2371 = vadd.f32 %v2299, %v2370
      %v2372 = vpop.f32.mrb[0].mxu0
      %2373 = vdwg.mxu0
      %2374 = vst [vmem:[#allocation16] sm:$0xff] %v2371
    $region69: #{tpu_custom_call.1} parent=1 // pred_fallthru
      _
    // Predicated region
    $region70: #{tpu_custom_call.1} parent=1 // pred_check
      _
    $region71: #{tpu_custom_call.1} parent=1 // pred_check_branch
      %2376 = sbr.rel (0) target = $region73
    $region72: #{tpu_custom_call.1} parent=1 // pred_region
      %s2378 = ssub.s32 128, 128
      %2379 = vsyncadd [#allocation9], %s2378
      %s2381 = sshll.u32 [#allocation16], 4
      %s2382 = int_to_ptr.vmem [resolvable:$true] %s2381
      %2384 = dma.vmem_to_hbm [thread:$0]  %s2382, 128, %s10, [#allocation9]
    $region73: #{tpu_custom_call.1} parent=1 // pred_fallthru
      _
    // Predicated region
    $region74: #{tpu_custom_call.1} parent=1 // pred_check
      _
    $region75: #{tpu_custom_call.1} parent=1 // pred_check_branch
      %2386 = sbr.rel (0) target = $region77
    $region76: #{tpu_custom_call.1} parent=1 // pred_region
      %2387 = dma.done [#allocation9], 128
    $region77: #{tpu_custom_call.1} parent=1 // pred_fallthru
      _
    %2388 = vsyncpa [#allocation8], 1
    %2389 = vsyncpa [#allocation11], 1
    %2390 = vsyncpa [#allocation14], 1
    %2391 = vsyncpa [#allocation9], 1

</llo_original>
